<compile_context>
chip_gen: v7x
topology: tpu7x:2x2x1
jax: 0.10.0
libtpu: 0.0.40
codegen_flags: <defaults>
</compile_context>

<pallas_src>
import functools

import jax
import jax.numpy as jnp
from jax.experimental import pallas as pl
from jax.experimental.pallas import tpu as pltpu


# ----------------------------- Pallas kernel ------------------------------

def _fused_dense_kernel(x_ref, w_ref, b_ref, g_ref, beta_ref, o_ref, acc_ref,
                        *, apply_ln, eps):
    """o = [LayerNorm](x @ w + b); grid = (M tiles, K tiles), K is reduction."""
    k = pl.program_id(1)

    @pl.when(k == 0)
    def _init():
        acc_ref[...] = jnp.zeros_like(acc_ref)

    # bf16 x bf16 -> f32 accumulate on the MXU.
    acc_ref[...] += jnp.dot(x_ref[...], w_ref[...],
                            preferred_element_type=jnp.float32)

    @pl.when(k == pl.num_programs(1) - 1)
    def _finalize():
        y = acc_ref[...] + b_ref[...]                      # f32 epilogue
        if apply_ln:                                       # fused LayerNorm
            mu = jnp.mean(y, axis=-1, keepdims=True)
            var = jnp.mean((y - mu) ** 2, axis=-1, keepdims=True)
            y = (y - mu) * jax.lax.rsqrt(var + eps)
            y = y * g_ref[...] + beta_ref[...]
        o_ref[...] = y.astype(o_ref.dtype)


def _pick_tm(m, candidates=(256, 128, 64, 32, 16, 8)):
    divisors = [c for c in candidates if m % c == 0]
    if not divisors:
        return m
    # Prefer >=2 M tiles so the 'parallel' axis can shard across v7x's 2 TCs.
    multi = [c for c in divisors if m // c >= 2]
    return multi[0] if multi else divisors[0]


def _pick_tk(k, candidates=(512, 256, 128)):
    for c in candidates:
        if k % c == 0:
            return c
    return k


def fused_dense(x, w, b, gamma=None, beta=None, *, out_dtype=jnp.float32,
                eps=1e-5):
    """y = x @ w + b, optionally followed by LayerNorm(gamma, beta) over N."""
    M, K = x.shape
    N = w.shape[1]
    apply_ln = gamma is not None
    if gamma is None:
        gamma = jnp.ones((N,), jnp.float32)
        beta = jnp.zeros((N,), jnp.float32)

    tm = _pick_tm(M)
    tk = _pick_tk(K)
    grid = (M // tm, K // tk)

    x_bf = x.astype(jnp.bfloat16)
    w_bf = w.astype(jnp.bfloat16)

    kernel = functools.partial(_fused_dense_kernel, apply_ln=apply_ln, eps=eps)

    out_bytes = jnp.dtype(out_dtype).itemsize
    cost = pl.CostEstimate(
        flops=2 * M * K * N,
        transcendentals=M if apply_ln else 0,
        bytes_accessed=M * K * 2 + K * N * 2 + M * N * out_bytes + 3 * N * 4,
    )

    return pl.pallas_call(
        kernel,
        out_shape=jax.ShapeDtypeStruct((M, N), out_dtype),
        grid_spec=pltpu.PrefetchScalarGridSpec(
            num_scalar_prefetch=0,
            grid=grid,
            in_specs=[
                pl.BlockSpec((tm, tk), lambda i, k: (i, k)),   # x tile
                pl.BlockSpec((tk, N), lambda i, k: (k, 0)),    # w tile (full N)
                pl.BlockSpec((1, N), lambda i, k: (0, 0)),     # bias
                pl.BlockSpec((1, N), lambda i, k: (0, 0)),     # ln gamma
                pl.BlockSpec((1, N), lambda i, k: (0, 0)),     # ln beta
            ],
            out_specs=pl.BlockSpec((tm, N), lambda i, k: (i, 0)),
            scratch_shapes=[pltpu.VMEM((tm, N), jnp.float32)],
        ),
        compiler_params=pltpu.CompilerParams(
            dimension_semantics=("parallel", "arbitrary"),
            vmem_limit_bytes=32 * 1024 * 1024,
        ),
        cost_estimate=cost,
    )(x_bf, w_bf, b.reshape(1, N), gamma.reshape(1, N), beta.reshape(1, N))


# ------------------------------ SimpleNet ----------------------------------

VOCAB, D_IN, D_HID = 2048, 1024, 2048  # Embedding(2048,1024), Linear dims per spec


def init_params(key):
    ks = jax.random.split(key, 4)

    def linear(k, fan_in, fan_out):
        bound = 1.0 / (fan_in ** 0.5)
        kw, kb = jax.random.split(k)
        # stored as (in, out) == W.T so no transpose is needed in the kernel
        w = jax.random.uniform(kw, (fan_in, fan_out), jnp.float32, -bound, bound)
        b = jax.random.uniform(kb, (fan_out,), jnp.float32, -bound, bound)
        return w, b

    w1, b1 = linear(ks[1], D_IN, D_IN)       # proj1: 1024 -> 1024
    w2, b2 = linear(ks[2], D_IN, D_HID)      # proj2: 1024 -> 2048
    wc, bc = linear(ks[3], D_HID, D_HID)     # classifier: 2048 -> 2048
    return {
        "embed": 0.02 * jax.random.normal(ks[0], (VOCAB, D_IN), jnp.float32),
        "w1": w1, "b1": b1,
        "ln1_g": jnp.ones((D_IN,), jnp.float32),
        "ln1_b": jnp.zeros((D_IN,), jnp.float32),
        "w2": w2, "b2": b2,
        "ln2_g": jnp.ones((D_HID,), jnp.float32),
        "ln2_b": jnp.zeros((D_HID,), jnp.float32),
        "wc": wc, "bc": bc,
    }


def simplenet_forward(params, ids):
    B, S = ids.shape
    h = params["embed"][ids]                      # (B, S, 1024) gather glue
    x = h.reshape(B * S, D_IN)

    # proj1 + ln1 fused, bf16 intermediate
    x = fused_dense(x, params["w1"], params["b1"],
                    params["ln1_g"], params["ln1_b"], out_dtype=jnp.bfloat16)
    # proj2 + ln2 fused, bf16 intermediate
    x = fused_dense(x, params["w2"], params["b2"],
                    params["ln2_g"], params["ln2_b"], out_dtype=jnp.bfloat16)
    # classifier (no LN), f32 output
    x = fused_dense(x, params["wc"], params["bc"], out_dtype=jnp.float32)
    return x.reshape(B, S, D_HID)


def _reference_forward(params, ids):
    # Pure-JAX f32 reference for a sanity check (bf16 MXU inputs in the kernel
    # introduce small, bounded differences).
    def ln(y, g, b):
        mu = jnp.mean(y, -1, keepdims=True)
        var = jnp.mean((y - mu) ** 2, -1, keepdims=True)
        return (y - mu) * jax.lax.rsqrt(var + 1e-5) * g + b

    h = params["embed"][ids]
    x = h.reshape(-1, D_IN)
    x = ln(x @ params["w1"] + params["b1"], params["ln1_g"], params["ln1_b"])
    x = ln(x @ params["w2"] + params["b2"], params["ln2_g"], params["ln2_b"])
    x = x @ params["wc"] + params["bc"]
    return x.reshape(ids.shape[0], ids.shape[1], D_HID)


# --------------------------------- main -------------------------------------

if __name__ == "__main__":
    key = jax.random.PRNGKey(0)
    pkey, ikey = jax.random.split(key)
    params = init_params(pkey)

    B, S = 2, 16
    input_ids = jax.random.randint(ikey, (B, S), 0, VOCAB, dtype=jnp.int32)

    fwd = jax.jit(simplenet_forward)
    out = fwd(params, input_ids)
    jax.block_until_ready(out)

    assert out.shape == (B, S, D_HID), out.shape
    assert out.dtype == jnp.float32
    assert bool(jnp.all(jnp.isfinite(out)))

    # Loose tolerance: bf16 matmul inputs vs f32 reference.
    ref = _reference_forward(params, input_ids)
    max_err = float(jnp.max(jnp.abs(out - ref)))
    assert max_err < 0.25, f"max abs error vs reference too large: {max_err}"

    print("KERNEL_OK")
</pallas_src>

<mosaic_0001>
module attributes {stable_mosaic.version = 11 : i64} {
  func.func @_fused_dense_kernel(%arg0: i32, %arg1: i32, %arg2: memref<16x512xbf16, #tpu.memory_space<vmem>>, %arg3: memref<512x1024xbf16, #tpu.memory_space<vmem>>, %arg4: memref<1x1024xf32, #tpu.memory_space<vmem>>, %arg5: memref<1x1024xf32, #tpu.memory_space<vmem>>, %arg6: memref<1x1024xf32, #tpu.memory_space<vmem>>, %arg7: memref<16x1024xbf16, #tpu.memory_space<vmem>>, %arg8: memref<16x1024xf32, #tpu.memory_space<vmem>>) attributes {dimension_semantics = [#tpu.dimension_semantics<parallel>, #tpu.dimension_semantics<arbitrary>], iteration_bounds = array<i64: 2, 2>, scalar_prefetch = 0 : i64, scratch_operands = 1 : i64, tpu.core_type = #tpu.core_type<tc>, window_params = [{transform_indices = @transform_0, window_bounds = array<i64: 16, 512>}, {transform_indices = @transform_1, window_bounds = array<i64: 512, 1024>}, {pipeline_mode = #tpu.pipeline_mode<synchronous>, transform_indices = @transform_2, window_bounds = array<i64: 1, 1024>}, {pipeline_mode = #tpu.pipeline_mode<synchronous>, transform_indices = @transform_3, window_bounds = array<i64: 1, 1024>}, {pipeline_mode = #tpu.pipeline_mode<synchronous>, transform_indices = @transform_4, window_bounds = array<i64: 1, 1024>}, {transform_indices = @transform_5, window_bounds = array<i64: 16, 1024>}]} {
    %c0_i32 = arith.constant 0 : i32
    %0 = arith.cmpi eq, %arg1, %c0_i32 : i32
    %1 = arith.extui %0 : i1 to i32
    %c0_i32_0 = arith.constant 0 : i32
    %2 = arith.cmpi ne, %1, %c0_i32_0 : i32
    scf.if %2 {
      %cst_9 = arith.constant 0.000000e+00 : f32
      %12 = vector.broadcast %cst_9 : f32 to vector<16x1024xf32>
      %c0_10 = arith.constant 0 : index
      %c0_11 = arith.constant 0 : index
      %13 = vector.load %arg8[%c0_10, %c0_11] : memref<16x1024xf32, #tpu.memory_space<vmem>>, vector<16x1024xf32>
      tpu.vector_store %arg8[%c0_10, %c0_11], %12 {strides = array<i32>} : memref<16x1024xf32, #tpu.memory_space<vmem>>, vector<16x1024xf32>,
    } else {
    }
    %c0 = arith.constant 0 : index
    %c0_1 = arith.constant 0 : index
    %3 = vector.load %arg8[%c0, %c0_1] : memref<16x1024xf32, #tpu.memory_space<vmem>>, vector<16x1024xf32>
    %c0_2 = arith.constant 0 : index
    %c0_3 = arith.constant 0 : index
    %4 = vector.load %arg2[%c0_2, %c0_3] : memref<16x512xbf16, #tpu.memory_space<vmem>>, vector<16x512xbf16>
    %c0_4 = arith.constant 0 : index
    %c0_5 = arith.constant 0 : index
    %5 = vector.load %arg3[%c0_4, %c0_5] : memref<512x1024xbf16, #tpu.memory_space<vmem>>, vector<512x1024xbf16>
    %cst = arith.constant dense<0.000000e+00> : vector<16x1024xf32>
    %6 = tpu.matmul %4, %5, %cst {dimension_numbers = #tpu.dot_dimension_numbers<[1], [0], [0], [1], [0, 0, 1, 1], [], []>} : vector<16x512xbf16>, vector<512x1024xbf16>, vector<16x1024xf32> -> vector<16x1024xf32>
    %7 = arith.addf %3, %6 : vector<16x1024xf32>
    %c0_6 = arith.constant 0 : index
    %c0_7 = arith.constant 0 : index
    %8 = vector.load %arg8[%c0_6, %c0_7] : memref<16x1024xf32, #tpu.memory_space<vmem>>, vector<16x1024xf32>
    tpu.vector_store %arg8[%c0_6, %c0_7], %7 {strides = array<i32>} : memref<16x1024xf32, #tpu.memory_space<vmem>>, vector<16x1024xf32>,
    %c1_i32 = arith.constant 1 : i32
    %9 = arith.cmpi eq, %arg1, %c1_i32 : i32
    %10 = arith.extui %9 : i1 to i32
    %c0_i32_8 = arith.constant 0 : i32
    %11 = arith.cmpi ne, %10, %c0_i32_8 : i32
    scf.if %11 {
      %c0_9 = arith.constant 0 : index
      %c0_10 = arith.constant 0 : index
      %12 = vector.load %arg8[%c0_9, %c0_10] : memref<16x1024xf32, #tpu.memory_space<vmem>>, vector<16x1024xf32>
      %c0_11 = arith.constant 0 : index
      %c0_12 = arith.constant 0 : index
      %13 = vector.load %arg4[%c0_11, %c0_12] : memref<1x1024xf32, #tpu.memory_space<vmem>>, vector<1x1024xf32>
      %14 = vector.broadcast %13 : vector<1x1024xf32> to vector<16x1024xf32>
      %15 = arith.addf %12, %14 : vector<16x1024xf32>
      %cst_13 = arith.constant dense<0.000000e+00> : vector<16xf32>
      %16 = vector.multi_reduction <add>, %15, %cst_13 [1] : vector<16x1024xf32> to vector<16xf32>
      %17 = vector.shape_cast %16 : vector<16xf32> to vector<16x1xf32>
      %cst_14 = arith.constant 1.024000e+03 : f32
      %18 = vector.broadcast %cst_14 : f32 to vector<16x1xf32>
      %19 = arith.divf %17, %18 : vector<16x1xf32>
      %20 = vector.broadcast %19 : vector<16x1xf32> to vector<16x1024xf32>
      %21 = arith.subf %15, %20 : vector<16x1024xf32>
      %22 = arith.mulf %21, %21 : vector<16x1024xf32>
      %cst_15 = arith.constant dense<0.000000e+00> : vector<16xf32>
      %23 = vector.multi_reduction <add>, %22, %cst_15 [1] : vector<16x1024xf32> to vector<16xf32>
      %24 = vector.shape_cast %23 : vector<16xf32> to vector<16x1xf32>
      %cst_16 = arith.constant 1.024000e+03 : f32
      %25 = vector.broadcast %cst_16 : f32 to vector<16x1xf32>
      %26 = arith.divf %24, %25 : vector<16x1xf32>
      %27 = vector.broadcast %19 : vector<16x1xf32> to vector<16x1024xf32>
      %28 = arith.subf %15, %27 : vector<16x1024xf32>
      %cst_17 = arith.constant 9.99999974E-6 : f32
      %29 = vector.broadcast %cst_17 : f32 to vector<16x1xf32>
      %30 = arith.addf %26, %29 : vector<16x1xf32>
      %31 = math.rsqrt %30 : vector<16x1xf32>
      %32 = vector.broadcast %31 : vector<16x1xf32> to vector<16x1024xf32>
      %33 = arith.mulf %28, %32 : vector<16x1024xf32>
      %c0_18 = arith.constant 0 : index
      %c0_19 = arith.constant 0 : index
      %34 = vector.load %arg5[%c0_18, %c0_19] : memref<1x1024xf32, #tpu.memory_space<vmem>>, vector<1x1024xf32>
      %35 = vector.broadcast %34 : vector<1x1024xf32> to vector<16x1024xf32>
      %36 = arith.mulf %33, %35 : vector<16x1024xf32>
      %c0_20 = arith.constant 0 : index
      %c0_21 = arith.constant 0 : index
      %37 = vector.load %arg6[%c0_20, %c0_21] : memref<1x1024xf32, #tpu.memory_space<vmem>>, vector<1x1024xf32>
      %38 = vector.broadcast %37 : vector<1x1024xf32> to vector<16x1024xf32>
      %39 = arith.addf %36, %38 : vector<16x1024xf32>
      %40 = arith.truncf %39 : vector<16x1024xf32> to vector<16x1024xbf16>
      %c0_22 = arith.constant 0 : index
      %c0_23 = arith.constant 0 : index
      %41 = vector.load %arg7[%c0_22, %c0_23] : memref<16x1024xbf16, #tpu.memory_space<vmem>>, vector<16x1024xbf16>
      tpu.vector_store %arg7[%c0_22, %c0_23], %40 {strides = array<i32>} : memref<16x1024xbf16, #tpu.memory_space<vmem>>, vector<16x1024xbf16>,
    } else {
    }
    return
  }
  func.func @transform_0(%arg0: i32, %arg1: i32) -> (i32, i32) {
    %c0_i32 = arith.constant 0 : i32
    return %arg0, %arg1 : i32, i32
  }
  func.func @transform_1(%arg0: i32, %arg1: i32) -> (i32, i32) {
    %c0_i32 = arith.constant 0 : i32
    %c0_i32_0 = arith.constant 0 : i32
    return %arg1, %c0_i32 : i32, i32
  }
  func.func @transform_2(%arg0: i32, %arg1: i32) -> (i32, i32) {
    %c0_i32 = arith.constant 0 : i32
    %c0_i32_0 = arith.constant 0 : i32
    %c0_i32_1 = arith.constant 0 : i32
    return %c0_i32, %c0_i32_0 : i32, i32
  }
  func.func @transform_3(%arg0: i32, %arg1: i32) -> (i32, i32) {
    %c0_i32 = arith.constant 0 : i32
    %c0_i32_0 = arith.constant 0 : i32
    %c0_i32_1 = arith.constant 0 : i32
    return %c0_i32, %c0_i32_0 : i32, i32
  }
  func.func @transform_4(%arg0: i32, %arg1: i32) -> (i32, i32) {
    %c0_i32 = arith.constant 0 : i32
    %c0_i32_0 = arith.constant 0 : i32
    %c0_i32_1 = arith.constant 0 : i32
    return %c0_i32, %c0_i32_0 : i32, i32
  }
  func.func @transform_5(%arg0: i32, %arg1: i32) -> (i32, i32) {
    %c0_i32 = arith.constant 0 : i32
    %c0_i32_0 = arith.constant 0 : i32
    return %arg0, %c0_i32 : i32, i32
  }
}

module attributes {stable_mosaic.version = 11 : i64} {
  func.func @_fused_dense_kernel(%arg0: i32, %arg1: i32, %arg2: memref<16x512xbf16, #tpu.memory_space<vmem>>, %arg3: memref<512x2048xbf16, #tpu.memory_space<vmem>>, %arg4: memref<1x2048xf32, #tpu.memory_space<vmem>>, %arg5: memref<1x2048xf32, #tpu.memory_space<vmem>>, %arg6: memref<1x2048xf32, #tpu.memory_space<vmem>>, %arg7: memref<16x2048xbf16, #tpu.memory_space<vmem>>, %arg8: memref<16x2048xf32, #tpu.memory_space<vmem>>) attributes {dimension_semantics = [#tpu.dimension_semantics<parallel>, #tpu.dimension_semantics<arbitrary>], iteration_bounds = array<i64: 2, 2>, scalar_prefetch = 0 : i64, scratch_operands = 1 : i64, tpu.core_type = #tpu.core_type<tc>, window_params = [{transform_indices = @transform_0, window_bounds = array<i64: 16, 512>}, {transform_indices = @transform_1, window_bounds = array<i64: 512, 2048>}, {pipeline_mode = #tpu.pipeline_mode<synchronous>, transform_indices = @transform_2, window_bounds = array<i64: 1, 2048>}, {pipeline_mode = #tpu.pipeline_mode<synchronous>, transform_indices = @transform_3, window_bounds = array<i64: 1, 2048>}, {pipeline_mode = #tpu.pipeline_mode<synchronous>, transform_indices = @transform_4, window_bounds = array<i64: 1, 2048>}, {transform_indices = @transform_5, window_bounds = array<i64: 16, 2048>}]} {
    %c0_i32 = arith.constant 0 : i32
    %0 = arith.cmpi eq, %arg1, %c0_i32 : i32
    %1 = arith.extui %0 : i1 to i32
    %c0_i32_0 = arith.constant 0 : i32
    %2 = arith.cmpi ne, %1, %c0_i32_0 : i32
    scf.if %2 {
      %cst_9 = arith.constant 0.000000e+00 : f32
      %12 = vector.broadcast %cst_9 : f32 to vector<16x2048xf32>
      %c0_10 = arith.constant 0 : index
      %c0_11 = arith.constant 0 : index
      %13 = vector.load %arg8[%c0_10, %c0_11] : memref<16x2048xf32, #tpu.memory_space<vmem>>, vector<16x2048xf32>
      tpu.vector_store %arg8[%c0_10, %c0_11], %12 {strides = array<i32>} : memref<16x2048xf32, #tpu.memory_space<vmem>>, vector<16x2048xf32>,
    } else {
    }
    %c0 = arith.constant 0 : index
    %c0_1 = arith.constant 0 : index
    %3 = vector.load %arg8[%c0, %c0_1] : memref<16x2048xf32, #tpu.memory_space<vmem>>, vector<16x2048xf32>
    %c0_2 = arith.constant 0 : index
    %c0_3 = arith.constant 0 : index
    %4 = vector.load %arg2[%c0_2, %c0_3] : memref<16x512xbf16, #tpu.memory_space<vmem>>, vector<16x512xbf16>
    %c0_4 = arith.constant 0 : index
    %c0_5 = arith.constant 0 : index
    %5 = vector.load %arg3[%c0_4, %c0_5] : memref<512x2048xbf16, #tpu.memory_space<vmem>>, vector<512x2048xbf16>
    %cst = arith.constant dense<0.000000e+00> : vector<16x2048xf32>
    %6 = tpu.matmul %4, %5, %cst {dimension_numbers = #tpu.dot_dimension_numbers<[1], [0], [0], [1], [0, 0, 1, 1], [], []>} : vector<16x512xbf16>, vector<512x2048xbf16>, vector<16x2048xf32> -> vector<16x2048xf32>
    %7 = arith.addf %3, %6 : vector<16x2048xf32>
    %c0_6 = arith.constant 0 : index
    %c0_7 = arith.constant 0 : index
    %8 = vector.load %arg8[%c0_6, %c0_7] : memref<16x2048xf32, #tpu.memory_space<vmem>>, vector<16x2048xf32>
    tpu.vector_store %arg8[%c0_6, %c0_7], %7 {strides = array<i32>} : memref<16x2048xf32, #tpu.memory_space<vmem>>, vector<16x2048xf32>,
    %c1_i32 = arith.constant 1 : i32
    %9 = arith.cmpi eq, %arg1, %c1_i32 : i32
    %10 = arith.extui %9 : i1 to i32
    %c0_i32_8 = arith.constant 0 : i32
    %11 = arith.cmpi ne, %10, %c0_i32_8 : i32
    scf.if %11 {
      %c0_9 = arith.constant 0 : index
      %c0_10 = arith.constant 0 : index
      %12 = vector.load %arg8[%c0_9, %c0_10] : memref<16x2048xf32, #tpu.memory_space<vmem>>, vector<16x2048xf32>
      %c0_11 = arith.constant 0 : index
      %c0_12 = arith.constant 0 : index
      %13 = vector.load %arg4[%c0_11, %c0_12] : memref<1x2048xf32, #tpu.memory_space<vmem>>, vector<1x2048xf32>
      %14 = vector.broadcast %13 : vector<1x2048xf32> to vector<16x2048xf32>
      %15 = arith.addf %12, %14 : vector<16x2048xf32>
      %cst_13 = arith.constant dense<0.000000e+00> : vector<16xf32>
      %16 = vector.multi_reduction <add>, %15, %cst_13 [1] : vector<16x2048xf32> to vector<16xf32>
      %17 = vector.shape_cast %16 : vector<16xf32> to vector<16x1xf32>
      %cst_14 = arith.constant 2.048000e+03 : f32
      %18 = vector.broadcast %cst_14 : f32 to vector<16x1xf32>
      %19 = arith.divf %17, %18 : vector<16x1xf32>
      %20 = vector.broadcast %19 : vector<16x1xf32> to vector<16x2048xf32>
      %21 = arith.subf %15, %20 : vector<16x2048xf32>
      %22 = arith.mulf %21, %21 : vector<16x2048xf32>
      %cst_15 = arith.constant dense<0.000000e+00> : vector<16xf32>
      %23 = vector.multi_reduction <add>, %22, %cst_15 [1] : vector<16x2048xf32> to vector<16xf32>
      %24 = vector.shape_cast %23 : vector<16xf32> to vector<16x1xf32>
      %cst_16 = arith.constant 2.048000e+03 : f32
      %25 = vector.broadcast %cst_16 : f32 to vector<16x1xf32>
      %26 = arith.divf %24, %25 : vector<16x1xf32>
      %27 = vector.broadcast %19 : vector<16x1xf32> to vector<16x2048xf32>
      %28 = arith.subf %15, %27 : vector<16x2048xf32>
      %cst_17 = arith.constant 9.99999974E-6 : f32
      %29 = vector.broadcast %cst_17 : f32 to vector<16x1xf32>
      %30 = arith.addf %26, %29 : vector<16x1xf32>
      %31 = math.rsqrt %30 : vector<16x1xf32>
      %32 = vector.broadcast %31 : vector<16x1xf32> to vector<16x2048xf32>
      %33 = arith.mulf %28, %32 : vector<16x2048xf32>
      %c0_18 = arith.constant 0 : index
      %c0_19 = arith.constant 0 : index
      %34 = vector.load %arg5[%c0_18, %c0_19] : memref<1x2048xf32, #tpu.memory_space<vmem>>, vector<1x2048xf32>
      %35 = vector.broadcast %34 : vector<1x2048xf32> to vector<16x2048xf32>
      %36 = arith.mulf %33, %35 : vector<16x2048xf32>
      %c0_20 = arith.constant 0 : index
      %c0_21 = arith.constant 0 : index
      %37 = vector.load %arg6[%c0_20, %c0_21] : memref<1x2048xf32, #tpu.memory_space<vmem>>, vector<1x2048xf32>
      %38 = vector.broadcast %37 : vector<1x2048xf32> to vector<16x2048xf32>
      %39 = arith.addf %36, %38 : vector<16x2048xf32>
      %40 = arith.truncf %39 : vector<16x2048xf32> to vector<16x2048xbf16>
      %c0_22 = arith.constant 0 : index
      %c0_23 = arith.constant 0 : index
      %41 = vector.load %arg7[%c0_22, %c0_23] : memref<16x2048xbf16, #tpu.memory_space<vmem>>, vector<16x2048xbf16>
      tpu.vector_store %arg7[%c0_22, %c0_23], %40 {strides = array<i32>} : memref<16x2048xbf16, #tpu.memory_space<vmem>>, vector<16x2048xbf16>,
    } else {
    }
    return
  }
  func.func @transform_0(%arg0: i32, %arg1: i32) -> (i32, i32) {
    %c0_i32 = arith.constant 0 : i32
    return %arg0, %arg1 : i32, i32
  }
  func.func @transform_1(%arg0: i32, %arg1: i32) -> (i32, i32) {
    %c0_i32 = arith.constant 0 : i32
    %c0_i32_0 = arith.constant 0 : i32
    return %arg1, %c0_i32 : i32, i32
  }
  func.func @transform_2(%arg0: i32, %arg1: i32) -> (i32, i32) {
    %c0_i32 = arith.constant 0 : i32
    %c0_i32_0 = arith.constant 0 : i32
    %c0_i32_1 = arith.constant 0 : i32
    return %c0_i32, %c0_i32_0 : i32, i32
  }
  func.func @transform_3(%arg0: i32, %arg1: i32) -> (i32, i32) {
    %c0_i32 = arith.constant 0 : i32
    %c0_i32_0 = arith.constant 0 : i32
    %c0_i32_1 = arith.constant 0 : i32
    return %c0_i32, %c0_i32_0 : i32, i32
  }
  func.func @transform_4(%arg0: i32, %arg1: i32) -> (i32, i32) {
    %c0_i32 = arith.constant 0 : i32
    %c0_i32_0 = arith.constant 0 : i32
    %c0_i32_1 = arith.constant 0 : i32
    return %c0_i32, %c0_i32_0 : i32, i32
  }
  func.func @transform_5(%arg0: i32, %arg1: i32) -> (i32, i32) {
    %c0_i32 = arith.constant 0 : i32
    %c0_i32_0 = arith.constant 0 : i32
    return %arg0, %c0_i32 : i32, i32
  }
}

module attributes {stable_mosaic.version = 11 : i64} {
  func.func @_fused_dense_kernel(%arg0: i32, %arg1: i32, %arg2: memref<16x512xbf16, #tpu.memory_space<vmem>>, %arg3: memref<512x2048xbf16, #tpu.memory_space<vmem>>, %arg4: memref<1x2048xf32, #tpu.memory_space<vmem>>, %arg5: memref<1x2048xf32, #tpu.memory_space<vmem>>, %arg6: memref<1x2048xf32, #tpu.memory_space<vmem>>, %arg7: memref<16x2048xf32, #tpu.memory_space<vmem>>, %arg8: memref<16x2048xf32, #tpu.memory_space<vmem>>) attributes {dimension_semantics = [#tpu.dimension_semantics<parallel>, #tpu.dimension_semantics<arbitrary>], iteration_bounds = array<i64: 2, 4>, scalar_prefetch = 0 : i64, scratch_operands = 1 : i64, tpu.core_type = #tpu.core_type<tc>, window_params = [{transform_indices = @transform_0, window_bounds = array<i64: 16, 512>}, {transform_indices = @transform_1, window_bounds = array<i64: 512, 2048>}, {pipeline_mode = #tpu.pipeline_mode<synchronous>, transform_indices = @transform_2, window_bounds = array<i64: 1, 2048>}, {pipeline_mode = #tpu.pipeline_mode<synchronous>, transform_indices = @transform_3, window_bounds = array<i64: 1, 2048>}, {pipeline_mode = #tpu.pipeline_mode<synchronous>, transform_indices = @transform_4, window_bounds = array<i64: 1, 2048>}, {transform_indices = @transform_5, window_bounds = array<i64: 16, 2048>}]} {
    %c0_i32 = arith.constant 0 : i32
    %0 = arith.cmpi eq, %arg1, %c0_i32 : i32
    %1 = arith.extui %0 : i1 to i32
    %c0_i32_0 = arith.constant 0 : i32
    %2 = arith.cmpi ne, %1, %c0_i32_0 : i32
    scf.if %2 {
      %cst_9 = arith.constant 0.000000e+00 : f32
      %12 = vector.broadcast %cst_9 : f32 to vector<16x2048xf32>
      %c0_10 = arith.constant 0 : index
      %c0_11 = arith.constant 0 : index
      %13 = vector.load %arg8[%c0_10, %c0_11] : memref<16x2048xf32, #tpu.memory_space<vmem>>, vector<16x2048xf32>
      tpu.vector_store %arg8[%c0_10, %c0_11], %12 {strides = array<i32>} : memref<16x2048xf32, #tpu.memory_space<vmem>>, vector<16x2048xf32>,
    } else {
    }
    %c0 = arith.constant 0 : index
    %c0_1 = arith.constant 0 : index
    %3 = vector.load %arg8[%c0, %c0_1] : memref<16x2048xf32, #tpu.memory_space<vmem>>, vector<16x2048xf32>
    %c0_2 = arith.constant 0 : index
    %c0_3 = arith.constant 0 : index
    %4 = vector.load %arg2[%c0_2, %c0_3] : memref<16x512xbf16, #tpu.memory_space<vmem>>, vector<16x512xbf16>
    %c0_4 = arith.constant 0 : index
    %c0_5 = arith.constant 0 : index
    %5 = vector.load %arg3[%c0_4, %c0_5] : memref<512x2048xbf16, #tpu.memory_space<vmem>>, vector<512x2048xbf16>
    %cst = arith.constant dense<0.000000e+00> : vector<16x2048xf32>
    %6 = tpu.matmul %4, %5, %cst {dimension_numbers = #tpu.dot_dimension_numbers<[1], [0], [0], [1], [0, 0, 1, 1], [], []>} : vector<16x512xbf16>, vector<512x2048xbf16>, vector<16x2048xf32> -> vector<16x2048xf32>
    %7 = arith.addf %3, %6 : vector<16x2048xf32>
    %c0_6 = arith.constant 0 : index
    %c0_7 = arith.constant 0 : index
    %8 = vector.load %arg8[%c0_6, %c0_7] : memref<16x2048xf32, #tpu.memory_space<vmem>>, vector<16x2048xf32>
    tpu.vector_store %arg8[%c0_6, %c0_7], %7 {strides = array<i32>} : memref<16x2048xf32, #tpu.memory_space<vmem>>, vector<16x2048xf32>,
    %c3_i32 = arith.constant 3 : i32
    %9 = arith.cmpi eq, %arg1, %c3_i32 : i32
    %10 = arith.extui %9 : i1 to i32
    %c0_i32_8 = arith.constant 0 : i32
    %11 = arith.cmpi ne, %10, %c0_i32_8 : i32
    scf.if %11 {
      %c0_9 = arith.constant 0 : index
      %c0_10 = arith.constant 0 : index
      %12 = vector.load %arg8[%c0_9, %c0_10] : memref<16x2048xf32, #tpu.memory_space<vmem>>, vector<16x2048xf32>
      %c0_11 = arith.constant 0 : index
      %c0_12 = arith.constant 0 : index
      %13 = vector.load %arg4[%c0_11, %c0_12] : memref<1x2048xf32, #tpu.memory_space<vmem>>, vector<1x2048xf32>
      %14 = vector.broadcast %13 : vector<1x2048xf32> to vector<16x2048xf32>
      %15 = arith.addf %12, %14 : vector<16x2048xf32>
      %c0_13 = arith.constant 0 : index
      %c0_14 = arith.constant 0 : index
      %16 = vector.load %arg7[%c0_13, %c0_14] : memref<16x2048xf32, #tpu.memory_space<vmem>>, vector<16x2048xf32>
      tpu.vector_store %arg7[%c0_13, %c0_14], %15 {strides = array<i32>} : memref<16x2048xf32, #tpu.memory_space<vmem>>, vector<16x2048xf32>,
    } else {
    }
    return
  }
  func.func @transform_0(%arg0: i32, %arg1: i32) -> (i32, i32) {
    %c0_i32 = arith.constant 0 : i32
    return %arg0, %arg1 : i32, i32
  }
  func.func @transform_1(%arg0: i32, %arg1: i32) -> (i32, i32) {
    %c0_i32 = arith.constant 0 : i32
    %c0_i32_0 = arith.constant 0 : i32
    return %arg1, %c0_i32 : i32, i32
  }
  func.func @transform_2(%arg0: i32, %arg1: i32) -> (i32, i32) {
    %c0_i32 = arith.constant 0 : i32
    %c0_i32_0 = arith.constant 0 : i32
    %c0_i32_1 = arith.constant 0 : i32
    return %c0_i32, %c0_i32_0 : i32, i32
  }
  func.func @transform_3(%arg0: i32, %arg1: i32) -> (i32, i32) {
    %c0_i32 = arith.constant 0 : i32
    %c0_i32_0 = arith.constant 0 : i32
    %c0_i32_1 = arith.constant 0 : i32
    return %c0_i32, %c0_i32_0 : i32, i32
  }
  func.func @transform_4(%arg0: i32, %arg1: i32) -> (i32, i32) {
    %c0_i32 = arith.constant 0 : i32
    %c0_i32_0 = arith.constant 0 : i32
    %c0_i32_1 = arith.constant 0 : i32
    return %c0_i32, %c0_i32_0 : i32, i32
  }
  func.func @transform_5(%arg0: i32, %arg1: i32) -> (i32, i32) {
    %c0_i32 = arith.constant 0 : i32
    %c0_i32_0 = arith.constant 0 : i32
    return %arg0, %c0_i32 : i32, i32
  }
}

</mosaic_0001>

<llo_original>
// kernel: simplenet_forward.3
$region0: #{simplenet_forward.3}
  #allocation0 [shape = 'u32[]', space=smem, size = 0x4, offset = 0x4, fixed_abs, tag = 'smem constant byte address 0x4 - core index']
  #allocation1 [shape = 'u32[144,128]{1,0:T(1,128)}', space=vmem, size = 0x12000, scoped, tag = 'internal scratch']
  #allocation2 [shape = 'f32[16,1024]{1,0:T(8,128)}', space=vmem, size = 0x10000, scoped, tag = 'scratch operand']
  %s0 = inlined_call_operand.vmem [shape: bf16[32,1024], index: 0, kind: input, shape index: {}]
  %s1 = inlined_call_operand.vmem [shape: bf16[1024,1024], index: 1, kind: input, shape index: {}]
  %s2 = inlined_call_operand.hbm [shape: f32[1,1024], index: 2, kind: input, shape index: {}]
  %s3 = inlined_call_operand.hbm [shape: f32[1,1024], index: 3, kind: input, shape index: {}]
  %s4 = inlined_call_operand.hbm [shape: f32[1,1024], index: 4, kind: input, shape index: {}]
  %s5 = inlined_call_operand.vmem [shape: bf16[32,1024], index: 5, kind: output, shape index: {}]
  %s6 = sld [smem:[#allocation0]]
  $region96: #{simplenet_forward.3} parent=0
    _
  %s8 = ssub.s32 1, %s6
  %s9 = scalar_select 0, %s8, %s6
  $region1: #{simplenet_forward.3} parent=0
    #allocation3 [shape = 'u8[32768]{0}', space=vmem, size = 0x8000, scoped, tag = 'input window, operand 0']
    #allocation4 [shape = 'u8[4096]{0}', space=vmem, size = 0x1000, scoped, tag = 'input window, operand 2, single buffered']
    #allocation5 [shape = 's32[2]{0}', space=sflag, size = 0x8, scoped, tag = 'scoped memory for simplenet_forward.3']
    #allocation6 [shape = 'u8[4096]{0}', space=vmem, size = 0x1000, scoped, tag = 'input window, operand 3, single buffered']
    #allocation7 [shape = 's32[1]{0}', space=sflag, size = 0x4, scoped, tag = 'scoped memory for simplenet_forward.3']
    #allocation8 [shape = 'u8[4096]{0}', space=vmem, size = 0x1000, scoped, tag = 'input window, operand 4, single buffered']
    %10 = vsyncpa [#allocation5], 0
    %11 = vsyncpa [#allocation7], 0
    loop: start=0, step=1, limit=6
    $region2: #{simplenet_forward.3} parent=1 // loop_pre_header
      _
    $region3: #{simplenet_forward.3} parent=1 // loop_header
      %s13 = sphi 0, %s17
      %p14 = scmp.ge.s32.totalorder %s13, 6
      %s20 = sphi 0, %s32
      %s21 = sphi 0, %s28
      %s22 = sphi 0, %s20
      %s23 = sphi 0, %s21
      %s24 = sphi 0, %s22
      %s25 = sphi 0, %s23
      %s37 = sphi 0, %s39
      %s40 = sphi 0, %s37
      %s41 = sphi 0, %s40
      %s57 = sphi 0, %s41
      %s63 = sphi 0, %s65
      %s66 = sphi 0, %s63
      %s67 = sphi 0, %s66
      %s83 = sphi 0, %s67
      %s87 = sphi 0, %s87
      %s89 = sphi 0, %s87
      %s90 = sphi 0, %s89
      %s104 = sphi 0, %s90
      %s108 = sphi 0, %s108
      %s110 = sphi 0, %s108
      %s111 = sphi 0, %s110
      %s125 = sphi 0, %s111
      %s129 = sphi 0, %s129
      %s131 = sphi 0, %s129
      %s132 = sphi 0, %s131
      %s146 = sphi 0, %s132
      %s152 = sphi 0, %s154
      %s155 = sphi 0, %s152
      %s156 = sphi 0, %s155
      %s172 = sphi 0, %s156
    $region4: #{simplenet_forward.3} parent=1 // loop_header_branch
      %16 = sbr.rel (%p14) target = $region8
    $region5: #{simplenet_forward.3} parent=1 // loop_body
      %s18 = ssub.s32 %s13, 1
      %s19 = ssub.s32 %s13, 2
      %s26 = sadd.s32 1, %s21
      %p27 = scmp.ge.s32.totalorder %s26, 2
      %s28 = scalar_select %p27, 0, %s26
      %s29 = sadd.s32 1, %s20
      %s30 = scalar_select %p27, %s29, %s20
      %p31 = scmp.ge.s32.totalorder %s30, 2
      %s32 = scalar_select %p31, 0, %s30
      %s33 = ssub.s32 %s20, %s32
      %s34 = ssub.s32 %s21, %s28
      %s35 = sor.u32 %s33, %s34
      %p36 = scmp.eq.s32.totalorder %s35, 0
      %s38 = sadd.s32 %s37, 1
      %s39 = scalar_select %p36, %s37, %s38
      %p42 = pneg %p36
      %p43 = scmp.eq.s32.totalorder %s13, 3
      %p44 = por %p42, %p43
      %p45 = scmp.ne.s32.totalorder %s37, %s40
      %p46 = scmp.eq.s32.totalorder %s13, 0
      %p47 = por %p45, %p46
      %p48 = scmp.ne.s32.totalorder %s37, %s40
      %p49 = scmp.eq.s32.totalorder %s18, 3
      %p50 = por %p48, %p49
      %p51 = scmp.ne.s32.totalorder %s40, %s41
      %p52 = scmp.eq.s32.totalorder %s18, 0
      %p53 = por %p51, %p52
      %p54 = scmp.ne.s32.totalorder %s40, %s41
      %p55 = scmp.eq.s32.totalorder %s19, 3
      %p56 = por %p54, %p55
      %p58 = scmp.ne.s32.totalorder %s41, %s57
      %p59 = scmp.eq.s32.totalorder %s19, 0
      %p60 = por %p58, %p59
      %s61 = ssub.s32 %s21, %s28
      %p62 = scmp.eq.s32.totalorder %s61, 0
      %s64 = sadd.s32 %s63, 1
      %s65 = scalar_select %p62, %s63, %s64
      %p68 = pneg %p62
      %p69 = scmp.eq.s32.totalorder %s13, 3
      %p70 = por %p68, %p69
      %p71 = scmp.ne.s32.totalorder %s63, %s66
      %p72 = scmp.eq.s32.totalorder %s13, 0
      %p73 = por %p71, %p72
      %p74 = scmp.ne.s32.totalorder %s63, %s66
      %p75 = scmp.eq.s32.totalorder %s18, 3
      %p76 = por %p74, %p75
      %p77 = scmp.ne.s32.totalorder %s66, %s67
      %p78 = scmp.eq.s32.totalorder %s18, 0
      %p79 = por %p77, %p78
      %p80 = scmp.ne.s32.totalorder %s66, %s67
      %p81 = scmp.eq.s32.totalorder %s19, 3
      %p82 = por %p80, %p81
      %p84 = scmp.ne.s32.totalorder %s67, %s83
      %p85 = scmp.eq.s32.totalorder %s19, 0
      %p86 = por %p84, %p85
      %s88 = sadd.s32 %s87, 1
      %p91 = scmp.eq.s32.totalorder %s13, 3
      %p92 = scmp.ne.s32.totalorder %s87, %s89
      %p93 = scmp.eq.s32.totalorder %s13, 0
      %p94 = por %p92, %p93
      %p95 = scmp.ne.s32.totalorder %s87, %s89
      %p96 = scmp.eq.s32.totalorder %s18, 3
      %p97 = por %p95, %p96
      %p98 = scmp.ne.s32.totalorder %s89, %s90
      %p99 = scmp.eq.s32.totalorder %s18, 0
      %p100 = por %p98, %p99
      %p101 = scmp.ne.s32.totalorder %s89, %s90
      %p102 = scmp.eq.s32.totalorder %s19, 3
      %p103 = por %p101, %p102
      %p105 = scmp.ne.s32.totalorder %s90, %s104
      %p106 = scmp.eq.s32.totalorder %s19, 0
      %p107 = por %p105, %p106
      %s109 = sadd.s32 %s108, 1
      %p112 = scmp.eq.s32.totalorder %s13, 3
      %p113 = scmp.ne.s32.totalorder %s108, %s110
      %p114 = scmp.eq.s32.totalorder %s13, 0
      %p115 = por %p113, %p114
      %p116 = scmp.ne.s32.totalorder %s108, %s110
      %p117 = scmp.eq.s32.totalorder %s18, 3
      %p118 = por %p116, %p117
      %p119 = scmp.ne.s32.totalorder %s110, %s111
      %p120 = scmp.eq.s32.totalorder %s18, 0
      %p121 = por %p119, %p120
      %p122 = scmp.ne.s32.totalorder %s110, %s111
      %p123 = scmp.eq.s32.totalorder %s19, 3
      %p124 = por %p122, %p123
      %p126 = scmp.ne.s32.totalorder %s111, %s125
      %p127 = scmp.eq.s32.totalorder %s19, 0
      %p128 = por %p126, %p127
      %s130 = sadd.s32 %s129, 1
      %p133 = scmp.eq.s32.totalorder %s13, 3
      %p134 = scmp.ne.s32.totalorder %s129, %s131
      %p135 = scmp.eq.s32.totalorder %s13, 0
      %p136 = por %p134, %p135
      %p137 = scmp.ne.s32.totalorder %s129, %s131
      %p138 = scmp.eq.s32.totalorder %s18, 3
      %p139 = por %p137, %p138
      %p140 = scmp.ne.s32.totalorder %s131, %s132
      %p141 = scmp.eq.s32.totalorder %s18, 0
      %p142 = por %p140, %p141
      %p143 = scmp.ne.s32.totalorder %s131, %s132
      %p144 = scmp.eq.s32.totalorder %s19, 3
      %p145 = por %p143, %p144
      %p147 = scmp.ne.s32.totalorder %s132, %s146
      %p148 = scmp.eq.s32.totalorder %s19, 0
      %p149 = por %p147, %p148
      %s150 = ssub.s32 %s20, %s32
      %p151 = scmp.eq.s32.totalorder %s150, 0
      %s153 = sadd.s32 %s152, 1
      %s154 = scalar_select %p151, %s152, %s153
      %p157 = pneg %p151
      %p158 = scmp.eq.s32.totalorder %s13, 3
      %p159 = por %p157, %p158
      %p160 = scmp.ne.s32.totalorder %s152, %s155
      %p161 = scmp.eq.s32.totalorder %s13, 0
      %p162 = por %p160, %p161
      %p163 = scmp.ne.s32.totalorder %s152, %s155
      %p164 = scmp.eq.s32.totalorder %s18, 3
      %p165 = por %p163, %p164
      %p166 = scmp.ne.s32.totalorder %s155, %s156
      %p167 = scmp.eq.s32.totalorder %s18, 0
      %p168 = por %p166, %p167
      %p169 = scmp.ne.s32.totalorder %s155, %s156
      %p170 = scmp.eq.s32.totalorder %s19, 3
      %p171 = por %p169, %p170
      %p173 = scmp.ne.s32.totalorder %s156, %s172
      %p174 = scmp.eq.s32.totalorder %s19, 0
      %p175 = por %p173, %p174
      %p176 = scmp.le.s32.totalorder 1, %s13
      %p177 = scmp.lt.s32.totalorder %s13, 5
      %p178 = pnand %p176, %p177
      %p179 = pneg %p178
      // Predicated region
      $region9: #{simplenet_forward.3} parent=5 // pred_check
        _
      $region10: #{simplenet_forward.3} parent=5 // pred_check_branch
        %181 = sbr.rel (%p178) target = $region12
      $region11: #{simplenet_forward.3} parent=5 // pred_region
        %s182 = ssub.s32 %s13, 1
        // Predicated region
        $region13: #{simplenet_forward.3} parent=11 // pred_check
          %p183 = pneg %p100
        $region14: #{simplenet_forward.3} parent=11 // pred_check_branch
          %185 = sbr.rel (%p183) target = $region16
        $region15: #{simplenet_forward.3} parent=11 // pred_region
          %s187 = ssub.s32 128, 128
          %188 = vsyncadd [#allocation5], %s187
          %s190 = sshll.u32 [#allocation4], 4
          %s191 = int_to_ptr.vmem [resolvable:$true] %s190
          %193 = dma.hbm_to_vmem [thread:$0]  %s2, 128, %s191, [#allocation5]
        $region16: #{simplenet_forward.3} parent=11 // pred_fallthru
          _
        // Predicated region
        $region17: #{simplenet_forward.3} parent=11 // pred_check
          %p194 = pneg %p121
        $region18: #{simplenet_forward.3} parent=11 // pred_check_branch
          %196 = sbr.rel (%p194) target = $region20
        $region19: #{simplenet_forward.3} parent=11 // pred_region
          %s198 = ssub.s32 128, 128
          %199 = vsyncadd [#allocation7], %s198
          %s201 = sshll.u32 [#allocation6], 4
          %s202 = int_to_ptr.vmem [resolvable:$true] %s201
          %204 = dma.hbm_to_vmem [thread:$0]  %s3, 128, %s202, [#allocation7]
        $region20: #{simplenet_forward.3} parent=11 // pred_fallthru
          _
        // Predicated region
        $region21: #{simplenet_forward.3} parent=11 // pred_check
          %p205 = pneg %p142
        $region22: #{simplenet_forward.3} parent=11 // pred_check_branch
          %207 = sbr.rel (%p205) target = $region24
        $region23: #{simplenet_forward.3} parent=11 // pred_region
          %s209 = ssub.s32 128, 128
          %210 = vsyncadd [#allocation7], %s209
          %s212 = sshll.u32 [#allocation8], 4
          %s213 = int_to_ptr.vmem [resolvable:$true] %s212
          %215 = dma.hbm_to_vmem [thread:$0]  %s4, 128, %s213, [#allocation7]
        $region24: #{simplenet_forward.3} parent=11 // pred_fallthru
          _
      $region12: #{simplenet_forward.3} parent=5 // pred_fallthru
        _
      %p216 = scmp.lt.s32.totalorder %s13, 4
      // Predicated region
      $region25: #{simplenet_forward.3} parent=5 // pred_check
        %p217 = pneg %p216
      $region26: #{simplenet_forward.3} parent=5 // pred_check_branch
        %219 = sbr.rel (%p217) target = $region28
      $region27: #{simplenet_forward.3} parent=5 // pred_region
        // Predicated region
        $region29: #{simplenet_forward.3} parent=27 // pred_check
          %p220 = pneg %p47
        $region30: #{simplenet_forward.3} parent=27 // pred_check_branch
          %222 = sbr.rel (%p220) target = $region32
        $region31: #{simplenet_forward.3} parent=27 // pred_region
          %s223 = sand.u32 %s37, 1
          %s224 = sand.u32 %s37, 1
          %s225 = smul.addr %s224, 32
          %s226 = scalar_lea.vmem [#allocation3], %s225
          %s227 = smul.u32 2, %s20
          %s228 = smul.u32 4, %s21
          %s229 = smul.addr %s227, 8
          %s230 = sadd.s32 %s228, %s229
          %s231 = smul.addr %s230, 4
          %s232 = scalar_lea.vmem %s0, %s231
          // Predicated region
          $region33: #{simplenet_forward.3} parent=31 // pred_check
            _
          $region34: #{simplenet_forward.3} parent=31 // pred_check_branch
            %234 = sbr.rel (0) target = $region36
          $region35: #{simplenet_forward.3} parent=31 // pred_region
            // Predicated region
            $region37: #{simplenet_forward.3} parent=35 // pred_check
              _
            $region38: #{simplenet_forward.3} parent=35 // pred_check_branch
              %236 = sbr.rel (0) target = $region40
            $region39: #{simplenet_forward.3} parent=35 // pred_region
              loop: start=0, step=1, limit=1
              $region41: #{simplenet_forward.3} parent=39 // loop_pre_header
                _
              $region42: #{simplenet_forward.3} parent=39 // loop_header
                %s238 = sphi 0, %s242
                %p239 = scmp.ge.s32.totalorder %s238, 1
                %s243 = sphi %s232, %s232
                %s244 = sphi %s226, %s226
              $region43: #{simplenet_forward.3} parent=39 // loop_header_branch
                %241 = sbr.rel (%p239) target = $region47
              $region44: #{simplenet_forward.3} parent=39 // loop_body
                %v245 = vld [vmem:[%s243] sm:$0xff]
                %246 = vst [vmem:[%s244] sm:$0xff] %v245
                %v247 = vld [vmem:[%s243 + $0x8] sm:$0xff]
                %248 = vst [vmem:[%s244 + $0x8] sm:$0xff] %v247
                %v249 = vld [vmem:[%s243 + $0x20] sm:$0xff]
                %250 = vst [vmem:[%s244 + $0x10] sm:$0xff] %v249
                %v251 = vld [vmem:[%s243 + $0x28] sm:$0xff]
                %252 = vst [vmem:[%s244 + $0x18] sm:$0xff] %v251
              $region45: #{simplenet_forward.3} parent=39 // loop_footer
                %s242 = sadd.s32 1, %s238
              $region46: #{simplenet_forward.3} parent=39 // loop_footer_branch
                %237 = sbr.rel target = $region42
              $region47: #{simplenet_forward.3} parent=39 // loop_exit
                _
            $region40: #{simplenet_forward.3} parent=35 // pred_fallthru
              _
            // Predicated region
            $region48: #{simplenet_forward.3} parent=35 // pred_check
              _
            $region49: #{simplenet_forward.3} parent=35 // pred_check_branch
              %254 = sbr.rel target = $region51
            $region50: #{simplenet_forward.3} parent=35 // pred_region
              _
            $region51: #{simplenet_forward.3} parent=35 // pred_fallthru
              _
          $region36: #{simplenet_forward.3} parent=31 // pred_fallthru
            _
          %255 = vnop
        $region32: #{simplenet_forward.3} parent=27 // pred_fallthru
          _
        // Predicated region
        $region52: #{simplenet_forward.3} parent=27 // pred_check
          %p256 = pneg %p73
        $region53: #{simplenet_forward.3} parent=27 // pred_check_branch
          %258 = sbr.rel (%p256) target = $region55
        $region54: #{simplenet_forward.3} parent=27 // pred_region
          %s259 = smul.u32 64, %s21
          %p260 = scmp.lt.s32.totalorder %s259, 127
          %s261 = scalar_select %p260, %s259, 127
          %s262 = smul.addr %s261, 8
          %s263 = smul.addr %s262, 4
          %s264 = scalar_lea.vmem %s1, %s263
          %s265 = smul.u32 64, %s21
        $region55: #{simplenet_forward.3} parent=27 // pred_fallthru
          _
      $region28: #{simplenet_forward.3} parent=5 // pred_fallthru
        _
      %p266 = scmp.le.s32.totalorder 1, %s13
      %p267 = scmp.lt.s32.totalorder %s13, 5
      %p268 = pnand %p266, %p267
      %p269 = pneg %p268
      // Predicated region
      $region56: #{simplenet_forward.3} parent=5 // pred_check
        _
      $region57: #{simplenet_forward.3} parent=5 // pred_check_branch
        %271 = sbr.rel (%p268) target = $region59
      $region58: #{simplenet_forward.3} parent=5 // pred_region
        %s272 = ssub.s32 %s13, 1
        %s273 = sand.u32 %s40, 1
        %s274 = sand.u32 %s40, 1
        %s275 = smul.addr %s274, 32
        %s276 = scalar_lea.vmem [#allocation3], %s275
        // Predicated region
        $region60: #{simplenet_forward.3} parent=58 // pred_check
          %p277 = pneg %p53
        $region61: #{simplenet_forward.3} parent=58 // pred_check_branch
          %279 = sbr.rel (%p277) target = $region63
        $region62: #{simplenet_forward.3} parent=58 // pred_region
          _
        $region63: #{simplenet_forward.3} parent=58 // pred_fallthru
          _
        // Predicated region
        $region64: #{simplenet_forward.3} parent=58 // pred_check
          %p280 = pneg %p100
        $region65: #{simplenet_forward.3} parent=58 // pred_check_branch
          %282 = sbr.rel (%p280) target = $region67
        $region66: #{simplenet_forward.3} parent=58 // pred_region
          %283 = dma.done [#allocation5], 128
        $region67: #{simplenet_forward.3} parent=58 // pred_fallthru
          _
        // Predicated region
        $region68: #{simplenet_forward.3} parent=58 // pred_check
          %p284 = pneg %p121
        $region69: #{simplenet_forward.3} parent=58 // pred_check_branch
          %286 = sbr.rel (%p284) target = $region71
        $region70: #{simplenet_forward.3} parent=58 // pred_region
          %287 = dma.done [#allocation7], 128
        $region71: #{simplenet_forward.3} parent=58 // pred_fallthru
          _
        // Predicated region
        $region72: #{simplenet_forward.3} parent=58 // pred_check
          %p288 = pneg %p142
        $region73: #{simplenet_forward.3} parent=58 // pred_check_branch
          %290 = sbr.rel (%p288) target = $region75
        $region74: #{simplenet_forward.3} parent=58 // pred_region
          %291 = dma.done [#allocation7], 128
        $region75: #{simplenet_forward.3} parent=58 // pred_fallthru
          _
        %s292 = sand.u32 %s40, 1
        %s293 = sand.u32 %s40, 1
        %s294 = smul.addr %s293, 32
        %s295 = scalar_lea.vmem [#allocation3], %s294
        %p296 = pneg %p53
        %p297 = pneg %p50
        %s298 = smul.u32 64, %s23
        %p299 = scmp.lt.s32.totalorder %s298, 127
        %s300 = scalar_select %p299, %s298, 127
        %s301 = smul.addr %s300, 8
        %s302 = smul.addr %s301, 4
        %s303 = scalar_lea.vmem %s1, %s302
        %p304 = pneg %p79
        %p305 = pneg %p76
        %p306 = pneg %p100
        %p307 = pneg %p97
        %p308 = pneg %p121
        %p309 = pneg %p118
        %p310 = pneg %p142
        %p311 = pneg %p139
        %p312 = pneg %p168
        %p313 = pneg %p165
        %s314 = smul.u32 2, %s22
        %p315 = scmp.lt.s32.totalorder %s314, 3
        %s316 = scalar_select %p315, %s314, 3
        %s317 = smul.addr %s316, 8
        %s318 = smul.addr %s317, 4
        %s319 = scalar_lea.vmem %s5, %s318
        %s320 = smul.u32 2, %s22
        %s321 = smul.u32 4, %s23
        %s322 = smul.u32 64, %s23
        %p323 = scmp.lt.s32.totalorder %s322, 127
        %s324 = scalar_select %p323, %s322, 127
        %s325 = smul.addr %s324, 8
        %s326 = smul.addr %s325, 4
        %s327 = scalar_lea.vmem %s1, %s326
        %s328 = smul.u32 64, %s23
        %s329 = smul.u32 2, %s22
        %p330 = scmp.lt.s32.totalorder %s329, 3
        %s331 = scalar_select %p330, %s329, 3
        %s332 = smul.addr %s331, 8
        %s333 = smul.addr %s332, 4
        %s334 = scalar_lea.vmem %s5, %s333
        %s335 = smul.u32 2, %s22
        %p336 = scmp.eq.s32.totalorder %s23, 0
        // Predicated region
        $region76: #{simplenet_forward.3} parent=58 // pred_check
          %p337 = pneg %p336
        $region77: #{simplenet_forward.3} parent=58 // pred_check_branch
          %339 = sbr.rel (%p337) target = $region79
        $region78: #{simplenet_forward.3} parent=58 // pred_region
          %340 = vst [vmem:[#allocation2] sm:$0xff] 0.0
          %341 = vst [vmem:[#allocation2 + $0x8] sm:$0xff] 0.0
          %342 = vst [vmem:[#allocation2 + $0x10] sm:$0xff] 0.0
          %343 = vst [vmem:[#allocation2 + $0x18] sm:$0xff] 0.0
          %344 = vst [vmem:[#allocation2 + $0x20] sm:$0xff] 0.0
          %345 = vst [vmem:[#allocation2 + $0x28] sm:$0xff] 0.0
          %346 = vst [vmem:[#allocation2 + $0x30] sm:$0xff] 0.0
          %347 = vst [vmem:[#allocation2 + $0x38] sm:$0xff] 0.0
          %348 = vst [vmem:[#allocation2 + $0x40] sm:$0xff] 0.0
          %349 = vst [vmem:[#allocation2 + $0x48] sm:$0xff] 0.0
          %350 = vst [vmem:[#allocation2 + $0x50] sm:$0xff] 0.0
          %351 = vst [vmem:[#allocation2 + $0x58] sm:$0xff] 0.0
          %352 = vst [vmem:[#allocation2 + $0x60] sm:$0xff] 0.0
          %353 = vst [vmem:[#allocation2 + $0x68] sm:$0xff] 0.0
          %354 = vst [vmem:[#allocation2 + $0x70] sm:$0xff] 0.0
          %355 = vst [vmem:[#allocation2 + $0x78] sm:$0xff] 0.0
        $region79: #{simplenet_forward.3} parent=58 // pred_fallthru
          _
        %v356 = vld [vmem:[#allocation2] sm:$0xff]
        %v357 = vld [vmem:[#allocation2 + $0x8] sm:$0xff]
        %v358 = vld [vmem:[#allocation2 + $0x10] sm:$0xff]
        %v359 = vld [vmem:[#allocation2 + $0x18] sm:$0xff]
        %v360 = vld [vmem:[#allocation2 + $0x20] sm:$0xff]
        %v361 = vld [vmem:[#allocation2 + $0x28] sm:$0xff]
        %v362 = vld [vmem:[#allocation2 + $0x30] sm:$0xff]
        %v363 = vld [vmem:[#allocation2 + $0x38] sm:$0xff]
        %v364 = vld [vmem:[#allocation2 + $0x40] sm:$0xff]
        %v365 = vld [vmem:[#allocation2 + $0x48] sm:$0xff]
        %v366 = vld [vmem:[#allocation2 + $0x50] sm:$0xff]
        %v367 = vld [vmem:[#allocation2 + $0x58] sm:$0xff]
        %v368 = vld [vmem:[#allocation2 + $0x60] sm:$0xff]
        %v369 = vld [vmem:[#allocation2 + $0x68] sm:$0xff]
        %v370 = vld [vmem:[#allocation2 + $0x70] sm:$0xff]
        %v371 = vld [vmem:[#allocation2 + $0x78] sm:$0xff]
        %v372 = vld [vmem:[%s276] sm:$0xff]
        %v373 = vld [vmem:[%s276 + $0x8] sm:$0xff]
        %v374 = vld [vmem:[%s276 + $0x10] sm:$0xff]
        %v375 = vld [vmem:[%s276 + $0x18] sm:$0xff]
        %v376 = vld [vmem:[%s327] sm:$0xff]
        %v377 = vld [vmem:[%s327 + $0x8] sm:$0xff]
        %v378 = vld [vmem:[%s327 + $0x10] sm:$0xff]
        %v379 = vld [vmem:[%s327 + $0x18] sm:$0xff]
        %v380 = vld [vmem:[%s327 + $0x20] sm:$0xff]
        %v381 = vld [vmem:[%s327 + $0x28] sm:$0xff]
        %v382 = vld [vmem:[%s327 + $0x30] sm:$0xff]
        %v383 = vld [vmem:[%s327 + $0x38] sm:$0xff]
        %v384 = vld [vmem:[%s327 + $0x40] sm:$0xff]
        %v385 = vld [vmem:[%s327 + $0x48] sm:$0xff]
        %v386 = vld [vmem:[%s327 + $0x50] sm:$0xff]
        %v387 = vld [vmem:[%s327 + $0x58] sm:$0xff]
        %v388 = vld [vmem:[%s327 + $0x60] sm:$0xff]
        %v389 = vld [vmem:[%s327 + $0x68] sm:$0xff]
        %v390 = vld [vmem:[%s327 + $0x70] sm:$0xff]
        %v391 = vld [vmem:[%s327 + $0x78] sm:$0xff]
        %v392 = vld [vmem:[%s327 + $0x80] sm:$0xff]
        %v393 = vld [vmem:[%s327 + $0x88] sm:$0xff]
        %v394 = vld [vmem:[%s327 + $0x90] sm:$0xff]
        %v395 = vld [vmem:[%s327 + $0x98] sm:$0xff]
        %v396 = vld [vmem:[%s327 + $0xa0] sm:$0xff]
        %v397 = vld [vmem:[%s327 + $0xa8] sm:$0xff]
        %v398 = vld [vmem:[%s327 + $0xb0] sm:$0xff]
        %v399 = vld [vmem:[%s327 + $0xb8] sm:$0xff]
        %v400 = vld [vmem:[%s327 + $0xc0] sm:$0xff]
        %v401 = vld [vmem:[%s327 + $0xc8] sm:$0xff]
        %v402 = vld [vmem:[%s327 + $0xd0] sm:$0xff]
        %v403 = vld [vmem:[%s327 + $0xd8] sm:$0xff]
        %v404 = vld [vmem:[%s327 + $0xe0] sm:$0xff]
        %v405 = vld [vmem:[%s327 + $0xe8] sm:$0xff]
        %v406 = vld [vmem:[%s327 + $0xf0] sm:$0xff]
        %v407 = vld [vmem:[%s327 + $0xf8] sm:$0xff]
        %v408 = vld [vmem:[%s327 + $0x100] sm:$0xff]
        %v409 = vld [vmem:[%s327 + $0x108] sm:$0xff]
        %v410 = vld [vmem:[%s327 + $0x110] sm:$0xff]
        %v411 = vld [vmem:[%s327 + $0x118] sm:$0xff]
        %v412 = vld [vmem:[%s327 + $0x120] sm:$0xff]
        %v413 = vld [vmem:[%s327 + $0x128] sm:$0xff]
        %v414 = vld [vmem:[%s327 + $0x130] sm:$0xff]
        %v415 = vld [vmem:[%s327 + $0x138] sm:$0xff]
        %v416 = vld [vmem:[%s327 + $0x140] sm:$0xff]
        %v417 = vld [vmem:[%s327 + $0x148] sm:$0xff]
        %v418 = vld [vmem:[%s327 + $0x150] sm:$0xff]
        %v419 = vld [vmem:[%s327 + $0x158] sm:$0xff]
        %v420 = vld [vmem:[%s327 + $0x160] sm:$0xff]
        %v421 = vld [vmem:[%s327 + $0x168] sm:$0xff]
        %v422 = vld [vmem:[%s327 + $0x170] sm:$0xff]
        %v423 = vld [vmem:[%s327 + $0x178] sm:$0xff]
        %v424 = vld [vmem:[%s327 + $0x180] sm:$0xff]
        %v425 = vld [vmem:[%s327 + $0x188] sm:$0xff]
        %v426 = vld [vmem:[%s327 + $0x190] sm:$0xff]
        %v427 = vld [vmem:[%s327 + $0x198] sm:$0xff]
        %v428 = vld [vmem:[%s327 + $0x1a0] sm:$0xff]
        %v429 = vld [vmem:[%s327 + $0x1a8] sm:$0xff]
        %v430 = vld [vmem:[%s327 + $0x1b0] sm:$0xff]
        %v431 = vld [vmem:[%s327 + $0x1b8] sm:$0xff]
        %v432 = vld [vmem:[%s327 + $0x1c0] sm:$0xff]
        %v433 = vld [vmem:[%s327 + $0x1c8] sm:$0xff]
        %v434 = vld [vmem:[%s327 + $0x1d0] sm:$0xff]
        %v435 = vld [vmem:[%s327 + $0x1d8] sm:$0xff]
        %v436 = vld [vmem:[%s327 + $0x1e0] sm:$0xff]
        %v437 = vld [vmem:[%s327 + $0x1e8] sm:$0xff]
        %v438 = vld [vmem:[%s327 + $0x1f0] sm:$0xff]
        %v439 = vld [vmem:[%s327 + $0x1f8] sm:$0xff]
        %v440 = vld [vmem:[%s327 + $0x200] sm:$0xff]
        %v441 = vld [vmem:[%s327 + $0x208] sm:$0xff]
        %v442 = vld [vmem:[%s327 + $0x210] sm:$0xff]
        %v443 = vld [vmem:[%s327 + $0x218] sm:$0xff]
        %v444 = vld [vmem:[%s327 + $0x220] sm:$0xff]
        %v445 = vld [vmem:[%s327 + $0x228] sm:$0xff]
        %v446 = vld [vmem:[%s327 + $0x230] sm:$0xff]
        %v447 = vld [vmem:[%s327 + $0x238] sm:$0xff]
        %v448 = vld [vmem:[%s327 + $0x240] sm:$0xff]
        %v449 = vld [vmem:[%s327 + $0x248] sm:$0xff]
        %v450 = vld [vmem:[%s327 + $0x250] sm:$0xff]
        %v451 = vld [vmem:[%s327 + $0x258] sm:$0xff]
        %v452 = vld [vmem:[%s327 + $0x260] sm:$0xff]
        %v453 = vld [vmem:[%s327 + $0x268] sm:$0xff]
        %v454 = vld [vmem:[%s327 + $0x270] sm:$0xff]
        %v455 = vld [vmem:[%s327 + $0x278] sm:$0xff]
        %v456 = vld [vmem:[%s327 + $0x280] sm:$0xff]
        %v457 = vld [vmem:[%s327 + $0x288] sm:$0xff]
        %v458 = vld [vmem:[%s327 + $0x290] sm:$0xff]
        %v459 = vld [vmem:[%s327 + $0x298] sm:$0xff]
        %v460 = vld [vmem:[%s327 + $0x2a0] sm:$0xff]
        %v461 = vld [vmem:[%s327 + $0x2a8] sm:$0xff]
        %v462 = vld [vmem:[%s327 + $0x2b0] sm:$0xff]
        %v463 = vld [vmem:[%s327 + $0x2b8] sm:$0xff]
        %v464 = vld [vmem:[%s327 + $0x2c0] sm:$0xff]
        %v465 = vld [vmem:[%s327 + $0x2c8] sm:$0xff]
        %v466 = vld [vmem:[%s327 + $0x2d0] sm:$0xff]
        %v467 = vld [vmem:[%s327 + $0x2d8] sm:$0xff]
        %v468 = vld [vmem:[%s327 + $0x2e0] sm:$0xff]
        %v469 = vld [vmem:[%s327 + $0x2e8] sm:$0xff]
        %v470 = vld [vmem:[%s327 + $0x2f0] sm:$0xff]
        %v471 = vld [vmem:[%s327 + $0x2f8] sm:$0xff]
        %v472 = vld [vmem:[%s327 + $0x300] sm:$0xff]
        %v473 = vld [vmem:[%s327 + $0x308] sm:$0xff]
        %v474 = vld [vmem:[%s327 + $0x310] sm:$0xff]
        %v475 = vld [vmem:[%s327 + $0x318] sm:$0xff]
        %v476 = vld [vmem:[%s327 + $0x320] sm:$0xff]
        %v477 = vld [vmem:[%s327 + $0x328] sm:$0xff]
        %v478 = vld [vmem:[%s327 + $0x330] sm:$0xff]
        %v479 = vld [vmem:[%s327 + $0x338] sm:$0xff]
        %v480 = vld [vmem:[%s327 + $0x340] sm:$0xff]
        %v481 = vld [vmem:[%s327 + $0x348] sm:$0xff]
        %v482 = vld [vmem:[%s327 + $0x350] sm:$0xff]
        %v483 = vld [vmem:[%s327 + $0x358] sm:$0xff]
        %v484 = vld [vmem:[%s327 + $0x360] sm:$0xff]
        %v485 = vld [vmem:[%s327 + $0x368] sm:$0xff]
        %v486 = vld [vmem:[%s327 + $0x370] sm:$0xff]
        %v487 = vld [vmem:[%s327 + $0x378] sm:$0xff]
        %v488 = vld [vmem:[%s327 + $0x380] sm:$0xff]
        %v489 = vld [vmem:[%s327 + $0x388] sm:$0xff]
        %v490 = vld [vmem:[%s327 + $0x390] sm:$0xff]
        %v491 = vld [vmem:[%s327 + $0x398] sm:$0xff]
        %v492 = vld [vmem:[%s327 + $0x3a0] sm:$0xff]
        %v493 = vld [vmem:[%s327 + $0x3a8] sm:$0xff]
        %v494 = vld [vmem:[%s327 + $0x3b0] sm:$0xff]
        %v495 = vld [vmem:[%s327 + $0x3b8] sm:$0xff]
        %v496 = vld [vmem:[%s327 + $0x3c0] sm:$0xff]
        %v497 = vld [vmem:[%s327 + $0x3c8] sm:$0xff]
        %v498 = vld [vmem:[%s327 + $0x3d0] sm:$0xff]
        %v499 = vld [vmem:[%s327 + $0x3d8] sm:$0xff]
        %v500 = vld [vmem:[%s327 + $0x3e0] sm:$0xff]
        %v501 = vld [vmem:[%s327 + $0x3e8] sm:$0xff]
        %v502 = vld [vmem:[%s327 + $0x3f0] sm:$0xff]
        %v503 = vld [vmem:[%s327 + $0x3f8] sm:$0xff]
        %v504 = vld [vmem:[%s327 + $0x400] sm:$0xff]
        %v505 = vld [vmem:[%s327 + $0x408] sm:$0xff]
        %v506 = vld [vmem:[%s327 + $0x410] sm:$0xff]
        %v507 = vld [vmem:[%s327 + $0x418] sm:$0xff]
        %v508 = vld [vmem:[%s327 + $0x420] sm:$0xff]
        %v509 = vld [vmem:[%s327 + $0x428] sm:$0xff]
        %v510 = vld [vmem:[%s327 + $0x430] sm:$0xff]
        %v511 = vld [vmem:[%s327 + $0x438] sm:$0xff]
        %v512 = vld [vmem:[%s327 + $0x440] sm:$0xff]
        %v513 = vld [vmem:[%s327 + $0x448] sm:$0xff]
        %v514 = vld [vmem:[%s327 + $0x450] sm:$0xff]
        %v515 = vld [vmem:[%s327 + $0x458] sm:$0xff]
        %v516 = vld [vmem:[%s327 + $0x460] sm:$0xff]
        %v517 = vld [vmem:[%s327 + $0x468] sm:$0xff]
        %v518 = vld [vmem:[%s327 + $0x470] sm:$0xff]
        %v519 = vld [vmem:[%s327 + $0x478] sm:$0xff]
        %v520 = vld [vmem:[%s327 + $0x480] sm:$0xff]
        %v521 = vld [vmem:[%s327 + $0x488] sm:$0xff]
        %v522 = vld [vmem:[%s327 + $0x490] sm:$0xff]
        %v523 = vld [vmem:[%s327 + $0x498] sm:$0xff]
        %v524 = vld [vmem:[%s327 + $0x4a0] sm:$0xff]
        %v525 = vld [vmem:[%s327 + $0x4a8] sm:$0xff]
        %v526 = vld [vmem:[%s327 + $0x4b0] sm:$0xff]
        %v527 = vld [vmem:[%s327 + $0x4b8] sm:$0xff]
        %v528 = vld [vmem:[%s327 + $0x4c0] sm:$0xff]
        %v529 = vld [vmem:[%s327 + $0x4c8] sm:$0xff]
        %v530 = vld [vmem:[%s327 + $0x4d0] sm:$0xff]
        %v531 = vld [vmem:[%s327 + $0x4d8] sm:$0xff]
        %v532 = vld [vmem:[%s327 + $0x4e0] sm:$0xff]
        %v533 = vld [vmem:[%s327 + $0x4e8] sm:$0xff]
        %v534 = vld [vmem:[%s327 + $0x4f0] sm:$0xff]
        %v535 = vld [vmem:[%s327 + $0x4f8] sm:$0xff]
        %v536 = vld [vmem:[%s327 + $0x500] sm:$0xff]
        %v537 = vld [vmem:[%s327 + $0x508] sm:$0xff]
        %v538 = vld [vmem:[%s327 + $0x510] sm:$0xff]
        %v539 = vld [vmem:[%s327 + $0x518] sm:$0xff]
        %v540 = vld [vmem:[%s327 + $0x520] sm:$0xff]
        %v541 = vld [vmem:[%s327 + $0x528] sm:$0xff]
        %v542 = vld [vmem:[%s327 + $0x530] sm:$0xff]
        %v543 = vld [vmem:[%s327 + $0x538] sm:$0xff]
        %v544 = vld [vmem:[%s327 + $0x540] sm:$0xff]
        %v545 = vld [vmem:[%s327 + $0x548] sm:$0xff]
        %v546 = vld [vmem:[%s327 + $0x550] sm:$0xff]
        %v547 = vld [vmem:[%s327 + $0x558] sm:$0xff]
        %v548 = vld [vmem:[%s327 + $0x560] sm:$0xff]
        %v549 = vld [vmem:[%s327 + $0x568] sm:$0xff]
        %v550 = vld [vmem:[%s327 + $0x570] sm:$0xff]
        %v551 = vld [vmem:[%s327 + $0x578] sm:$0xff]
        %v552 = vld [vmem:[%s327 + $0x580] sm:$0xff]
        %v553 = vld [vmem:[%s327 + $0x588] sm:$0xff]
        %v554 = vld [vmem:[%s327 + $0x590] sm:$0xff]
        %v555 = vld [vmem:[%s327 + $0x598] sm:$0xff]
        %v556 = vld [vmem:[%s327 + $0x5a0] sm:$0xff]
        %v557 = vld [vmem:[%s327 + $0x5a8] sm:$0xff]
        %v558 = vld [vmem:[%s327 + $0x5b0] sm:$0xff]
        %v559 = vld [vmem:[%s327 + $0x5b8] sm:$0xff]
        %v560 = vld [vmem:[%s327 + $0x5c0] sm:$0xff]
        %v561 = vld [vmem:[%s327 + $0x5c8] sm:$0xff]
        %v562 = vld [vmem:[%s327 + $0x5d0] sm:$0xff]
        %v563 = vld [vmem:[%s327 + $0x5d8] sm:$0xff]
        %v564 = vld [vmem:[%s327 + $0x5e0] sm:$0xff]
        %v565 = vld [vmem:[%s327 + $0x5e8] sm:$0xff]
        %v566 = vld [vmem:[%s327 + $0x5f0] sm:$0xff]
        %v567 = vld [vmem:[%s327 + $0x5f8] sm:$0xff]
        %v568 = vld [vmem:[%s327 + $0x600] sm:$0xff]
        %v569 = vld [vmem:[%s327 + $0x608] sm:$0xff]
        %v570 = vld [vmem:[%s327 + $0x610] sm:$0xff]
        %v571 = vld [vmem:[%s327 + $0x618] sm:$0xff]
        %v572 = vld [vmem:[%s327 + $0x620] sm:$0xff]
        %v573 = vld [vmem:[%s327 + $0x628] sm:$0xff]
        %v574 = vld [vmem:[%s327 + $0x630] sm:$0xff]
        %v575 = vld [vmem:[%s327 + $0x638] sm:$0xff]
        %v576 = vld [vmem:[%s327 + $0x640] sm:$0xff]
        %v577 = vld [vmem:[%s327 + $0x648] sm:$0xff]
        %v578 = vld [vmem:[%s327 + $0x650] sm:$0xff]
        %v579 = vld [vmem:[%s327 + $0x658] sm:$0xff]
        %v580 = vld [vmem:[%s327 + $0x660] sm:$0xff]
        %v581 = vld [vmem:[%s327 + $0x668] sm:$0xff]
        %v582 = vld [vmem:[%s327 + $0x670] sm:$0xff]
        %v583 = vld [vmem:[%s327 + $0x678] sm:$0xff]
        %v584 = vld [vmem:[%s327 + $0x680] sm:$0xff]
        %v585 = vld [vmem:[%s327 + $0x688] sm:$0xff]
        %v586 = vld [vmem:[%s327 + $0x690] sm:$0xff]
        %v587 = vld [vmem:[%s327 + $0x698] sm:$0xff]
        %v588 = vld [vmem:[%s327 + $0x6a0] sm:$0xff]
        %v589 = vld [vmem:[%s327 + $0x6a8] sm:$0xff]
        %v590 = vld [vmem:[%s327 + $0x6b0] sm:$0xff]
        %v591 = vld [vmem:[%s327 + $0x6b8] sm:$0xff]
        %v592 = vld [vmem:[%s327 + $0x6c0] sm:$0xff]
        %v593 = vld [vmem:[%s327 + $0x6c8] sm:$0xff]
        %v594 = vld [vmem:[%s327 + $0x6d0] sm:$0xff]
        %v595 = vld [vmem:[%s327 + $0x6d8] sm:$0xff]
        %v596 = vld [vmem:[%s327 + $0x6e0] sm:$0xff]
        %v597 = vld [vmem:[%s327 + $0x6e8] sm:$0xff]
        %v598 = vld [vmem:[%s327 + $0x6f0] sm:$0xff]
        %v599 = vld [vmem:[%s327 + $0x6f8] sm:$0xff]
        %v600 = vld [vmem:[%s327 + $0x700] sm:$0xff]
        %v601 = vld [vmem:[%s327 + $0x708] sm:$0xff]
        %v602 = vld [vmem:[%s327 + $0x710] sm:$0xff]
        %v603 = vld [vmem:[%s327 + $0x718] sm:$0xff]
        %v604 = vld [vmem:[%s327 + $0x720] sm:$0xff]
        %v605 = vld [vmem:[%s327 + $0x728] sm:$0xff]
        %v606 = vld [vmem:[%s327 + $0x730] sm:$0xff]
        %v607 = vld [vmem:[%s327 + $0x738] sm:$0xff]
        %v608 = vld [vmem:[%s327 + $0x740] sm:$0xff]
        %v609 = vld [vmem:[%s327 + $0x748] sm:$0xff]
        %v610 = vld [vmem:[%s327 + $0x750] sm:$0xff]
        %v611 = vld [vmem:[%s327 + $0x758] sm:$0xff]
        %v612 = vld [vmem:[%s327 + $0x760] sm:$0xff]
        %v613 = vld [vmem:[%s327 + $0x768] sm:$0xff]
        %v614 = vld [vmem:[%s327 + $0x770] sm:$0xff]
        %v615 = vld [vmem:[%s327 + $0x778] sm:$0xff]
        %v616 = vld [vmem:[%s327 + $0x780] sm:$0xff]
        %v617 = vld [vmem:[%s327 + $0x788] sm:$0xff]
        %v618 = vld [vmem:[%s327 + $0x790] sm:$0xff]
        %v619 = vld [vmem:[%s327 + $0x798] sm:$0xff]
        %v620 = vld [vmem:[%s327 + $0x7a0] sm:$0xff]
        %v621 = vld [vmem:[%s327 + $0x7a8] sm:$0xff]
        %v622 = vld [vmem:[%s327 + $0x7b0] sm:$0xff]
        %v623 = vld [vmem:[%s327 + $0x7b8] sm:$0xff]
        %v624 = vld [vmem:[%s327 + $0x7c0] sm:$0xff]
        %v625 = vld [vmem:[%s327 + $0x7c8] sm:$0xff]
        %v626 = vld [vmem:[%s327 + $0x7d0] sm:$0xff]
        %v627 = vld [vmem:[%s327 + $0x7d8] sm:$0xff]
        %v628 = vld [vmem:[%s327 + $0x7e0] sm:$0xff]
        %v629 = vld [vmem:[%s327 + $0x7e8] sm:$0xff]
        %v630 = vld [vmem:[%s327 + $0x7f0] sm:$0xff]
        %v631 = vld [vmem:[%s327 + $0x7f8] sm:$0xff]
        %v636 = vunpack.c.l.b16 %v372
        %v637 = vunpack.c.h.b16 %v372
        %v638 = vunpack.c.l.b16 %v373
        %v639 = vunpack.c.h.b16 %v373
        %v640 = vunpack.c.l.b16 %v374
        %v641 = vunpack.c.h.b16 %v374
        %v642 = vunpack.c.l.b16 %v375
        %v643 = vunpack.c.h.b16 %v375
        %v644 = vpack.c.b16 %v640, %v636
        %v645 = vpack.c.b16 %v641, %v637
        %v646 = vpack.c.b16 %v642, %v638
        %v647 = vpack.c.b16 %v643, %v639
        %v908 = vunpack.c.l.b16 %v376
        %v909 = vunpack.c.h.b16 %v376
        %v910 = vunpack.c.l.b16 %v377
        %v911 = vunpack.c.h.b16 %v377
        %v912 = vunpack.c.l.b16 %v378
        %v913 = vunpack.c.h.b16 %v378
        %v914 = vunpack.c.l.b16 %v379
        %v915 = vunpack.c.h.b16 %v379
        %v916 = vunpack.c.l.b16 %v380
        %v917 = vunpack.c.h.b16 %v380
        %v918 = vunpack.c.l.b16 %v381
        %v919 = vunpack.c.h.b16 %v381
        %v920 = vunpack.c.l.b16 %v382
        %v921 = vunpack.c.h.b16 %v382
        %v922 = vunpack.c.l.b16 %v383
        %v923 = vunpack.c.h.b16 %v383
        %v924 = vunpack.c.l.b16 %v384
        %v925 = vunpack.c.h.b16 %v384
        %v926 = vunpack.c.l.b16 %v385
        %v927 = vunpack.c.h.b16 %v385
        %v928 = vunpack.c.l.b16 %v386
        %v929 = vunpack.c.h.b16 %v386
        %v930 = vunpack.c.l.b16 %v387
        %v931 = vunpack.c.h.b16 %v387
        %v932 = vunpack.c.l.b16 %v388
        %v933 = vunpack.c.h.b16 %v388
        %v934 = vunpack.c.l.b16 %v389
        %v935 = vunpack.c.h.b16 %v389
        %v936 = vunpack.c.l.b16 %v390
        %v937 = vunpack.c.h.b16 %v390
        %v938 = vunpack.c.l.b16 %v391
        %v939 = vunpack.c.h.b16 %v391
        %v940 = vunpack.c.l.b16 %v392
        %v941 = vunpack.c.h.b16 %v392
        %v942 = vunpack.c.l.b16 %v393
        %v943 = vunpack.c.h.b16 %v393
        %v944 = vunpack.c.l.b16 %v394
        %v945 = vunpack.c.h.b16 %v394
        %v946 = vunpack.c.l.b16 %v395
        %v947 = vunpack.c.h.b16 %v395
        %v948 = vunpack.c.l.b16 %v396
        %v949 = vunpack.c.h.b16 %v396
        %v950 = vunpack.c.l.b16 %v397
        %v951 = vunpack.c.h.b16 %v397
        %v952 = vunpack.c.l.b16 %v398
        %v953 = vunpack.c.h.b16 %v398
        %v954 = vunpack.c.l.b16 %v399
        %v955 = vunpack.c.h.b16 %v399
        %v956 = vunpack.c.l.b16 %v400
        %v957 = vunpack.c.h.b16 %v400
        %v958 = vunpack.c.l.b16 %v401
        %v959 = vunpack.c.h.b16 %v401
        %v960 = vunpack.c.l.b16 %v402
        %v961 = vunpack.c.h.b16 %v402
        %v962 = vunpack.c.l.b16 %v403
        %v963 = vunpack.c.h.b16 %v403
        %v964 = vunpack.c.l.b16 %v404
        %v965 = vunpack.c.h.b16 %v404
        %v966 = vunpack.c.l.b16 %v405
        %v967 = vunpack.c.h.b16 %v405
        %v968 = vunpack.c.l.b16 %v406
        %v969 = vunpack.c.h.b16 %v406
        %v970 = vunpack.c.l.b16 %v407
        %v971 = vunpack.c.h.b16 %v407
        %v972 = vunpack.c.l.b16 %v408
        %v973 = vunpack.c.h.b16 %v408
        %v974 = vunpack.c.l.b16 %v409
        %v975 = vunpack.c.h.b16 %v409
        %v976 = vunpack.c.l.b16 %v410
        %v977 = vunpack.c.h.b16 %v410
        %v978 = vunpack.c.l.b16 %v411
        %v979 = vunpack.c.h.b16 %v411
        %v980 = vunpack.c.l.b16 %v412
        %v981 = vunpack.c.h.b16 %v412
        %v982 = vunpack.c.l.b16 %v413
        %v983 = vunpack.c.h.b16 %v413
        %v984 = vunpack.c.l.b16 %v414
        %v985 = vunpack.c.h.b16 %v414
        %v986 = vunpack.c.l.b16 %v415
        %v987 = vunpack.c.h.b16 %v415
        %v988 = vunpack.c.l.b16 %v416
        %v989 = vunpack.c.h.b16 %v416
        %v990 = vunpack.c.l.b16 %v417
        %v991 = vunpack.c.h.b16 %v417
        %v992 = vunpack.c.l.b16 %v418
        %v993 = vunpack.c.h.b16 %v418
        %v994 = vunpack.c.l.b16 %v419
        %v995 = vunpack.c.h.b16 %v419
        %v996 = vunpack.c.l.b16 %v420
        %v997 = vunpack.c.h.b16 %v420
        %v998 = vunpack.c.l.b16 %v421
        %v999 = vunpack.c.h.b16 %v421
        %v1000 = vunpack.c.l.b16 %v422
        %v1001 = vunpack.c.h.b16 %v422
        %v1002 = vunpack.c.l.b16 %v423
        %v1003 = vunpack.c.h.b16 %v423
        %v1004 = vunpack.c.l.b16 %v424
        %v1005 = vunpack.c.h.b16 %v424
        %v1006 = vunpack.c.l.b16 %v425
        %v1007 = vunpack.c.h.b16 %v425
        %v1008 = vunpack.c.l.b16 %v426
        %v1009 = vunpack.c.h.b16 %v426
        %v1010 = vunpack.c.l.b16 %v427
        %v1011 = vunpack.c.h.b16 %v427
        %v1012 = vunpack.c.l.b16 %v428
        %v1013 = vunpack.c.h.b16 %v428
        %v1014 = vunpack.c.l.b16 %v429
        %v1015 = vunpack.c.h.b16 %v429
        %v1016 = vunpack.c.l.b16 %v430
        %v1017 = vunpack.c.h.b16 %v430
        %v1018 = vunpack.c.l.b16 %v431
        %v1019 = vunpack.c.h.b16 %v431
        %v1020 = vunpack.c.l.b16 %v432
        %v1021 = vunpack.c.h.b16 %v432
        %v1022 = vunpack.c.l.b16 %v433
        %v1023 = vunpack.c.h.b16 %v433
        %v1024 = vunpack.c.l.b16 %v434
        %v1025 = vunpack.c.h.b16 %v434
        %v1026 = vunpack.c.l.b16 %v435
        %v1027 = vunpack.c.h.b16 %v435
        %v1028 = vunpack.c.l.b16 %v436
        %v1029 = vunpack.c.h.b16 %v436
        %v1030 = vunpack.c.l.b16 %v437
        %v1031 = vunpack.c.h.b16 %v437
        %v1032 = vunpack.c.l.b16 %v438
        %v1033 = vunpack.c.h.b16 %v438
        %v1034 = vunpack.c.l.b16 %v439
        %v1035 = vunpack.c.h.b16 %v439
        %v1036 = vunpack.c.l.b16 %v440
        %v1037 = vunpack.c.h.b16 %v440
        %v1038 = vunpack.c.l.b16 %v441
        %v1039 = vunpack.c.h.b16 %v441
        %v1040 = vunpack.c.l.b16 %v442
        %v1041 = vunpack.c.h.b16 %v442
        %v1042 = vunpack.c.l.b16 %v443
        %v1043 = vunpack.c.h.b16 %v443
        %v1044 = vunpack.c.l.b16 %v444
        %v1045 = vunpack.c.h.b16 %v444
        %v1046 = vunpack.c.l.b16 %v445
        %v1047 = vunpack.c.h.b16 %v445
        %v1048 = vunpack.c.l.b16 %v446
        %v1049 = vunpack.c.h.b16 %v446
        %v1050 = vunpack.c.l.b16 %v447
        %v1051 = vunpack.c.h.b16 %v447
        %v1052 = vunpack.c.l.b16 %v448
        %v1053 = vunpack.c.h.b16 %v448
        %v1054 = vunpack.c.l.b16 %v449
        %v1055 = vunpack.c.h.b16 %v449
        %v1056 = vunpack.c.l.b16 %v450
        %v1057 = vunpack.c.h.b16 %v450
        %v1058 = vunpack.c.l.b16 %v451
        %v1059 = vunpack.c.h.b16 %v451
        %v1060 = vunpack.c.l.b16 %v452
        %v1061 = vunpack.c.h.b16 %v452
        %v1062 = vunpack.c.l.b16 %v453
        %v1063 = vunpack.c.h.b16 %v453
        %v1064 = vunpack.c.l.b16 %v454
        %v1065 = vunpack.c.h.b16 %v454
        %v1066 = vunpack.c.l.b16 %v455
        %v1067 = vunpack.c.h.b16 %v455
        %v1068 = vunpack.c.l.b16 %v456
        %v1069 = vunpack.c.h.b16 %v456
        %v1070 = vunpack.c.l.b16 %v457
        %v1071 = vunpack.c.h.b16 %v457
        %v1072 = vunpack.c.l.b16 %v458
        %v1073 = vunpack.c.h.b16 %v458
        %v1074 = vunpack.c.l.b16 %v459
        %v1075 = vunpack.c.h.b16 %v459
        %v1076 = vunpack.c.l.b16 %v460
        %v1077 = vunpack.c.h.b16 %v460
        %v1078 = vunpack.c.l.b16 %v461
        %v1079 = vunpack.c.h.b16 %v461
        %v1080 = vunpack.c.l.b16 %v462
        %v1081 = vunpack.c.h.b16 %v462
        %v1082 = vunpack.c.l.b16 %v463
        %v1083 = vunpack.c.h.b16 %v463
        %v1084 = vunpack.c.l.b16 %v464
        %v1085 = vunpack.c.h.b16 %v464
        %v1086 = vunpack.c.l.b16 %v465
        %v1087 = vunpack.c.h.b16 %v465
        %v1088 = vunpack.c.l.b16 %v466
        %v1089 = vunpack.c.h.b16 %v466
        %v1090 = vunpack.c.l.b16 %v467
        %v1091 = vunpack.c.h.b16 %v467
        %v1092 = vunpack.c.l.b16 %v468
        %v1093 = vunpack.c.h.b16 %v468
        %v1094 = vunpack.c.l.b16 %v469
        %v1095 = vunpack.c.h.b16 %v469
        %v1096 = vunpack.c.l.b16 %v470
        %v1097 = vunpack.c.h.b16 %v470
        %v1098 = vunpack.c.l.b16 %v471
        %v1099 = vunpack.c.h.b16 %v471
        %v1100 = vunpack.c.l.b16 %v472
        %v1101 = vunpack.c.h.b16 %v472
        %v1102 = vunpack.c.l.b16 %v473
        %v1103 = vunpack.c.h.b16 %v473
        %v1104 = vunpack.c.l.b16 %v474
        %v1105 = vunpack.c.h.b16 %v474
        %v1106 = vunpack.c.l.b16 %v475
        %v1107 = vunpack.c.h.b16 %v475
        %v1108 = vunpack.c.l.b16 %v476
        %v1109 = vunpack.c.h.b16 %v476
        %v1110 = vunpack.c.l.b16 %v477
        %v1111 = vunpack.c.h.b16 %v477
        %v1112 = vunpack.c.l.b16 %v478
        %v1113 = vunpack.c.h.b16 %v478
        %v1114 = vunpack.c.l.b16 %v479
        %v1115 = vunpack.c.h.b16 %v479
        %v1116 = vunpack.c.l.b16 %v480
        %v1117 = vunpack.c.h.b16 %v480
        %v1118 = vunpack.c.l.b16 %v481
        %v1119 = vunpack.c.h.b16 %v481
        %v1120 = vunpack.c.l.b16 %v482
        %v1121 = vunpack.c.h.b16 %v482
        %v1122 = vunpack.c.l.b16 %v483
        %v1123 = vunpack.c.h.b16 %v483
        %v1124 = vunpack.c.l.b16 %v484
        %v1125 = vunpack.c.h.b16 %v484
        %v1126 = vunpack.c.l.b16 %v485
        %v1127 = vunpack.c.h.b16 %v485
        %v1128 = vunpack.c.l.b16 %v486
        %v1129 = vunpack.c.h.b16 %v486
        %v1130 = vunpack.c.l.b16 %v487
        %v1131 = vunpack.c.h.b16 %v487
        %v1132 = vunpack.c.l.b16 %v488
        %v1133 = vunpack.c.h.b16 %v488
        %v1134 = vunpack.c.l.b16 %v489
        %v1135 = vunpack.c.h.b16 %v489
        %v1136 = vunpack.c.l.b16 %v490
        %v1137 = vunpack.c.h.b16 %v490
        %v1138 = vunpack.c.l.b16 %v491
        %v1139 = vunpack.c.h.b16 %v491
        %v1140 = vunpack.c.l.b16 %v492
        %v1141 = vunpack.c.h.b16 %v492
        %v1142 = vunpack.c.l.b16 %v493
        %v1143 = vunpack.c.h.b16 %v493
        %v1144 = vunpack.c.l.b16 %v494
        %v1145 = vunpack.c.h.b16 %v494
        %v1146 = vunpack.c.l.b16 %v495
        %v1147 = vunpack.c.h.b16 %v495
        %v1148 = vunpack.c.l.b16 %v496
        %v1149 = vunpack.c.h.b16 %v496
        %v1150 = vunpack.c.l.b16 %v497
        %v1151 = vunpack.c.h.b16 %v497
        %v1152 = vunpack.c.l.b16 %v498
        %v1153 = vunpack.c.h.b16 %v498
        %v1154 = vunpack.c.l.b16 %v499
        %v1155 = vunpack.c.h.b16 %v499
        %v1156 = vunpack.c.l.b16 %v500
        %v1157 = vunpack.c.h.b16 %v500
        %v1158 = vunpack.c.l.b16 %v501
        %v1159 = vunpack.c.h.b16 %v501
        %v1160 = vunpack.c.l.b16 %v502
        %v1161 = vunpack.c.h.b16 %v502
        %v1162 = vunpack.c.l.b16 %v503
        %v1163 = vunpack.c.h.b16 %v503
        %v1164 = vunpack.c.l.b16 %v504
        %v1165 = vunpack.c.h.b16 %v504
        %v1166 = vunpack.c.l.b16 %v505
        %v1167 = vunpack.c.h.b16 %v505
        %v1168 = vunpack.c.l.b16 %v506
        %v1169 = vunpack.c.h.b16 %v506
        %v1170 = vunpack.c.l.b16 %v507
        %v1171 = vunpack.c.h.b16 %v507
        %v1172 = vunpack.c.l.b16 %v508
        %v1173 = vunpack.c.h.b16 %v508
        %v1174 = vunpack.c.l.b16 %v509
        %v1175 = vunpack.c.h.b16 %v509
        %v1176 = vunpack.c.l.b16 %v510
        %v1177 = vunpack.c.h.b16 %v510
        %v1178 = vunpack.c.l.b16 %v511
        %v1179 = vunpack.c.h.b16 %v511
        %v1180 = vunpack.c.l.b16 %v512
        %v1181 = vunpack.c.h.b16 %v512
        %v1182 = vunpack.c.l.b16 %v513
        %v1183 = vunpack.c.h.b16 %v513
        %v1184 = vunpack.c.l.b16 %v514
        %v1185 = vunpack.c.h.b16 %v514
        %v1186 = vunpack.c.l.b16 %v515
        %v1187 = vunpack.c.h.b16 %v515
        %v1188 = vunpack.c.l.b16 %v516
        %v1189 = vunpack.c.h.b16 %v516
        %v1190 = vunpack.c.l.b16 %v517
        %v1191 = vunpack.c.h.b16 %v517
        %v1192 = vunpack.c.l.b16 %v518
        %v1193 = vunpack.c.h.b16 %v518
        %v1194 = vunpack.c.l.b16 %v519
        %v1195 = vunpack.c.h.b16 %v519
        %v1196 = vunpack.c.l.b16 %v520
        %v1197 = vunpack.c.h.b16 %v520
        %v1198 = vunpack.c.l.b16 %v521
        %v1199 = vunpack.c.h.b16 %v521
        %v1200 = vunpack.c.l.b16 %v522
        %v1201 = vunpack.c.h.b16 %v522
        %v1202 = vunpack.c.l.b16 %v523
        %v1203 = vunpack.c.h.b16 %v523
        %v1204 = vunpack.c.l.b16 %v524
        %v1205 = vunpack.c.h.b16 %v524
        %v1206 = vunpack.c.l.b16 %v525
        %v1207 = vunpack.c.h.b16 %v525
        %v1208 = vunpack.c.l.b16 %v526
        %v1209 = vunpack.c.h.b16 %v526
        %v1210 = vunpack.c.l.b16 %v527
        %v1211 = vunpack.c.h.b16 %v527
        %v1212 = vunpack.c.l.b16 %v528
        %v1213 = vunpack.c.h.b16 %v528
        %v1214 = vunpack.c.l.b16 %v529
        %v1215 = vunpack.c.h.b16 %v529
        %v1216 = vunpack.c.l.b16 %v530
        %v1217 = vunpack.c.h.b16 %v530
        %v1218 = vunpack.c.l.b16 %v531
        %v1219 = vunpack.c.h.b16 %v531
        %v1220 = vunpack.c.l.b16 %v532
        %v1221 = vunpack.c.h.b16 %v532
        %v1222 = vunpack.c.l.b16 %v533
        %v1223 = vunpack.c.h.b16 %v533
        %v1224 = vunpack.c.l.b16 %v534
        %v1225 = vunpack.c.h.b16 %v534
        %v1226 = vunpack.c.l.b16 %v535
        %v1227 = vunpack.c.h.b16 %v535
        %v1228 = vunpack.c.l.b16 %v536
        %v1229 = vunpack.c.h.b16 %v536
        %v1230 = vunpack.c.l.b16 %v537
        %v1231 = vunpack.c.h.b16 %v537
        %v1232 = vunpack.c.l.b16 %v538
        %v1233 = vunpack.c.h.b16 %v538
        %v1234 = vunpack.c.l.b16 %v539
        %v1235 = vunpack.c.h.b16 %v539
        %v1236 = vunpack.c.l.b16 %v540
        %v1237 = vunpack.c.h.b16 %v540
        %v1238 = vunpack.c.l.b16 %v541
        %v1239 = vunpack.c.h.b16 %v541
        %v1240 = vunpack.c.l.b16 %v542
        %v1241 = vunpack.c.h.b16 %v542
        %v1242 = vunpack.c.l.b16 %v543
        %v1243 = vunpack.c.h.b16 %v543
        %v1244 = vunpack.c.l.b16 %v544
        %v1245 = vunpack.c.h.b16 %v544
        %v1246 = vunpack.c.l.b16 %v545
        %v1247 = vunpack.c.h.b16 %v545
        %v1248 = vunpack.c.l.b16 %v546
        %v1249 = vunpack.c.h.b16 %v546
        %v1250 = vunpack.c.l.b16 %v547
        %v1251 = vunpack.c.h.b16 %v547
        %v1252 = vunpack.c.l.b16 %v548
        %v1253 = vunpack.c.h.b16 %v548
        %v1254 = vunpack.c.l.b16 %v549
        %v1255 = vunpack.c.h.b16 %v549
        %v1256 = vunpack.c.l.b16 %v550
        %v1257 = vunpack.c.h.b16 %v550
        %v1258 = vunpack.c.l.b16 %v551
        %v1259 = vunpack.c.h.b16 %v551
        %v1260 = vunpack.c.l.b16 %v552
        %v1261 = vunpack.c.h.b16 %v552
        %v1262 = vunpack.c.l.b16 %v553
        %v1263 = vunpack.c.h.b16 %v553
        %v1264 = vunpack.c.l.b16 %v554
        %v1265 = vunpack.c.h.b16 %v554
        %v1266 = vunpack.c.l.b16 %v555
        %v1267 = vunpack.c.h.b16 %v555
        %v1268 = vunpack.c.l.b16 %v556
        %v1269 = vunpack.c.h.b16 %v556
        %v1270 = vunpack.c.l.b16 %v557
        %v1271 = vunpack.c.h.b16 %v557
        %v1272 = vunpack.c.l.b16 %v558
        %v1273 = vunpack.c.h.b16 %v558
        %v1274 = vunpack.c.l.b16 %v559
        %v1275 = vunpack.c.h.b16 %v559
        %v1276 = vunpack.c.l.b16 %v560
        %v1277 = vunpack.c.h.b16 %v560
        %v1278 = vunpack.c.l.b16 %v561
        %v1279 = vunpack.c.h.b16 %v561
        %v1280 = vunpack.c.l.b16 %v562
        %v1281 = vunpack.c.h.b16 %v562
        %v1282 = vunpack.c.l.b16 %v563
        %v1283 = vunpack.c.h.b16 %v563
        %v1284 = vunpack.c.l.b16 %v564
        %v1285 = vunpack.c.h.b16 %v564
        %v1286 = vunpack.c.l.b16 %v565
        %v1287 = vunpack.c.h.b16 %v565
        %v1288 = vunpack.c.l.b16 %v566
        %v1289 = vunpack.c.h.b16 %v566
        %v1290 = vunpack.c.l.b16 %v567
        %v1291 = vunpack.c.h.b16 %v567
        %v1292 = vunpack.c.l.b16 %v568
        %v1293 = vunpack.c.h.b16 %v568
        %v1294 = vunpack.c.l.b16 %v569
        %v1295 = vunpack.c.h.b16 %v569
        %v1296 = vunpack.c.l.b16 %v570
        %v1297 = vunpack.c.h.b16 %v570
        %v1298 = vunpack.c.l.b16 %v571
        %v1299 = vunpack.c.h.b16 %v571
        %v1300 = vunpack.c.l.b16 %v572
        %v1301 = vunpack.c.h.b16 %v572
        %v1302 = vunpack.c.l.b16 %v573
        %v1303 = vunpack.c.h.b16 %v573
        %v1304 = vunpack.c.l.b16 %v574
        %v1305 = vunpack.c.h.b16 %v574
        %v1306 = vunpack.c.l.b16 %v575
        %v1307 = vunpack.c.h.b16 %v575
        %v1308 = vunpack.c.l.b16 %v576
        %v1309 = vunpack.c.h.b16 %v576
        %v1310 = vunpack.c.l.b16 %v577
        %v1311 = vunpack.c.h.b16 %v577
        %v1312 = vunpack.c.l.b16 %v578
        %v1313 = vunpack.c.h.b16 %v578
        %v1314 = vunpack.c.l.b16 %v579
        %v1315 = vunpack.c.h.b16 %v579
        %v1316 = vunpack.c.l.b16 %v580
        %v1317 = vunpack.c.h.b16 %v580
        %v1318 = vunpack.c.l.b16 %v581
        %v1319 = vunpack.c.h.b16 %v581
        %v1320 = vunpack.c.l.b16 %v582
        %v1321 = vunpack.c.h.b16 %v582
        %v1322 = vunpack.c.l.b16 %v583
        %v1323 = vunpack.c.h.b16 %v583
        %v1324 = vunpack.c.l.b16 %v584
        %v1325 = vunpack.c.h.b16 %v584
        %v1326 = vunpack.c.l.b16 %v585
        %v1327 = vunpack.c.h.b16 %v585
        %v1328 = vunpack.c.l.b16 %v586
        %v1329 = vunpack.c.h.b16 %v586
        %v1330 = vunpack.c.l.b16 %v587
        %v1331 = vunpack.c.h.b16 %v587
        %v1332 = vunpack.c.l.b16 %v588
        %v1333 = vunpack.c.h.b16 %v588
        %v1334 = vunpack.c.l.b16 %v589
        %v1335 = vunpack.c.h.b16 %v589
        %v1336 = vunpack.c.l.b16 %v590
        %v1337 = vunpack.c.h.b16 %v590
        %v1338 = vunpack.c.l.b16 %v591
        %v1339 = vunpack.c.h.b16 %v591
        %v1340 = vunpack.c.l.b16 %v592
        %v1341 = vunpack.c.h.b16 %v592
        %v1342 = vunpack.c.l.b16 %v593
        %v1343 = vunpack.c.h.b16 %v593
        %v1344 = vunpack.c.l.b16 %v594
        %v1345 = vunpack.c.h.b16 %v594
        %v1346 = vunpack.c.l.b16 %v595
        %v1347 = vunpack.c.h.b16 %v595
        %v1348 = vunpack.c.l.b16 %v596
        %v1349 = vunpack.c.h.b16 %v596
        %v1350 = vunpack.c.l.b16 %v597
        %v1351 = vunpack.c.h.b16 %v597
        %v1352 = vunpack.c.l.b16 %v598
        %v1353 = vunpack.c.h.b16 %v598
        %v1354 = vunpack.c.l.b16 %v599
        %v1355 = vunpack.c.h.b16 %v599
        %v1356 = vunpack.c.l.b16 %v600
        %v1357 = vunpack.c.h.b16 %v600
        %v1358 = vunpack.c.l.b16 %v601
        %v1359 = vunpack.c.h.b16 %v601
        %v1360 = vunpack.c.l.b16 %v602
        %v1361 = vunpack.c.h.b16 %v602
        %v1362 = vunpack.c.l.b16 %v603
        %v1363 = vunpack.c.h.b16 %v603
        %v1364 = vunpack.c.l.b16 %v604
        %v1365 = vunpack.c.h.b16 %v604
        %v1366 = vunpack.c.l.b16 %v605
        %v1367 = vunpack.c.h.b16 %v605
        %v1368 = vunpack.c.l.b16 %v606
        %v1369 = vunpack.c.h.b16 %v606
        %v1370 = vunpack.c.l.b16 %v607
        %v1371 = vunpack.c.h.b16 %v607
        %v1372 = vunpack.c.l.b16 %v608
        %v1373 = vunpack.c.h.b16 %v608
        %v1374 = vunpack.c.l.b16 %v609
        %v1375 = vunpack.c.h.b16 %v609
        %v1376 = vunpack.c.l.b16 %v610
        %v1377 = vunpack.c.h.b16 %v610
        %v1378 = vunpack.c.l.b16 %v611
        %v1379 = vunpack.c.h.b16 %v611
        %v1380 = vunpack.c.l.b16 %v612
        %v1381 = vunpack.c.h.b16 %v612
        %v1382 = vunpack.c.l.b16 %v613
        %v1383 = vunpack.c.h.b16 %v613
        %v1384 = vunpack.c.l.b16 %v614
        %v1385 = vunpack.c.h.b16 %v614
        %v1386 = vunpack.c.l.b16 %v615
        %v1387 = vunpack.c.h.b16 %v615
        %v1388 = vunpack.c.l.b16 %v616
        %v1389 = vunpack.c.h.b16 %v616
        %v1390 = vunpack.c.l.b16 %v617
        %v1391 = vunpack.c.h.b16 %v617
        %v1392 = vunpack.c.l.b16 %v618
        %v1393 = vunpack.c.h.b16 %v618
        %v1394 = vunpack.c.l.b16 %v619
        %v1395 = vunpack.c.h.b16 %v619
        %v1396 = vunpack.c.l.b16 %v620
        %v1397 = vunpack.c.h.b16 %v620
        %v1398 = vunpack.c.l.b16 %v621
        %v1399 = vunpack.c.h.b16 %v621
        %v1400 = vunpack.c.l.b16 %v622
        %v1401 = vunpack.c.h.b16 %v622
        %v1402 = vunpack.c.l.b16 %v623
        %v1403 = vunpack.c.h.b16 %v623
        %v1404 = vunpack.c.l.b16 %v624
        %v1405 = vunpack.c.h.b16 %v624
        %v1406 = vunpack.c.l.b16 %v625
        %v1407 = vunpack.c.h.b16 %v625
        %v1408 = vunpack.c.l.b16 %v626
        %v1409 = vunpack.c.h.b16 %v626
        %v1410 = vunpack.c.l.b16 %v627
        %v1411 = vunpack.c.h.b16 %v627
        %v1412 = vunpack.c.l.b16 %v628
        %v1413 = vunpack.c.h.b16 %v628
        %v1414 = vunpack.c.l.b16 %v629
        %v1415 = vunpack.c.h.b16 %v629
        %v1416 = vunpack.c.l.b16 %v630
        %v1417 = vunpack.c.h.b16 %v630
        %v1418 = vunpack.c.l.b16 %v631
        %v1419 = vunpack.c.h.b16 %v631
        %v1420 = vpack.c.b16 %v916, %v908
        %v1421 = vpack.c.b16 %v917, %v909
        %v1422 = vpack.c.b16 %v918, %v910
        %v1423 = vpack.c.b16 %v919, %v911
        %v1424 = vpack.c.b16 %v920, %v912
        %v1425 = vpack.c.b16 %v921, %v913
        %v1426 = vpack.c.b16 %v922, %v914
        %v1427 = vpack.c.b16 %v923, %v915
        %v1428 = vpack.c.b16 %v932, %v924
        %v1429 = vpack.c.b16 %v933, %v925
        %v1430 = vpack.c.b16 %v934, %v926
        %v1431 = vpack.c.b16 %v935, %v927
        %v1432 = vpack.c.b16 %v936, %v928
        %v1433 = vpack.c.b16 %v937, %v929
        %v1434 = vpack.c.b16 %v938, %v930
        %v1435 = vpack.c.b16 %v939, %v931
        %v1436 = vpack.c.b16 %v948, %v940
        %v1437 = vpack.c.b16 %v949, %v941
        %v1438 = vpack.c.b16 %v950, %v942
        %v1439 = vpack.c.b16 %v951, %v943
        %v1440 = vpack.c.b16 %v952, %v944
        %v1441 = vpack.c.b16 %v953, %v945
        %v1442 = vpack.c.b16 %v954, %v946
        %v1443 = vpack.c.b16 %v955, %v947
        %v1444 = vpack.c.b16 %v964, %v956
        %v1445 = vpack.c.b16 %v965, %v957
        %v1446 = vpack.c.b16 %v966, %v958
        %v1447 = vpack.c.b16 %v967, %v959
        %v1448 = vpack.c.b16 %v968, %v960
        %v1449 = vpack.c.b16 %v969, %v961
        %v1450 = vpack.c.b16 %v970, %v962
        %v1451 = vpack.c.b16 %v971, %v963
        %v1452 = vpack.c.b16 %v980, %v972
        %v1453 = vpack.c.b16 %v981, %v973
        %v1454 = vpack.c.b16 %v982, %v974
        %v1455 = vpack.c.b16 %v983, %v975
        %v1456 = vpack.c.b16 %v984, %v976
        %v1457 = vpack.c.b16 %v985, %v977
        %v1458 = vpack.c.b16 %v986, %v978
        %v1459 = vpack.c.b16 %v987, %v979
        %v1460 = vpack.c.b16 %v996, %v988
        %v1461 = vpack.c.b16 %v997, %v989
        %v1462 = vpack.c.b16 %v998, %v990
        %v1463 = vpack.c.b16 %v999, %v991
        %v1464 = vpack.c.b16 %v1000, %v992
        %v1465 = vpack.c.b16 %v1001, %v993
        %v1466 = vpack.c.b16 %v1002, %v994
        %v1467 = vpack.c.b16 %v1003, %v995
        %v1468 = vpack.c.b16 %v1012, %v1004
        %v1469 = vpack.c.b16 %v1013, %v1005
        %v1470 = vpack.c.b16 %v1014, %v1006
        %v1471 = vpack.c.b16 %v1015, %v1007
        %v1472 = vpack.c.b16 %v1016, %v1008
        %v1473 = vpack.c.b16 %v1017, %v1009
        %v1474 = vpack.c.b16 %v1018, %v1010
        %v1475 = vpack.c.b16 %v1019, %v1011
        %v1476 = vpack.c.b16 %v1028, %v1020
        %v1477 = vpack.c.b16 %v1029, %v1021
        %v1478 = vpack.c.b16 %v1030, %v1022
        %v1479 = vpack.c.b16 %v1031, %v1023
        %v1480 = vpack.c.b16 %v1032, %v1024
        %v1481 = vpack.c.b16 %v1033, %v1025
        %v1482 = vpack.c.b16 %v1034, %v1026
        %v1483 = vpack.c.b16 %v1035, %v1027
        %v1484 = vpack.c.b16 %v1044, %v1036
        %v1485 = vpack.c.b16 %v1045, %v1037
        %v1486 = vpack.c.b16 %v1046, %v1038
        %v1487 = vpack.c.b16 %v1047, %v1039
        %v1488 = vpack.c.b16 %v1048, %v1040
        %v1489 = vpack.c.b16 %v1049, %v1041
        %v1490 = vpack.c.b16 %v1050, %v1042
        %v1491 = vpack.c.b16 %v1051, %v1043
        %v1492 = vpack.c.b16 %v1060, %v1052
        %v1493 = vpack.c.b16 %v1061, %v1053
        %v1494 = vpack.c.b16 %v1062, %v1054
        %v1495 = vpack.c.b16 %v1063, %v1055
        %v1496 = vpack.c.b16 %v1064, %v1056
        %v1497 = vpack.c.b16 %v1065, %v1057
        %v1498 = vpack.c.b16 %v1066, %v1058
        %v1499 = vpack.c.b16 %v1067, %v1059
        %v1500 = vpack.c.b16 %v1076, %v1068
        %v1501 = vpack.c.b16 %v1077, %v1069
        %v1502 = vpack.c.b16 %v1078, %v1070
        %v1503 = vpack.c.b16 %v1079, %v1071
        %v1504 = vpack.c.b16 %v1080, %v1072
        %v1505 = vpack.c.b16 %v1081, %v1073
        %v1506 = vpack.c.b16 %v1082, %v1074
        %v1507 = vpack.c.b16 %v1083, %v1075
        %v1508 = vpack.c.b16 %v1092, %v1084
        %v1509 = vpack.c.b16 %v1093, %v1085
        %v1510 = vpack.c.b16 %v1094, %v1086
        %v1511 = vpack.c.b16 %v1095, %v1087
        %v1512 = vpack.c.b16 %v1096, %v1088
        %v1513 = vpack.c.b16 %v1097, %v1089
        %v1514 = vpack.c.b16 %v1098, %v1090
        %v1515 = vpack.c.b16 %v1099, %v1091
        %v1516 = vpack.c.b16 %v1108, %v1100
        %v1517 = vpack.c.b16 %v1109, %v1101
        %v1518 = vpack.c.b16 %v1110, %v1102
        %v1519 = vpack.c.b16 %v1111, %v1103
        %v1520 = vpack.c.b16 %v1112, %v1104
        %v1521 = vpack.c.b16 %v1113, %v1105
        %v1522 = vpack.c.b16 %v1114, %v1106
        %v1523 = vpack.c.b16 %v1115, %v1107
        %v1524 = vpack.c.b16 %v1124, %v1116
        %v1525 = vpack.c.b16 %v1125, %v1117
        %v1526 = vpack.c.b16 %v1126, %v1118
        %v1527 = vpack.c.b16 %v1127, %v1119
        %v1528 = vpack.c.b16 %v1128, %v1120
        %v1529 = vpack.c.b16 %v1129, %v1121
        %v1530 = vpack.c.b16 %v1130, %v1122
        %v1531 = vpack.c.b16 %v1131, %v1123
        %v1532 = vpack.c.b16 %v1140, %v1132
        %v1533 = vpack.c.b16 %v1141, %v1133
        %v1534 = vpack.c.b16 %v1142, %v1134
        %v1535 = vpack.c.b16 %v1143, %v1135
        %v1536 = vpack.c.b16 %v1144, %v1136
        %v1537 = vpack.c.b16 %v1145, %v1137
        %v1538 = vpack.c.b16 %v1146, %v1138
        %v1539 = vpack.c.b16 %v1147, %v1139
        %v1540 = vpack.c.b16 %v1156, %v1148
        %v1541 = vpack.c.b16 %v1157, %v1149
        %v1542 = vpack.c.b16 %v1158, %v1150
        %v1543 = vpack.c.b16 %v1159, %v1151
        %v1544 = vpack.c.b16 %v1160, %v1152
        %v1545 = vpack.c.b16 %v1161, %v1153
        %v1546 = vpack.c.b16 %v1162, %v1154
        %v1547 = vpack.c.b16 %v1163, %v1155
        %v1548 = vpack.c.b16 %v1172, %v1164
        %v1549 = vpack.c.b16 %v1173, %v1165
        %v1550 = vpack.c.b16 %v1174, %v1166
        %v1551 = vpack.c.b16 %v1175, %v1167
        %v1552 = vpack.c.b16 %v1176, %v1168
        %v1553 = vpack.c.b16 %v1177, %v1169
        %v1554 = vpack.c.b16 %v1178, %v1170
        %v1555 = vpack.c.b16 %v1179, %v1171
        %v1556 = vpack.c.b16 %v1188, %v1180
        %v1557 = vpack.c.b16 %v1189, %v1181
        %v1558 = vpack.c.b16 %v1190, %v1182
        %v1559 = vpack.c.b16 %v1191, %v1183
        %v1560 = vpack.c.b16 %v1192, %v1184
        %v1561 = vpack.c.b16 %v1193, %v1185
        %v1562 = vpack.c.b16 %v1194, %v1186
        %v1563 = vpack.c.b16 %v1195, %v1187
        %v1564 = vpack.c.b16 %v1204, %v1196
        %v1565 = vpack.c.b16 %v1205, %v1197
        %v1566 = vpack.c.b16 %v1206, %v1198
        %v1567 = vpack.c.b16 %v1207, %v1199
        %v1568 = vpack.c.b16 %v1208, %v1200
        %v1569 = vpack.c.b16 %v1209, %v1201
        %v1570 = vpack.c.b16 %v1210, %v1202
        %v1571 = vpack.c.b16 %v1211, %v1203
        %v1572 = vpack.c.b16 %v1220, %v1212
        %v1573 = vpack.c.b16 %v1221, %v1213
        %v1574 = vpack.c.b16 %v1222, %v1214
        %v1575 = vpack.c.b16 %v1223, %v1215
        %v1576 = vpack.c.b16 %v1224, %v1216
        %v1577 = vpack.c.b16 %v1225, %v1217
        %v1578 = vpack.c.b16 %v1226, %v1218
        %v1579 = vpack.c.b16 %v1227, %v1219
        %v1580 = vpack.c.b16 %v1236, %v1228
        %v1581 = vpack.c.b16 %v1237, %v1229
        %v1582 = vpack.c.b16 %v1238, %v1230
        %v1583 = vpack.c.b16 %v1239, %v1231
        %v1584 = vpack.c.b16 %v1240, %v1232
        %v1585 = vpack.c.b16 %v1241, %v1233
        %v1586 = vpack.c.b16 %v1242, %v1234
        %v1587 = vpack.c.b16 %v1243, %v1235
        %v1588 = vpack.c.b16 %v1252, %v1244
        %v1589 = vpack.c.b16 %v1253, %v1245
        %v1590 = vpack.c.b16 %v1254, %v1246
        %v1591 = vpack.c.b16 %v1255, %v1247
        %v1592 = vpack.c.b16 %v1256, %v1248
        %v1593 = vpack.c.b16 %v1257, %v1249
        %v1594 = vpack.c.b16 %v1258, %v1250
        %v1595 = vpack.c.b16 %v1259, %v1251
        %v1596 = vpack.c.b16 %v1268, %v1260
        %v1597 = vpack.c.b16 %v1269, %v1261
        %v1598 = vpack.c.b16 %v1270, %v1262
        %v1599 = vpack.c.b16 %v1271, %v1263
        %v1600 = vpack.c.b16 %v1272, %v1264
        %v1601 = vpack.c.b16 %v1273, %v1265
        %v1602 = vpack.c.b16 %v1274, %v1266
        %v1603 = vpack.c.b16 %v1275, %v1267
        %v1604 = vpack.c.b16 %v1284, %v1276
        %v1605 = vpack.c.b16 %v1285, %v1277
        %v1606 = vpack.c.b16 %v1286, %v1278
        %v1607 = vpack.c.b16 %v1287, %v1279
        %v1608 = vpack.c.b16 %v1288, %v1280
        %v1609 = vpack.c.b16 %v1289, %v1281
        %v1610 = vpack.c.b16 %v1290, %v1282
        %v1611 = vpack.c.b16 %v1291, %v1283
        %v1612 = vpack.c.b16 %v1300, %v1292
        %v1613 = vpack.c.b16 %v1301, %v1293
        %v1614 = vpack.c.b16 %v1302, %v1294
        %v1615 = vpack.c.b16 %v1303, %v1295
        %v1616 = vpack.c.b16 %v1304, %v1296
        %v1617 = vpack.c.b16 %v1305, %v1297
        %v1618 = vpack.c.b16 %v1306, %v1298
        %v1619 = vpack.c.b16 %v1307, %v1299
        %v1620 = vpack.c.b16 %v1316, %v1308
        %v1621 = vpack.c.b16 %v1317, %v1309
        %v1622 = vpack.c.b16 %v1318, %v1310
        %v1623 = vpack.c.b16 %v1319, %v1311
        %v1624 = vpack.c.b16 %v1320, %v1312
        %v1625 = vpack.c.b16 %v1321, %v1313
        %v1626 = vpack.c.b16 %v1322, %v1314
        %v1627 = vpack.c.b16 %v1323, %v1315
        %v1628 = vpack.c.b16 %v1332, %v1324
        %v1629 = vpack.c.b16 %v1333, %v1325
        %v1630 = vpack.c.b16 %v1334, %v1326
        %v1631 = vpack.c.b16 %v1335, %v1327
        %v1632 = vpack.c.b16 %v1336, %v1328
        %v1633 = vpack.c.b16 %v1337, %v1329
        %v1634 = vpack.c.b16 %v1338, %v1330
        %v1635 = vpack.c.b16 %v1339, %v1331
        %v1636 = vpack.c.b16 %v1348, %v1340
        %v1637 = vpack.c.b16 %v1349, %v1341
        %v1638 = vpack.c.b16 %v1350, %v1342
        %v1639 = vpack.c.b16 %v1351, %v1343
        %v1640 = vpack.c.b16 %v1352, %v1344
        %v1641 = vpack.c.b16 %v1353, %v1345
        %v1642 = vpack.c.b16 %v1354, %v1346
        %v1643 = vpack.c.b16 %v1355, %v1347
        %v1644 = vpack.c.b16 %v1364, %v1356
        %v1645 = vpack.c.b16 %v1365, %v1357
        %v1646 = vpack.c.b16 %v1366, %v1358
        %v1647 = vpack.c.b16 %v1367, %v1359
        %v1648 = vpack.c.b16 %v1368, %v1360
        %v1649 = vpack.c.b16 %v1369, %v1361
        %v1650 = vpack.c.b16 %v1370, %v1362
        %v1651 = vpack.c.b16 %v1371, %v1363
        %v1652 = vpack.c.b16 %v1380, %v1372
        %v1653 = vpack.c.b16 %v1381, %v1373
        %v1654 = vpack.c.b16 %v1382, %v1374
        %v1655 = vpack.c.b16 %v1383, %v1375
        %v1656 = vpack.c.b16 %v1384, %v1376
        %v1657 = vpack.c.b16 %v1385, %v1377
        %v1658 = vpack.c.b16 %v1386, %v1378
        %v1659 = vpack.c.b16 %v1387, %v1379
        %v1660 = vpack.c.b16 %v1396, %v1388
        %v1661 = vpack.c.b16 %v1397, %v1389
        %v1662 = vpack.c.b16 %v1398, %v1390
        %v1663 = vpack.c.b16 %v1399, %v1391
        %v1664 = vpack.c.b16 %v1400, %v1392
        %v1665 = vpack.c.b16 %v1401, %v1393
        %v1666 = vpack.c.b16 %v1402, %v1394
        %v1667 = vpack.c.b16 %v1403, %v1395
        %v1668 = vpack.c.b16 %v1412, %v1404
        %v1669 = vpack.c.b16 %v1413, %v1405
        %v1670 = vpack.c.b16 %v1414, %v1406
        %v1671 = vpack.c.b16 %v1415, %v1407
        %v1672 = vpack.c.b16 %v1416, %v1408
        %v1673 = vpack.c.b16 %v1417, %v1409
        %v1674 = vpack.c.b16 %v1418, %v1410
        %v1675 = vpack.c.b16 %v1419, %v1411
        %1932 = vmatprep.subr.bf16.mxu0 %v1421
        %1933 = vmatpush1.bf16.msra.mxu0 %v1420
        %1934 = vmatprep.subr.bf16.mxu0 %v1429
        %1935 = vmatpush1.bf16.msra.mxu0 %v1428
        %1936 = vmatprep.subr.bf16.mxu0 %v1437
        %1937 = vmatpush1.bf16.msra.mxu0 %v1436
        %1938 = vmatprep.subr.bf16.mxu0 %v1445
        %1939 = vmatpush1.bf16.msra.mxu0 %v1444
        %1940 = vmatprep.subr.bf16.mxu0 %v1453
        %1941 = vmatpush1.bf16.msra.mxu0 %v1452
        %1942 = vmatprep.subr.bf16.mxu0 %v1461
        %1943 = vmatpush1.bf16.msra.mxu0 %v1460
        %1944 = vmatprep.subr.bf16.mxu0 %v1469
        %1945 = vmatpush1.bf16.msra.mxu0 %v1468
        %1946 = vmatprep.subr.bf16.mxu0 %v1477
        %1947 = vmatpush1.bf16.msra.mxu0 %v1476
        %1948 = vmatprep.subr.bf16.mxu0 %v1485
        %1949 = vmatpush1.bf16.msra.mxu0 %v1484
        %1950 = vmatprep.subr.bf16.mxu0 %v1493
        %1951 = vmatpush1.bf16.msra.mxu0 %v1492
        %1952 = vmatprep.subr.bf16.mxu0 %v1501
        %1953 = vmatpush1.bf16.msra.mxu0 %v1500
        %1954 = vmatprep.subr.bf16.mxu0 %v1509
        %1955 = vmatpush1.bf16.msra.mxu0 %v1508
        %1956 = vmatprep.subr.bf16.mxu0 %v1517
        %1957 = vmatpush1.bf16.msra.mxu0 %v1516
        %1958 = vmatprep.subr.bf16.mxu0 %v1525
        %1959 = vmatpush1.bf16.msra.mxu0 %v1524
        %1960 = vmatprep.subr.bf16.mxu0 %v1533
        %1961 = vmatpush1.bf16.msra.mxu0 %v1532
        %1962 = vmatprep.subr.bf16.mxu0 %v1541
        %1963 = vmatpush1.bf16.msra.mxu0 %v1540
        %1964 = vmatprep.mubr.bf16.mxu0 %v645
        %1965 = vmatmul.mubr.bf16.gmra.mrb[0].mxu0 %v644
        %v1966 = vpop.f32.mrb[0].mxu0
        %v1967 = vadd.f32 0.0, %v1966
        %v1968 = vpop.f32.mrb[0].mxu0
        %v1969 = vadd.f32 0.0, %v1968
        %v1970 = vpop.f32.mrb[0].mxu0
        %v1971 = vadd.f32 0.0, %v1970
        %v1972 = vpop.f32.mrb[0].mxu0
        %v1973 = vadd.f32 0.0, %v1972
        %1974 = vdwg.mxu0
        %1975 = vmatprep.subr.bf16.mxu0 %v1549
        %1976 = vmatpush1.bf16.msra.mxu0 %v1548
        %1977 = vmatprep.subr.bf16.mxu0 %v1557
        %1978 = vmatpush1.bf16.msra.mxu0 %v1556
        %1979 = vmatprep.subr.bf16.mxu0 %v1565
        %1980 = vmatpush1.bf16.msra.mxu0 %v1564
        %1981 = vmatprep.subr.bf16.mxu0 %v1573
        %1982 = vmatpush1.bf16.msra.mxu0 %v1572
        %1983 = vmatprep.subr.bf16.mxu0 %v1581
        %1984 = vmatpush1.bf16.msra.mxu0 %v1580
        %1985 = vmatprep.subr.bf16.mxu0 %v1589
        %1986 = vmatpush1.bf16.msra.mxu0 %v1588
        %1987 = vmatprep.subr.bf16.mxu0 %v1597
        %1988 = vmatpush1.bf16.msra.mxu0 %v1596
        %1989 = vmatprep.subr.bf16.mxu0 %v1605
        %1990 = vmatpush1.bf16.msra.mxu0 %v1604
        %1991 = vmatprep.subr.bf16.mxu0 %v1613
        %1992 = vmatpush1.bf16.msra.mxu0 %v1612
        %1993 = vmatprep.subr.bf16.mxu0 %v1621
        %1994 = vmatpush1.bf16.msra.mxu0 %v1620
        %1995 = vmatprep.subr.bf16.mxu0 %v1629
        %1996 = vmatpush1.bf16.msra.mxu0 %v1628
        %1997 = vmatprep.subr.bf16.mxu0 %v1637
        %1998 = vmatpush1.bf16.msra.mxu0 %v1636
        %1999 = vmatprep.subr.bf16.mxu0 %v1645
        %2000 = vmatpush1.bf16.msra.mxu0 %v1644
        %2001 = vmatprep.subr.bf16.mxu0 %v1653
        %2002 = vmatpush1.bf16.msra.mxu0 %v1652
        %2003 = vmatprep.subr.bf16.mxu0 %v1661
        %2004 = vmatpush1.bf16.msra.mxu0 %v1660
        %2005 = vmatprep.subr.bf16.mxu0 %v1669
        %2006 = vmatpush1.bf16.msra.mxu0 %v1668
        %2007 = vmatprep.mubr.bf16.mxu0 %v647
        %2008 = vmatmul.mubr.bf16.gmra.mrb[0].mxu0 %v646
        %v2009 = vpop.f32.mrb[0].mxu0
        %v2010 = vadd.f32 %v1967, %v2009
        %v2011 = vpop.f32.mrb[0].mxu0
        %v2012 = vadd.f32 %v1969, %v2011
        %v2013 = vpop.f32.mrb[0].mxu0
        %v2014 = vadd.f32 %v1971, %v2013
        %v2015 = vpop.f32.mrb[0].mxu0
        %v2016 = vadd.f32 %v1973, %v2015
        %2017 = vdwg.mxu0
        %2018 = vmatprep.subr.bf16.mxu0 %v1423
        %2019 = vmatpush1.bf16.msra.mxu0 %v1422
        %2020 = vmatprep.subr.bf16.mxu0 %v1431
        %2021 = vmatpush1.bf16.msra.mxu0 %v1430
        %2022 = vmatprep.subr.bf16.mxu0 %v1439
        %2023 = vmatpush1.bf16.msra.mxu0 %v1438
        %2024 = vmatprep.subr.bf16.mxu0 %v1447
        %2025 = vmatpush1.bf16.msra.mxu0 %v1446
        %2026 = vmatprep.subr.bf16.mxu0 %v1455
        %2027 = vmatpush1.bf16.msra.mxu0 %v1454
        %2028 = vmatprep.subr.bf16.mxu0 %v1463
        %2029 = vmatpush1.bf16.msra.mxu0 %v1462
        %2030 = vmatprep.subr.bf16.mxu0 %v1471
        %2031 = vmatpush1.bf16.msra.mxu0 %v1470
        %2032 = vmatprep.subr.bf16.mxu0 %v1479
        %2033 = vmatpush1.bf16.msra.mxu0 %v1478
        %2034 = vmatprep.subr.bf16.mxu0 %v1487
        %2035 = vmatpush1.bf16.msra.mxu0 %v1486
        %2036 = vmatprep.subr.bf16.mxu0 %v1495
        %2037 = vmatpush1.bf16.msra.mxu0 %v1494
        %2038 = vmatprep.subr.bf16.mxu0 %v1503
        %2039 = vmatpush1.bf16.msra.mxu0 %v1502
        %2040 = vmatprep.subr.bf16.mxu0 %v1511
        %2041 = vmatpush1.bf16.msra.mxu0 %v1510
        %2042 = vmatprep.subr.bf16.mxu0 %v1519
        %2043 = vmatpush1.bf16.msra.mxu0 %v1518
        %2044 = vmatprep.subr.bf16.mxu0 %v1527
        %2045 = vmatpush1.bf16.msra.mxu0 %v1526
        %2046 = vmatprep.subr.bf16.mxu0 %v1535
        %2047 = vmatpush1.bf16.msra.mxu0 %v1534
        %2048 = vmatprep.subr.bf16.mxu0 %v1543
        %2049 = vmatpush1.bf16.msra.mxu0 %v1542
        %2050 = vmatprep.mubr.bf16.mxu0 %v645
        %2051 = vmatmul.mubr.bf16.gmra.mrb[0].mxu0 %v644
        %v2052 = vpop.f32.mrb[0].mxu0
        %v2053 = vadd.f32 0.0, %v2052
        %v2054 = vpop.f32.mrb[0].mxu0
        %v2055 = vadd.f32 0.0, %v2054
        %v2056 = vpop.f32.mrb[0].mxu0
        %v2057 = vadd.f32 0.0, %v2056
        %v2058 = vpop.f32.mrb[0].mxu0
        %v2059 = vadd.f32 0.0, %v2058
        %2060 = vdwg.mxu0
        %2061 = vmatprep.subr.bf16.mxu0 %v1551
        %2062 = vmatpush1.bf16.msra.mxu0 %v1550
        %2063 = vmatprep.subr.bf16.mxu0 %v1559
        %2064 = vmatpush1.bf16.msra.mxu0 %v1558
        %2065 = vmatprep.subr.bf16.mxu0 %v1567
        %2066 = vmatpush1.bf16.msra.mxu0 %v1566
        %2067 = vmatprep.subr.bf16.mxu0 %v1575
        %2068 = vmatpush1.bf16.msra.mxu0 %v1574
        %2069 = vmatprep.subr.bf16.mxu0 %v1583
        %2070 = vmatpush1.bf16.msra.mxu0 %v1582
        %2071 = vmatprep.subr.bf16.mxu0 %v1591
        %2072 = vmatpush1.bf16.msra.mxu0 %v1590
        %2073 = vmatprep.subr.bf16.mxu0 %v1599
        %2074 = vmatpush1.bf16.msra.mxu0 %v1598
        %2075 = vmatprep.subr.bf16.mxu0 %v1607
        %2076 = vmatpush1.bf16.msra.mxu0 %v1606
        %2077 = vmatprep.subr.bf16.mxu0 %v1615
        %2078 = vmatpush1.bf16.msra.mxu0 %v1614
        %2079 = vmatprep.subr.bf16.mxu0 %v1623
        %2080 = vmatpush1.bf16.msra.mxu0 %v1622
        %2081 = vmatprep.subr.bf16.mxu0 %v1631
        %2082 = vmatpush1.bf16.msra.mxu0 %v1630
        %2083 = vmatprep.subr.bf16.mxu0 %v1639
        %2084 = vmatpush1.bf16.msra.mxu0 %v1638
        %2085 = vmatprep.subr.bf16.mxu0 %v1647
        %2086 = vmatpush1.bf16.msra.mxu0 %v1646
        %2087 = vmatprep.subr.bf16.mxu0 %v1655
        %2088 = vmatpush1.bf16.msra.mxu0 %v1654
        %2089 = vmatprep.subr.bf16.mxu0 %v1663
        %2090 = vmatpush1.bf16.msra.mxu0 %v1662
        %2091 = vmatprep.subr.bf16.mxu0 %v1671
        %2092 = vmatpush1.bf16.msra.mxu0 %v1670
        %2093 = vmatprep.mubr.bf16.mxu0 %v647
        %2094 = vmatmul.mubr.bf16.gmra.mrb[0].mxu0 %v646
        %v2095 = vpop.f32.mrb[0].mxu0
        %v2096 = vadd.f32 %v2053, %v2095
        %v2097 = vpop.f32.mrb[0].mxu0
        %v2098 = vadd.f32 %v2055, %v2097
        %v2099 = vpop.f32.mrb[0].mxu0
        %v2100 = vadd.f32 %v2057, %v2099
        %v2101 = vpop.f32.mrb[0].mxu0
        %v2102 = vadd.f32 %v2059, %v2101
        %2103 = vdwg.mxu0
        %2104 = vmatprep.subr.bf16.mxu0 %v1425
        %2105 = vmatpush1.bf16.msra.mxu0 %v1424
        %2106 = vmatprep.subr.bf16.mxu0 %v1433
        %2107 = vmatpush1.bf16.msra.mxu0 %v1432
        %2108 = vmatprep.subr.bf16.mxu0 %v1441
        %2109 = vmatpush1.bf16.msra.mxu0 %v1440
        %2110 = vmatprep.subr.bf16.mxu0 %v1449
        %2111 = vmatpush1.bf16.msra.mxu0 %v1448
        %2112 = vmatprep.subr.bf16.mxu0 %v1457
        %2113 = vmatpush1.bf16.msra.mxu0 %v1456
        %2114 = vmatprep.subr.bf16.mxu0 %v1465
        %2115 = vmatpush1.bf16.msra.mxu0 %v1464
        %2116 = vmatprep.subr.bf16.mxu0 %v1473
        %2117 = vmatpush1.bf16.msra.mxu0 %v1472
        %2118 = vmatprep.subr.bf16.mxu0 %v1481
        %2119 = vmatpush1.bf16.msra.mxu0 %v1480
        %2120 = vmatprep.subr.bf16.mxu0 %v1489
        %2121 = vmatpush1.bf16.msra.mxu0 %v1488
        %2122 = vmatprep.subr.bf16.mxu0 %v1497
        %2123 = vmatpush1.bf16.msra.mxu0 %v1496
        %2124 = vmatprep.subr.bf16.mxu0 %v1505
        %2125 = vmatpush1.bf16.msra.mxu0 %v1504
        %2126 = vmatprep.subr.bf16.mxu0 %v1513
        %2127 = vmatpush1.bf16.msra.mxu0 %v1512
        %2128 = vmatprep.subr.bf16.mxu0 %v1521
        %2129 = vmatpush1.bf16.msra.mxu0 %v1520
        %2130 = vmatprep.subr.bf16.mxu0 %v1529
        %2131 = vmatpush1.bf16.msra.mxu0 %v1528
        %2132 = vmatprep.subr.bf16.mxu0 %v1537
        %2133 = vmatpush1.bf16.msra.mxu0 %v1536
        %2134 = vmatprep.subr.bf16.mxu0 %v1545
        %2135 = vmatpush1.bf16.msra.mxu0 %v1544
        %2136 = vmatprep.mubr.bf16.mxu0 %v645
        %2137 = vmatmul.mubr.bf16.gmra.mrb[0].mxu0 %v644
        %v2138 = vpop.f32.mrb[0].mxu0
        %v2139 = vadd.f32 0.0, %v2138
        %v2140 = vpop.f32.mrb[0].mxu0
        %v2141 = vadd.f32 0.0, %v2140
        %v2142 = vpop.f32.mrb[0].mxu0
        %v2143 = vadd.f32 0.0, %v2142
        %v2144 = vpop.f32.mrb[0].mxu0
        %v2145 = vadd.f32 0.0, %v2144
        %2146 = vdwg.mxu0
        %2147 = vmatprep.subr.bf16.mxu0 %v1553
        %2148 = vmatpush1.bf16.msra.mxu0 %v1552
        %2149 = vmatprep.subr.bf16.mxu0 %v1561
        %2150 = vmatpush1.bf16.msra.mxu0 %v1560
        %2151 = vmatprep.subr.bf16.mxu0 %v1569
        %2152 = vmatpush1.bf16.msra.mxu0 %v1568
        %2153 = vmatprep.subr.bf16.mxu0 %v1577
        %2154 = vmatpush1.bf16.msra.mxu0 %v1576
        %2155 = vmatprep.subr.bf16.mxu0 %v1585
        %2156 = vmatpush1.bf16.msra.mxu0 %v1584
        %2157 = vmatprep.subr.bf16.mxu0 %v1593
        %2158 = vmatpush1.bf16.msra.mxu0 %v1592
        %2159 = vmatprep.subr.bf16.mxu0 %v1601
        %2160 = vmatpush1.bf16.msra.mxu0 %v1600
        %2161 = vmatprep.subr.bf16.mxu0 %v1609
        %2162 = vmatpush1.bf16.msra.mxu0 %v1608
        %2163 = vmatprep.subr.bf16.mxu0 %v1617
        %2164 = vmatpush1.bf16.msra.mxu0 %v1616
        %2165 = vmatprep.subr.bf16.mxu0 %v1625
        %2166 = vmatpush1.bf16.msra.mxu0 %v1624
        %2167 = vmatprep.subr.bf16.mxu0 %v1633
        %2168 = vmatpush1.bf16.msra.mxu0 %v1632
        %2169 = vmatprep.subr.bf16.mxu0 %v1641
        %2170 = vmatpush1.bf16.msra.mxu0 %v1640
        %2171 = vmatprep.subr.bf16.mxu0 %v1649
        %2172 = vmatpush1.bf16.msra.mxu0 %v1648
        %2173 = vmatprep.subr.bf16.mxu0 %v1657
        %2174 = vmatpush1.bf16.msra.mxu0 %v1656
        %2175 = vmatprep.subr.bf16.mxu0 %v1665
        %2176 = vmatpush1.bf16.msra.mxu0 %v1664
        %2177 = vmatprep.subr.bf16.mxu0 %v1673
        %2178 = vmatpush1.bf16.msra.mxu0 %v1672
        %2179 = vmatprep.mubr.bf16.mxu0 %v647
        %2180 = vmatmul.mubr.bf16.gmra.mrb[0].mxu0 %v646
        %v2181 = vpop.f32.mrb[0].mxu0
        %v2182 = vadd.f32 %v2139, %v2181
        %v2183 = vpop.f32.mrb[0].mxu0
        %v2184 = vadd.f32 %v2141, %v2183
        %v2185 = vpop.f32.mrb[0].mxu0
        %v2186 = vadd.f32 %v2143, %v2185
        %v2187 = vpop.f32.mrb[0].mxu0
        %v2188 = vadd.f32 %v2145, %v2187
        %2189 = vdwg.mxu0
        %2190 = vmatprep.subr.bf16.mxu0 %v1427
        %2191 = vmatpush1.bf16.msra.mxu0 %v1426
        %2192 = vmatprep.subr.bf16.mxu0 %v1435
        %2193 = vmatpush1.bf16.msra.mxu0 %v1434
        %2194 = vmatprep.subr.bf16.mxu0 %v1443
        %2195 = vmatpush1.bf16.msra.mxu0 %v1442
        %2196 = vmatprep.subr.bf16.mxu0 %v1451
        %2197 = vmatpush1.bf16.msra.mxu0 %v1450
        %2198 = vmatprep.subr.bf16.mxu0 %v1459
        %2199 = vmatpush1.bf16.msra.mxu0 %v1458
        %2200 = vmatprep.subr.bf16.mxu0 %v1467
        %2201 = vmatpush1.bf16.msra.mxu0 %v1466
        %2202 = vmatprep.subr.bf16.mxu0 %v1475
        %2203 = vmatpush1.bf16.msra.mxu0 %v1474
        %2204 = vmatprep.subr.bf16.mxu0 %v1483
        %2205 = vmatpush1.bf16.msra.mxu0 %v1482
        %2206 = vmatprep.subr.bf16.mxu0 %v1491
        %2207 = vmatpush1.bf16.msra.mxu0 %v1490
        %2208 = vmatprep.subr.bf16.mxu0 %v1499
        %2209 = vmatpush1.bf16.msra.mxu0 %v1498
        %2210 = vmatprep.subr.bf16.mxu0 %v1507
        %2211 = vmatpush1.bf16.msra.mxu0 %v1506
        %2212 = vmatprep.subr.bf16.mxu0 %v1515
        %2213 = vmatpush1.bf16.msra.mxu0 %v1514
        %2214 = vmatprep.subr.bf16.mxu0 %v1523
        %2215 = vmatpush1.bf16.msra.mxu0 %v1522
        %2216 = vmatprep.subr.bf16.mxu0 %v1531
        %2217 = vmatpush1.bf16.msra.mxu0 %v1530
        %2218 = vmatprep.subr.bf16.mxu0 %v1539
        %2219 = vmatpush1.bf16.msra.mxu0 %v1538
        %2220 = vmatprep.subr.bf16.mxu0 %v1547
        %2221 = vmatpush1.bf16.msra.mxu0 %v1546
        %2222 = vmatprep.mubr.bf16.mxu0 %v645
        %2223 = vmatmul.mubr.bf16.gmra.mrb[0].mxu0 %v644
        %v2224 = vpop.f32.mrb[0].mxu0
        %v2225 = vadd.f32 0.0, %v2224
        %v2226 = vpop.f32.mrb[0].mxu0
        %v2227 = vadd.f32 0.0, %v2226
        %v2228 = vpop.f32.mrb[0].mxu0
        %v2229 = vadd.f32 0.0, %v2228
        %v2230 = vpop.f32.mrb[0].mxu0
        %v2231 = vadd.f32 0.0, %v2230
        %2232 = vdwg.mxu0
        %2233 = vmatprep.subr.bf16.mxu0 %v1555
        %2234 = vmatpush1.bf16.msra.mxu0 %v1554
        %2235 = vmatprep.subr.bf16.mxu0 %v1563
        %2236 = vmatpush1.bf16.msra.mxu0 %v1562
        %2237 = vmatprep.subr.bf16.mxu0 %v1571
        %2238 = vmatpush1.bf16.msra.mxu0 %v1570
        %2239 = vmatprep.subr.bf16.mxu0 %v1579
        %2240 = vmatpush1.bf16.msra.mxu0 %v1578
        %2241 = vmatprep.subr.bf16.mxu0 %v1587
        %2242 = vmatpush1.bf16.msra.mxu0 %v1586
        %2243 = vmatprep.subr.bf16.mxu0 %v1595
        %2244 = vmatpush1.bf16.msra.mxu0 %v1594
        %2245 = vmatprep.subr.bf16.mxu0 %v1603
        %2246 = vmatpush1.bf16.msra.mxu0 %v1602
        %2247 = vmatprep.subr.bf16.mxu0 %v1611
        %2248 = vmatpush1.bf16.msra.mxu0 %v1610
        %2249 = vmatprep.subr.bf16.mxu0 %v1619
        %2250 = vmatpush1.bf16.msra.mxu0 %v1618
        %2251 = vmatprep.subr.bf16.mxu0 %v1627
        %2252 = vmatpush1.bf16.msra.mxu0 %v1626
        %2253 = vmatprep.subr.bf16.mxu0 %v1635
        %2254 = vmatpush1.bf16.msra.mxu0 %v1634
        %2255 = vmatprep.subr.bf16.mxu0 %v1643
        %2256 = vmatpush1.bf16.msra.mxu0 %v1642
        %2257 = vmatprep.subr.bf16.mxu0 %v1651
        %2258 = vmatpush1.bf16.msra.mxu0 %v1650
        %2259 = vmatprep.subr.bf16.mxu0 %v1659
        %2260 = vmatpush1.bf16.msra.mxu0 %v1658
        %2261 = vmatprep.subr.bf16.mxu0 %v1667
        %2262 = vmatpush1.bf16.msra.mxu0 %v1666
        %2263 = vmatprep.subr.bf16.mxu0 %v1675
        %2264 = vmatpush1.bf16.msra.mxu0 %v1674
        %2265 = vmatprep.mubr.bf16.mxu0 %v647
        %2266 = vmatmul.mubr.bf16.gmra.mrb[0].mxu0 %v646
        %v2267 = vpop.f32.mrb[0].mxu0
        %v2268 = vadd.f32 %v2225, %v2267
        %v2269 = vpop.f32.mrb[0].mxu0
        %v2270 = vadd.f32 %v2227, %v2269
        %v2271 = vpop.f32.mrb[0].mxu0
        %v2272 = vadd.f32 %v2229, %v2271
        %v2273 = vpop.f32.mrb[0].mxu0
        %v2274 = vadd.f32 %v2231, %v2273
        %2275 = vdwg.mxu0
        %v2276 = vadd.f32 %v356, %v2010
        %v2277 = vadd.f32 %v357, %v2012
        %v2278 = vadd.f32 %v358, %v2096
        %v2279 = vadd.f32 %v359, %v2098
        %v2280 = vadd.f32 %v360, %v2182
        %v2281 = vadd.f32 %v361, %v2184
        %v2282 = vadd.f32 %v362, %v2268
        %v2283 = vadd.f32 %v363, %v2270
        %v2284 = vadd.f32 %v364, %v2014
        %v2285 = vadd.f32 %v365, %v2016
        %v2286 = vadd.f32 %v366, %v2100
        %v2287 = vadd.f32 %v367, %v2102
        %v2288 = vadd.f32 %v368, %v2186
        %v2289 = vadd.f32 %v369, %v2188
        %v2290 = vadd.f32 %v370, %v2272
        %v2291 = vadd.f32 %v371, %v2274
        %2292 = vst [vmem:[#allocation2] sm:$0xff] %v2276
        %2293 = vst [vmem:[#allocation2 + $0x8] sm:$0xff] %v2277
        %2294 = vst [vmem:[#allocation2 + $0x10] sm:$0xff] %v2278
        %2295 = vst [vmem:[#allocation2 + $0x18] sm:$0xff] %v2279
        %2296 = vst [vmem:[#allocation2 + $0x20] sm:$0xff] %v2280
        %2297 = vst [vmem:[#allocation2 + $0x28] sm:$0xff] %v2281
        %2298 = vst [vmem:[#allocation2 + $0x30] sm:$0xff] %v2282
        %2299 = vst [vmem:[#allocation2 + $0x38] sm:$0xff] %v2283
        %2300 = vst [vmem:[#allocation2 + $0x40] sm:$0xff] %v2284
        %2301 = vst [vmem:[#allocation2 + $0x48] sm:$0xff] %v2285
        %2302 = vst [vmem:[#allocation2 + $0x50] sm:$0xff] %v2286
        %2303 = vst [vmem:[#allocation2 + $0x58] sm:$0xff] %v2287
        %2304 = vst [vmem:[#allocation2 + $0x60] sm:$0xff] %v2288
        %2305 = vst [vmem:[#allocation2 + $0x68] sm:$0xff] %v2289
        %2306 = vst [vmem:[#allocation2 + $0x70] sm:$0xff] %v2290
        %2307 = vst [vmem:[#allocation2 + $0x78] sm:$0xff] %v2291
        %p2308 = scmp.eq.s32.totalorder %s23, 1
        // Predicated region
        $region80: #{simplenet_forward.3} parent=58 // pred_check
          %p2309 = pneg %p2308
        $region81: #{simplenet_forward.3} parent=58 // pred_check_branch
          %2311 = sbr.rel (%p2309) target = $region83
        $region82: #{simplenet_forward.3} parent=58 // pred_region
          %v2312 = vld [vmem:[#allocation2] sm:$0xff]
          %v2313 = vld [vmem:[#allocation2 + $0x8] sm:$0xff]
          %v2314 = vld [vmem:[#allocation2 + $0x10] sm:$0xff]
          %v2315 = vld [vmem:[#allocation2 + $0x18] sm:$0xff]
          %v2316 = vld [vmem:[#allocation2 + $0x20] sm:$0xff]
          %v2317 = vld [vmem:[#allocation2 + $0x28] sm:$0xff]
          %v2318 = vld [vmem:[#allocation2 + $0x30] sm:$0xff]
          %v2319 = vld [vmem:[#allocation2 + $0x38] sm:$0xff]
          %v2320 = vld [vmem:[#allocation2 + $0x40] sm:$0xff]
          %v2321 = vld [vmem:[#allocation2 + $0x48] sm:$0xff]
          %v2322 = vld [vmem:[#allocation2 + $0x50] sm:$0xff]
          %v2323 = vld [vmem:[#allocation2 + $0x58] sm:$0xff]
          %v2324 = vld [vmem:[#allocation2 + $0x60] sm:$0xff]
          %v2325 = vld [vmem:[#allocation2 + $0x68] sm:$0xff]
          %v2326 = vld [vmem:[#allocation2 + $0x70] sm:$0xff]
          %v2327 = vld [vmem:[#allocation2 + $0x78] sm:$0xff]
          %v2328 = vld [vmem:[#allocation4] sm:$0xff]
          %v2330 = vlaneseq
          %v2331 = vshrl.u32 %v2330, 7
          %v2332 = vsub.s32 0, %v2331
          %v2333 = vrot.slane %v2328, %v2332
          %v2334 = vlaneseq
          %v2335 = vshrl.u32 %v2334, 7
          %v2336 = vsub.s32 1, %v2335
          %v2337 = vrot.slane %v2328, %v2336
          %v2338 = vlaneseq
          %v2339 = vshrl.u32 %v2338, 7
          %v2340 = vsub.s32 2, %v2339
          %v2341 = vrot.slane %v2328, %v2340
          %v2342 = vlaneseq
          %v2343 = vshrl.u32 %v2342, 7
          %v2344 = vsub.s32 3, %v2343
          %v2345 = vrot.slane %v2328, %v2344
          %v2346 = vlaneseq
          %v2347 = vshrl.u32 %v2346, 7
          %v2348 = vsub.s32 4, %v2347
          %v2349 = vrot.slane %v2328, %v2348
          %v2350 = vlaneseq
          %v2351 = vshrl.u32 %v2350, 7
          %v2352 = vsub.s32 5, %v2351
          %v2353 = vrot.slane %v2328, %v2352
          %v2354 = vlaneseq
          %v2355 = vshrl.u32 %v2354, 7
          %v2356 = vsub.s32 6, %v2355
          %v2357 = vrot.slane %v2328, %v2356
          %v2358 = vlaneseq
          %v2359 = vshrl.u32 %v2358, 7
          %v2360 = vsub.s32 7, %v2359
          %v2361 = vrot.slane %v2328, %v2360
          %v2370 = vadd.f32 %v2312, %v2333
          %v2371 = vadd.f32 %v2313, %v2337
          %v2372 = vadd.f32 %v2314, %v2341
          %v2373 = vadd.f32 %v2315, %v2345
          %v2374 = vadd.f32 %v2316, %v2349
          %v2375 = vadd.f32 %v2317, %v2353
          %v2376 = vadd.f32 %v2318, %v2357
          %v2377 = vadd.f32 %v2319, %v2361
          %v2378 = vadd.f32 %v2320, %v2333
          %v2379 = vadd.f32 %v2321, %v2337
          %v2380 = vadd.f32 %v2322, %v2341
          %v2381 = vadd.f32 %v2323, %v2345
          %v2382 = vadd.f32 %v2324, %v2349
          %v2383 = vadd.f32 %v2325, %v2353
          %v2384 = vadd.f32 %v2326, %v2357
          %v2385 = vadd.f32 %v2327, %v2361
          %v2386 = vadd.f32 %v2370, %v2371
          %v2387 = vadd.f32 %v2386, %v2372
          %v2388 = vadd.f32 %v2387, %v2373
          %v2389 = vadd.f32 %v2388, %v2374
          %v2390 = vadd.f32 %v2389, %v2375
          %v2391 = vadd.f32 %v2390, %v2376
          %v2392 = vadd.f32 %v2391, %v2377
          %2393 = vadd.xlane.f32.xlu0 %v2392
          %v2394 = vpop.xlane.xlu0 %2393
          %v2395 = vadd.f32 %v2378, %v2379
          %v2396 = vadd.f32 %v2395, %v2380
          %v2397 = vadd.f32 %v2396, %v2381
          %v2398 = vadd.f32 %v2397, %v2382
          %v2399 = vadd.f32 %v2398, %v2383
          %v2400 = vadd.f32 %v2399, %v2384
          %v2401 = vadd.f32 %v2400, %v2385
          %2402 = vadd.xlane.f32.xlu0 %v2401
          %v2403 = vpop.xlane.xlu0 %2402
          %v2404 = vrcp.pop 1024.0
          %v2405 = vmul.f32 %v2394, %v2404
          %v2406 = vmul.f32 %v2403, %v2404
          %v2407 = vsub.f32 %v2370, %v2405
          %v2408 = vsub.f32 %v2371, %v2405
          %v2409 = vsub.f32 %v2372, %v2405
          %v2410 = vsub.f32 %v2373, %v2405
          %v2411 = vsub.f32 %v2374, %v2405
          %v2412 = vsub.f32 %v2375, %v2405
          %v2413 = vsub.f32 %v2376, %v2405
          %v2414 = vsub.f32 %v2377, %v2405
          %v2415 = vsub.f32 %v2378, %v2406
          %v2416 = vsub.f32 %v2379, %v2406
          %v2417 = vsub.f32 %v2380, %v2406
          %v2418 = vsub.f32 %v2381, %v2406
          %v2419 = vsub.f32 %v2382, %v2406
          %v2420 = vsub.f32 %v2383, %v2406
          %v2421 = vsub.f32 %v2384, %v2406
          %v2422 = vsub.f32 %v2385, %v2406
          %v2423 = vmul.f32 %v2407, %v2407
          %v2424 = vmul.f32 %v2408, %v2408
          %v2425 = vmul.f32 %v2409, %v2409
          %v2426 = vmul.f32 %v2410, %v2410
          %v2427 = vmul.f32 %v2411, %v2411
          %v2428 = vmul.f32 %v2412, %v2412
          %v2429 = vmul.f32 %v2413, %v2413
          %v2430 = vmul.f32 %v2414, %v2414
          %v2431 = vmul.f32 %v2415, %v2415
          %v2432 = vmul.f32 %v2416, %v2416
          %v2433 = vmul.f32 %v2417, %v2417
          %v2434 = vmul.f32 %v2418, %v2418
          %v2435 = vmul.f32 %v2419, %v2419
          %v2436 = vmul.f32 %v2420, %v2420
          %v2437 = vmul.f32 %v2421, %v2421
          %v2438 = vmul.f32 %v2422, %v2422
          %v2439 = vadd.f32 %v2423, %v2424
          %v2440 = vadd.f32 %v2439, %v2425
          %v2441 = vadd.f32 %v2440, %v2426
          %v2442 = vadd.f32 %v2441, %v2427
          %v2443 = vadd.f32 %v2442, %v2428
          %v2444 = vadd.f32 %v2443, %v2429
          %v2445 = vadd.f32 %v2444, %v2430
          %2446 = vadd.xlane.f32.xlu0 %v2445
          %v2447 = vpop.xlane.xlu0 %2446
          %v2448 = vadd.f32 %v2431, %v2432
          %v2449 = vadd.f32 %v2448, %v2433
          %v2450 = vadd.f32 %v2449, %v2434
          %v2451 = vadd.f32 %v2450, %v2435
          %v2452 = vadd.f32 %v2451, %v2436
          %v2453 = vadd.f32 %v2452, %v2437
          %v2454 = vadd.f32 %v2453, %v2438
          %2455 = vadd.xlane.f32.xlu0 %v2454
          %v2456 = vpop.xlane.xlu0 %2455
          %v2457 = vmul.f32 %v2447, %v2404
          %v2458 = vmul.f32 %v2456, %v2404
          %v2459 = vadd.f32 %v2457, 1e-05
          %v2460 = vadd.f32 %v2458, 1e-05
          %v2461 = vrsqrt.pop %v2459
          %v2462 = vrsqrt.pop %v2460
          %v2463 = vmul.f32 %v2407, %v2461
          %v2464 = vmul.f32 %v2408, %v2461
          %v2465 = vmul.f32 %v2409, %v2461
          %v2466 = vmul.f32 %v2410, %v2461
          %v2467 = vmul.f32 %v2411, %v2461
          %v2468 = vmul.f32 %v2412, %v2461
          %v2469 = vmul.f32 %v2413, %v2461
          %v2470 = vmul.f32 %v2414, %v2461
          %v2471 = vmul.f32 %v2415, %v2462
          %v2472 = vmul.f32 %v2416, %v2462
          %v2473 = vmul.f32 %v2417, %v2462
          %v2474 = vmul.f32 %v2418, %v2462
          %v2475 = vmul.f32 %v2419, %v2462
          %v2476 = vmul.f32 %v2420, %v2462
          %v2477 = vmul.f32 %v2421, %v2462
          %v2478 = vmul.f32 %v2422, %v2462
          %v2479 = vld [vmem:[#allocation6] sm:$0xff]
          %v2481 = vlaneseq
          %v2482 = vshrl.u32 %v2481, 7
          %v2483 = vsub.s32 0, %v2482
          %v2484 = vrot.slane %v2479, %v2483
          %v2485 = vlaneseq
          %v2486 = vshrl.u32 %v2485, 7
          %v2487 = vsub.s32 1, %v2486
          %v2488 = vrot.slane %v2479, %v2487
          %v2489 = vlaneseq
          %v2490 = vshrl.u32 %v2489, 7
          %v2491 = vsub.s32 2, %v2490
          %v2492 = vrot.slane %v2479, %v2491
          %v2493 = vlaneseq
          %v2494 = vshrl.u32 %v2493, 7
          %v2495 = vsub.s32 3, %v2494
          %v2496 = vrot.slane %v2479, %v2495
          %v2497 = vlaneseq
          %v2498 = vshrl.u32 %v2497, 7
          %v2499 = vsub.s32 4, %v2498
          %v2500 = vrot.slane %v2479, %v2499
          %v2501 = vlaneseq
          %v2502 = vshrl.u32 %v2501, 7
          %v2503 = vsub.s32 5, %v2502
          %v2504 = vrot.slane %v2479, %v2503
          %v2505 = vlaneseq
          %v2506 = vshrl.u32 %v2505, 7
          %v2507 = vsub.s32 6, %v2506
          %v2508 = vrot.slane %v2479, %v2507
          %v2509 = vlaneseq
          %v2510 = vshrl.u32 %v2509, 7
          %v2511 = vsub.s32 7, %v2510
          %v2512 = vrot.slane %v2479, %v2511
          %v2521 = vmul.f32 %v2463, %v2484
          %v2522 = vmul.f32 %v2464, %v2488
          %v2523 = vmul.f32 %v2465, %v2492
          %v2524 = vmul.f32 %v2466, %v2496
          %v2525 = vmul.f32 %v2467, %v2500
          %v2526 = vmul.f32 %v2468, %v2504
          %v2527 = vmul.f32 %v2469, %v2508
          %v2528 = vmul.f32 %v2470, %v2512
          %v2529 = vmul.f32 %v2471, %v2484
          %v2530 = vmul.f32 %v2472, %v2488
          %v2531 = vmul.f32 %v2473, %v2492
          %v2532 = vmul.f32 %v2474, %v2496
          %v2533 = vmul.f32 %v2475, %v2500
          %v2534 = vmul.f32 %v2476, %v2504
          %v2535 = vmul.f32 %v2477, %v2508
          %v2536 = vmul.f32 %v2478, %v2512
          %v2537 = vld [vmem:[#allocation8] sm:$0xff]
          %v2539 = vlaneseq
          %v2540 = vshrl.u32 %v2539, 7
          %v2541 = vsub.s32 0, %v2540
          %v2542 = vrot.slane %v2537, %v2541
          %v2543 = vlaneseq
          %v2544 = vshrl.u32 %v2543, 7
          %v2545 = vsub.s32 1, %v2544
          %v2546 = vrot.slane %v2537, %v2545
          %v2547 = vlaneseq
          %v2548 = vshrl.u32 %v2547, 7
          %v2549 = vsub.s32 2, %v2548
          %v2550 = vrot.slane %v2537, %v2549
          %v2551 = vlaneseq
          %v2552 = vshrl.u32 %v2551, 7
          %v2553 = vsub.s32 3, %v2552
          %v2554 = vrot.slane %v2537, %v2553
          %v2555 = vlaneseq
          %v2556 = vshrl.u32 %v2555, 7
          %v2557 = vsub.s32 4, %v2556
          %v2558 = vrot.slane %v2537, %v2557
          %v2559 = vlaneseq
          %v2560 = vshrl.u32 %v2559, 7
          %v2561 = vsub.s32 5, %v2560
          %v2562 = vrot.slane %v2537, %v2561
          %v2563 = vlaneseq
          %v2564 = vshrl.u32 %v2563, 7
          %v2565 = vsub.s32 6, %v2564
          %v2566 = vrot.slane %v2537, %v2565
          %v2567 = vlaneseq
          %v2568 = vshrl.u32 %v2567, 7
          %v2569 = vsub.s32 7, %v2568
          %v2570 = vrot.slane %v2537, %v2569
          %v2579 = vadd.f32 %v2521, %v2542
          %v2580 = vadd.f32 %v2522, %v2546
          %v2581 = vadd.f32 %v2523, %v2550
          %v2582 = vadd.f32 %v2524, %v2554
          %v2583 = vadd.f32 %v2525, %v2558
          %v2584 = vadd.f32 %v2526, %v2562
          %v2585 = vadd.f32 %v2527, %v2566
          %v2586 = vadd.f32 %v2528, %v2570
          %v2587 = vadd.f32 %v2529, %v2542
          %v2588 = vadd.f32 %v2530, %v2546
          %v2589 = vadd.f32 %v2531, %v2550
          %v2590 = vadd.f32 %v2532, %v2554
          %v2591 = vadd.f32 %v2533, %v2558
          %v2592 = vadd.f32 %v2534, %v2562
          %v2593 = vadd.f32 %v2535, %v2566
          %v2594 = vadd.f32 %v2536, %v2570
          %v2595 = vpack.c.bf16 %v2587, %v2579
          %v2596 = vpack.c.bf16 %v2588, %v2580
          %v2597 = vpack.c.bf16 %v2589, %v2581
          %v2598 = vpack.c.bf16 %v2590, %v2582
          %v2599 = vpack.c.bf16 %v2591, %v2583
          %v2600 = vpack.c.bf16 %v2592, %v2584
          %v2601 = vpack.c.bf16 %v2593, %v2585
          %v2602 = vpack.c.bf16 %v2594, %v2586
          %v2611 = vunpack.c.l.b16 %v2595
          %v2612 = vunpack.c.l.b16 %v2596
          %v2613 = vunpack.c.l.b16 %v2597
          %v2614 = vunpack.c.l.b16 %v2598
          %v2615 = vunpack.c.l.b16 %v2599
          %v2616 = vunpack.c.l.b16 %v2600
          %v2617 = vunpack.c.l.b16 %v2601
          %v2618 = vunpack.c.l.b16 %v2602
          %v2619 = vunpack.c.h.b16 %v2595
          %v2620 = vunpack.c.h.b16 %v2596
          %v2621 = vunpack.c.h.b16 %v2597
          %v2622 = vunpack.c.h.b16 %v2598
          %v2623 = vunpack.c.h.b16 %v2599
          %v2624 = vunpack.c.h.b16 %v2600
          %v2625 = vunpack.c.h.b16 %v2601
          %v2626 = vunpack.c.h.b16 %v2602
          %v2627 = vpack.c.b16 %v2612, %v2611
          %v2628 = vpack.c.b16 %v2614, %v2613
          %v2629 = vpack.c.b16 %v2616, %v2615
          %v2630 = vpack.c.b16 %v2618, %v2617
          %v2631 = vpack.c.b16 %v2620, %v2619
          %v2632 = vpack.c.b16 %v2622, %v2621
          %v2633 = vpack.c.b16 %v2624, %v2623
          %v2634 = vpack.c.b16 %v2626, %v2625
          %2643 = vst [vmem:[%s334] sm:$0xff] %v2627
          %2644 = vst [vmem:[%s334 + $0x8] sm:$0xff] %v2628
          %2645 = vst [vmem:[%s334 + $0x10] sm:$0xff] %v2629
          %2646 = vst [vmem:[%s334 + $0x18] sm:$0xff] %v2630
          %2647 = vst [vmem:[%s334 + $0x20] sm:$0xff] %v2631
          %2648 = vst [vmem:[%s334 + $0x28] sm:$0xff] %v2632
          %2649 = vst [vmem:[%s334 + $0x30] sm:$0xff] %v2633
          %2650 = vst [vmem:[%s334 + $0x38] sm:$0xff] %v2634
        $region83: #{simplenet_forward.3} parent=58 // pred_fallthru
          _
        %s2651 = smul.u32 2, %s22
        %p2652 = scmp.lt.s32.totalorder %s2651, 3
        %s2653 = scalar_select %p2652, %s2651, 3
        %s2654 = smul.addr %s2653, 8
        %s2655 = smul.addr %s2654, 4
        %s2656 = scalar_lea.vmem %s5, %s2655
        // Predicated region
        $region84: #{simplenet_forward.3} parent=58 // pred_check
          %p2657 = pneg %p165
        $region85: #{simplenet_forward.3} parent=58 // pred_check_branch
          %2659 = sbr.rel (%p2657) target = $region87
        $region86: #{simplenet_forward.3} parent=58 // pred_region
          %s2660 = smul.u32 2, %s22
        $region87: #{simplenet_forward.3} parent=58 // pred_fallthru
          _
      $region59: #{simplenet_forward.3} parent=5 // pred_fallthru
        _
      %p2661 = scmp.le.s32.totalorder 2, %s13
      // Predicated region
      $region88: #{simplenet_forward.3} parent=5 // pred_check
        %p2662 = pneg %p2661
      $region89: #{simplenet_forward.3} parent=5 // pred_check_branch
        %2664 = sbr.rel (%p2662) target = $region91
      $region90: #{simplenet_forward.3} parent=5 // pred_region
        %s2665 = ssub.s32 %s13, 2
        // Predicated region
        $region92: #{simplenet_forward.3} parent=90 // pred_check
          %p2666 = pneg %p171
        $region93: #{simplenet_forward.3} parent=90 // pred_check_branch
          %2668 = sbr.rel (%p2666) target = $region95
        $region94: #{simplenet_forward.3} parent=90 // pred_region
          %s2669 = smul.u32 2, %s24
          %p2670 = scmp.lt.s32.totalorder %s2669, 3
          %s2671 = scalar_select %p2670, %s2669, 3
          %s2672 = smul.addr %s2671, 8
          %s2673 = smul.addr %s2672, 4
          %s2674 = scalar_lea.vmem %s5, %s2673
        $region95: #{simplenet_forward.3} parent=90 // pred_fallthru
          _
      $region91: #{simplenet_forward.3} parent=5 // pred_fallthru
        _
    $region6: #{simplenet_forward.3} parent=1 // loop_footer
      %s17 = sadd.s32 1, %s13
    $region7: #{simplenet_forward.3} parent=1 // loop_footer_branch
      %12 = sbr.rel target = $region3
    $region8: #{simplenet_forward.3} parent=1 // loop_exit
      _
    %2675 = vsyncpa [#allocation5], 1
    %s2676 = scalar_lea.sflag [#allocation5], 1
    %2677 = vsyncpa %s2676, 1
    %2678 = vsyncpa [#allocation7], 1

// kernel: simplenet_forward.4
$region0: #{simplenet_forward.4}
  #allocation0 [shape = 'u32[]', space=smem, size = 0x4, offset = 0x4, fixed_abs, tag = 'smem constant byte address 0x4 - core index']
  #allocation1 [shape = 'u32[144,128]{1,0:T(1,128)}', space=vmem, size = 0x12000, scoped, tag = 'internal scratch']
  #allocation2 [shape = 'f32[16,2048]{1,0:T(8,128)}', space=vmem, size = 0x20000, scoped, tag = 'scratch operand']
  %s0 = inlined_call_operand.vmem [shape: bf16[32,1024], index: 0, kind: input, shape index: {}]
  %s1 = inlined_call_operand.vmem [shape: bf16[1024,2048], index: 1, kind: input, shape index: {}]
  %s2 = inlined_call_operand.vmem [shape: f32[1,2048], index: 2, kind: input, shape index: {}]
  %s3 = inlined_call_operand.vmem [shape: f32[1,2048], index: 3, kind: input, shape index: {}]
  %s4 = inlined_call_operand.vmem [shape: f32[1,2048], index: 4, kind: input, shape index: {}]
  %s5 = inlined_call_operand.hbm [shape: bf16[32,2048], index: 5, kind: output, shape index: {}]
  %s6 = sld [smem:[#allocation0]]
  $region84: #{simplenet_forward.4} parent=0
    _
  %s8 = ssub.s32 1, %s6
  %s9 = scalar_select 0, %s8, %s6
  $region1: #{simplenet_forward.4} parent=0
    #allocation3 [shape = 'u8[32768]{0}', space=vmem, size = 0x8000, scoped, tag = 'input window, operand 0']
    #allocation4 [shape = 'u8[131072]{0}', space=vmem, size = 0x20000, scoped, tag = 'output window, operand 0']
    #allocation5 [shape = 's32[2]{0}', space=sflag, size = 0x8, scoped, tag = 'scoped memory for simplenet_forward.4']
    %10 = vsyncpa [#allocation5], 0
    %s11 = scalar_lea.sflag [#allocation5], 1
    %12 = vsyncpa %s11, 0
    loop: start=0, step=1, limit=6
    $region2: #{simplenet_forward.4} parent=1 // loop_pre_header
      _
    $region3: #{simplenet_forward.4} parent=1 // loop_header
      %s14 = sphi 0, %s18
      %p15 = scmp.ge.s32.totalorder %s14, 6
      %s21 = sphi 0, %s33
      %s22 = sphi 0, %s29
      %s23 = sphi 0, %s21
      %s24 = sphi 0, %s22
      %s25 = sphi 0, %s23
      %s26 = sphi 0, %s24
      %s38 = sphi 0, %s40
      %s41 = sphi 0, %s38
      %s42 = sphi 0, %s41
      %s58 = sphi 0, %s42
      %s64 = sphi 0, %s66
      %s67 = sphi 0, %s64
      %s68 = sphi 0, %s67
      %s84 = sphi 0, %s68
      %s88 = sphi 0, %s88
      %s90 = sphi 0, %s88
      %s91 = sphi 0, %s90
      %s105 = sphi 0, %s91
      %s109 = sphi 0, %s109
      %s111 = sphi 0, %s109
      %s112 = sphi 0, %s111
      %s126 = sphi 0, %s112
      %s130 = sphi 0, %s130
      %s132 = sphi 0, %s130
      %s133 = sphi 0, %s132
      %s147 = sphi 0, %s133
      %s153 = sphi 0, %s155
      %s156 = sphi 0, %s153
      %s157 = sphi 0, %s156
      %s173 = sphi 0, %s157
    $region4: #{simplenet_forward.4} parent=1 // loop_header_branch
      %17 = sbr.rel (%p15) target = $region8
    $region5: #{simplenet_forward.4} parent=1 // loop_body
      %s19 = ssub.s32 %s14, 1
      %s20 = ssub.s32 %s14, 2
      %s27 = sadd.s32 1, %s22
      %p28 = scmp.ge.s32.totalorder %s27, 2
      %s29 = scalar_select %p28, 0, %s27
      %s30 = sadd.s32 1, %s21
      %s31 = scalar_select %p28, %s30, %s21
      %p32 = scmp.ge.s32.totalorder %s31, 2
      %s33 = scalar_select %p32, 0, %s31
      %s34 = ssub.s32 %s21, %s33
      %s35 = ssub.s32 %s22, %s29
      %s36 = sor.u32 %s34, %s35
      %p37 = scmp.eq.s32.totalorder %s36, 0
      %s39 = sadd.s32 %s38, 1
      %s40 = scalar_select %p37, %s38, %s39
      %p43 = pneg %p37
      %p44 = scmp.eq.s32.totalorder %s14, 3
      %p45 = por %p43, %p44
      %p46 = scmp.ne.s32.totalorder %s38, %s41
      %p47 = scmp.eq.s32.totalorder %s14, 0
      %p48 = por %p46, %p47
      %p49 = scmp.ne.s32.totalorder %s38, %s41
      %p50 = scmp.eq.s32.totalorder %s19, 3
      %p51 = por %p49, %p50
      %p52 = scmp.ne.s32.totalorder %s41, %s42
      %p53 = scmp.eq.s32.totalorder %s19, 0
      %p54 = por %p52, %p53
      %p55 = scmp.ne.s32.totalorder %s41, %s42
      %p56 = scmp.eq.s32.totalorder %s20, 3
      %p57 = por %p55, %p56
      %p59 = scmp.ne.s32.totalorder %s42, %s58
      %p60 = scmp.eq.s32.totalorder %s20, 0
      %p61 = por %p59, %p60
      %s62 = ssub.s32 %s22, %s29
      %p63 = scmp.eq.s32.totalorder %s62, 0
      %s65 = sadd.s32 %s64, 1
      %s66 = scalar_select %p63, %s64, %s65
      %p69 = pneg %p63
      %p70 = scmp.eq.s32.totalorder %s14, 3
      %p71 = por %p69, %p70
      %p72 = scmp.ne.s32.totalorder %s64, %s67
      %p73 = scmp.eq.s32.totalorder %s14, 0
      %p74 = por %p72, %p73
      %p75 = scmp.ne.s32.totalorder %s64, %s67
      %p76 = scmp.eq.s32.totalorder %s19, 3
      %p77 = por %p75, %p76
      %p78 = scmp.ne.s32.totalorder %s67, %s68
      %p79 = scmp.eq.s32.totalorder %s19, 0
      %p80 = por %p78, %p79
      %p81 = scmp.ne.s32.totalorder %s67, %s68
      %p82 = scmp.eq.s32.totalorder %s20, 3
      %p83 = por %p81, %p82
      %p85 = scmp.ne.s32.totalorder %s68, %s84
      %p86 = scmp.eq.s32.totalorder %s20, 0
      %p87 = por %p85, %p86
      %s89 = sadd.s32 %s88, 1
      %p92 = scmp.eq.s32.totalorder %s14, 3
      %p93 = scmp.ne.s32.totalorder %s88, %s90
      %p94 = scmp.eq.s32.totalorder %s14, 0
      %p95 = por %p93, %p94
      %p96 = scmp.ne.s32.totalorder %s88, %s90
      %p97 = scmp.eq.s32.totalorder %s19, 3
      %p98 = por %p96, %p97
      %p99 = scmp.ne.s32.totalorder %s90, %s91
      %p100 = scmp.eq.s32.totalorder %s19, 0
      %p101 = por %p99, %p100
      %p102 = scmp.ne.s32.totalorder %s90, %s91
      %p103 = scmp.eq.s32.totalorder %s20, 3
      %p104 = por %p102, %p103
      %p106 = scmp.ne.s32.totalorder %s91, %s105
      %p107 = scmp.eq.s32.totalorder %s20, 0
      %p108 = por %p106, %p107
      %s110 = sadd.s32 %s109, 1
      %p113 = scmp.eq.s32.totalorder %s14, 3
      %p114 = scmp.ne.s32.totalorder %s109, %s111
      %p115 = scmp.eq.s32.totalorder %s14, 0
      %p116 = por %p114, %p115
      %p117 = scmp.ne.s32.totalorder %s109, %s111
      %p118 = scmp.eq.s32.totalorder %s19, 3
      %p119 = por %p117, %p118
      %p120 = scmp.ne.s32.totalorder %s111, %s112
      %p121 = scmp.eq.s32.totalorder %s19, 0
      %p122 = por %p120, %p121
      %p123 = scmp.ne.s32.totalorder %s111, %s112
      %p124 = scmp.eq.s32.totalorder %s20, 3
      %p125 = por %p123, %p124
      %p127 = scmp.ne.s32.totalorder %s112, %s126
      %p128 = scmp.eq.s32.totalorder %s20, 0
      %p129 = por %p127, %p128
      %s131 = sadd.s32 %s130, 1
      %p134 = scmp.eq.s32.totalorder %s14, 3
      %p135 = scmp.ne.s32.totalorder %s130, %s132
      %p136 = scmp.eq.s32.totalorder %s14, 0
      %p137 = por %p135, %p136
      %p138 = scmp.ne.s32.totalorder %s130, %s132
      %p139 = scmp.eq.s32.totalorder %s19, 3
      %p140 = por %p138, %p139
      %p141 = scmp.ne.s32.totalorder %s132, %s133
      %p142 = scmp.eq.s32.totalorder %s19, 0
      %p143 = por %p141, %p142
      %p144 = scmp.ne.s32.totalorder %s132, %s133
      %p145 = scmp.eq.s32.totalorder %s20, 3
      %p146 = por %p144, %p145
      %p148 = scmp.ne.s32.totalorder %s133, %s147
      %p149 = scmp.eq.s32.totalorder %s20, 0
      %p150 = por %p148, %p149
      %s151 = ssub.s32 %s21, %s33
      %p152 = scmp.eq.s32.totalorder %s151, 0
      %s154 = sadd.s32 %s153, 1
      %s155 = scalar_select %p152, %s153, %s154
      %p158 = pneg %p152
      %p159 = scmp.eq.s32.totalorder %s14, 3
      %p160 = por %p158, %p159
      %p161 = scmp.ne.s32.totalorder %s153, %s156
      %p162 = scmp.eq.s32.totalorder %s14, 0
      %p163 = por %p161, %p162
      %p164 = scmp.ne.s32.totalorder %s153, %s156
      %p165 = scmp.eq.s32.totalorder %s19, 3
      %p166 = por %p164, %p165
      %p167 = scmp.ne.s32.totalorder %s156, %s157
      %p168 = scmp.eq.s32.totalorder %s19, 0
      %p169 = por %p167, %p168
      %p170 = scmp.ne.s32.totalorder %s156, %s157
      %p171 = scmp.eq.s32.totalorder %s20, 3
      %p172 = por %p170, %p171
      %p174 = scmp.ne.s32.totalorder %s157, %s173
      %p175 = scmp.eq.s32.totalorder %s20, 0
      %p176 = por %p174, %p175
      %p177 = scmp.le.s32.totalorder 1, %s14
      %p178 = scmp.lt.s32.totalorder %s14, 5
      %p179 = pnand %p177, %p178
      %p180 = pneg %p179
      // Predicated region
      $region9: #{simplenet_forward.4} parent=5 // pred_check
        _
      $region10: #{simplenet_forward.4} parent=5 // pred_check_branch
        %182 = sbr.rel (%p179) target = $region12
      $region11: #{simplenet_forward.4} parent=5 // pred_region
        %s183 = ssub.s32 %s14, 1
        // Predicated region
        $region13: #{simplenet_forward.4} parent=11 // pred_check
          %p184 = pneg %p101
        $region14: #{simplenet_forward.4} parent=11 // pred_check_branch
          %186 = sbr.rel (%p184) target = $region16
        $region15: #{simplenet_forward.4} parent=11 // pred_region
          _
        $region16: #{simplenet_forward.4} parent=11 // pred_fallthru
          _
        // Predicated region
        $region17: #{simplenet_forward.4} parent=11 // pred_check
          %p187 = pneg %p122
        $region18: #{simplenet_forward.4} parent=11 // pred_check_branch
          %189 = sbr.rel (%p187) target = $region20
        $region19: #{simplenet_forward.4} parent=11 // pred_region
          _
        $region20: #{simplenet_forward.4} parent=11 // pred_fallthru
          _
        // Predicated region
        $region21: #{simplenet_forward.4} parent=11 // pred_check
          %p190 = pneg %p143
        $region22: #{simplenet_forward.4} parent=11 // pred_check_branch
          %192 = sbr.rel (%p190) target = $region24
        $region23: #{simplenet_forward.4} parent=11 // pred_region
          _
        $region24: #{simplenet_forward.4} parent=11 // pred_fallthru
          _
      $region12: #{simplenet_forward.4} parent=5 // pred_fallthru
        _
      %p193 = scmp.lt.s32.totalorder %s14, 4
      // Predicated region
      $region25: #{simplenet_forward.4} parent=5 // pred_check
        %p194 = pneg %p193
      $region26: #{simplenet_forward.4} parent=5 // pred_check_branch
        %196 = sbr.rel (%p194) target = $region28
      $region27: #{simplenet_forward.4} parent=5 // pred_region
        // Predicated region
        $region29: #{simplenet_forward.4} parent=27 // pred_check
          %p197 = pneg %p48
        $region30: #{simplenet_forward.4} parent=27 // pred_check_branch
          %199 = sbr.rel (%p197) target = $region32
        $region31: #{simplenet_forward.4} parent=27 // pred_region
          %s200 = sand.u32 %s38, 1
          %s201 = sand.u32 %s38, 1
          %s202 = smul.addr %s201, 32
          %s203 = scalar_lea.vmem [#allocation3], %s202
          %s204 = smul.u32 2, %s21
          %s205 = smul.u32 4, %s22
          %s206 = smul.addr %s204, 8
          %s207 = sadd.s32 %s205, %s206
          %s208 = smul.addr %s207, 4
          %s209 = scalar_lea.vmem %s0, %s208
          // Predicated region
          $region33: #{simplenet_forward.4} parent=31 // pred_check
            _
          $region34: #{simplenet_forward.4} parent=31 // pred_check_branch
            %211 = sbr.rel (0) target = $region36
          $region35: #{simplenet_forward.4} parent=31 // pred_region
            // Predicated region
            $region37: #{simplenet_forward.4} parent=35 // pred_check
              _
            $region38: #{simplenet_forward.4} parent=35 // pred_check_branch
              %213 = sbr.rel (0) target = $region40
            $region39: #{simplenet_forward.4} parent=35 // pred_region
              loop: start=0, step=1, limit=1
              $region41: #{simplenet_forward.4} parent=39 // loop_pre_header
                _
              $region42: #{simplenet_forward.4} parent=39 // loop_header
                %s215 = sphi 0, %s219
                %p216 = scmp.ge.s32.totalorder %s215, 1
                %s220 = sphi %s209, %s209
                %s221 = sphi %s203, %s203
              $region43: #{simplenet_forward.4} parent=39 // loop_header_branch
                %218 = sbr.rel (%p216) target = $region47
              $region44: #{simplenet_forward.4} parent=39 // loop_body
                %v222 = vld [vmem:[%s220] sm:$0xff]
                %223 = vst [vmem:[%s221] sm:$0xff] %v222
                %v224 = vld [vmem:[%s220 + $0x8] sm:$0xff]
                %225 = vst [vmem:[%s221 + $0x8] sm:$0xff] %v224
                %v226 = vld [vmem:[%s220 + $0x20] sm:$0xff]
                %227 = vst [vmem:[%s221 + $0x10] sm:$0xff] %v226
                %v228 = vld [vmem:[%s220 + $0x28] sm:$0xff]
                %229 = vst [vmem:[%s221 + $0x18] sm:$0xff] %v228
              $region45: #{simplenet_forward.4} parent=39 // loop_footer
                %s219 = sadd.s32 1, %s215
              $region46: #{simplenet_forward.4} parent=39 // loop_footer_branch
                %214 = sbr.rel target = $region42
              $region47: #{simplenet_forward.4} parent=39 // loop_exit
                _
            $region40: #{simplenet_forward.4} parent=35 // pred_fallthru
              _
            // Predicated region
            $region48: #{simplenet_forward.4} parent=35 // pred_check
              _
            $region49: #{simplenet_forward.4} parent=35 // pred_check_branch
              %231 = sbr.rel target = $region51
            $region50: #{simplenet_forward.4} parent=35 // pred_region
              _
            $region51: #{simplenet_forward.4} parent=35 // pred_fallthru
              _
          $region36: #{simplenet_forward.4} parent=31 // pred_fallthru
            _
          %232 = vnop
        $region32: #{simplenet_forward.4} parent=27 // pred_fallthru
          _
        // Predicated region
        $region52: #{simplenet_forward.4} parent=27 // pred_check
          %p233 = pneg %p74
        $region53: #{simplenet_forward.4} parent=27 // pred_check_branch
          %235 = sbr.rel (%p233) target = $region55
        $region54: #{simplenet_forward.4} parent=27 // pred_region
          %s236 = smul.u32 64, %s22
          %p237 = scmp.lt.s32.totalorder %s236, 127
          %s238 = scalar_select %p237, %s236, 127
          %s239 = smul.addr %s238, 16
          %s240 = smul.addr %s239, 4
          %s241 = scalar_lea.vmem %s1, %s240
          %s242 = smul.u32 64, %s22
        $region55: #{simplenet_forward.4} parent=27 // pred_fallthru
          _
      $region28: #{simplenet_forward.4} parent=5 // pred_fallthru
        _
      %p243 = scmp.le.s32.totalorder 1, %s14
      %p244 = scmp.lt.s32.totalorder %s14, 5
      %p245 = pnand %p243, %p244
      %p246 = pneg %p245
      // Predicated region
      $region56: #{simplenet_forward.4} parent=5 // pred_check
        _
      $region57: #{simplenet_forward.4} parent=5 // pred_check_branch
        %248 = sbr.rel (%p245) target = $region59
      $region58: #{simplenet_forward.4} parent=5 // pred_region
        %s249 = ssub.s32 %s14, 1
        %s250 = sand.u32 %s41, 1
        %s251 = sand.u32 %s41, 1
        %s252 = smul.addr %s251, 32
        %s253 = scalar_lea.vmem [#allocation3], %s252
        // Predicated region
        $region60: #{simplenet_forward.4} parent=58 // pred_check
          %p254 = pneg %p54
        $region61: #{simplenet_forward.4} parent=58 // pred_check_branch
          %256 = sbr.rel (%p254) target = $region63
        $region62: #{simplenet_forward.4} parent=58 // pred_region
          _
        $region63: #{simplenet_forward.4} parent=58 // pred_fallthru
          _
        %s257 = sand.u32 %s41, 1
        %s258 = sand.u32 %s41, 1
        %s259 = smul.addr %s258, 32
        %s260 = scalar_lea.vmem [#allocation3], %s259
        %p261 = pneg %p54
        %p262 = pneg %p51
        %s263 = smul.u32 64, %s24
        %p264 = scmp.lt.s32.totalorder %s263, 127
        %s265 = scalar_select %p264, %s263, 127
        %s266 = smul.addr %s265, 16
        %s267 = smul.addr %s266, 4
        %s268 = scalar_lea.vmem %s1, %s267
        %p269 = pneg %p80
        %p270 = pneg %p77
        %p271 = pneg %p101
        %p272 = pneg %p98
        %p273 = pneg %p122
        %p274 = pneg %p119
        %p275 = pneg %p143
        %p276 = pneg %p140
        %p277 = pneg %p169
        %p278 = pneg %p166
        %s279 = sand.u32 %s156, 1
        %s280 = scalar_lea.sflag [#allocation5], %s279
        %s281 = sand.u32 %s156, 1
        %s282 = smul.addr %s281, 128
        %s283 = scalar_lea.vmem [#allocation4], %s282
        %s284 = smul.u32 2, %s23
        %s285 = smul.u32 4, %s24
        %s286 = smul.u32 64, %s24
        %p287 = scmp.lt.s32.totalorder %s286, 127
        %s288 = scalar_select %p287, %s286, 127
        %s289 = smul.addr %s288, 16
        %s290 = smul.addr %s289, 4
        %s291 = scalar_lea.vmem %s1, %s290
        %s292 = smul.u32 64, %s24
        %s293 = smul.u32 2, %s23
        %p294 = scmp.eq.s32.totalorder %s24, 0
        // Predicated region
        $region64: #{simplenet_forward.4} parent=58 // pred_check
          %p295 = pneg %p294
        $region65: #{simplenet_forward.4} parent=58 // pred_check_branch
          %297 = sbr.rel (%p295) target = $region67
        $region66: #{simplenet_forward.4} parent=58 // pred_region
          %298 = vst [vmem:[#allocation2] sm:$0xff] 0.0
          %299 = vst [vmem:[#allocation2 + $0x8] sm:$0xff] 0.0
          %300 = vst [vmem:[#allocation2 + $0x10] sm:$0xff] 0.0
          %301 = vst [vmem:[#allocation2 + $0x18] sm:$0xff] 0.0
          %302 = vst [vmem:[#allocation2 + $0x20] sm:$0xff] 0.0
          %303 = vst [vmem:[#allocation2 + $0x28] sm:$0xff] 0.0
          %304 = vst [vmem:[#allocation2 + $0x30] sm:$0xff] 0.0
          %305 = vst [vmem:[#allocation2 + $0x38] sm:$0xff] 0.0
          %306 = vst [vmem:[#allocation2 + $0x40] sm:$0xff] 0.0
          %307 = vst [vmem:[#allocation2 + $0x48] sm:$0xff] 0.0
          %308 = vst [vmem:[#allocation2 + $0x50] sm:$0xff] 0.0
          %309 = vst [vmem:[#allocation2 + $0x58] sm:$0xff] 0.0
          %310 = vst [vmem:[#allocation2 + $0x60] sm:$0xff] 0.0
          %311 = vst [vmem:[#allocation2 + $0x68] sm:$0xff] 0.0
          %312 = vst [vmem:[#allocation2 + $0x70] sm:$0xff] 0.0
          %313 = vst [vmem:[#allocation2 + $0x78] sm:$0xff] 0.0
          %314 = vst [vmem:[#allocation2 + $0x80] sm:$0xff] 0.0
          %315 = vst [vmem:[#allocation2 + $0x88] sm:$0xff] 0.0
          %316 = vst [vmem:[#allocation2 + $0x90] sm:$0xff] 0.0
          %317 = vst [vmem:[#allocation2 + $0x98] sm:$0xff] 0.0
          %318 = vst [vmem:[#allocation2 + $0xa0] sm:$0xff] 0.0
          %319 = vst [vmem:[#allocation2 + $0xa8] sm:$0xff] 0.0
          %320 = vst [vmem:[#allocation2 + $0xb0] sm:$0xff] 0.0
          %321 = vst [vmem:[#allocation2 + $0xb8] sm:$0xff] 0.0
          %322 = vst [vmem:[#allocation2 + $0xc0] sm:$0xff] 0.0
          %323 = vst [vmem:[#allocation2 + $0xc8] sm:$0xff] 0.0
          %324 = vst [vmem:[#allocation2 + $0xd0] sm:$0xff] 0.0
          %325 = vst [vmem:[#allocation2 + $0xd8] sm:$0xff] 0.0
          %326 = vst [vmem:[#allocation2 + $0xe0] sm:$0xff] 0.0
          %327 = vst [vmem:[#allocation2 + $0xe8] sm:$0xff] 0.0
          %328 = vst [vmem:[#allocation2 + $0xf0] sm:$0xff] 0.0
          %329 = vst [vmem:[#allocation2 + $0xf8] sm:$0xff] 0.0
        $region67: #{simplenet_forward.4} parent=58 // pred_fallthru
          _
        %v330 = vld [vmem:[#allocation2] sm:$0xff]
        %v331 = vld [vmem:[#allocation2 + $0x8] sm:$0xff]
        %v332 = vld [vmem:[#allocation2 + $0x10] sm:$0xff]
        %v333 = vld [vmem:[#allocation2 + $0x18] sm:$0xff]
        %v334 = vld [vmem:[#allocation2 + $0x20] sm:$0xff]
        %v335 = vld [vmem:[#allocation2 + $0x28] sm:$0xff]
        %v336 = vld [vmem:[#allocation2 + $0x30] sm:$0xff]
        %v337 = vld [vmem:[#allocation2 + $0x38] sm:$0xff]
        %v338 = vld [vmem:[#allocation2 + $0x40] sm:$0xff]
        %v339 = vld [vmem:[#allocation2 + $0x48] sm:$0xff]
        %v340 = vld [vmem:[#allocation2 + $0x50] sm:$0xff]
        %v341 = vld [vmem:[#allocation2 + $0x58] sm:$0xff]
        %v342 = vld [vmem:[#allocation2 + $0x60] sm:$0xff]
        %v343 = vld [vmem:[#allocation2 + $0x68] sm:$0xff]
        %v344 = vld [vmem:[#allocation2 + $0x70] sm:$0xff]
        %v345 = vld [vmem:[#allocation2 + $0x78] sm:$0xff]
        %v346 = vld [vmem:[#allocation2 + $0x80] sm:$0xff]
        %v347 = vld [vmem:[#allocation2 + $0x88] sm:$0xff]
        %v348 = vld [vmem:[#allocation2 + $0x90] sm:$0xff]
        %v349 = vld [vmem:[#allocation2 + $0x98] sm:$0xff]
        %v350 = vld [vmem:[#allocation2 + $0xa0] sm:$0xff]
        %v351 = vld [vmem:[#allocation2 + $0xa8] sm:$0xff]
        %v352 = vld [vmem:[#allocation2 + $0xb0] sm:$0xff]
        %v353 = vld [vmem:[#allocation2 + $0xb8] sm:$0xff]
        %v354 = vld [vmem:[#allocation2 + $0xc0] sm:$0xff]
        %v355 = vld [vmem:[#allocation2 + $0xc8] sm:$0xff]
        %v356 = vld [vmem:[#allocation2 + $0xd0] sm:$0xff]
        %v357 = vld [vmem:[#allocation2 + $0xd8] sm:$0xff]
        %v358 = vld [vmem:[#allocation2 + $0xe0] sm:$0xff]
        %v359 = vld [vmem:[#allocation2 + $0xe8] sm:$0xff]
        %v360 = vld [vmem:[#allocation2 + $0xf0] sm:$0xff]
        %v361 = vld [vmem:[#allocation2 + $0xf8] sm:$0xff]
        %v362 = vld [vmem:[%s253] sm:$0xff]
        %v363 = vld [vmem:[%s253 + $0x8] sm:$0xff]
        %v364 = vld [vmem:[%s253 + $0x10] sm:$0xff]
        %v365 = vld [vmem:[%s253 + $0x18] sm:$0xff]
        %v366 = vld [vmem:[%s291] sm:$0xff]
        %v367 = vld [vmem:[%s291 + $0x8] sm:$0xff]
        %v368 = vld [vmem:[%s291 + $0x10] sm:$0xff]
        %v369 = vld [vmem:[%s291 + $0x18] sm:$0xff]
        %v370 = vld [vmem:[%s291 + $0x20] sm:$0xff]
        %v371 = vld [vmem:[%s291 + $0x28] sm:$0xff]
        %v372 = vld [vmem:[%s291 + $0x30] sm:$0xff]
        %v373 = vld [vmem:[%s291 + $0x38] sm:$0xff]
        %v374 = vld [vmem:[%s291 + $0x40] sm:$0xff]
        %v375 = vld [vmem:[%s291 + $0x48] sm:$0xff]
        %v376 = vld [vmem:[%s291 + $0x50] sm:$0xff]
        %v377 = vld [vmem:[%s291 + $0x58] sm:$0xff]
        %v378 = vld [vmem:[%s291 + $0x60] sm:$0xff]
        %v379 = vld [vmem:[%s291 + $0x68] sm:$0xff]
        %v380 = vld [vmem:[%s291 + $0x70] sm:$0xff]
        %v381 = vld [vmem:[%s291 + $0x78] sm:$0xff]
        %v382 = vld [vmem:[%s291 + $0x80] sm:$0xff]
        %v383 = vld [vmem:[%s291 + $0x88] sm:$0xff]
        %v384 = vld [vmem:[%s291 + $0x90] sm:$0xff]
        %v385 = vld [vmem:[%s291 + $0x98] sm:$0xff]
        %v386 = vld [vmem:[%s291 + $0xa0] sm:$0xff]
        %v387 = vld [vmem:[%s291 + $0xa8] sm:$0xff]
        %v388 = vld [vmem:[%s291 + $0xb0] sm:$0xff]
        %v389 = vld [vmem:[%s291 + $0xb8] sm:$0xff]
        %v390 = vld [vmem:[%s291 + $0xc0] sm:$0xff]
        %v391 = vld [vmem:[%s291 + $0xc8] sm:$0xff]
        %v392 = vld [vmem:[%s291 + $0xd0] sm:$0xff]
        %v393 = vld [vmem:[%s291 + $0xd8] sm:$0xff]
        %v394 = vld [vmem:[%s291 + $0xe0] sm:$0xff]
        %v395 = vld [vmem:[%s291 + $0xe8] sm:$0xff]
        %v396 = vld [vmem:[%s291 + $0xf0] sm:$0xff]
        %v397 = vld [vmem:[%s291 + $0xf8] sm:$0xff]
        %v398 = vld [vmem:[%s291 + $0x100] sm:$0xff]
        %v399 = vld [vmem:[%s291 + $0x108] sm:$0xff]
        %v400 = vld [vmem:[%s291 + $0x110] sm:$0xff]
        %v401 = vld [vmem:[%s291 + $0x118] sm:$0xff]
        %v402 = vld [vmem:[%s291 + $0x120] sm:$0xff]
        %v403 = vld [vmem:[%s291 + $0x128] sm:$0xff]
        %v404 = vld [vmem:[%s291 + $0x130] sm:$0xff]
        %v405 = vld [vmem:[%s291 + $0x138] sm:$0xff]
        %v406 = vld [vmem:[%s291 + $0x140] sm:$0xff]
        %v407 = vld [vmem:[%s291 + $0x148] sm:$0xff]
        %v408 = vld [vmem:[%s291 + $0x150] sm:$0xff]
        %v409 = vld [vmem:[%s291 + $0x158] sm:$0xff]
        %v410 = vld [vmem:[%s291 + $0x160] sm:$0xff]
        %v411 = vld [vmem:[%s291 + $0x168] sm:$0xff]
        %v412 = vld [vmem:[%s291 + $0x170] sm:$0xff]
        %v413 = vld [vmem:[%s291 + $0x178] sm:$0xff]
        %v414 = vld [vmem:[%s291 + $0x180] sm:$0xff]
        %v415 = vld [vmem:[%s291 + $0x188] sm:$0xff]
        %v416 = vld [vmem:[%s291 + $0x190] sm:$0xff]
        %v417 = vld [vmem:[%s291 + $0x198] sm:$0xff]
        %v418 = vld [vmem:[%s291 + $0x1a0] sm:$0xff]
        %v419 = vld [vmem:[%s291 + $0x1a8] sm:$0xff]
        %v420 = vld [vmem:[%s291 + $0x1b0] sm:$0xff]
        %v421 = vld [vmem:[%s291 + $0x1b8] sm:$0xff]
        %v422 = vld [vmem:[%s291 + $0x1c0] sm:$0xff]
        %v423 = vld [vmem:[%s291 + $0x1c8] sm:$0xff]
        %v424 = vld [vmem:[%s291 + $0x1d0] sm:$0xff]
        %v425 = vld [vmem:[%s291 + $0x1d8] sm:$0xff]
        %v426 = vld [vmem:[%s291 + $0x1e0] sm:$0xff]
        %v427 = vld [vmem:[%s291 + $0x1e8] sm:$0xff]
        %v428 = vld [vmem:[%s291 + $0x1f0] sm:$0xff]
        %v429 = vld [vmem:[%s291 + $0x1f8] sm:$0xff]
        %v430 = vld [vmem:[%s291 + $0x200] sm:$0xff]
        %v431 = vld [vmem:[%s291 + $0x208] sm:$0xff]
        %v432 = vld [vmem:[%s291 + $0x210] sm:$0xff]
        %v433 = vld [vmem:[%s291 + $0x218] sm:$0xff]
        %v434 = vld [vmem:[%s291 + $0x220] sm:$0xff]
        %v435 = vld [vmem:[%s291 + $0x228] sm:$0xff]
        %v436 = vld [vmem:[%s291 + $0x230] sm:$0xff]
        %v437 = vld [vmem:[%s291 + $0x238] sm:$0xff]
        %v438 = vld [vmem:[%s291 + $0x240] sm:$0xff]
        %v439 = vld [vmem:[%s291 + $0x248] sm:$0xff]
        %v440 = vld [vmem:[%s291 + $0x250] sm:$0xff]
        %v441 = vld [vmem:[%s291 + $0x258] sm:$0xff]
        %v442 = vld [vmem:[%s291 + $0x260] sm:$0xff]
        %v443 = vld [vmem:[%s291 + $0x268] sm:$0xff]
        %v444 = vld [vmem:[%s291 + $0x270] sm:$0xff]
        %v445 = vld [vmem:[%s291 + $0x278] sm:$0xff]
        %v446 = vld [vmem:[%s291 + $0x280] sm:$0xff]
        %v447 = vld [vmem:[%s291 + $0x288] sm:$0xff]
        %v448 = vld [vmem:[%s291 + $0x290] sm:$0xff]
        %v449 = vld [vmem:[%s291 + $0x298] sm:$0xff]
        %v450 = vld [vmem:[%s291 + $0x2a0] sm:$0xff]
        %v451 = vld [vmem:[%s291 + $0x2a8] sm:$0xff]
        %v452 = vld [vmem:[%s291 + $0x2b0] sm:$0xff]
        %v453 = vld [vmem:[%s291 + $0x2b8] sm:$0xff]
        %v454 = vld [vmem:[%s291 + $0x2c0] sm:$0xff]
        %v455 = vld [vmem:[%s291 + $0x2c8] sm:$0xff]
        %v456 = vld [vmem:[%s291 + $0x2d0] sm:$0xff]
        %v457 = vld [vmem:[%s291 + $0x2d8] sm:$0xff]
        %v458 = vld [vmem:[%s291 + $0x2e0] sm:$0xff]
        %v459 = vld [vmem:[%s291 + $0x2e8] sm:$0xff]
        %v460 = vld [vmem:[%s291 + $0x2f0] sm:$0xff]
        %v461 = vld [vmem:[%s291 + $0x2f8] sm:$0xff]
        %v462 = vld [vmem:[%s291 + $0x300] sm:$0xff]
        %v463 = vld [vmem:[%s291 + $0x308] sm:$0xff]
        %v464 = vld [vmem:[%s291 + $0x310] sm:$0xff]
        %v465 = vld [vmem:[%s291 + $0x318] sm:$0xff]
        %v466 = vld [vmem:[%s291 + $0x320] sm:$0xff]
        %v467 = vld [vmem:[%s291 + $0x328] sm:$0xff]
        %v468 = vld [vmem:[%s291 + $0x330] sm:$0xff]
        %v469 = vld [vmem:[%s291 + $0x338] sm:$0xff]
        %v470 = vld [vmem:[%s291 + $0x340] sm:$0xff]
        %v471 = vld [vmem:[%s291 + $0x348] sm:$0xff]
        %v472 = vld [vmem:[%s291 + $0x350] sm:$0xff]
        %v473 = vld [vmem:[%s291 + $0x358] sm:$0xff]
        %v474 = vld [vmem:[%s291 + $0x360] sm:$0xff]
        %v475 = vld [vmem:[%s291 + $0x368] sm:$0xff]
        %v476 = vld [vmem:[%s291 + $0x370] sm:$0xff]
        %v477 = vld [vmem:[%s291 + $0x378] sm:$0xff]
        %v478 = vld [vmem:[%s291 + $0x380] sm:$0xff]
        %v479 = vld [vmem:[%s291 + $0x388] sm:$0xff]
        %v480 = vld [vmem:[%s291 + $0x390] sm:$0xff]
        %v481 = vld [vmem:[%s291 + $0x398] sm:$0xff]
        %v482 = vld [vmem:[%s291 + $0x3a0] sm:$0xff]
        %v483 = vld [vmem:[%s291 + $0x3a8] sm:$0xff]
        %v484 = vld [vmem:[%s291 + $0x3b0] sm:$0xff]
        %v485 = vld [vmem:[%s291 + $0x3b8] sm:$0xff]
        %v486 = vld [vmem:[%s291 + $0x3c0] sm:$0xff]
        %v487 = vld [vmem:[%s291 + $0x3c8] sm:$0xff]
        %v488 = vld [vmem:[%s291 + $0x3d0] sm:$0xff]
        %v489 = vld [vmem:[%s291 + $0x3d8] sm:$0xff]
        %v490 = vld [vmem:[%s291 + $0x3e0] sm:$0xff]
        %v491 = vld [vmem:[%s291 + $0x3e8] sm:$0xff]
        %v492 = vld [vmem:[%s291 + $0x3f0] sm:$0xff]
        %v493 = vld [vmem:[%s291 + $0x3f8] sm:$0xff]
        %v494 = vld [vmem:[%s291 + $0x400] sm:$0xff]
        %v495 = vld [vmem:[%s291 + $0x408] sm:$0xff]
        %v496 = vld [vmem:[%s291 + $0x410] sm:$0xff]
        %v497 = vld [vmem:[%s291 + $0x418] sm:$0xff]
        %v498 = vld [vmem:[%s291 + $0x420] sm:$0xff]
        %v499 = vld [vmem:[%s291 + $0x428] sm:$0xff]
        %v500 = vld [vmem:[%s291 + $0x430] sm:$0xff]
        %v501 = vld [vmem:[%s291 + $0x438] sm:$0xff]
        %v502 = vld [vmem:[%s291 + $0x440] sm:$0xff]
        %v503 = vld [vmem:[%s291 + $0x448] sm:$0xff]
        %v504 = vld [vmem:[%s291 + $0x450] sm:$0xff]
        %v505 = vld [vmem:[%s291 + $0x458] sm:$0xff]
        %v506 = vld [vmem:[%s291 + $0x460] sm:$0xff]
        %v507 = vld [vmem:[%s291 + $0x468] sm:$0xff]
        %v508 = vld [vmem:[%s291 + $0x470] sm:$0xff]
        %v509 = vld [vmem:[%s291 + $0x478] sm:$0xff]
        %v510 = vld [vmem:[%s291 + $0x480] sm:$0xff]
        %v511 = vld [vmem:[%s291 + $0x488] sm:$0xff]
        %v512 = vld [vmem:[%s291 + $0x490] sm:$0xff]
        %v513 = vld [vmem:[%s291 + $0x498] sm:$0xff]
        %v514 = vld [vmem:[%s291 + $0x4a0] sm:$0xff]
        %v515 = vld [vmem:[%s291 + $0x4a8] sm:$0xff]
        %v516 = vld [vmem:[%s291 + $0x4b0] sm:$0xff]
        %v517 = vld [vmem:[%s291 + $0x4b8] sm:$0xff]
        %v518 = vld [vmem:[%s291 + $0x4c0] sm:$0xff]
        %v519 = vld [vmem:[%s291 + $0x4c8] sm:$0xff]
        %v520 = vld [vmem:[%s291 + $0x4d0] sm:$0xff]
        %v521 = vld [vmem:[%s291 + $0x4d8] sm:$0xff]
        %v522 = vld [vmem:[%s291 + $0x4e0] sm:$0xff]
        %v523 = vld [vmem:[%s291 + $0x4e8] sm:$0xff]
        %v524 = vld [vmem:[%s291 + $0x4f0] sm:$0xff]
        %v525 = vld [vmem:[%s291 + $0x4f8] sm:$0xff]
        %v526 = vld [vmem:[%s291 + $0x500] sm:$0xff]
        %v527 = vld [vmem:[%s291 + $0x508] sm:$0xff]
        %v528 = vld [vmem:[%s291 + $0x510] sm:$0xff]
        %v529 = vld [vmem:[%s291 + $0x518] sm:$0xff]
        %v530 = vld [vmem:[%s291 + $0x520] sm:$0xff]
        %v531 = vld [vmem:[%s291 + $0x528] sm:$0xff]
        %v532 = vld [vmem:[%s291 + $0x530] sm:$0xff]
        %v533 = vld [vmem:[%s291 + $0x538] sm:$0xff]
        %v534 = vld [vmem:[%s291 + $0x540] sm:$0xff]
        %v535 = vld [vmem:[%s291 + $0x548] sm:$0xff]
        %v536 = vld [vmem:[%s291 + $0x550] sm:$0xff]
        %v537 = vld [vmem:[%s291 + $0x558] sm:$0xff]
        %v538 = vld [vmem:[%s291 + $0x560] sm:$0xff]
        %v539 = vld [vmem:[%s291 + $0x568] sm:$0xff]
        %v540 = vld [vmem:[%s291 + $0x570] sm:$0xff]
        %v541 = vld [vmem:[%s291 + $0x578] sm:$0xff]
        %v542 = vld [vmem:[%s291 + $0x580] sm:$0xff]
        %v543 = vld [vmem:[%s291 + $0x588] sm:$0xff]
        %v544 = vld [vmem:[%s291 + $0x590] sm:$0xff]
        %v545 = vld [vmem:[%s291 + $0x598] sm:$0xff]
        %v546 = vld [vmem:[%s291 + $0x5a0] sm:$0xff]
        %v547 = vld [vmem:[%s291 + $0x5a8] sm:$0xff]
        %v548 = vld [vmem:[%s291 + $0x5b0] sm:$0xff]
        %v549 = vld [vmem:[%s291 + $0x5b8] sm:$0xff]
        %v550 = vld [vmem:[%s291 + $0x5c0] sm:$0xff]
        %v551 = vld [vmem:[%s291 + $0x5c8] sm:$0xff]
        %v552 = vld [vmem:[%s291 + $0x5d0] sm:$0xff]
        %v553 = vld [vmem:[%s291 + $0x5d8] sm:$0xff]
        %v554 = vld [vmem:[%s291 + $0x5e0] sm:$0xff]
        %v555 = vld [vmem:[%s291 + $0x5e8] sm:$0xff]
        %v556 = vld [vmem:[%s291 + $0x5f0] sm:$0xff]
        %v557 = vld [vmem:[%s291 + $0x5f8] sm:$0xff]
        %v558 = vld [vmem:[%s291 + $0x600] sm:$0xff]
        %v559 = vld [vmem:[%s291 + $0x608] sm:$0xff]
        %v560 = vld [vmem:[%s291 + $0x610] sm:$0xff]
        %v561 = vld [vmem:[%s291 + $0x618] sm:$0xff]
        %v562 = vld [vmem:[%s291 + $0x620] sm:$0xff]
        %v563 = vld [vmem:[%s291 + $0x628] sm:$0xff]
        %v564 = vld [vmem:[%s291 + $0x630] sm:$0xff]
        %v565 = vld [vmem:[%s291 + $0x638] sm:$0xff]
        %v566 = vld [vmem:[%s291 + $0x640] sm:$0xff]
        %v567 = vld [vmem:[%s291 + $0x648] sm:$0xff]
        %v568 = vld [vmem:[%s291 + $0x650] sm:$0xff]
        %v569 = vld [vmem:[%s291 + $0x658] sm:$0xff]
        %v570 = vld [vmem:[%s291 + $0x660] sm:$0xff]
        %v571 = vld [vmem:[%s291 + $0x668] sm:$0xff]
        %v572 = vld [vmem:[%s291 + $0x670] sm:$0xff]
        %v573 = vld [vmem:[%s291 + $0x678] sm:$0xff]
        %v574 = vld [vmem:[%s291 + $0x680] sm:$0xff]
        %v575 = vld [vmem:[%s291 + $0x688] sm:$0xff]
        %v576 = vld [vmem:[%s291 + $0x690] sm:$0xff]
        %v577 = vld [vmem:[%s291 + $0x698] sm:$0xff]
        %v578 = vld [vmem:[%s291 + $0x6a0] sm:$0xff]
        %v579 = vld [vmem:[%s291 + $0x6a8] sm:$0xff]
        %v580 = vld [vmem:[%s291 + $0x6b0] sm:$0xff]
        %v581 = vld [vmem:[%s291 + $0x6b8] sm:$0xff]
        %v582 = vld [vmem:[%s291 + $0x6c0] sm:$0xff]
        %v583 = vld [vmem:[%s291 + $0x6c8] sm:$0xff]
        %v584 = vld [vmem:[%s291 + $0x6d0] sm:$0xff]
        %v585 = vld [vmem:[%s291 + $0x6d8] sm:$0xff]
        %v586 = vld [vmem:[%s291 + $0x6e0] sm:$0xff]
        %v587 = vld [vmem:[%s291 + $0x6e8] sm:$0xff]
        %v588 = vld [vmem:[%s291 + $0x6f0] sm:$0xff]
        %v589 = vld [vmem:[%s291 + $0x6f8] sm:$0xff]
        %v590 = vld [vmem:[%s291 + $0x700] sm:$0xff]
        %v591 = vld [vmem:[%s291 + $0x708] sm:$0xff]
        %v592 = vld [vmem:[%s291 + $0x710] sm:$0xff]
        %v593 = vld [vmem:[%s291 + $0x718] sm:$0xff]
        %v594 = vld [vmem:[%s291 + $0x720] sm:$0xff]
        %v595 = vld [vmem:[%s291 + $0x728] sm:$0xff]
        %v596 = vld [vmem:[%s291 + $0x730] sm:$0xff]
        %v597 = vld [vmem:[%s291 + $0x738] sm:$0xff]
        %v598 = vld [vmem:[%s291 + $0x740] sm:$0xff]
        %v599 = vld [vmem:[%s291 + $0x748] sm:$0xff]
        %v600 = vld [vmem:[%s291 + $0x750] sm:$0xff]
        %v601 = vld [vmem:[%s291 + $0x758] sm:$0xff]
        %v602 = vld [vmem:[%s291 + $0x760] sm:$0xff]
        %v603 = vld [vmem:[%s291 + $0x768] sm:$0xff]
        %v604 = vld [vmem:[%s291 + $0x770] sm:$0xff]
        %v605 = vld [vmem:[%s291 + $0x778] sm:$0xff]
        %v606 = vld [vmem:[%s291 + $0x780] sm:$0xff]
        %v607 = vld [vmem:[%s291 + $0x788] sm:$0xff]
        %v608 = vld [vmem:[%s291 + $0x790] sm:$0xff]
        %v609 = vld [vmem:[%s291 + $0x798] sm:$0xff]
        %v610 = vld [vmem:[%s291 + $0x7a0] sm:$0xff]
        %v611 = vld [vmem:[%s291 + $0x7a8] sm:$0xff]
        %v612 = vld [vmem:[%s291 + $0x7b0] sm:$0xff]
        %v613 = vld [vmem:[%s291 + $0x7b8] sm:$0xff]
        %v614 = vld [vmem:[%s291 + $0x7c0] sm:$0xff]
        %v615 = vld [vmem:[%s291 + $0x7c8] sm:$0xff]
        %v616 = vld [vmem:[%s291 + $0x7d0] sm:$0xff]
        %v617 = vld [vmem:[%s291 + $0x7d8] sm:$0xff]
        %v618 = vld [vmem:[%s291 + $0x7e0] sm:$0xff]
        %v619 = vld [vmem:[%s291 + $0x7e8] sm:$0xff]
        %v620 = vld [vmem:[%s291 + $0x7f0] sm:$0xff]
        %v621 = vld [vmem:[%s291 + $0x7f8] sm:$0xff]
        %v622 = vld [vmem:[%s291 + $0x800] sm:$0xff]
        %v623 = vld [vmem:[%s291 + $0x808] sm:$0xff]
        %v624 = vld [vmem:[%s291 + $0x810] sm:$0xff]
        %v625 = vld [vmem:[%s291 + $0x818] sm:$0xff]
        %v626 = vld [vmem:[%s291 + $0x820] sm:$0xff]
        %v627 = vld [vmem:[%s291 + $0x828] sm:$0xff]
        %v628 = vld [vmem:[%s291 + $0x830] sm:$0xff]
        %v629 = vld [vmem:[%s291 + $0x838] sm:$0xff]
        %v630 = vld [vmem:[%s291 + $0x840] sm:$0xff]
        %v631 = vld [vmem:[%s291 + $0x848] sm:$0xff]
        %v632 = vld [vmem:[%s291 + $0x850] sm:$0xff]
        %v633 = vld [vmem:[%s291 + $0x858] sm:$0xff]
        %v634 = vld [vmem:[%s291 + $0x860] sm:$0xff]
        %v635 = vld [vmem:[%s291 + $0x868] sm:$0xff]
        %v636 = vld [vmem:[%s291 + $0x870] sm:$0xff]
        %v637 = vld [vmem:[%s291 + $0x878] sm:$0xff]
        %v638 = vld [vmem:[%s291 + $0x880] sm:$0xff]
        %v639 = vld [vmem:[%s291 + $0x888] sm:$0xff]
        %v640 = vld [vmem:[%s291 + $0x890] sm:$0xff]
        %v641 = vld [vmem:[%s291 + $0x898] sm:$0xff]
        %v642 = vld [vmem:[%s291 + $0x8a0] sm:$0xff]
        %v643 = vld [vmem:[%s291 + $0x8a8] sm:$0xff]
        %v644 = vld [vmem:[%s291 + $0x8b0] sm:$0xff]
        %v645 = vld [vmem:[%s291 + $0x8b8] sm:$0xff]
        %v646 = vld [vmem:[%s291 + $0x8c0] sm:$0xff]
        %v647 = vld [vmem:[%s291 + $0x8c8] sm:$0xff]
        %v648 = vld [vmem:[%s291 + $0x8d0] sm:$0xff]
        %v649 = vld [vmem:[%s291 + $0x8d8] sm:$0xff]
        %v650 = vld [vmem:[%s291 + $0x8e0] sm:$0xff]
        %v651 = vld [vmem:[%s291 + $0x8e8] sm:$0xff]
        %v652 = vld [vmem:[%s291 + $0x8f0] sm:$0xff]
        %v653 = vld [vmem:[%s291 + $0x8f8] sm:$0xff]
        %v654 = vld [vmem:[%s291 + $0x900] sm:$0xff]
        %v655 = vld [vmem:[%s291 + $0x908] sm:$0xff]
        %v656 = vld [vmem:[%s291 + $0x910] sm:$0xff]
        %v657 = vld [vmem:[%s291 + $0x918] sm:$0xff]
        %v658 = vld [vmem:[%s291 + $0x920] sm:$0xff]
        %v659 = vld [vmem:[%s291 + $0x928] sm:$0xff]
        %v660 = vld [vmem:[%s291 + $0x930] sm:$0xff]
        %v661 = vld [vmem:[%s291 + $0x938] sm:$0xff]
        %v662 = vld [vmem:[%s291 + $0x940] sm:$0xff]
        %v663 = vld [vmem:[%s291 + $0x948] sm:$0xff]
        %v664 = vld [vmem:[%s291 + $0x950] sm:$0xff]
        %v665 = vld [vmem:[%s291 + $0x958] sm:$0xff]
        %v666 = vld [vmem:[%s291 + $0x960] sm:$0xff]
        %v667 = vld [vmem:[%s291 + $0x968] sm:$0xff]
        %v668 = vld [vmem:[%s291 + $0x970] sm:$0xff]
        %v669 = vld [vmem:[%s291 + $0x978] sm:$0xff]
        %v670 = vld [vmem:[%s291 + $0x980] sm:$0xff]
        %v671 = vld [vmem:[%s291 + $0x988] sm:$0xff]
        %v672 = vld [vmem:[%s291 + $0x990] sm:$0xff]
        %v673 = vld [vmem:[%s291 + $0x998] sm:$0xff]
        %v674 = vld [vmem:[%s291 + $0x9a0] sm:$0xff]
        %v675 = vld [vmem:[%s291 + $0x9a8] sm:$0xff]
        %v676 = vld [vmem:[%s291 + $0x9b0] sm:$0xff]
        %v677 = vld [vmem:[%s291 + $0x9b8] sm:$0xff]
        %v678 = vld [vmem:[%s291 + $0x9c0] sm:$0xff]
        %v679 = vld [vmem:[%s291 + $0x9c8] sm:$0xff]
        %v680 = vld [vmem:[%s291 + $0x9d0] sm:$0xff]
        %v681 = vld [vmem:[%s291 + $0x9d8] sm:$0xff]
        %v682 = vld [vmem:[%s291 + $0x9e0] sm:$0xff]
        %v683 = vld [vmem:[%s291 + $0x9e8] sm:$0xff]
        %v684 = vld [vmem:[%s291 + $0x9f0] sm:$0xff]
        %v685 = vld [vmem:[%s291 + $0x9f8] sm:$0xff]
        %v686 = vld [vmem:[%s291 + $0xa00] sm:$0xff]
        %v687 = vld [vmem:[%s291 + $0xa08] sm:$0xff]
        %v688 = vld [vmem:[%s291 + $0xa10] sm:$0xff]
        %v689 = vld [vmem:[%s291 + $0xa18] sm:$0xff]
        %v690 = vld [vmem:[%s291 + $0xa20] sm:$0xff]
        %v691 = vld [vmem:[%s291 + $0xa28] sm:$0xff]
        %v692 = vld [vmem:[%s291 + $0xa30] sm:$0xff]
        %v693 = vld [vmem:[%s291 + $0xa38] sm:$0xff]
        %v694 = vld [vmem:[%s291 + $0xa40] sm:$0xff]
        %v695 = vld [vmem:[%s291 + $0xa48] sm:$0xff]
        %v696 = vld [vmem:[%s291 + $0xa50] sm:$0xff]
        %v697 = vld [vmem:[%s291 + $0xa58] sm:$0xff]
        %v698 = vld [vmem:[%s291 + $0xa60] sm:$0xff]
        %v699 = vld [vmem:[%s291 + $0xa68] sm:$0xff]
        %v700 = vld [vmem:[%s291 + $0xa70] sm:$0xff]
        %v701 = vld [vmem:[%s291 + $0xa78] sm:$0xff]
        %v702 = vld [vmem:[%s291 + $0xa80] sm:$0xff]
        %v703 = vld [vmem:[%s291 + $0xa88] sm:$0xff]
        %v704 = vld [vmem:[%s291 + $0xa90] sm:$0xff]
        %v705 = vld [vmem:[%s291 + $0xa98] sm:$0xff]
        %v706 = vld [vmem:[%s291 + $0xaa0] sm:$0xff]
        %v707 = vld [vmem:[%s291 + $0xaa8] sm:$0xff]
        %v708 = vld [vmem:[%s291 + $0xab0] sm:$0xff]
        %v709 = vld [vmem:[%s291 + $0xab8] sm:$0xff]
        %v710 = vld [vmem:[%s291 + $0xac0] sm:$0xff]
        %v711 = vld [vmem:[%s291 + $0xac8] sm:$0xff]
        %v712 = vld [vmem:[%s291 + $0xad0] sm:$0xff]
        %v713 = vld [vmem:[%s291 + $0xad8] sm:$0xff]
        %v714 = vld [vmem:[%s291 + $0xae0] sm:$0xff]
        %v715 = vld [vmem:[%s291 + $0xae8] sm:$0xff]
        %v716 = vld [vmem:[%s291 + $0xaf0] sm:$0xff]
        %v717 = vld [vmem:[%s291 + $0xaf8] sm:$0xff]
        %v718 = vld [vmem:[%s291 + $0xb00] sm:$0xff]
        %v719 = vld [vmem:[%s291 + $0xb08] sm:$0xff]
        %v720 = vld [vmem:[%s291 + $0xb10] sm:$0xff]
        %v721 = vld [vmem:[%s291 + $0xb18] sm:$0xff]
        %v722 = vld [vmem:[%s291 + $0xb20] sm:$0xff]
        %v723 = vld [vmem:[%s291 + $0xb28] sm:$0xff]
        %v724 = vld [vmem:[%s291 + $0xb30] sm:$0xff]
        %v725 = vld [vmem:[%s291 + $0xb38] sm:$0xff]
        %v726 = vld [vmem:[%s291 + $0xb40] sm:$0xff]
        %v727 = vld [vmem:[%s291 + $0xb48] sm:$0xff]
        %v728 = vld [vmem:[%s291 + $0xb50] sm:$0xff]
        %v729 = vld [vmem:[%s291 + $0xb58] sm:$0xff]
        %v730 = vld [vmem:[%s291 + $0xb60] sm:$0xff]
        %v731 = vld [vmem:[%s291 + $0xb68] sm:$0xff]
        %v732 = vld [vmem:[%s291 + $0xb70] sm:$0xff]
        %v733 = vld [vmem:[%s291 + $0xb78] sm:$0xff]
        %v734 = vld [vmem:[%s291 + $0xb80] sm:$0xff]
        %v735 = vld [vmem:[%s291 + $0xb88] sm:$0xff]
        %v736 = vld [vmem:[%s291 + $0xb90] sm:$0xff]
        %v737 = vld [vmem:[%s291 + $0xb98] sm:$0xff]
        %v738 = vld [vmem:[%s291 + $0xba0] sm:$0xff]
        %v739 = vld [vmem:[%s291 + $0xba8] sm:$0xff]
        %v740 = vld [vmem:[%s291 + $0xbb0] sm:$0xff]
        %v741 = vld [vmem:[%s291 + $0xbb8] sm:$0xff]
        %v742 = vld [vmem:[%s291 + $0xbc0] sm:$0xff]
        %v743 = vld [vmem:[%s291 + $0xbc8] sm:$0xff]
        %v744 = vld [vmem:[%s291 + $0xbd0] sm:$0xff]
        %v745 = vld [vmem:[%s291 + $0xbd8] sm:$0xff]
        %v746 = vld [vmem:[%s291 + $0xbe0] sm:$0xff]
        %v747 = vld [vmem:[%s291 + $0xbe8] sm:$0xff]
        %v748 = vld [vmem:[%s291 + $0xbf0] sm:$0xff]
        %v749 = vld [vmem:[%s291 + $0xbf8] sm:$0xff]
        %v750 = vld [vmem:[%s291 + $0xc00] sm:$0xff]
        %v751 = vld [vmem:[%s291 + $0xc08] sm:$0xff]
        %v752 = vld [vmem:[%s291 + $0xc10] sm:$0xff]
        %v753 = vld [vmem:[%s291 + $0xc18] sm:$0xff]
        %v754 = vld [vmem:[%s291 + $0xc20] sm:$0xff]
        %v755 = vld [vmem:[%s291 + $0xc28] sm:$0xff]
        %v756 = vld [vmem:[%s291 + $0xc30] sm:$0xff]
        %v757 = vld [vmem:[%s291 + $0xc38] sm:$0xff]
        %v758 = vld [vmem:[%s291 + $0xc40] sm:$0xff]
        %v759 = vld [vmem:[%s291 + $0xc48] sm:$0xff]
        %v760 = vld [vmem:[%s291 + $0xc50] sm:$0xff]
        %v761 = vld [vmem:[%s291 + $0xc58] sm:$0xff]
        %v762 = vld [vmem:[%s291 + $0xc60] sm:$0xff]
        %v763 = vld [vmem:[%s291 + $0xc68] sm:$0xff]
        %v764 = vld [vmem:[%s291 + $0xc70] sm:$0xff]
        %v765 = vld [vmem:[%s291 + $0xc78] sm:$0xff]
        %v766 = vld [vmem:[%s291 + $0xc80] sm:$0xff]
        %v767 = vld [vmem:[%s291 + $0xc88] sm:$0xff]
        %v768 = vld [vmem:[%s291 + $0xc90] sm:$0xff]
        %v769 = vld [vmem:[%s291 + $0xc98] sm:$0xff]
        %v770 = vld [vmem:[%s291 + $0xca0] sm:$0xff]
        %v771 = vld [vmem:[%s291 + $0xca8] sm:$0xff]
        %v772 = vld [vmem:[%s291 + $0xcb0] sm:$0xff]
        %v773 = vld [vmem:[%s291 + $0xcb8] sm:$0xff]
        %v774 = vld [vmem:[%s291 + $0xcc0] sm:$0xff]
        %v775 = vld [vmem:[%s291 + $0xcc8] sm:$0xff]
        %v776 = vld [vmem:[%s291 + $0xcd0] sm:$0xff]
        %v777 = vld [vmem:[%s291 + $0xcd8] sm:$0xff]
        %v778 = vld [vmem:[%s291 + $0xce0] sm:$0xff]
        %v779 = vld [vmem:[%s291 + $0xce8] sm:$0xff]
        %v780 = vld [vmem:[%s291 + $0xcf0] sm:$0xff]
        %v781 = vld [vmem:[%s291 + $0xcf8] sm:$0xff]
        %v782 = vld [vmem:[%s291 + $0xd00] sm:$0xff]
        %v783 = vld [vmem:[%s291 + $0xd08] sm:$0xff]
        %v784 = vld [vmem:[%s291 + $0xd10] sm:$0xff]
        %v785 = vld [vmem:[%s291 + $0xd18] sm:$0xff]
        %v786 = vld [vmem:[%s291 + $0xd20] sm:$0xff]
        %v787 = vld [vmem:[%s291 + $0xd28] sm:$0xff]
        %v788 = vld [vmem:[%s291 + $0xd30] sm:$0xff]
        %v789 = vld [vmem:[%s291 + $0xd38] sm:$0xff]
        %v790 = vld [vmem:[%s291 + $0xd40] sm:$0xff]
        %v791 = vld [vmem:[%s291 + $0xd48] sm:$0xff]
        %v792 = vld [vmem:[%s291 + $0xd50] sm:$0xff]
        %v793 = vld [vmem:[%s291 + $0xd58] sm:$0xff]
        %v794 = vld [vmem:[%s291 + $0xd60] sm:$0xff]
        %v795 = vld [vmem:[%s291 + $0xd68] sm:$0xff]
        %v796 = vld [vmem:[%s291 + $0xd70] sm:$0xff]
        %v797 = vld [vmem:[%s291 + $0xd78] sm:$0xff]
        %v798 = vld [vmem:[%s291 + $0xd80] sm:$0xff]
        %v799 = vld [vmem:[%s291 + $0xd88] sm:$0xff]
        %v800 = vld [vmem:[%s291 + $0xd90] sm:$0xff]
        %v801 = vld [vmem:[%s291 + $0xd98] sm:$0xff]
        %v802 = vld [vmem:[%s291 + $0xda0] sm:$0xff]
        %v803 = vld [vmem:[%s291 + $0xda8] sm:$0xff]
        %v804 = vld [vmem:[%s291 + $0xdb0] sm:$0xff]
        %v805 = vld [vmem:[%s291 + $0xdb8] sm:$0xff]
        %v806 = vld [vmem:[%s291 + $0xdc0] sm:$0xff]
        %v807 = vld [vmem:[%s291 + $0xdc8] sm:$0xff]
        %v808 = vld [vmem:[%s291 + $0xdd0] sm:$0xff]
        %v809 = vld [vmem:[%s291 + $0xdd8] sm:$0xff]
        %v810 = vld [vmem:[%s291 + $0xde0] sm:$0xff]
        %v811 = vld [vmem:[%s291 + $0xde8] sm:$0xff]
        %v812 = vld [vmem:[%s291 + $0xdf0] sm:$0xff]
        %v813 = vld [vmem:[%s291 + $0xdf8] sm:$0xff]
        %v814 = vld [vmem:[%s291 + $0xe00] sm:$0xff]
        %v815 = vld [vmem:[%s291 + $0xe08] sm:$0xff]
        %v816 = vld [vmem:[%s291 + $0xe10] sm:$0xff]
        %v817 = vld [vmem:[%s291 + $0xe18] sm:$0xff]
        %v818 = vld [vmem:[%s291 + $0xe20] sm:$0xff]
        %v819 = vld [vmem:[%s291 + $0xe28] sm:$0xff]
        %v820 = vld [vmem:[%s291 + $0xe30] sm:$0xff]
        %v821 = vld [vmem:[%s291 + $0xe38] sm:$0xff]
        %v822 = vld [vmem:[%s291 + $0xe40] sm:$0xff]
        %v823 = vld [vmem:[%s291 + $0xe48] sm:$0xff]
        %v824 = vld [vmem:[%s291 + $0xe50] sm:$0xff]
        %v825 = vld [vmem:[%s291 + $0xe58] sm:$0xff]
        %v826 = vld [vmem:[%s291 + $0xe60] sm:$0xff]
        %v827 = vld [vmem:[%s291 + $0xe68] sm:$0xff]
        %v828 = vld [vmem:[%s291 + $0xe70] sm:$0xff]
        %v829 = vld [vmem:[%s291 + $0xe78] sm:$0xff]
        %v830 = vld [vmem:[%s291 + $0xe80] sm:$0xff]
        %v831 = vld [vmem:[%s291 + $0xe88] sm:$0xff]
        %v832 = vld [vmem:[%s291 + $0xe90] sm:$0xff]
        %v833 = vld [vmem:[%s291 + $0xe98] sm:$0xff]
        %v834 = vld [vmem:[%s291 + $0xea0] sm:$0xff]
        %v835 = vld [vmem:[%s291 + $0xea8] sm:$0xff]
        %v836 = vld [vmem:[%s291 + $0xeb0] sm:$0xff]
        %v837 = vld [vmem:[%s291 + $0xeb8] sm:$0xff]
        %v838 = vld [vmem:[%s291 + $0xec0] sm:$0xff]
        %v839 = vld [vmem:[%s291 + $0xec8] sm:$0xff]
        %v840 = vld [vmem:[%s291 + $0xed0] sm:$0xff]
        %v841 = vld [vmem:[%s291 + $0xed8] sm:$0xff]
        %v842 = vld [vmem:[%s291 + $0xee0] sm:$0xff]
        %v843 = vld [vmem:[%s291 + $0xee8] sm:$0xff]
        %v844 = vld [vmem:[%s291 + $0xef0] sm:$0xff]
        %v845 = vld [vmem:[%s291 + $0xef8] sm:$0xff]
        %v846 = vld [vmem:[%s291 + $0xf00] sm:$0xff]
        %v847 = vld [vmem:[%s291 + $0xf08] sm:$0xff]
        %v848 = vld [vmem:[%s291 + $0xf10] sm:$0xff]
        %v849 = vld [vmem:[%s291 + $0xf18] sm:$0xff]
        %v850 = vld [vmem:[%s291 + $0xf20] sm:$0xff]
        %v851 = vld [vmem:[%s291 + $0xf28] sm:$0xff]
        %v852 = vld [vmem:[%s291 + $0xf30] sm:$0xff]
        %v853 = vld [vmem:[%s291 + $0xf38] sm:$0xff]
        %v854 = vld [vmem:[%s291 + $0xf40] sm:$0xff]
        %v855 = vld [vmem:[%s291 + $0xf48] sm:$0xff]
        %v856 = vld [vmem:[%s291 + $0xf50] sm:$0xff]
        %v857 = vld [vmem:[%s291 + $0xf58] sm:$0xff]
        %v858 = vld [vmem:[%s291 + $0xf60] sm:$0xff]
        %v859 = vld [vmem:[%s291 + $0xf68] sm:$0xff]
        %v860 = vld [vmem:[%s291 + $0xf70] sm:$0xff]
        %v861 = vld [vmem:[%s291 + $0xf78] sm:$0xff]
        %v862 = vld [vmem:[%s291 + $0xf80] sm:$0xff]
        %v863 = vld [vmem:[%s291 + $0xf88] sm:$0xff]
        %v864 = vld [vmem:[%s291 + $0xf90] sm:$0xff]
        %v865 = vld [vmem:[%s291 + $0xf98] sm:$0xff]
        %v866 = vld [vmem:[%s291 + $0xfa0] sm:$0xff]
        %v867 = vld [vmem:[%s291 + $0xfa8] sm:$0xff]
        %v868 = vld [vmem:[%s291 + $0xfb0] sm:$0xff]
        %v869 = vld [vmem:[%s291 + $0xfb8] sm:$0xff]
        %v870 = vld [vmem:[%s291 + $0xfc0] sm:$0xff]
        %v871 = vld [vmem:[%s291 + $0xfc8] sm:$0xff]
        %v872 = vld [vmem:[%s291 + $0xfd0] sm:$0xff]
        %v873 = vld [vmem:[%s291 + $0xfd8] sm:$0xff]
        %v874 = vld [vmem:[%s291 + $0xfe0] sm:$0xff]
        %v875 = vld [vmem:[%s291 + $0xfe8] sm:$0xff]
        %v876 = vld [vmem:[%s291 + $0xff0] sm:$0xff]
        %v877 = vld [vmem:[%s291 + $0xff8] sm:$0xff]
        %v882 = vunpack.c.l.b16 %v362
        %v883 = vunpack.c.h.b16 %v362
        %v884 = vunpack.c.l.b16 %v363
        %v885 = vunpack.c.h.b16 %v363
        %v886 = vunpack.c.l.b16 %v364
        %v887 = vunpack.c.h.b16 %v364
        %v888 = vunpack.c.l.b16 %v365
        %v889 = vunpack.c.h.b16 %v365
        %v890 = vpack.c.b16 %v886, %v882
        %v891 = vpack.c.b16 %v887, %v883
        %v892 = vpack.c.b16 %v888, %v884
        %v893 = vpack.c.b16 %v889, %v885
        %v1410 = vunpack.c.l.b16 %v366
        %v1411 = vunpack.c.h.b16 %v366
        %v1412 = vunpack.c.l.b16 %v367
        %v1413 = vunpack.c.h.b16 %v367
        %v1414 = vunpack.c.l.b16 %v368
        %v1415 = vunpack.c.h.b16 %v368
        %v1416 = vunpack.c.l.b16 %v369
        %v1417 = vunpack.c.h.b16 %v369
        %v1418 = vunpack.c.l.b16 %v370
        %v1419 = vunpack.c.h.b16 %v370
        %v1420 = vunpack.c.l.b16 %v371
        %v1421 = vunpack.c.h.b16 %v371
        %v1422 = vunpack.c.l.b16 %v372
        %v1423 = vunpack.c.h.b16 %v372
        %v1424 = vunpack.c.l.b16 %v373
        %v1425 = vunpack.c.h.b16 %v373
        %v1426 = vunpack.c.l.b16 %v374
        %v1427 = vunpack.c.h.b16 %v374
        %v1428 = vunpack.c.l.b16 %v375
        %v1429 = vunpack.c.h.b16 %v375
        %v1430 = vunpack.c.l.b16 %v376
        %v1431 = vunpack.c.h.b16 %v376
        %v1432 = vunpack.c.l.b16 %v377
        %v1433 = vunpack.c.h.b16 %v377
        %v1434 = vunpack.c.l.b16 %v378
        %v1435 = vunpack.c.h.b16 %v378
        %v1436 = vunpack.c.l.b16 %v379
        %v1437 = vunpack.c.h.b16 %v379
        %v1438 = vunpack.c.l.b16 %v380
        %v1439 = vunpack.c.h.b16 %v380
        %v1440 = vunpack.c.l.b16 %v381
        %v1441 = vunpack.c.h.b16 %v381
        %v1442 = vunpack.c.l.b16 %v382
        %v1443 = vunpack.c.h.b16 %v382
        %v1444 = vunpack.c.l.b16 %v383
        %v1445 = vunpack.c.h.b16 %v383
        %v1446 = vunpack.c.l.b16 %v384
        %v1447 = vunpack.c.h.b16 %v384
        %v1448 = vunpack.c.l.b16 %v385
        %v1449 = vunpack.c.h.b16 %v385
        %v1450 = vunpack.c.l.b16 %v386
        %v1451 = vunpack.c.h.b16 %v386
        %v1452 = vunpack.c.l.b16 %v387
        %v1453 = vunpack.c.h.b16 %v387
        %v1454 = vunpack.c.l.b16 %v388
        %v1455 = vunpack.c.h.b16 %v388
        %v1456 = vunpack.c.l.b16 %v389
        %v1457 = vunpack.c.h.b16 %v389
        %v1458 = vunpack.c.l.b16 %v390
        %v1459 = vunpack.c.h.b16 %v390
        %v1460 = vunpack.c.l.b16 %v391
        %v1461 = vunpack.c.h.b16 %v391
        %v1462 = vunpack.c.l.b16 %v392
        %v1463 = vunpack.c.h.b16 %v392
        %v1464 = vunpack.c.l.b16 %v393
        %v1465 = vunpack.c.h.b16 %v393
        %v1466 = vunpack.c.l.b16 %v394
        %v1467 = vunpack.c.h.b16 %v394
        %v1468 = vunpack.c.l.b16 %v395
        %v1469 = vunpack.c.h.b16 %v395
        %v1470 = vunpack.c.l.b16 %v396
        %v1471 = vunpack.c.h.b16 %v396
        %v1472 = vunpack.c.l.b16 %v397
        %v1473 = vunpack.c.h.b16 %v397
        %v1474 = vunpack.c.l.b16 %v398
        %v1475 = vunpack.c.h.b16 %v398
        %v1476 = vunpack.c.l.b16 %v399
        %v1477 = vunpack.c.h.b16 %v399
        %v1478 = vunpack.c.l.b16 %v400
        %v1479 = vunpack.c.h.b16 %v400
        %v1480 = vunpack.c.l.b16 %v401
        %v1481 = vunpack.c.h.b16 %v401
        %v1482 = vunpack.c.l.b16 %v402
        %v1483 = vunpack.c.h.b16 %v402
        %v1484 = vunpack.c.l.b16 %v403
        %v1485 = vunpack.c.h.b16 %v403
        %v1486 = vunpack.c.l.b16 %v404
        %v1487 = vunpack.c.h.b16 %v404
        %v1488 = vunpack.c.l.b16 %v405
        %v1489 = vunpack.c.h.b16 %v405
        %v1490 = vunpack.c.l.b16 %v406
        %v1491 = vunpack.c.h.b16 %v406
        %v1492 = vunpack.c.l.b16 %v407
        %v1493 = vunpack.c.h.b16 %v407
        %v1494 = vunpack.c.l.b16 %v408
        %v1495 = vunpack.c.h.b16 %v408
        %v1496 = vunpack.c.l.b16 %v409
        %v1497 = vunpack.c.h.b16 %v409
        %v1498 = vunpack.c.l.b16 %v410
        %v1499 = vunpack.c.h.b16 %v410
        %v1500 = vunpack.c.l.b16 %v411
        %v1501 = vunpack.c.h.b16 %v411
        %v1502 = vunpack.c.l.b16 %v412
        %v1503 = vunpack.c.h.b16 %v412
        %v1504 = vunpack.c.l.b16 %v413
        %v1505 = vunpack.c.h.b16 %v413
        %v1506 = vunpack.c.l.b16 %v414
        %v1507 = vunpack.c.h.b16 %v414
        %v1508 = vunpack.c.l.b16 %v415
        %v1509 = vunpack.c.h.b16 %v415
        %v1510 = vunpack.c.l.b16 %v416
        %v1511 = vunpack.c.h.b16 %v416
        %v1512 = vunpack.c.l.b16 %v417
        %v1513 = vunpack.c.h.b16 %v417
        %v1514 = vunpack.c.l.b16 %v418
        %v1515 = vunpack.c.h.b16 %v418
        %v1516 = vunpack.c.l.b16 %v419
        %v1517 = vunpack.c.h.b16 %v419
        %v1518 = vunpack.c.l.b16 %v420
        %v1519 = vunpack.c.h.b16 %v420
        %v1520 = vunpack.c.l.b16 %v421
        %v1521 = vunpack.c.h.b16 %v421
        %v1522 = vunpack.c.l.b16 %v422
        %v1523 = vunpack.c.h.b16 %v422
        %v1524 = vunpack.c.l.b16 %v423
        %v1525 = vunpack.c.h.b16 %v423
        %v1526 = vunpack.c.l.b16 %v424
        %v1527 = vunpack.c.h.b16 %v424
        %v1528 = vunpack.c.l.b16 %v425
        %v1529 = vunpack.c.h.b16 %v425
        %v1530 = vunpack.c.l.b16 %v426
        %v1531 = vunpack.c.h.b16 %v426
        %v1532 = vunpack.c.l.b16 %v427
        %v1533 = vunpack.c.h.b16 %v427
        %v1534 = vunpack.c.l.b16 %v428
        %v1535 = vunpack.c.h.b16 %v428
        %v1536 = vunpack.c.l.b16 %v429
        %v1537 = vunpack.c.h.b16 %v429
        %v1538 = vunpack.c.l.b16 %v430
        %v1539 = vunpack.c.h.b16 %v430
        %v1540 = vunpack.c.l.b16 %v431
        %v1541 = vunpack.c.h.b16 %v431
        %v1542 = vunpack.c.l.b16 %v432
        %v1543 = vunpack.c.h.b16 %v432
        %v1544 = vunpack.c.l.b16 %v433
        %v1545 = vunpack.c.h.b16 %v433
        %v1546 = vunpack.c.l.b16 %v434
        %v1547 = vunpack.c.h.b16 %v434
        %v1548 = vunpack.c.l.b16 %v435
        %v1549 = vunpack.c.h.b16 %v435
        %v1550 = vunpack.c.l.b16 %v436
        %v1551 = vunpack.c.h.b16 %v436
        %v1552 = vunpack.c.l.b16 %v437
        %v1553 = vunpack.c.h.b16 %v437
        %v1554 = vunpack.c.l.b16 %v438
        %v1555 = vunpack.c.h.b16 %v438
        %v1556 = vunpack.c.l.b16 %v439
        %v1557 = vunpack.c.h.b16 %v439
        %v1558 = vunpack.c.l.b16 %v440
        %v1559 = vunpack.c.h.b16 %v440
        %v1560 = vunpack.c.l.b16 %v441
        %v1561 = vunpack.c.h.b16 %v441
        %v1562 = vunpack.c.l.b16 %v442
        %v1563 = vunpack.c.h.b16 %v442
        %v1564 = vunpack.c.l.b16 %v443
        %v1565 = vunpack.c.h.b16 %v443
        %v1566 = vunpack.c.l.b16 %v444
        %v1567 = vunpack.c.h.b16 %v444
        %v1568 = vunpack.c.l.b16 %v445
        %v1569 = vunpack.c.h.b16 %v445
        %v1570 = vunpack.c.l.b16 %v446
        %v1571 = vunpack.c.h.b16 %v446
        %v1572 = vunpack.c.l.b16 %v447
        %v1573 = vunpack.c.h.b16 %v447
        %v1574 = vunpack.c.l.b16 %v448
        %v1575 = vunpack.c.h.b16 %v448
        %v1576 = vunpack.c.l.b16 %v449
        %v1577 = vunpack.c.h.b16 %v449
        %v1578 = vunpack.c.l.b16 %v450
        %v1579 = vunpack.c.h.b16 %v450
        %v1580 = vunpack.c.l.b16 %v451
        %v1581 = vunpack.c.h.b16 %v451
        %v1582 = vunpack.c.l.b16 %v452
        %v1583 = vunpack.c.h.b16 %v452
        %v1584 = vunpack.c.l.b16 %v453
        %v1585 = vunpack.c.h.b16 %v453
        %v1586 = vunpack.c.l.b16 %v454
        %v1587 = vunpack.c.h.b16 %v454
        %v1588 = vunpack.c.l.b16 %v455
        %v1589 = vunpack.c.h.b16 %v455
        %v1590 = vunpack.c.l.b16 %v456
        %v1591 = vunpack.c.h.b16 %v456
        %v1592 = vunpack.c.l.b16 %v457
        %v1593 = vunpack.c.h.b16 %v457
        %v1594 = vunpack.c.l.b16 %v458
        %v1595 = vunpack.c.h.b16 %v458
        %v1596 = vunpack.c.l.b16 %v459
        %v1597 = vunpack.c.h.b16 %v459
        %v1598 = vunpack.c.l.b16 %v460
        %v1599 = vunpack.c.h.b16 %v460
        %v1600 = vunpack.c.l.b16 %v461
        %v1601 = vunpack.c.h.b16 %v461
        %v1602 = vunpack.c.l.b16 %v462
        %v1603 = vunpack.c.h.b16 %v462
        %v1604 = vunpack.c.l.b16 %v463
        %v1605 = vunpack.c.h.b16 %v463
        %v1606 = vunpack.c.l.b16 %v464
        %v1607 = vunpack.c.h.b16 %v464
        %v1608 = vunpack.c.l.b16 %v465
        %v1609 = vunpack.c.h.b16 %v465
        %v1610 = vunpack.c.l.b16 %v466
        %v1611 = vunpack.c.h.b16 %v466
        %v1612 = vunpack.c.l.b16 %v467
        %v1613 = vunpack.c.h.b16 %v467
        %v1614 = vunpack.c.l.b16 %v468
        %v1615 = vunpack.c.h.b16 %v468
        %v1616 = vunpack.c.l.b16 %v469
        %v1617 = vunpack.c.h.b16 %v469
        %v1618 = vunpack.c.l.b16 %v470
        %v1619 = vunpack.c.h.b16 %v470
        %v1620 = vunpack.c.l.b16 %v471
        %v1621 = vunpack.c.h.b16 %v471
        %v1622 = vunpack.c.l.b16 %v472
        %v1623 = vunpack.c.h.b16 %v472
        %v1624 = vunpack.c.l.b16 %v473
        %v1625 = vunpack.c.h.b16 %v473
        %v1626 = vunpack.c.l.b16 %v474
        %v1627 = vunpack.c.h.b16 %v474
        %v1628 = vunpack.c.l.b16 %v475
        %v1629 = vunpack.c.h.b16 %v475
        %v1630 = vunpack.c.l.b16 %v476
        %v1631 = vunpack.c.h.b16 %v476
        %v1632 = vunpack.c.l.b16 %v477
        %v1633 = vunpack.c.h.b16 %v477
        %v1634 = vunpack.c.l.b16 %v478
        %v1635 = vunpack.c.h.b16 %v478
        %v1636 = vunpack.c.l.b16 %v479
        %v1637 = vunpack.c.h.b16 %v479
        %v1638 = vunpack.c.l.b16 %v480
        %v1639 = vunpack.c.h.b16 %v480
        %v1640 = vunpack.c.l.b16 %v481
        %v1641 = vunpack.c.h.b16 %v481
        %v1642 = vunpack.c.l.b16 %v482
        %v1643 = vunpack.c.h.b16 %v482
        %v1644 = vunpack.c.l.b16 %v483
        %v1645 = vunpack.c.h.b16 %v483
        %v1646 = vunpack.c.l.b16 %v484
        %v1647 = vunpack.c.h.b16 %v484
        %v1648 = vunpack.c.l.b16 %v485
        %v1649 = vunpack.c.h.b16 %v485
        %v1650 = vunpack.c.l.b16 %v486
        %v1651 = vunpack.c.h.b16 %v486
        %v1652 = vunpack.c.l.b16 %v487
        %v1653 = vunpack.c.h.b16 %v487
        %v1654 = vunpack.c.l.b16 %v488
        %v1655 = vunpack.c.h.b16 %v488
        %v1656 = vunpack.c.l.b16 %v489
        %v1657 = vunpack.c.h.b16 %v489
        %v1658 = vunpack.c.l.b16 %v490
        %v1659 = vunpack.c.h.b16 %v490
        %v1660 = vunpack.c.l.b16 %v491
        %v1661 = vunpack.c.h.b16 %v491
        %v1662 = vunpack.c.l.b16 %v492
        %v1663 = vunpack.c.h.b16 %v492
        %v1664 = vunpack.c.l.b16 %v493
        %v1665 = vunpack.c.h.b16 %v493
        %v1666 = vunpack.c.l.b16 %v494
        %v1667 = vunpack.c.h.b16 %v494
        %v1668 = vunpack.c.l.b16 %v495
        %v1669 = vunpack.c.h.b16 %v495
        %v1670 = vunpack.c.l.b16 %v496
        %v1671 = vunpack.c.h.b16 %v496
        %v1672 = vunpack.c.l.b16 %v497
        %v1673 = vunpack.c.h.b16 %v497
        %v1674 = vunpack.c.l.b16 %v498
        %v1675 = vunpack.c.h.b16 %v498
        %v1676 = vunpack.c.l.b16 %v499
        %v1677 = vunpack.c.h.b16 %v499
        %v1678 = vunpack.c.l.b16 %v500
        %v1679 = vunpack.c.h.b16 %v500
        %v1680 = vunpack.c.l.b16 %v501
        %v1681 = vunpack.c.h.b16 %v501
        %v1682 = vunpack.c.l.b16 %v502
        %v1683 = vunpack.c.h.b16 %v502
        %v1684 = vunpack.c.l.b16 %v503
        %v1685 = vunpack.c.h.b16 %v503
        %v1686 = vunpack.c.l.b16 %v504
        %v1687 = vunpack.c.h.b16 %v504
        %v1688 = vunpack.c.l.b16 %v505
        %v1689 = vunpack.c.h.b16 %v505
        %v1690 = vunpack.c.l.b16 %v506
        %v1691 = vunpack.c.h.b16 %v506
        %v1692 = vunpack.c.l.b16 %v507
        %v1693 = vunpack.c.h.b16 %v507
        %v1694 = vunpack.c.l.b16 %v508
        %v1695 = vunpack.c.h.b16 %v508
        %v1696 = vunpack.c.l.b16 %v509
        %v1697 = vunpack.c.h.b16 %v509
        %v1698 = vunpack.c.l.b16 %v510
        %v1699 = vunpack.c.h.b16 %v510
        %v1700 = vunpack.c.l.b16 %v511
        %v1701 = vunpack.c.h.b16 %v511
        %v1702 = vunpack.c.l.b16 %v512
        %v1703 = vunpack.c.h.b16 %v512
        %v1704 = vunpack.c.l.b16 %v513
        %v1705 = vunpack.c.h.b16 %v513
        %v1706 = vunpack.c.l.b16 %v514
        %v1707 = vunpack.c.h.b16 %v514
        %v1708 = vunpack.c.l.b16 %v515
        %v1709 = vunpack.c.h.b16 %v515
        %v1710 = vunpack.c.l.b16 %v516
        %v1711 = vunpack.c.h.b16 %v516
        %v1712 = vunpack.c.l.b16 %v517
        %v1713 = vunpack.c.h.b16 %v517
        %v1714 = vunpack.c.l.b16 %v518
        %v1715 = vunpack.c.h.b16 %v518
        %v1716 = vunpack.c.l.b16 %v519
        %v1717 = vunpack.c.h.b16 %v519
        %v1718 = vunpack.c.l.b16 %v520
        %v1719 = vunpack.c.h.b16 %v520
        %v1720 = vunpack.c.l.b16 %v521
        %v1721 = vunpack.c.h.b16 %v521
        %v1722 = vunpack.c.l.b16 %v522
        %v1723 = vunpack.c.h.b16 %v522
        %v1724 = vunpack.c.l.b16 %v523
        %v1725 = vunpack.c.h.b16 %v523
        %v1726 = vunpack.c.l.b16 %v524
        %v1727 = vunpack.c.h.b16 %v524
        %v1728 = vunpack.c.l.b16 %v525
        %v1729 = vunpack.c.h.b16 %v525
        %v1730 = vunpack.c.l.b16 %v526
        %v1731 = vunpack.c.h.b16 %v526
        %v1732 = vunpack.c.l.b16 %v527
        %v1733 = vunpack.c.h.b16 %v527
        %v1734 = vunpack.c.l.b16 %v528
        %v1735 = vunpack.c.h.b16 %v528
        %v1736 = vunpack.c.l.b16 %v529
        %v1737 = vunpack.c.h.b16 %v529
        %v1738 = vunpack.c.l.b16 %v530
        %v1739 = vunpack.c.h.b16 %v530
        %v1740 = vunpack.c.l.b16 %v531
        %v1741 = vunpack.c.h.b16 %v531
        %v1742 = vunpack.c.l.b16 %v532
        %v1743 = vunpack.c.h.b16 %v532
        %v1744 = vunpack.c.l.b16 %v533
        %v1745 = vunpack.c.h.b16 %v533
        %v1746 = vunpack.c.l.b16 %v534
        %v1747 = vunpack.c.h.b16 %v534
        %v1748 = vunpack.c.l.b16 %v535
        %v1749 = vunpack.c.h.b16 %v535
        %v1750 = vunpack.c.l.b16 %v536
        %v1751 = vunpack.c.h.b16 %v536
        %v1752 = vunpack.c.l.b16 %v537
        %v1753 = vunpack.c.h.b16 %v537
        %v1754 = vunpack.c.l.b16 %v538
        %v1755 = vunpack.c.h.b16 %v538
        %v1756 = vunpack.c.l.b16 %v539
        %v1757 = vunpack.c.h.b16 %v539
        %v1758 = vunpack.c.l.b16 %v540
        %v1759 = vunpack.c.h.b16 %v540
        %v1760 = vunpack.c.l.b16 %v541
        %v1761 = vunpack.c.h.b16 %v541
        %v1762 = vunpack.c.l.b16 %v542
        %v1763 = vunpack.c.h.b16 %v542
        %v1764 = vunpack.c.l.b16 %v543
        %v1765 = vunpack.c.h.b16 %v543
        %v1766 = vunpack.c.l.b16 %v544
        %v1767 = vunpack.c.h.b16 %v544
        %v1768 = vunpack.c.l.b16 %v545
        %v1769 = vunpack.c.h.b16 %v545
        %v1770 = vunpack.c.l.b16 %v546
        %v1771 = vunpack.c.h.b16 %v546
        %v1772 = vunpack.c.l.b16 %v547
        %v1773 = vunpack.c.h.b16 %v547
        %v1774 = vunpack.c.l.b16 %v548
        %v1775 = vunpack.c.h.b16 %v548
        %v1776 = vunpack.c.l.b16 %v549
        %v1777 = vunpack.c.h.b16 %v549
        %v1778 = vunpack.c.l.b16 %v550
        %v1779 = vunpack.c.h.b16 %v550
        %v1780 = vunpack.c.l.b16 %v551
        %v1781 = vunpack.c.h.b16 %v551
        %v1782 = vunpack.c.l.b16 %v552
        %v1783 = vunpack.c.h.b16 %v552
        %v1784 = vunpack.c.l.b16 %v553
        %v1785 = vunpack.c.h.b16 %v553
        %v1786 = vunpack.c.l.b16 %v554
        %v1787 = vunpack.c.h.b16 %v554
        %v1788 = vunpack.c.l.b16 %v555
        %v1789 = vunpack.c.h.b16 %v555
        %v1790 = vunpack.c.l.b16 %v556
        %v1791 = vunpack.c.h.b16 %v556
        %v1792 = vunpack.c.l.b16 %v557
        %v1793 = vunpack.c.h.b16 %v557
        %v1794 = vunpack.c.l.b16 %v558
        %v1795 = vunpack.c.h.b16 %v558
        %v1796 = vunpack.c.l.b16 %v559
        %v1797 = vunpack.c.h.b16 %v559
        %v1798 = vunpack.c.l.b16 %v560
        %v1799 = vunpack.c.h.b16 %v560
        %v1800 = vunpack.c.l.b16 %v561
        %v1801 = vunpack.c.h.b16 %v561
        %v1802 = vunpack.c.l.b16 %v562
        %v1803 = vunpack.c.h.b16 %v562
        %v1804 = vunpack.c.l.b16 %v563
        %v1805 = vunpack.c.h.b16 %v563
        %v1806 = vunpack.c.l.b16 %v564
        %v1807 = vunpack.c.h.b16 %v564
        %v1808 = vunpack.c.l.b16 %v565
        %v1809 = vunpack.c.h.b16 %v565
        %v1810 = vunpack.c.l.b16 %v566
        %v1811 = vunpack.c.h.b16 %v566
        %v1812 = vunpack.c.l.b16 %v567
        %v1813 = vunpack.c.h.b16 %v567
        %v1814 = vunpack.c.l.b16 %v568
        %v1815 = vunpack.c.h.b16 %v568
        %v1816 = vunpack.c.l.b16 %v569
        %v1817 = vunpack.c.h.b16 %v569
        %v1818 = vunpack.c.l.b16 %v570
        %v1819 = vunpack.c.h.b16 %v570
        %v1820 = vunpack.c.l.b16 %v571
        %v1821 = vunpack.c.h.b16 %v571
        %v1822 = vunpack.c.l.b16 %v572
        %v1823 = vunpack.c.h.b16 %v572
        %v1824 = vunpack.c.l.b16 %v573
        %v1825 = vunpack.c.h.b16 %v573
        %v1826 = vunpack.c.l.b16 %v574
        %v1827 = vunpack.c.h.b16 %v574
        %v1828 = vunpack.c.l.b16 %v575
        %v1829 = vunpack.c.h.b16 %v575
        %v1830 = vunpack.c.l.b16 %v576
        %v1831 = vunpack.c.h.b16 %v576
        %v1832 = vunpack.c.l.b16 %v577
        %v1833 = vunpack.c.h.b16 %v577
        %v1834 = vunpack.c.l.b16 %v578
        %v1835 = vunpack.c.h.b16 %v578
        %v1836 = vunpack.c.l.b16 %v579
        %v1837 = vunpack.c.h.b16 %v579
        %v1838 = vunpack.c.l.b16 %v580
        %v1839 = vunpack.c.h.b16 %v580
        %v1840 = vunpack.c.l.b16 %v581
        %v1841 = vunpack.c.h.b16 %v581
        %v1842 = vunpack.c.l.b16 %v582
        %v1843 = vunpack.c.h.b16 %v582
        %v1844 = vunpack.c.l.b16 %v583
        %v1845 = vunpack.c.h.b16 %v583
        %v1846 = vunpack.c.l.b16 %v584
        %v1847 = vunpack.c.h.b16 %v584
        %v1848 = vunpack.c.l.b16 %v585
        %v1849 = vunpack.c.h.b16 %v585
        %v1850 = vunpack.c.l.b16 %v586
        %v1851 = vunpack.c.h.b16 %v586
        %v1852 = vunpack.c.l.b16 %v587
        %v1853 = vunpack.c.h.b16 %v587
        %v1854 = vunpack.c.l.b16 %v588
        %v1855 = vunpack.c.h.b16 %v588
        %v1856 = vunpack.c.l.b16 %v589
        %v1857 = vunpack.c.h.b16 %v589
        %v1858 = vunpack.c.l.b16 %v590
        %v1859 = vunpack.c.h.b16 %v590
        %v1860 = vunpack.c.l.b16 %v591
        %v1861 = vunpack.c.h.b16 %v591
        %v1862 = vunpack.c.l.b16 %v592
        %v1863 = vunpack.c.h.b16 %v592
        %v1864 = vunpack.c.l.b16 %v593
        %v1865 = vunpack.c.h.b16 %v593
        %v1866 = vunpack.c.l.b16 %v594
        %v1867 = vunpack.c.h.b16 %v594
        %v1868 = vunpack.c.l.b16 %v595
        %v1869 = vunpack.c.h.b16 %v595
        %v1870 = vunpack.c.l.b16 %v596
        %v1871 = vunpack.c.h.b16 %v596
        %v1872 = vunpack.c.l.b16 %v597
        %v1873 = vunpack.c.h.b16 %v597
        %v1874 = vunpack.c.l.b16 %v598
        %v1875 = vunpack.c.h.b16 %v598
        %v1876 = vunpack.c.l.b16 %v599
        %v1877 = vunpack.c.h.b16 %v599
        %v1878 = vunpack.c.l.b16 %v600
        %v1879 = vunpack.c.h.b16 %v600
        %v1880 = vunpack.c.l.b16 %v601
        %v1881 = vunpack.c.h.b16 %v601
        %v1882 = vunpack.c.l.b16 %v602
        %v1883 = vunpack.c.h.b16 %v602
        %v1884 = vunpack.c.l.b16 %v603
        %v1885 = vunpack.c.h.b16 %v603
        %v1886 = vunpack.c.l.b16 %v604
        %v1887 = vunpack.c.h.b16 %v604
        %v1888 = vunpack.c.l.b16 %v605
        %v1889 = vunpack.c.h.b16 %v605
        %v1890 = vunpack.c.l.b16 %v606
        %v1891 = vunpack.c.h.b16 %v606
        %v1892 = vunpack.c.l.b16 %v607
        %v1893 = vunpack.c.h.b16 %v607
        %v1894 = vunpack.c.l.b16 %v608
        %v1895 = vunpack.c.h.b16 %v608
        %v1896 = vunpack.c.l.b16 %v609
        %v1897 = vunpack.c.h.b16 %v609
        %v1898 = vunpack.c.l.b16 %v610
        %v1899 = vunpack.c.h.b16 %v610
        %v1900 = vunpack.c.l.b16 %v611
        %v1901 = vunpack.c.h.b16 %v611
        %v1902 = vunpack.c.l.b16 %v612
        %v1903 = vunpack.c.h.b16 %v612
        %v1904 = vunpack.c.l.b16 %v613
        %v1905 = vunpack.c.h.b16 %v613
        %v1906 = vunpack.c.l.b16 %v614
        %v1907 = vunpack.c.h.b16 %v614
        %v1908 = vunpack.c.l.b16 %v615
        %v1909 = vunpack.c.h.b16 %v615
        %v1910 = vunpack.c.l.b16 %v616
        %v1911 = vunpack.c.h.b16 %v616
        %v1912 = vunpack.c.l.b16 %v617
        %v1913 = vunpack.c.h.b16 %v617
        %v1914 = vunpack.c.l.b16 %v618
        %v1915 = vunpack.c.h.b16 %v618
        %v1916 = vunpack.c.l.b16 %v619
        %v1917 = vunpack.c.h.b16 %v619
        %v1918 = vunpack.c.l.b16 %v620
        %v1919 = vunpack.c.h.b16 %v620
        %v1920 = vunpack.c.l.b16 %v621
        %v1921 = vunpack.c.h.b16 %v621
        %v1922 = vunpack.c.l.b16 %v622
        %v1923 = vunpack.c.h.b16 %v622
        %v1924 = vunpack.c.l.b16 %v623
        %v1925 = vunpack.c.h.b16 %v623
        %v1926 = vunpack.c.l.b16 %v624
        %v1927 = vunpack.c.h.b16 %v624
        %v1928 = vunpack.c.l.b16 %v625
        %v1929 = vunpack.c.h.b16 %v625
        %v1930 = vunpack.c.l.b16 %v626
        %v1931 = vunpack.c.h.b16 %v626
        %v1932 = vunpack.c.l.b16 %v627
        %v1933 = vunpack.c.h.b16 %v627
        %v1934 = vunpack.c.l.b16 %v628
        %v1935 = vunpack.c.h.b16 %v628
        %v1936 = vunpack.c.l.b16 %v629
        %v1937 = vunpack.c.h.b16 %v629
        %v1938 = vunpack.c.l.b16 %v630
        %v1939 = vunpack.c.h.b16 %v630
        %v1940 = vunpack.c.l.b16 %v631
        %v1941 = vunpack.c.h.b16 %v631
        %v1942 = vunpack.c.l.b16 %v632
        %v1943 = vunpack.c.h.b16 %v632
        %v1944 = vunpack.c.l.b16 %v633
        %v1945 = vunpack.c.h.b16 %v633
        %v1946 = vunpack.c.l.b16 %v634
        %v1947 = vunpack.c.h.b16 %v634
        %v1948 = vunpack.c.l.b16 %v635
        %v1949 = vunpack.c.h.b16 %v635
        %v1950 = vunpack.c.l.b16 %v636
        %v1951 = vunpack.c.h.b16 %v636
        %v1952 = vunpack.c.l.b16 %v637
        %v1953 = vunpack.c.h.b16 %v637
        %v1954 = vunpack.c.l.b16 %v638
        %v1955 = vunpack.c.h.b16 %v638
        %v1956 = vunpack.c.l.b16 %v639
        %v1957 = vunpack.c.h.b16 %v639
        %v1958 = vunpack.c.l.b16 %v640
        %v1959 = vunpack.c.h.b16 %v640
        %v1960 = vunpack.c.l.b16 %v641
        %v1961 = vunpack.c.h.b16 %v641
        %v1962 = vunpack.c.l.b16 %v642
        %v1963 = vunpack.c.h.b16 %v642
        %v1964 = vunpack.c.l.b16 %v643
        %v1965 = vunpack.c.h.b16 %v643
        %v1966 = vunpack.c.l.b16 %v644
        %v1967 = vunpack.c.h.b16 %v644
        %v1968 = vunpack.c.l.b16 %v645
        %v1969 = vunpack.c.h.b16 %v645
        %v1970 = vunpack.c.l.b16 %v646
        %v1971 = vunpack.c.h.b16 %v646
        %v1972 = vunpack.c.l.b16 %v647
        %v1973 = vunpack.c.h.b16 %v647
        %v1974 = vunpack.c.l.b16 %v648
        %v1975 = vunpack.c.h.b16 %v648
        %v1976 = vunpack.c.l.b16 %v649
        %v1977 = vunpack.c.h.b16 %v649
        %v1978 = vunpack.c.l.b16 %v650
        %v1979 = vunpack.c.h.b16 %v650
        %v1980 = vunpack.c.l.b16 %v651
        %v1981 = vunpack.c.h.b16 %v651
        %v1982 = vunpack.c.l.b16 %v652
        %v1983 = vunpack.c.h.b16 %v652
        %v1984 = vunpack.c.l.b16 %v653
        %v1985 = vunpack.c.h.b16 %v653
        %v1986 = vunpack.c.l.b16 %v654
        %v1987 = vunpack.c.h.b16 %v654
        %v1988 = vunpack.c.l.b16 %v655
        %v1989 = vunpack.c.h.b16 %v655
        %v1990 = vunpack.c.l.b16 %v656
        %v1991 = vunpack.c.h.b16 %v656
        %v1992 = vunpack.c.l.b16 %v657
        %v1993 = vunpack.c.h.b16 %v657
        %v1994 = vunpack.c.l.b16 %v658
        %v1995 = vunpack.c.h.b16 %v658
        %v1996 = vunpack.c.l.b16 %v659
        %v1997 = vunpack.c.h.b16 %v659
        %v1998 = vunpack.c.l.b16 %v660
        %v1999 = vunpack.c.h.b16 %v660
        %v2000 = vunpack.c.l.b16 %v661
        %v2001 = vunpack.c.h.b16 %v661
        %v2002 = vunpack.c.l.b16 %v662
        %v2003 = vunpack.c.h.b16 %v662
        %v2004 = vunpack.c.l.b16 %v663
        %v2005 = vunpack.c.h.b16 %v663
        %v2006 = vunpack.c.l.b16 %v664
        %v2007 = vunpack.c.h.b16 %v664
        %v2008 = vunpack.c.l.b16 %v665
        %v2009 = vunpack.c.h.b16 %v665
        %v2010 = vunpack.c.l.b16 %v666
        %v2011 = vunpack.c.h.b16 %v666
        %v2012 = vunpack.c.l.b16 %v667
        %v2013 = vunpack.c.h.b16 %v667
        %v2014 = vunpack.c.l.b16 %v668
        %v2015 = vunpack.c.h.b16 %v668
        %v2016 = vunpack.c.l.b16 %v669
        %v2017 = vunpack.c.h.b16 %v669
        %v2018 = vunpack.c.l.b16 %v670
        %v2019 = vunpack.c.h.b16 %v670
        %v2020 = vunpack.c.l.b16 %v671
        %v2021 = vunpack.c.h.b16 %v671
        %v2022 = vunpack.c.l.b16 %v672
        %v2023 = vunpack.c.h.b16 %v672
        %v2024 = vunpack.c.l.b16 %v673
        %v2025 = vunpack.c.h.b16 %v673
        %v2026 = vunpack.c.l.b16 %v674
        %v2027 = vunpack.c.h.b16 %v674
        %v2028 = vunpack.c.l.b16 %v675
        %v2029 = vunpack.c.h.b16 %v675
        %v2030 = vunpack.c.l.b16 %v676
        %v2031 = vunpack.c.h.b16 %v676
        %v2032 = vunpack.c.l.b16 %v677
        %v2033 = vunpack.c.h.b16 %v677
        %v2034 = vunpack.c.l.b16 %v678
        %v2035 = vunpack.c.h.b16 %v678
        %v2036 = vunpack.c.l.b16 %v679
        %v2037 = vunpack.c.h.b16 %v679
        %v2038 = vunpack.c.l.b16 %v680
        %v2039 = vunpack.c.h.b16 %v680
        %v2040 = vunpack.c.l.b16 %v681
        %v2041 = vunpack.c.h.b16 %v681
        %v2042 = vunpack.c.l.b16 %v682
        %v2043 = vunpack.c.h.b16 %v682
        %v2044 = vunpack.c.l.b16 %v683
        %v2045 = vunpack.c.h.b16 %v683
        %v2046 = vunpack.c.l.b16 %v684
        %v2047 = vunpack.c.h.b16 %v684
        %v2048 = vunpack.c.l.b16 %v685
        %v2049 = vunpack.c.h.b16 %v685
        %v2050 = vunpack.c.l.b16 %v686
        %v2051 = vunpack.c.h.b16 %v686
        %v2052 = vunpack.c.l.b16 %v687
        %v2053 = vunpack.c.h.b16 %v687
        %v2054 = vunpack.c.l.b16 %v688
        %v2055 = vunpack.c.h.b16 %v688
        %v2056 = vunpack.c.l.b16 %v689
        %v2057 = vunpack.c.h.b16 %v689
        %v2058 = vunpack.c.l.b16 %v690
        %v2059 = vunpack.c.h.b16 %v690
        %v2060 = vunpack.c.l.b16 %v691
        %v2061 = vunpack.c.h.b16 %v691
        %v2062 = vunpack.c.l.b16 %v692
        %v2063 = vunpack.c.h.b16 %v692
        %v2064 = vunpack.c.l.b16 %v693
        %v2065 = vunpack.c.h.b16 %v693
        %v2066 = vunpack.c.l.b16 %v694
        %v2067 = vunpack.c.h.b16 %v694
        %v2068 = vunpack.c.l.b16 %v695
        %v2069 = vunpack.c.h.b16 %v695
        %v2070 = vunpack.c.l.b16 %v696
        %v2071 = vunpack.c.h.b16 %v696
        %v2072 = vunpack.c.l.b16 %v697
        %v2073 = vunpack.c.h.b16 %v697
        %v2074 = vunpack.c.l.b16 %v698
        %v2075 = vunpack.c.h.b16 %v698
        %v2076 = vunpack.c.l.b16 %v699
        %v2077 = vunpack.c.h.b16 %v699
        %v2078 = vunpack.c.l.b16 %v700
        %v2079 = vunpack.c.h.b16 %v700
        %v2080 = vunpack.c.l.b16 %v701
        %v2081 = vunpack.c.h.b16 %v701
        %v2082 = vunpack.c.l.b16 %v702
        %v2083 = vunpack.c.h.b16 %v702
        %v2084 = vunpack.c.l.b16 %v703
        %v2085 = vunpack.c.h.b16 %v703
        %v2086 = vunpack.c.l.b16 %v704
        %v2087 = vunpack.c.h.b16 %v704
        %v2088 = vunpack.c.l.b16 %v705
        %v2089 = vunpack.c.h.b16 %v705
        %v2090 = vunpack.c.l.b16 %v706
        %v2091 = vunpack.c.h.b16 %v706
        %v2092 = vunpack.c.l.b16 %v707
        %v2093 = vunpack.c.h.b16 %v707
        %v2094 = vunpack.c.l.b16 %v708
        %v2095 = vunpack.c.h.b16 %v708
        %v2096 = vunpack.c.l.b16 %v709
        %v2097 = vunpack.c.h.b16 %v709
        %v2098 = vunpack.c.l.b16 %v710
        %v2099 = vunpack.c.h.b16 %v710
        %v2100 = vunpack.c.l.b16 %v711
        %v2101 = vunpack.c.h.b16 %v711
        %v2102 = vunpack.c.l.b16 %v712
        %v2103 = vunpack.c.h.b16 %v712
        %v2104 = vunpack.c.l.b16 %v713
        %v2105 = vunpack.c.h.b16 %v713
        %v2106 = vunpack.c.l.b16 %v714
        %v2107 = vunpack.c.h.b16 %v714
        %v2108 = vunpack.c.l.b16 %v715
        %v2109 = vunpack.c.h.b16 %v715
        %v2110 = vunpack.c.l.b16 %v716
        %v2111 = vunpack.c.h.b16 %v716
        %v2112 = vunpack.c.l.b16 %v717
        %v2113 = vunpack.c.h.b16 %v717
        %v2114 = vunpack.c.l.b16 %v718
        %v2115 = vunpack.c.h.b16 %v718
        %v2116 = vunpack.c.l.b16 %v719
        %v2117 = vunpack.c.h.b16 %v719
        %v2118 = vunpack.c.l.b16 %v720
        %v2119 = vunpack.c.h.b16 %v720
        %v2120 = vunpack.c.l.b16 %v721
        %v2121 = vunpack.c.h.b16 %v721
        %v2122 = vunpack.c.l.b16 %v722
        %v2123 = vunpack.c.h.b16 %v722
        %v2124 = vunpack.c.l.b16 %v723
        %v2125 = vunpack.c.h.b16 %v723
        %v2126 = vunpack.c.l.b16 %v724
        %v2127 = vunpack.c.h.b16 %v724
        %v2128 = vunpack.c.l.b16 %v725
        %v2129 = vunpack.c.h.b16 %v725
        %v2130 = vunpack.c.l.b16 %v726
        %v2131 = vunpack.c.h.b16 %v726
        %v2132 = vunpack.c.l.b16 %v727
        %v2133 = vunpack.c.h.b16 %v727
        %v2134 = vunpack.c.l.b16 %v728
        %v2135 = vunpack.c.h.b16 %v728
        %v2136 = vunpack.c.l.b16 %v729
        %v2137 = vunpack.c.h.b16 %v729
        %v2138 = vunpack.c.l.b16 %v730
        %v2139 = vunpack.c.h.b16 %v730
        %v2140 = vunpack.c.l.b16 %v731
        %v2141 = vunpack.c.h.b16 %v731
        %v2142 = vunpack.c.l.b16 %v732
        %v2143 = vunpack.c.h.b16 %v732
        %v2144 = vunpack.c.l.b16 %v733
        %v2145 = vunpack.c.h.b16 %v733
        %v2146 = vunpack.c.l.b16 %v734
        %v2147 = vunpack.c.h.b16 %v734
        %v2148 = vunpack.c.l.b16 %v735
        %v2149 = vunpack.c.h.b16 %v735
        %v2150 = vunpack.c.l.b16 %v736
        %v2151 = vunpack.c.h.b16 %v736
        %v2152 = vunpack.c.l.b16 %v737
        %v2153 = vunpack.c.h.b16 %v737
        %v2154 = vunpack.c.l.b16 %v738
        %v2155 = vunpack.c.h.b16 %v738
        %v2156 = vunpack.c.l.b16 %v739
        %v2157 = vunpack.c.h.b16 %v739
        %v2158 = vunpack.c.l.b16 %v740
        %v2159 = vunpack.c.h.b16 %v740
        %v2160 = vunpack.c.l.b16 %v741
        %v2161 = vunpack.c.h.b16 %v741
        %v2162 = vunpack.c.l.b16 %v742
        %v2163 = vunpack.c.h.b16 %v742
        %v2164 = vunpack.c.l.b16 %v743
        %v2165 = vunpack.c.h.b16 %v743
        %v2166 = vunpack.c.l.b16 %v744
        %v2167 = vunpack.c.h.b16 %v744
        %v2168 = vunpack.c.l.b16 %v745
        %v2169 = vunpack.c.h.b16 %v745
        %v2170 = vunpack.c.l.b16 %v746
        %v2171 = vunpack.c.h.b16 %v746
        %v2172 = vunpack.c.l.b16 %v747
        %v2173 = vunpack.c.h.b16 %v747
        %v2174 = vunpack.c.l.b16 %v748
        %v2175 = vunpack.c.h.b16 %v748
        %v2176 = vunpack.c.l.b16 %v749
        %v2177 = vunpack.c.h.b16 %v749
        %v2178 = vunpack.c.l.b16 %v750
        %v2179 = vunpack.c.h.b16 %v750
        %v2180 = vunpack.c.l.b16 %v751
        %v2181 = vunpack.c.h.b16 %v751
        %v2182 = vunpack.c.l.b16 %v752
        %v2183 = vunpack.c.h.b16 %v752
        %v2184 = vunpack.c.l.b16 %v753
        %v2185 = vunpack.c.h.b16 %v753
        %v2186 = vunpack.c.l.b16 %v754
        %v2187 = vunpack.c.h.b16 %v754
        %v2188 = vunpack.c.l.b16 %v755
        %v2189 = vunpack.c.h.b16 %v755
        %v2190 = vunpack.c.l.b16 %v756
        %v2191 = vunpack.c.h.b16 %v756
        %v2192 = vunpack.c.l.b16 %v757
        %v2193 = vunpack.c.h.b16 %v757
        %v2194 = vunpack.c.l.b16 %v758
        %v2195 = vunpack.c.h.b16 %v758
        %v2196 = vunpack.c.l.b16 %v759
        %v2197 = vunpack.c.h.b16 %v759
        %v2198 = vunpack.c.l.b16 %v760
        %v2199 = vunpack.c.h.b16 %v760
        %v2200 = vunpack.c.l.b16 %v761
        %v2201 = vunpack.c.h.b16 %v761
        %v2202 = vunpack.c.l.b16 %v762
        %v2203 = vunpack.c.h.b16 %v762
        %v2204 = vunpack.c.l.b16 %v763
        %v2205 = vunpack.c.h.b16 %v763
        %v2206 = vunpack.c.l.b16 %v764
        %v2207 = vunpack.c.h.b16 %v764
        %v2208 = vunpack.c.l.b16 %v765
        %v2209 = vunpack.c.h.b16 %v765
        %v2210 = vunpack.c.l.b16 %v766
        %v2211 = vunpack.c.h.b16 %v766
        %v2212 = vunpack.c.l.b16 %v767
        %v2213 = vunpack.c.h.b16 %v767
        %v2214 = vunpack.c.l.b16 %v768
        %v2215 = vunpack.c.h.b16 %v768
        %v2216 = vunpack.c.l.b16 %v769
        %v2217 = vunpack.c.h.b16 %v769
        %v2218 = vunpack.c.l.b16 %v770
        %v2219 = vunpack.c.h.b16 %v770
        %v2220 = vunpack.c.l.b16 %v771
        %v2221 = vunpack.c.h.b16 %v771
        %v2222 = vunpack.c.l.b16 %v772
        %v2223 = vunpack.c.h.b16 %v772
        %v2224 = vunpack.c.l.b16 %v773
        %v2225 = vunpack.c.h.b16 %v773
        %v2226 = vunpack.c.l.b16 %v774
        %v2227 = vunpack.c.h.b16 %v774
        %v2228 = vunpack.c.l.b16 %v775
        %v2229 = vunpack.c.h.b16 %v775
        %v2230 = vunpack.c.l.b16 %v776
        %v2231 = vunpack.c.h.b16 %v776
        %v2232 = vunpack.c.l.b16 %v777
        %v2233 = vunpack.c.h.b16 %v777
        %v2234 = vunpack.c.l.b16 %v778
        %v2235 = vunpack.c.h.b16 %v778
        %v2236 = vunpack.c.l.b16 %v779
        %v2237 = vunpack.c.h.b16 %v779
        %v2238 = vunpack.c.l.b16 %v780
        %v2239 = vunpack.c.h.b16 %v780
        %v2240 = vunpack.c.l.b16 %v781
        %v2241 = vunpack.c.h.b16 %v781
        %v2242 = vunpack.c.l.b16 %v782
        %v2243 = vunpack.c.h.b16 %v782
        %v2244 = vunpack.c.l.b16 %v783
        %v2245 = vunpack.c.h.b16 %v783
        %v2246 = vunpack.c.l.b16 %v784
        %v2247 = vunpack.c.h.b16 %v784
        %v2248 = vunpack.c.l.b16 %v785
        %v2249 = vunpack.c.h.b16 %v785
        %v2250 = vunpack.c.l.b16 %v786
        %v2251 = vunpack.c.h.b16 %v786
        %v2252 = vunpack.c.l.b16 %v787
        %v2253 = vunpack.c.h.b16 %v787
        %v2254 = vunpack.c.l.b16 %v788
        %v2255 = vunpack.c.h.b16 %v788
        %v2256 = vunpack.c.l.b16 %v789
        %v2257 = vunpack.c.h.b16 %v789
        %v2258 = vunpack.c.l.b16 %v790
        %v2259 = vunpack.c.h.b16 %v790
        %v2260 = vunpack.c.l.b16 %v791
        %v2261 = vunpack.c.h.b16 %v791
        %v2262 = vunpack.c.l.b16 %v792
        %v2263 = vunpack.c.h.b16 %v792
        %v2264 = vunpack.c.l.b16 %v793
        %v2265 = vunpack.c.h.b16 %v793
        %v2266 = vunpack.c.l.b16 %v794
        %v2267 = vunpack.c.h.b16 %v794
        %v2268 = vunpack.c.l.b16 %v795
        %v2269 = vunpack.c.h.b16 %v795
        %v2270 = vunpack.c.l.b16 %v796
        %v2271 = vunpack.c.h.b16 %v796
        %v2272 = vunpack.c.l.b16 %v797
        %v2273 = vunpack.c.h.b16 %v797
        %v2274 = vunpack.c.l.b16 %v798
        %v2275 = vunpack.c.h.b16 %v798
        %v2276 = vunpack.c.l.b16 %v799
        %v2277 = vunpack.c.h.b16 %v799
        %v2278 = vunpack.c.l.b16 %v800
        %v2279 = vunpack.c.h.b16 %v800
        %v2280 = vunpack.c.l.b16 %v801
        %v2281 = vunpack.c.h.b16 %v801
        %v2282 = vunpack.c.l.b16 %v802
        %v2283 = vunpack.c.h.b16 %v802
        %v2284 = vunpack.c.l.b16 %v803
        %v2285 = vunpack.c.h.b16 %v803
        %v2286 = vunpack.c.l.b16 %v804
        %v2287 = vunpack.c.h.b16 %v804
        %v2288 = vunpack.c.l.b16 %v805
        %v2289 = vunpack.c.h.b16 %v805
        %v2290 = vunpack.c.l.b16 %v806
        %v2291 = vunpack.c.h.b16 %v806
        %v2292 = vunpack.c.l.b16 %v807
        %v2293 = vunpack.c.h.b16 %v807
        %v2294 = vunpack.c.l.b16 %v808
        %v2295 = vunpack.c.h.b16 %v808
        %v2296 = vunpack.c.l.b16 %v809
        %v2297 = vunpack.c.h.b16 %v809
        %v2298 = vunpack.c.l.b16 %v810
        %v2299 = vunpack.c.h.b16 %v810
        %v2300 = vunpack.c.l.b16 %v811
        %v2301 = vunpack.c.h.b16 %v811
        %v2302 = vunpack.c.l.b16 %v812
        %v2303 = vunpack.c.h.b16 %v812
        %v2304 = vunpack.c.l.b16 %v813
        %v2305 = vunpack.c.h.b16 %v813
        %v2306 = vunpack.c.l.b16 %v814
        %v2307 = vunpack.c.h.b16 %v814
        %v2308 = vunpack.c.l.b16 %v815
        %v2309 = vunpack.c.h.b16 %v815
        %v2310 = vunpack.c.l.b16 %v816
        %v2311 = vunpack.c.h.b16 %v816
        %v2312 = vunpack.c.l.b16 %v817
        %v2313 = vunpack.c.h.b16 %v817
        %v2314 = vunpack.c.l.b16 %v818
        %v2315 = vunpack.c.h.b16 %v818
        %v2316 = vunpack.c.l.b16 %v819
        %v2317 = vunpack.c.h.b16 %v819
        %v2318 = vunpack.c.l.b16 %v820
        %v2319 = vunpack.c.h.b16 %v820
        %v2320 = vunpack.c.l.b16 %v821
        %v2321 = vunpack.c.h.b16 %v821
        %v2322 = vunpack.c.l.b16 %v822
        %v2323 = vunpack.c.h.b16 %v822
        %v2324 = vunpack.c.l.b16 %v823
        %v2325 = vunpack.c.h.b16 %v823
        %v2326 = vunpack.c.l.b16 %v824
        %v2327 = vunpack.c.h.b16 %v824
        %v2328 = vunpack.c.l.b16 %v825
        %v2329 = vunpack.c.h.b16 %v825
        %v2330 = vunpack.c.l.b16 %v826
        %v2331 = vunpack.c.h.b16 %v826
        %v2332 = vunpack.c.l.b16 %v827
        %v2333 = vunpack.c.h.b16 %v827
        %v2334 = vunpack.c.l.b16 %v828
        %v2335 = vunpack.c.h.b16 %v828
        %v2336 = vunpack.c.l.b16 %v829
        %v2337 = vunpack.c.h.b16 %v829
        %v2338 = vunpack.c.l.b16 %v830
        %v2339 = vunpack.c.h.b16 %v830
        %v2340 = vunpack.c.l.b16 %v831
        %v2341 = vunpack.c.h.b16 %v831
        %v2342 = vunpack.c.l.b16 %v832
        %v2343 = vunpack.c.h.b16 %v832
        %v2344 = vunpack.c.l.b16 %v833
        %v2345 = vunpack.c.h.b16 %v833
        %v2346 = vunpack.c.l.b16 %v834
        %v2347 = vunpack.c.h.b16 %v834
        %v2348 = vunpack.c.l.b16 %v835
        %v2349 = vunpack.c.h.b16 %v835
        %v2350 = vunpack.c.l.b16 %v836
        %v2351 = vunpack.c.h.b16 %v836
        %v2352 = vunpack.c.l.b16 %v837
        %v2353 = vunpack.c.h.b16 %v837
        %v2354 = vunpack.c.l.b16 %v838
        %v2355 = vunpack.c.h.b16 %v838
        %v2356 = vunpack.c.l.b16 %v839
        %v2357 = vunpack.c.h.b16 %v839
        %v2358 = vunpack.c.l.b16 %v840
        %v2359 = vunpack.c.h.b16 %v840
        %v2360 = vunpack.c.l.b16 %v841
        %v2361 = vunpack.c.h.b16 %v841
        %v2362 = vunpack.c.l.b16 %v842
        %v2363 = vunpack.c.h.b16 %v842
        %v2364 = vunpack.c.l.b16 %v843
        %v2365 = vunpack.c.h.b16 %v843
        %v2366 = vunpack.c.l.b16 %v844
        %v2367 = vunpack.c.h.b16 %v844
        %v2368 = vunpack.c.l.b16 %v845
        %v2369 = vunpack.c.h.b16 %v845
        %v2370 = vunpack.c.l.b16 %v846
        %v2371 = vunpack.c.h.b16 %v846
        %v2372 = vunpack.c.l.b16 %v847
        %v2373 = vunpack.c.h.b16 %v847
        %v2374 = vunpack.c.l.b16 %v848
        %v2375 = vunpack.c.h.b16 %v848
        %v2376 = vunpack.c.l.b16 %v849
        %v2377 = vunpack.c.h.b16 %v849
        %v2378 = vunpack.c.l.b16 %v850
        %v2379 = vunpack.c.h.b16 %v850
        %v2380 = vunpack.c.l.b16 %v851
        %v2381 = vunpack.c.h.b16 %v851
        %v2382 = vunpack.c.l.b16 %v852
        %v2383 = vunpack.c.h.b16 %v852
        %v2384 = vunpack.c.l.b16 %v853
        %v2385 = vunpack.c.h.b16 %v853
        %v2386 = vunpack.c.l.b16 %v854
        %v2387 = vunpack.c.h.b16 %v854
        %v2388 = vunpack.c.l.b16 %v855
        %v2389 = vunpack.c.h.b16 %v855
        %v2390 = vunpack.c.l.b16 %v856
        %v2391 = vunpack.c.h.b16 %v856
        %v2392 = vunpack.c.l.b16 %v857
        %v2393 = vunpack.c.h.b16 %v857
        %v2394 = vunpack.c.l.b16 %v858
        %v2395 = vunpack.c.h.b16 %v858
        %v2396 = vunpack.c.l.b16 %v859
        %v2397 = vunpack.c.h.b16 %v859
        %v2398 = vunpack.c.l.b16 %v860
        %v2399 = vunpack.c.h.b16 %v860
        %v2400 = vunpack.c.l.b16 %v861
        %v2401 = vunpack.c.h.b16 %v861
        %v2402 = vunpack.c.l.b16 %v862
        %v2403 = vunpack.c.h.b16 %v862
        %v2404 = vunpack.c.l.b16 %v863
        %v2405 = vunpack.c.h.b16 %v863
        %v2406 = vunpack.c.l.b16 %v864
        %v2407 = vunpack.c.h.b16 %v864
        %v2408 = vunpack.c.l.b16 %v865
        %v2409 = vunpack.c.h.b16 %v865
        %v2410 = vunpack.c.l.b16 %v866
        %v2411 = vunpack.c.h.b16 %v866
        %v2412 = vunpack.c.l.b16 %v867
        %v2413 = vunpack.c.h.b16 %v867
        %v2414 = vunpack.c.l.b16 %v868
        %v2415 = vunpack.c.h.b16 %v868
        %v2416 = vunpack.c.l.b16 %v869
        %v2417 = vunpack.c.h.b16 %v869
        %v2418 = vunpack.c.l.b16 %v870
        %v2419 = vunpack.c.h.b16 %v870
        %v2420 = vunpack.c.l.b16 %v871
        %v2421 = vunpack.c.h.b16 %v871
        %v2422 = vunpack.c.l.b16 %v872
        %v2423 = vunpack.c.h.b16 %v872
        %v2424 = vunpack.c.l.b16 %v873
        %v2425 = vunpack.c.h.b16 %v873
        %v2426 = vunpack.c.l.b16 %v874
        %v2427 = vunpack.c.h.b16 %v874
        %v2428 = vunpack.c.l.b16 %v875
        %v2429 = vunpack.c.h.b16 %v875
        %v2430 = vunpack.c.l.b16 %v876
        %v2431 = vunpack.c.h.b16 %v876
        %v2432 = vunpack.c.l.b16 %v877
        %v2433 = vunpack.c.h.b16 %v877
        %v2434 = vpack.c.b16 %v1426, %v1410
        %v2435 = vpack.c.b16 %v1427, %v1411
        %v2436 = vpack.c.b16 %v1428, %v1412
        %v2437 = vpack.c.b16 %v1429, %v1413
        %v2438 = vpack.c.b16 %v1430, %v1414
        %v2439 = vpack.c.b16 %v1431, %v1415
        %v2440 = vpack.c.b16 %v1432, %v1416
        %v2441 = vpack.c.b16 %v1433, %v1417
        %v2442 = vpack.c.b16 %v1434, %v1418
        %v2443 = vpack.c.b16 %v1435, %v1419
        %v2444 = vpack.c.b16 %v1436, %v1420
        %v2445 = vpack.c.b16 %v1437, %v1421
        %v2446 = vpack.c.b16 %v1438, %v1422
        %v2447 = vpack.c.b16 %v1439, %v1423
        %v2448 = vpack.c.b16 %v1440, %v1424
        %v2449 = vpack.c.b16 %v1441, %v1425
        %v2450 = vpack.c.b16 %v1458, %v1442
        %v2451 = vpack.c.b16 %v1459, %v1443
        %v2452 = vpack.c.b16 %v1460, %v1444
        %v2453 = vpack.c.b16 %v1461, %v1445
        %v2454 = vpack.c.b16 %v1462, %v1446
        %v2455 = vpack.c.b16 %v1463, %v1447
        %v2456 = vpack.c.b16 %v1464, %v1448
        %v2457 = vpack.c.b16 %v1465, %v1449
        %v2458 = vpack.c.b16 %v1466, %v1450
        %v2459 = vpack.c.b16 %v1467, %v1451
        %v2460 = vpack.c.b16 %v1468, %v1452
        %v2461 = vpack.c.b16 %v1469, %v1453
        %v2462 = vpack.c.b16 %v1470, %v1454
        %v2463 = vpack.c.b16 %v1471, %v1455
        %v2464 = vpack.c.b16 %v1472, %v1456
        %v2465 = vpack.c.b16 %v1473, %v1457
        %v2466 = vpack.c.b16 %v1490, %v1474
        %v2467 = vpack.c.b16 %v1491, %v1475
        %v2468 = vpack.c.b16 %v1492, %v1476
        %v2469 = vpack.c.b16 %v1493, %v1477
        %v2470 = vpack.c.b16 %v1494, %v1478
        %v2471 = vpack.c.b16 %v1495, %v1479
        %v2472 = vpack.c.b16 %v1496, %v1480
        %v2473 = vpack.c.b16 %v1497, %v1481
        %v2474 = vpack.c.b16 %v1498, %v1482
        %v2475 = vpack.c.b16 %v1499, %v1483
        %v2476 = vpack.c.b16 %v1500, %v1484
        %v2477 = vpack.c.b16 %v1501, %v1485
        %v2478 = vpack.c.b16 %v1502, %v1486
        %v2479 = vpack.c.b16 %v1503, %v1487
        %v2480 = vpack.c.b16 %v1504, %v1488
        %v2481 = vpack.c.b16 %v1505, %v1489
        %v2482 = vpack.c.b16 %v1522, %v1506
        %v2483 = vpack.c.b16 %v1523, %v1507
        %v2484 = vpack.c.b16 %v1524, %v1508
        %v2485 = vpack.c.b16 %v1525, %v1509
        %v2486 = vpack.c.b16 %v1526, %v1510
        %v2487 = vpack.c.b16 %v1527, %v1511
        %v2488 = vpack.c.b16 %v1528, %v1512
        %v2489 = vpack.c.b16 %v1529, %v1513
        %v2490 = vpack.c.b16 %v1530, %v1514
        %v2491 = vpack.c.b16 %v1531, %v1515
        %v2492 = vpack.c.b16 %v1532, %v1516
        %v2493 = vpack.c.b16 %v1533, %v1517
        %v2494 = vpack.c.b16 %v1534, %v1518
        %v2495 = vpack.c.b16 %v1535, %v1519
        %v2496 = vpack.c.b16 %v1536, %v1520
        %v2497 = vpack.c.b16 %v1537, %v1521
        %v2498 = vpack.c.b16 %v1554, %v1538
        %v2499 = vpack.c.b16 %v1555, %v1539
        %v2500 = vpack.c.b16 %v1556, %v1540
        %v2501 = vpack.c.b16 %v1557, %v1541
        %v2502 = vpack.c.b16 %v1558, %v1542
        %v2503 = vpack.c.b16 %v1559, %v1543
        %v2504 = vpack.c.b16 %v1560, %v1544
        %v2505 = vpack.c.b16 %v1561, %v1545
        %v2506 = vpack.c.b16 %v1562, %v1546
        %v2507 = vpack.c.b16 %v1563, %v1547
        %v2508 = vpack.c.b16 %v1564, %v1548
        %v2509 = vpack.c.b16 %v1565, %v1549
        %v2510 = vpack.c.b16 %v1566, %v1550
        %v2511 = vpack.c.b16 %v1567, %v1551
        %v2512 = vpack.c.b16 %v1568, %v1552
        %v2513 = vpack.c.b16 %v1569, %v1553
        %v2514 = vpack.c.b16 %v1586, %v1570
        %v2515 = vpack.c.b16 %v1587, %v1571
        %v2516 = vpack.c.b16 %v1588, %v1572
        %v2517 = vpack.c.b16 %v1589, %v1573
        %v2518 = vpack.c.b16 %v1590, %v1574
        %v2519 = vpack.c.b16 %v1591, %v1575
        %v2520 = vpack.c.b16 %v1592, %v1576
        %v2521 = vpack.c.b16 %v1593, %v1577
        %v2522 = vpack.c.b16 %v1594, %v1578
        %v2523 = vpack.c.b16 %v1595, %v1579
        %v2524 = vpack.c.b16 %v1596, %v1580
        %v2525 = vpack.c.b16 %v1597, %v1581
        %v2526 = vpack.c.b16 %v1598, %v1582
        %v2527 = vpack.c.b16 %v1599, %v1583
        %v2528 = vpack.c.b16 %v1600, %v1584
        %v2529 = vpack.c.b16 %v1601, %v1585
        %v2530 = vpack.c.b16 %v1618, %v1602
        %v2531 = vpack.c.b16 %v1619, %v1603
        %v2532 = vpack.c.b16 %v1620, %v1604
        %v2533 = vpack.c.b16 %v1621, %v1605
        %v2534 = vpack.c.b16 %v1622, %v1606
        %v2535 = vpack.c.b16 %v1623, %v1607
        %v2536 = vpack.c.b16 %v1624, %v1608
        %v2537 = vpack.c.b16 %v1625, %v1609
        %v2538 = vpack.c.b16 %v1626, %v1610
        %v2539 = vpack.c.b16 %v1627, %v1611
        %v2540 = vpack.c.b16 %v1628, %v1612
        %v2541 = vpack.c.b16 %v1629, %v1613
        %v2542 = vpack.c.b16 %v1630, %v1614
        %v2543 = vpack.c.b16 %v1631, %v1615
        %v2544 = vpack.c.b16 %v1632, %v1616
        %v2545 = vpack.c.b16 %v1633, %v1617
        %v2546 = vpack.c.b16 %v1650, %v1634
        %v2547 = vpack.c.b16 %v1651, %v1635
        %v2548 = vpack.c.b16 %v1652, %v1636
        %v2549 = vpack.c.b16 %v1653, %v1637
        %v2550 = vpack.c.b16 %v1654, %v1638
        %v2551 = vpack.c.b16 %v1655, %v1639
        %v2552 = vpack.c.b16 %v1656, %v1640
        %v2553 = vpack.c.b16 %v1657, %v1641
        %v2554 = vpack.c.b16 %v1658, %v1642
        %v2555 = vpack.c.b16 %v1659, %v1643
        %v2556 = vpack.c.b16 %v1660, %v1644
        %v2557 = vpack.c.b16 %v1661, %v1645
        %v2558 = vpack.c.b16 %v1662, %v1646
        %v2559 = vpack.c.b16 %v1663, %v1647
        %v2560 = vpack.c.b16 %v1664, %v1648
        %v2561 = vpack.c.b16 %v1665, %v1649
        %v2562 = vpack.c.b16 %v1682, %v1666
        %v2563 = vpack.c.b16 %v1683, %v1667
        %v2564 = vpack.c.b16 %v1684, %v1668
        %v2565 = vpack.c.b16 %v1685, %v1669
        %v2566 = vpack.c.b16 %v1686, %v1670
        %v2567 = vpack.c.b16 %v1687, %v1671
        %v2568 = vpack.c.b16 %v1688, %v1672
        %v2569 = vpack.c.b16 %v1689, %v1673
        %v2570 = vpack.c.b16 %v1690, %v1674
        %v2571 = vpack.c.b16 %v1691, %v1675
        %v2572 = vpack.c.b16 %v1692, %v1676
        %v2573 = vpack.c.b16 %v1693, %v1677
        %v2574 = vpack.c.b16 %v1694, %v1678
        %v2575 = vpack.c.b16 %v1695, %v1679
        %v2576 = vpack.c.b16 %v1696, %v1680
        %v2577 = vpack.c.b16 %v1697, %v1681
        %v2578 = vpack.c.b16 %v1714, %v1698
        %v2579 = vpack.c.b16 %v1715, %v1699
        %v2580 = vpack.c.b16 %v1716, %v1700
        %v2581 = vpack.c.b16 %v1717, %v1701
        %v2582 = vpack.c.b16 %v1718, %v1702
        %v2583 = vpack.c.b16 %v1719, %v1703
        %v2584 = vpack.c.b16 %v1720, %v1704
        %v2585 = vpack.c.b16 %v1721, %v1705
        %v2586 = vpack.c.b16 %v1722, %v1706
        %v2587 = vpack.c.b16 %v1723, %v1707
        %v2588 = vpack.c.b16 %v1724, %v1708
        %v2589 = vpack.c.b16 %v1725, %v1709
        %v2590 = vpack.c.b16 %v1726, %v1710
        %v2591 = vpack.c.b16 %v1727, %v1711
        %v2592 = vpack.c.b16 %v1728, %v1712
        %v2593 = vpack.c.b16 %v1729, %v1713
        %v2594 = vpack.c.b16 %v1746, %v1730
        %v2595 = vpack.c.b16 %v1747, %v1731
        %v2596 = vpack.c.b16 %v1748, %v1732
        %v2597 = vpack.c.b16 %v1749, %v1733
        %v2598 = vpack.c.b16 %v1750, %v1734
        %v2599 = vpack.c.b16 %v1751, %v1735
        %v2600 = vpack.c.b16 %v1752, %v1736
        %v2601 = vpack.c.b16 %v1753, %v1737
        %v2602 = vpack.c.b16 %v1754, %v1738
        %v2603 = vpack.c.b16 %v1755, %v1739
        %v2604 = vpack.c.b16 %v1756, %v1740
        %v2605 = vpack.c.b16 %v1757, %v1741
        %v2606 = vpack.c.b16 %v1758, %v1742
        %v2607 = vpack.c.b16 %v1759, %v1743
        %v2608 = vpack.c.b16 %v1760, %v1744
        %v2609 = vpack.c.b16 %v1761, %v1745
        %v2610 = vpack.c.b16 %v1778, %v1762
        %v2611 = vpack.c.b16 %v1779, %v1763
        %v2612 = vpack.c.b16 %v1780, %v1764
        %v2613 = vpack.c.b16 %v1781, %v1765
        %v2614 = vpack.c.b16 %v1782, %v1766
        %v2615 = vpack.c.b16 %v1783, %v1767
        %v2616 = vpack.c.b16 %v1784, %v1768
        %v2617 = vpack.c.b16 %v1785, %v1769
        %v2618 = vpack.c.b16 %v1786, %v1770
        %v2619 = vpack.c.b16 %v1787, %v1771
        %v2620 = vpack.c.b16 %v1788, %v1772
        %v2621 = vpack.c.b16 %v1789, %v1773
        %v2622 = vpack.c.b16 %v1790, %v1774
        %v2623 = vpack.c.b16 %v1791, %v1775
        %v2624 = vpack.c.b16 %v1792, %v1776
        %v2625 = vpack.c.b16 %v1793, %v1777
        %v2626 = vpack.c.b16 %v1810, %v1794
        %v2627 = vpack.c.b16 %v1811, %v1795
        %v2628 = vpack.c.b16 %v1812, %v1796
        %v2629 = vpack.c.b16 %v1813, %v1797
        %v2630 = vpack.c.b16 %v1814, %v1798
        %v2631 = vpack.c.b16 %v1815, %v1799
        %v2632 = vpack.c.b16 %v1816, %v1800
        %v2633 = vpack.c.b16 %v1817, %v1801
        %v2634 = vpack.c.b16 %v1818, %v1802
        %v2635 = vpack.c.b16 %v1819, %v1803
        %v2636 = vpack.c.b16 %v1820, %v1804
        %v2637 = vpack.c.b16 %v1821, %v1805
        %v2638 = vpack.c.b16 %v1822, %v1806
        %v2639 = vpack.c.b16 %v1823, %v1807
        %v2640 = vpack.c.b16 %v1824, %v1808
        %v2641 = vpack.c.b16 %v1825, %v1809
        %v2642 = vpack.c.b16 %v1842, %v1826
        %v2643 = vpack.c.b16 %v1843, %v1827
        %v2644 = vpack.c.b16 %v1844, %v1828
        %v2645 = vpack.c.b16 %v1845, %v1829
        %v2646 = vpack.c.b16 %v1846, %v1830
        %v2647 = vpack.c.b16 %v1847, %v1831
        %v2648 = vpack.c.b16 %v1848, %v1832
        %v2649 = vpack.c.b16 %v1849, %v1833
        %v2650 = vpack.c.b16 %v1850, %v1834
        %v2651 = vpack.c.b16 %v1851, %v1835
        %v2652 = vpack.c.b16 %v1852, %v1836
        %v2653 = vpack.c.b16 %v1853, %v1837
        %v2654 = vpack.c.b16 %v1854, %v1838
        %v2655 = vpack.c.b16 %v1855, %v1839
        %v2656 = vpack.c.b16 %v1856, %v1840
        %v2657 = vpack.c.b16 %v1857, %v1841
        %v2658 = vpack.c.b16 %v1874, %v1858
        %v2659 = vpack.c.b16 %v1875, %v1859
        %v2660 = vpack.c.b16 %v1876, %v1860
        %v2661 = vpack.c.b16 %v1877, %v1861
        %v2662 = vpack.c.b16 %v1878, %v1862
        %v2663 = vpack.c.b16 %v1879, %v1863
        %v2664 = vpack.c.b16 %v1880, %v1864
        %v2665 = vpack.c.b16 %v1881, %v1865
        %v2666 = vpack.c.b16 %v1882, %v1866
        %v2667 = vpack.c.b16 %v1883, %v1867
        %v2668 = vpack.c.b16 %v1884, %v1868
        %v2669 = vpack.c.b16 %v1885, %v1869
        %v2670 = vpack.c.b16 %v1886, %v1870
        %v2671 = vpack.c.b16 %v1887, %v1871
        %v2672 = vpack.c.b16 %v1888, %v1872
        %v2673 = vpack.c.b16 %v1889, %v1873
        %v2674 = vpack.c.b16 %v1906, %v1890
        %v2675 = vpack.c.b16 %v1907, %v1891
        %v2676 = vpack.c.b16 %v1908, %v1892
        %v2677 = vpack.c.b16 %v1909, %v1893
        %v2678 = vpack.c.b16 %v1910, %v1894
        %v2679 = vpack.c.b16 %v1911, %v1895
        %v2680 = vpack.c.b16 %v1912, %v1896
        %v2681 = vpack.c.b16 %v1913, %v1897
        %v2682 = vpack.c.b16 %v1914, %v1898
        %v2683 = vpack.c.b16 %v1915, %v1899
        %v2684 = vpack.c.b16 %v1916, %v1900
        %v2685 = vpack.c.b16 %v1917, %v1901
        %v2686 = vpack.c.b16 %v1918, %v1902
        %v2687 = vpack.c.b16 %v1919, %v1903
        %v2688 = vpack.c.b16 %v1920, %v1904
        %v2689 = vpack.c.b16 %v1921, %v1905
        %v2690 = vpack.c.b16 %v1938, %v1922
        %v2691 = vpack.c.b16 %v1939, %v1923
        %v2692 = vpack.c.b16 %v1940, %v1924
        %v2693 = vpack.c.b16 %v1941, %v1925
        %v2694 = vpack.c.b16 %v1942, %v1926
        %v2695 = vpack.c.b16 %v1943, %v1927
        %v2696 = vpack.c.b16 %v1944, %v1928
        %v2697 = vpack.c.b16 %v1945, %v1929
        %v2698 = vpack.c.b16 %v1946, %v1930
        %v2699 = vpack.c.b16 %v1947, %v1931
        %v2700 = vpack.c.b16 %v1948, %v1932
        %v2701 = vpack.c.b16 %v1949, %v1933
        %v2702 = vpack.c.b16 %v1950, %v1934
        %v2703 = vpack.c.b16 %v1951, %v1935
        %v2704 = vpack.c.b16 %v1952, %v1936
        %v2705 = vpack.c.b16 %v1953, %v1937
        %v2706 = vpack.c.b16 %v1970, %v1954
        %v2707 = vpack.c.b16 %v1971, %v1955
        %v2708 = vpack.c.b16 %v1972, %v1956
        %v2709 = vpack.c.b16 %v1973, %v1957
        %v2710 = vpack.c.b16 %v1974, %v1958
        %v2711 = vpack.c.b16 %v1975, %v1959
        %v2712 = vpack.c.b16 %v1976, %v1960
        %v2713 = vpack.c.b16 %v1977, %v1961
        %v2714 = vpack.c.b16 %v1978, %v1962
        %v2715 = vpack.c.b16 %v1979, %v1963
        %v2716 = vpack.c.b16 %v1980, %v1964
        %v2717 = vpack.c.b16 %v1981, %v1965
        %v2718 = vpack.c.b16 %v1982, %v1966
        %v2719 = vpack.c.b16 %v1983, %v1967
        %v2720 = vpack.c.b16 %v1984, %v1968
        %v2721 = vpack.c.b16 %v1985, %v1969
        %v2722 = vpack.c.b16 %v2002, %v1986
        %v2723 = vpack.c.b16 %v2003, %v1987
        %v2724 = vpack.c.b16 %v2004, %v1988
        %v2725 = vpack.c.b16 %v2005, %v1989
        %v2726 = vpack.c.b16 %v2006, %v1990
        %v2727 = vpack.c.b16 %v2007, %v1991
        %v2728 = vpack.c.b16 %v2008, %v1992
        %v2729 = vpack.c.b16 %v2009, %v1993
        %v2730 = vpack.c.b16 %v2010, %v1994
        %v2731 = vpack.c.b16 %v2011, %v1995
        %v2732 = vpack.c.b16 %v2012, %v1996
        %v2733 = vpack.c.b16 %v2013, %v1997
        %v2734 = vpack.c.b16 %v2014, %v1998
        %v2735 = vpack.c.b16 %v2015, %v1999
        %v2736 = vpack.c.b16 %v2016, %v2000
        %v2737 = vpack.c.b16 %v2017, %v2001
        %v2738 = vpack.c.b16 %v2034, %v2018
        %v2739 = vpack.c.b16 %v2035, %v2019
        %v2740 = vpack.c.b16 %v2036, %v2020
        %v2741 = vpack.c.b16 %v2037, %v2021
        %v2742 = vpack.c.b16 %v2038, %v2022
        %v2743 = vpack.c.b16 %v2039, %v2023
        %v2744 = vpack.c.b16 %v2040, %v2024
        %v2745 = vpack.c.b16 %v2041, %v2025
        %v2746 = vpack.c.b16 %v2042, %v2026
        %v2747 = vpack.c.b16 %v2043, %v2027
        %v2748 = vpack.c.b16 %v2044, %v2028
        %v2749 = vpack.c.b16 %v2045, %v2029
        %v2750 = vpack.c.b16 %v2046, %v2030
        %v2751 = vpack.c.b16 %v2047, %v2031
        %v2752 = vpack.c.b16 %v2048, %v2032
        %v2753 = vpack.c.b16 %v2049, %v2033
        %v2754 = vpack.c.b16 %v2066, %v2050
        %v2755 = vpack.c.b16 %v2067, %v2051
        %v2756 = vpack.c.b16 %v2068, %v2052
        %v2757 = vpack.c.b16 %v2069, %v2053
        %v2758 = vpack.c.b16 %v2070, %v2054
        %v2759 = vpack.c.b16 %v2071, %v2055
        %v2760 = vpack.c.b16 %v2072, %v2056
        %v2761 = vpack.c.b16 %v2073, %v2057
        %v2762 = vpack.c.b16 %v2074, %v2058
        %v2763 = vpack.c.b16 %v2075, %v2059
        %v2764 = vpack.c.b16 %v2076, %v2060
        %v2765 = vpack.c.b16 %v2077, %v2061
        %v2766 = vpack.c.b16 %v2078, %v2062
        %v2767 = vpack.c.b16 %v2079, %v2063
        %v2768 = vpack.c.b16 %v2080, %v2064
        %v2769 = vpack.c.b16 %v2081, %v2065
        %v2770 = vpack.c.b16 %v2098, %v2082
        %v2771 = vpack.c.b16 %v2099, %v2083
        %v2772 = vpack.c.b16 %v2100, %v2084
        %v2773 = vpack.c.b16 %v2101, %v2085
        %v2774 = vpack.c.b16 %v2102, %v2086
        %v2775 = vpack.c.b16 %v2103, %v2087
        %v2776 = vpack.c.b16 %v2104, %v2088
        %v2777 = vpack.c.b16 %v2105, %v2089
        %v2778 = vpack.c.b16 %v2106, %v2090
        %v2779 = vpack.c.b16 %v2107, %v2091
        %v2780 = vpack.c.b16 %v2108, %v2092
        %v2781 = vpack.c.b16 %v2109, %v2093
        %v2782 = vpack.c.b16 %v2110, %v2094
        %v2783 = vpack.c.b16 %v2111, %v2095
        %v2784 = vpack.c.b16 %v2112, %v2096
        %v2785 = vpack.c.b16 %v2113, %v2097
        %v2786 = vpack.c.b16 %v2130, %v2114
        %v2787 = vpack.c.b16 %v2131, %v2115
        %v2788 = vpack.c.b16 %v2132, %v2116
        %v2789 = vpack.c.b16 %v2133, %v2117
        %v2790 = vpack.c.b16 %v2134, %v2118
        %v2791 = vpack.c.b16 %v2135, %v2119
        %v2792 = vpack.c.b16 %v2136, %v2120
        %v2793 = vpack.c.b16 %v2137, %v2121
        %v2794 = vpack.c.b16 %v2138, %v2122
        %v2795 = vpack.c.b16 %v2139, %v2123
        %v2796 = vpack.c.b16 %v2140, %v2124
        %v2797 = vpack.c.b16 %v2141, %v2125
        %v2798 = vpack.c.b16 %v2142, %v2126
        %v2799 = vpack.c.b16 %v2143, %v2127
        %v2800 = vpack.c.b16 %v2144, %v2128
        %v2801 = vpack.c.b16 %v2145, %v2129
        %v2802 = vpack.c.b16 %v2162, %v2146
        %v2803 = vpack.c.b16 %v2163, %v2147
        %v2804 = vpack.c.b16 %v2164, %v2148
        %v2805 = vpack.c.b16 %v2165, %v2149
        %v2806 = vpack.c.b16 %v2166, %v2150
        %v2807 = vpack.c.b16 %v2167, %v2151
        %v2808 = vpack.c.b16 %v2168, %v2152
        %v2809 = vpack.c.b16 %v2169, %v2153
        %v2810 = vpack.c.b16 %v2170, %v2154
        %v2811 = vpack.c.b16 %v2171, %v2155
        %v2812 = vpack.c.b16 %v2172, %v2156
        %v2813 = vpack.c.b16 %v2173, %v2157
        %v2814 = vpack.c.b16 %v2174, %v2158
        %v2815 = vpack.c.b16 %v2175, %v2159
        %v2816 = vpack.c.b16 %v2176, %v2160
        %v2817 = vpack.c.b16 %v2177, %v2161
        %v2818 = vpack.c.b16 %v2194, %v2178
        %v2819 = vpack.c.b16 %v2195, %v2179
        %v2820 = vpack.c.b16 %v2196, %v2180
        %v2821 = vpack.c.b16 %v2197, %v2181
        %v2822 = vpack.c.b16 %v2198, %v2182
        %v2823 = vpack.c.b16 %v2199, %v2183
        %v2824 = vpack.c.b16 %v2200, %v2184
        %v2825 = vpack.c.b16 %v2201, %v2185
        %v2826 = vpack.c.b16 %v2202, %v2186
        %v2827 = vpack.c.b16 %v2203, %v2187
        %v2828 = vpack.c.b16 %v2204, %v2188
        %v2829 = vpack.c.b16 %v2205, %v2189
        %v2830 = vpack.c.b16 %v2206, %v2190
        %v2831 = vpack.c.b16 %v2207, %v2191
        %v2832 = vpack.c.b16 %v2208, %v2192
        %v2833 = vpack.c.b16 %v2209, %v2193
        %v2834 = vpack.c.b16 %v2226, %v2210
        %v2835 = vpack.c.b16 %v2227, %v2211
        %v2836 = vpack.c.b16 %v2228, %v2212
        %v2837 = vpack.c.b16 %v2229, %v2213
        %v2838 = vpack.c.b16 %v2230, %v2214
        %v2839 = vpack.c.b16 %v2231, %v2215
        %v2840 = vpack.c.b16 %v2232, %v2216
        %v2841 = vpack.c.b16 %v2233, %v2217
        %v2842 = vpack.c.b16 %v2234, %v2218
        %v2843 = vpack.c.b16 %v2235, %v2219
        %v2844 = vpack.c.b16 %v2236, %v2220
        %v2845 = vpack.c.b16 %v2237, %v2221
        %v2846 = vpack.c.b16 %v2238, %v2222
        %v2847 = vpack.c.b16 %v2239, %v2223
        %v2848 = vpack.c.b16 %v2240, %v2224
        %v2849 = vpack.c.b16 %v2241, %v2225
        %v2850 = vpack.c.b16 %v2258, %v2242
        %v2851 = vpack.c.b16 %v2259, %v2243
        %v2852 = vpack.c.b16 %v2260, %v2244
        %v2853 = vpack.c.b16 %v2261, %v2245
        %v2854 = vpack.c.b16 %v2262, %v2246
        %v2855 = vpack.c.b16 %v2263, %v2247
        %v2856 = vpack.c.b16 %v2264, %v2248
        %v2857 = vpack.c.b16 %v2265, %v2249
        %v2858 = vpack.c.b16 %v2266, %v2250
        %v2859 = vpack.c.b16 %v2267, %v2251
        %v2860 = vpack.c.b16 %v2268, %v2252
        %v2861 = vpack.c.b16 %v2269, %v2253
        %v2862 = vpack.c.b16 %v2270, %v2254
        %v2863 = vpack.c.b16 %v2271, %v2255
        %v2864 = vpack.c.b16 %v2272, %v2256
        %v2865 = vpack.c.b16 %v2273, %v2257
        %v2866 = vpack.c.b16 %v2290, %v2274
        %v2867 = vpack.c.b16 %v2291, %v2275
        %v2868 = vpack.c.b16 %v2292, %v2276
        %v2869 = vpack.c.b16 %v2293, %v2277
        %v2870 = vpack.c.b16 %v2294, %v2278
        %v2871 = vpack.c.b16 %v2295, %v2279
        %v2872 = vpack.c.b16 %v2296, %v2280
        %v2873 = vpack.c.b16 %v2297, %v2281
        %v2874 = vpack.c.b16 %v2298, %v2282
        %v2875 = vpack.c.b16 %v2299, %v2283
        %v2876 = vpack.c.b16 %v2300, %v2284
        %v2877 = vpack.c.b16 %v2301, %v2285
        %v2878 = vpack.c.b16 %v2302, %v2286
        %v2879 = vpack.c.b16 %v2303, %v2287
        %v2880 = vpack.c.b16 %v2304, %v2288
        %v2881 = vpack.c.b16 %v2305, %v2289
        %v2882 = vpack.c.b16 %v2322, %v2306
        %v2883 = vpack.c.b16 %v2323, %v2307
        %v2884 = vpack.c.b16 %v2324, %v2308
        %v2885 = vpack.c.b16 %v2325, %v2309
        %v2886 = vpack.c.b16 %v2326, %v2310
        %v2887 = vpack.c.b16 %v2327, %v2311
        %v2888 = vpack.c.b16 %v2328, %v2312
        %v2889 = vpack.c.b16 %v2329, %v2313
        %v2890 = vpack.c.b16 %v2330, %v2314
        %v2891 = vpack.c.b16 %v2331, %v2315
        %v2892 = vpack.c.b16 %v2332, %v2316
        %v2893 = vpack.c.b16 %v2333, %v2317
        %v2894 = vpack.c.b16 %v2334, %v2318
        %v2895 = vpack.c.b16 %v2335, %v2319
        %v2896 = vpack.c.b16 %v2336, %v2320
        %v2897 = vpack.c.b16 %v2337, %v2321
        %v2898 = vpack.c.b16 %v2354, %v2338
        %v2899 = vpack.c.b16 %v2355, %v2339
        %v2900 = vpack.c.b16 %v2356, %v2340
        %v2901 = vpack.c.b16 %v2357, %v2341
        %v2902 = vpack.c.b16 %v2358, %v2342
        %v2903 = vpack.c.b16 %v2359, %v2343
        %v2904 = vpack.c.b16 %v2360, %v2344
        %v2905 = vpack.c.b16 %v2361, %v2345
        %v2906 = vpack.c.b16 %v2362, %v2346
        %v2907 = vpack.c.b16 %v2363, %v2347
        %v2908 = vpack.c.b16 %v2364, %v2348
        %v2909 = vpack.c.b16 %v2365, %v2349
        %v2910 = vpack.c.b16 %v2366, %v2350
        %v2911 = vpack.c.b16 %v2367, %v2351
        %v2912 = vpack.c.b16 %v2368, %v2352
        %v2913 = vpack.c.b16 %v2369, %v2353
        %v2914 = vpack.c.b16 %v2386, %v2370
        %v2915 = vpack.c.b16 %v2387, %v2371
        %v2916 = vpack.c.b16 %v2388, %v2372
        %v2917 = vpack.c.b16 %v2389, %v2373
        %v2918 = vpack.c.b16 %v2390, %v2374
        %v2919 = vpack.c.b16 %v2391, %v2375
        %v2920 = vpack.c.b16 %v2392, %v2376
        %v2921 = vpack.c.b16 %v2393, %v2377
        %v2922 = vpack.c.b16 %v2394, %v2378
        %v2923 = vpack.c.b16 %v2395, %v2379
        %v2924 = vpack.c.b16 %v2396, %v2380
        %v2925 = vpack.c.b16 %v2397, %v2381
        %v2926 = vpack.c.b16 %v2398, %v2382
        %v2927 = vpack.c.b16 %v2399, %v2383
        %v2928 = vpack.c.b16 %v2400, %v2384
        %v2929 = vpack.c.b16 %v2401, %v2385
        %v2930 = vpack.c.b16 %v2418, %v2402
        %v2931 = vpack.c.b16 %v2419, %v2403
        %v2932 = vpack.c.b16 %v2420, %v2404
        %v2933 = vpack.c.b16 %v2421, %v2405
        %v2934 = vpack.c.b16 %v2422, %v2406
        %v2935 = vpack.c.b16 %v2423, %v2407
        %v2936 = vpack.c.b16 %v2424, %v2408
        %v2937 = vpack.c.b16 %v2425, %v2409
        %v2938 = vpack.c.b16 %v2426, %v2410
        %v2939 = vpack.c.b16 %v2427, %v2411
        %v2940 = vpack.c.b16 %v2428, %v2412
        %v2941 = vpack.c.b16 %v2429, %v2413
        %v2942 = vpack.c.b16 %v2430, %v2414
        %v2943 = vpack.c.b16 %v2431, %v2415
        %v2944 = vpack.c.b16 %v2432, %v2416
        %v2945 = vpack.c.b16 %v2433, %v2417
        %3458 = vmatprep.subr.bf16.mxu0 %v2435
        %3459 = vmatpush1.bf16.msra.mxu0 %v2434
        %3460 = vmatprep.subr.bf16.mxu0 %v2451
        %3461 = vmatpush1.bf16.msra.mxu0 %v2450
        %3462 = vmatprep.subr.bf16.mxu0 %v2467
        %3463 = vmatpush1.bf16.msra.mxu0 %v2466
        %3464 = vmatprep.subr.bf16.mxu0 %v2483
        %3465 = vmatpush1.bf16.msra.mxu0 %v2482
        %3466 = vmatprep.subr.bf16.mxu0 %v2499
        %3467 = vmatpush1.bf16.msra.mxu0 %v2498
        %3468 = vmatprep.subr.bf16.mxu0 %v2515
        %3469 = vmatpush1.bf16.msra.mxu0 %v2514
        %3470 = vmatprep.subr.bf16.mxu0 %v2531
        %3471 = vmatpush1.bf16.msra.mxu0 %v2530
        %3472 = vmatprep.subr.bf16.mxu0 %v2547
        %3473 = vmatpush1.bf16.msra.mxu0 %v2546
        %3474 = vmatprep.subr.bf16.mxu0 %v2563
        %3475 = vmatpush1.bf16.msra.mxu0 %v2562
        %3476 = vmatprep.subr.bf16.mxu0 %v2579
        %3477 = vmatpush1.bf16.msra.mxu0 %v2578
        %3478 = vmatprep.subr.bf16.mxu0 %v2595
        %3479 = vmatpush1.bf16.msra.mxu0 %v2594
        %3480 = vmatprep.subr.bf16.mxu0 %v2611
        %3481 = vmatpush1.bf16.msra.mxu0 %v2610
        %3482 = vmatprep.subr.bf16.mxu0 %v2627
        %3483 = vmatpush1.bf16.msra.mxu0 %v2626
        %3484 = vmatprep.subr.bf16.mxu0 %v2643
        %3485 = vmatpush1.bf16.msra.mxu0 %v2642
        %3486 = vmatprep.subr.bf16.mxu0 %v2659
        %3487 = vmatpush1.bf16.msra.mxu0 %v2658
        %3488 = vmatprep.subr.bf16.mxu0 %v2675
        %3489 = vmatpush1.bf16.msra.mxu0 %v2674
        %3490 = vmatprep.mubr.bf16.mxu0 %v891
        %3491 = vmatmul.mubr.bf16.gmra.mrb[0].mxu0 %v890
        %v3492 = vpop.f32.mrb[0].mxu0
        %v3493 = vadd.f32 0.0, %v3492
        %v3494 = vpop.f32.mrb[0].mxu0
        %v3495 = vadd.f32 0.0, %v3494
        %v3496 = vpop.f32.mrb[0].mxu0
        %v3497 = vadd.f32 0.0, %v3496
        %v3498 = vpop.f32.mrb[0].mxu0
        %v3499 = vadd.f32 0.0, %v3498
        %3500 = vdwg.mxu0
        %3501 = vmatprep.subr.bf16.mxu0 %v2691
        %3502 = vmatpush1.bf16.msra.mxu0 %v2690
        %3503 = vmatprep.subr.bf16.mxu0 %v2707
        %3504 = vmatpush1.bf16.msra.mxu0 %v2706
        %3505 = vmatprep.subr.bf16.mxu0 %v2723
        %3506 = vmatpush1.bf16.msra.mxu0 %v2722
        %3507 = vmatprep.subr.bf16.mxu0 %v2739
        %3508 = vmatpush1.bf16.msra.mxu0 %v2738
        %3509 = vmatprep.subr.bf16.mxu0 %v2755
        %3510 = vmatpush1.bf16.msra.mxu0 %v2754
        %3511 = vmatprep.subr.bf16.mxu0 %v2771
        %3512 = vmatpush1.bf16.msra.mxu0 %v2770
        %3513 = vmatprep.subr.bf16.mxu0 %v2787
        %3514 = vmatpush1.bf16.msra.mxu0 %v2786
        %3515 = vmatprep.subr.bf16.mxu0 %v2803
        %3516 = vmatpush1.bf16.msra.mxu0 %v2802
        %3517 = vmatprep.subr.bf16.mxu0 %v2819
        %3518 = vmatpush1.bf16.msra.mxu0 %v2818
        %3519 = vmatprep.subr.bf16.mxu0 %v2835
        %3520 = vmatpush1.bf16.msra.mxu0 %v2834
        %3521 = vmatprep.subr.bf16.mxu0 %v2851
        %3522 = vmatpush1.bf16.msra.mxu0 %v2850
        %3523 = vmatprep.subr.bf16.mxu0 %v2867
        %3524 = vmatpush1.bf16.msra.mxu0 %v2866
        %3525 = vmatprep.subr.bf16.mxu0 %v2883
        %3526 = vmatpush1.bf16.msra.mxu0 %v2882
        %3527 = vmatprep.subr.bf16.mxu0 %v2899
        %3528 = vmatpush1.bf16.msra.mxu0 %v2898
        %3529 = vmatprep.subr.bf16.mxu0 %v2915
        %3530 = vmatpush1.bf16.msra.mxu0 %v2914
        %3531 = vmatprep.subr.bf16.mxu0 %v2931
        %3532 = vmatpush1.bf16.msra.mxu0 %v2930
        %3533 = vmatprep.mubr.bf16.mxu0 %v893
        %3534 = vmatmul.mubr.bf16.gmra.mrb[0].mxu0 %v892
        %v3535 = vpop.f32.mrb[0].mxu0
        %v3536 = vadd.f32 %v3493, %v3535
        %v3537 = vpop.f32.mrb[0].mxu0
        %v3538 = vadd.f32 %v3495, %v3537
        %v3539 = vpop.f32.mrb[0].mxu0
        %v3540 = vadd.f32 %v3497, %v3539
        %v3541 = vpop.f32.mrb[0].mxu0
        %v3542 = vadd.f32 %v3499, %v3541
        %3543 = vdwg.mxu0
        %3544 = vmatprep.subr.bf16.mxu0 %v2437
        %3545 = vmatpush1.bf16.msra.mxu0 %v2436
        %3546 = vmatprep.subr.bf16.mxu0 %v2453
        %3547 = vmatpush1.bf16.msra.mxu0 %v2452
        %3548 = vmatprep.subr.bf16.mxu0 %v2469
        %3549 = vmatpush1.bf16.msra.mxu0 %v2468
        %3550 = vmatprep.subr.bf16.mxu0 %v2485
        %3551 = vmatpush1.bf16.msra.mxu0 %v2484
        %3552 = vmatprep.subr.bf16.mxu0 %v2501
        %3553 = vmatpush1.bf16.msra.mxu0 %v2500
        %3554 = vmatprep.subr.bf16.mxu0 %v2517
        %3555 = vmatpush1.bf16.msra.mxu0 %v2516
        %3556 = vmatprep.subr.bf16.mxu0 %v2533
        %3557 = vmatpush1.bf16.msra.mxu0 %v2532
        %3558 = vmatprep.subr.bf16.mxu0 %v2549
        %3559 = vmatpush1.bf16.msra.mxu0 %v2548
        %3560 = vmatprep.subr.bf16.mxu0 %v2565
        %3561 = vmatpush1.bf16.msra.mxu0 %v2564
        %3562 = vmatprep.subr.bf16.mxu0 %v2581
        %3563 = vmatpush1.bf16.msra.mxu0 %v2580
        %3564 = vmatprep.subr.bf16.mxu0 %v2597
        %3565 = vmatpush1.bf16.msra.mxu0 %v2596
        %3566 = vmatprep.subr.bf16.mxu0 %v2613
        %3567 = vmatpush1.bf16.msra.mxu0 %v2612
        %3568 = vmatprep.subr.bf16.mxu0 %v2629
        %3569 = vmatpush1.bf16.msra.mxu0 %v2628
        %3570 = vmatprep.subr.bf16.mxu0 %v2645
        %3571 = vmatpush1.bf16.msra.mxu0 %v2644
        %3572 = vmatprep.subr.bf16.mxu0 %v2661
        %3573 = vmatpush1.bf16.msra.mxu0 %v2660
        %3574 = vmatprep.subr.bf16.mxu0 %v2677
        %3575 = vmatpush1.bf16.msra.mxu0 %v2676
        %3576 = vmatprep.mubr.bf16.mxu0 %v891
        %3577 = vmatmul.mubr.bf16.gmra.mrb[0].mxu0 %v890
        %v3578 = vpop.f32.mrb[0].mxu0
        %v3579 = vadd.f32 0.0, %v3578
        %v3580 = vpop.f32.mrb[0].mxu0
        %v3581 = vadd.f32 0.0, %v3580
        %v3582 = vpop.f32.mrb[0].mxu0
        %v3583 = vadd.f32 0.0, %v3582
        %v3584 = vpop.f32.mrb[0].mxu0
        %v3585 = vadd.f32 0.0, %v3584
        %3586 = vdwg.mxu0
        %3587 = vmatprep.subr.bf16.mxu0 %v2693
        %3588 = vmatpush1.bf16.msra.mxu0 %v2692
        %3589 = vmatprep.subr.bf16.mxu0 %v2709
        %3590 = vmatpush1.bf16.msra.mxu0 %v2708
        %3591 = vmatprep.subr.bf16.mxu0 %v2725
        %3592 = vmatpush1.bf16.msra.mxu0 %v2724
        %3593 = vmatprep.subr.bf16.mxu0 %v2741
        %3594 = vmatpush1.bf16.msra.mxu0 %v2740
        %3595 = vmatprep.subr.bf16.mxu0 %v2757
        %3596 = vmatpush1.bf16.msra.mxu0 %v2756
        %3597 = vmatprep.subr.bf16.mxu0 %v2773
        %3598 = vmatpush1.bf16.msra.mxu0 %v2772
        %3599 = vmatprep.subr.bf16.mxu0 %v2789
        %3600 = vmatpush1.bf16.msra.mxu0 %v2788
        %3601 = vmatprep.subr.bf16.mxu0 %v2805
        %3602 = vmatpush1.bf16.msra.mxu0 %v2804
        %3603 = vmatprep.subr.bf16.mxu0 %v2821
        %3604 = vmatpush1.bf16.msra.mxu0 %v2820
        %3605 = vmatprep.subr.bf16.mxu0 %v2837
        %3606 = vmatpush1.bf16.msra.mxu0 %v2836
        %3607 = vmatprep.subr.bf16.mxu0 %v2853
        %3608 = vmatpush1.bf16.msra.mxu0 %v2852
        %3609 = vmatprep.subr.bf16.mxu0 %v2869
        %3610 = vmatpush1.bf16.msra.mxu0 %v2868
        %3611 = vmatprep.subr.bf16.mxu0 %v2885
        %3612 = vmatpush1.bf16.msra.mxu0 %v2884
        %3613 = vmatprep.subr.bf16.mxu0 %v2901
        %3614 = vmatpush1.bf16.msra.mxu0 %v2900
        %3615 = vmatprep.subr.bf16.mxu0 %v2917
        %3616 = vmatpush1.bf16.msra.mxu0 %v2916
        %3617 = vmatprep.subr.bf16.mxu0 %v2933
        %3618 = vmatpush1.bf16.msra.mxu0 %v2932
        %3619 = vmatprep.mubr.bf16.mxu0 %v893
        %3620 = vmatmul.mubr.bf16.gmra.mrb[0].mxu0 %v892
        %v3621 = vpop.f32.mrb[0].mxu0
        %v3622 = vadd.f32 %v3579, %v3621
        %v3623 = vpop.f32.mrb[0].mxu0
        %v3624 = vadd.f32 %v3581, %v3623
        %v3625 = vpop.f32.mrb[0].mxu0
        %v3626 = vadd.f32 %v3583, %v3625
        %v3627 = vpop.f32.mrb[0].mxu0
        %v3628 = vadd.f32 %v3585, %v3627
        %3629 = vdwg.mxu0
        %3630 = vmatprep.subr.bf16.mxu0 %v2439
        %3631 = vmatpush1.bf16.msra.mxu0 %v2438
        %3632 = vmatprep.subr.bf16.mxu0 %v2455
        %3633 = vmatpush1.bf16.msra.mxu0 %v2454
        %3634 = vmatprep.subr.bf16.mxu0 %v2471
        %3635 = vmatpush1.bf16.msra.mxu0 %v2470
        %3636 = vmatprep.subr.bf16.mxu0 %v2487
        %3637 = vmatpush1.bf16.msra.mxu0 %v2486
        %3638 = vmatprep.subr.bf16.mxu0 %v2503
        %3639 = vmatpush1.bf16.msra.mxu0 %v2502
        %3640 = vmatprep.subr.bf16.mxu0 %v2519
        %3641 = vmatpush1.bf16.msra.mxu0 %v2518
        %3642 = vmatprep.subr.bf16.mxu0 %v2535
        %3643 = vmatpush1.bf16.msra.mxu0 %v2534
        %3644 = vmatprep.subr.bf16.mxu0 %v2551
        %3645 = vmatpush1.bf16.msra.mxu0 %v2550
        %3646 = vmatprep.subr.bf16.mxu0 %v2567
        %3647 = vmatpush1.bf16.msra.mxu0 %v2566
        %3648 = vmatprep.subr.bf16.mxu0 %v2583
        %3649 = vmatpush1.bf16.msra.mxu0 %v2582
        %3650 = vmatprep.subr.bf16.mxu0 %v2599
        %3651 = vmatpush1.bf16.msra.mxu0 %v2598
        %3652 = vmatprep.subr.bf16.mxu0 %v2615
        %3653 = vmatpush1.bf16.msra.mxu0 %v2614
        %3654 = vmatprep.subr.bf16.mxu0 %v2631
        %3655 = vmatpush1.bf16.msra.mxu0 %v2630
        %3656 = vmatprep.subr.bf16.mxu0 %v2647
        %3657 = vmatpush1.bf16.msra.mxu0 %v2646
        %3658 = vmatprep.subr.bf16.mxu0 %v2663
        %3659 = vmatpush1.bf16.msra.mxu0 %v2662
        %3660 = vmatprep.subr.bf16.mxu0 %v2679
        %3661 = vmatpush1.bf16.msra.mxu0 %v2678
        %3662 = vmatprep.mubr.bf16.mxu0 %v891
        %3663 = vmatmul.mubr.bf16.gmra.mrb[0].mxu0 %v890
        %v3664 = vpop.f32.mrb[0].mxu0
        %v3665 = vadd.f32 0.0, %v3664
        %v3666 = vpop.f32.mrb[0].mxu0
        %v3667 = vadd.f32 0.0, %v3666
        %v3668 = vpop.f32.mrb[0].mxu0
        %v3669 = vadd.f32 0.0, %v3668
        %v3670 = vpop.f32.mrb[0].mxu0
        %v3671 = vadd.f32 0.0, %v3670
        %3672 = vdwg.mxu0
        %3673 = vmatprep.subr.bf16.mxu0 %v2695
        %3674 = vmatpush1.bf16.msra.mxu0 %v2694
        %3675 = vmatprep.subr.bf16.mxu0 %v2711
        %3676 = vmatpush1.bf16.msra.mxu0 %v2710
        %3677 = vmatprep.subr.bf16.mxu0 %v2727
        %3678 = vmatpush1.bf16.msra.mxu0 %v2726
        %3679 = vmatprep.subr.bf16.mxu0 %v2743
        %3680 = vmatpush1.bf16.msra.mxu0 %v2742
        %3681 = vmatprep.subr.bf16.mxu0 %v2759
        %3682 = vmatpush1.bf16.msra.mxu0 %v2758
        %3683 = vmatprep.subr.bf16.mxu0 %v2775
        %3684 = vmatpush1.bf16.msra.mxu0 %v2774
        %3685 = vmatprep.subr.bf16.mxu0 %v2791
        %3686 = vmatpush1.bf16.msra.mxu0 %v2790
        %3687 = vmatprep.subr.bf16.mxu0 %v2807
        %3688 = vmatpush1.bf16.msra.mxu0 %v2806
        %3689 = vmatprep.subr.bf16.mxu0 %v2823
        %3690 = vmatpush1.bf16.msra.mxu0 %v2822
        %3691 = vmatprep.subr.bf16.mxu0 %v2839
        %3692 = vmatpush1.bf16.msra.mxu0 %v2838
        %3693 = vmatprep.subr.bf16.mxu0 %v2855
        %3694 = vmatpush1.bf16.msra.mxu0 %v2854
        %3695 = vmatprep.subr.bf16.mxu0 %v2871
        %3696 = vmatpush1.bf16.msra.mxu0 %v2870
        %3697 = vmatprep.subr.bf16.mxu0 %v2887
        %3698 = vmatpush1.bf16.msra.mxu0 %v2886
        %3699 = vmatprep.subr.bf16.mxu0 %v2903
        %3700 = vmatpush1.bf16.msra.mxu0 %v2902
        %3701 = vmatprep.subr.bf16.mxu0 %v2919
        %3702 = vmatpush1.bf16.msra.mxu0 %v2918
        %3703 = vmatprep.subr.bf16.mxu0 %v2935
        %3704 = vmatpush1.bf16.msra.mxu0 %v2934
        %3705 = vmatprep.mubr.bf16.mxu0 %v893
        %3706 = vmatmul.mubr.bf16.gmra.mrb[0].mxu0 %v892
        %v3707 = vpop.f32.mrb[0].mxu0
        %v3708 = vadd.f32 %v3665, %v3707
        %v3709 = vpop.f32.mrb[0].mxu0
        %v3710 = vadd.f32 %v3667, %v3709
        %v3711 = vpop.f32.mrb[0].mxu0
        %v3712 = vadd.f32 %v3669, %v3711
        %v3713 = vpop.f32.mrb[0].mxu0
        %v3714 = vadd.f32 %v3671, %v3713
        %3715 = vdwg.mxu0
        %3716 = vmatprep.subr.bf16.mxu0 %v2441
        %3717 = vmatpush1.bf16.msra.mxu0 %v2440
        %3718 = vmatprep.subr.bf16.mxu0 %v2457
        %3719 = vmatpush1.bf16.msra.mxu0 %v2456
        %3720 = vmatprep.subr.bf16.mxu0 %v2473
        %3721 = vmatpush1.bf16.msra.mxu0 %v2472
        %3722 = vmatprep.subr.bf16.mxu0 %v2489
        %3723 = vmatpush1.bf16.msra.mxu0 %v2488
        %3724 = vmatprep.subr.bf16.mxu0 %v2505
        %3725 = vmatpush1.bf16.msra.mxu0 %v2504
        %3726 = vmatprep.subr.bf16.mxu0 %v2521
        %3727 = vmatpush1.bf16.msra.mxu0 %v2520
        %3728 = vmatprep.subr.bf16.mxu0 %v2537
        %3729 = vmatpush1.bf16.msra.mxu0 %v2536
        %3730 = vmatprep.subr.bf16.mxu0 %v2553
        %3731 = vmatpush1.bf16.msra.mxu0 %v2552
        %3732 = vmatprep.subr.bf16.mxu0 %v2569
        %3733 = vmatpush1.bf16.msra.mxu0 %v2568
        %3734 = vmatprep.subr.bf16.mxu0 %v2585
        %3735 = vmatpush1.bf16.msra.mxu0 %v2584
        %3736 = vmatprep.subr.bf16.mxu0 %v2601
        %3737 = vmatpush1.bf16.msra.mxu0 %v2600
        %3738 = vmatprep.subr.bf16.mxu0 %v2617
        %3739 = vmatpush1.bf16.msra.mxu0 %v2616
        %3740 = vmatprep.subr.bf16.mxu0 %v2633
        %3741 = vmatpush1.bf16.msra.mxu0 %v2632
        %3742 = vmatprep.subr.bf16.mxu0 %v2649
        %3743 = vmatpush1.bf16.msra.mxu0 %v2648
        %3744 = vmatprep.subr.bf16.mxu0 %v2665
        %3745 = vmatpush1.bf16.msra.mxu0 %v2664
        %3746 = vmatprep.subr.bf16.mxu0 %v2681
        %3747 = vmatpush1.bf16.msra.mxu0 %v2680
        %3748 = vmatprep.mubr.bf16.mxu0 %v891
        %3749 = vmatmul.mubr.bf16.gmra.mrb[0].mxu0 %v890
        %v3750 = vpop.f32.mrb[0].mxu0
        %v3751 = vadd.f32 0.0, %v3750
        %v3752 = vpop.f32.mrb[0].mxu0
        %v3753 = vadd.f32 0.0, %v3752
        %v3754 = vpop.f32.mrb[0].mxu0
        %v3755 = vadd.f32 0.0, %v3754
        %v3756 = vpop.f32.mrb[0].mxu0
        %v3757 = vadd.f32 0.0, %v3756
        %3758 = vdwg.mxu0
        %3759 = vmatprep.subr.bf16.mxu0 %v2697
        %3760 = vmatpush1.bf16.msra.mxu0 %v2696
        %3761 = vmatprep.subr.bf16.mxu0 %v2713
        %3762 = vmatpush1.bf16.msra.mxu0 %v2712
        %3763 = vmatprep.subr.bf16.mxu0 %v2729
        %3764 = vmatpush1.bf16.msra.mxu0 %v2728
        %3765 = vmatprep.subr.bf16.mxu0 %v2745
        %3766 = vmatpush1.bf16.msra.mxu0 %v2744
        %3767 = vmatprep.subr.bf16.mxu0 %v2761
        %3768 = vmatpush1.bf16.msra.mxu0 %v2760
        %3769 = vmatprep.subr.bf16.mxu0 %v2777
        %3770 = vmatpush1.bf16.msra.mxu0 %v2776
        %3771 = vmatprep.subr.bf16.mxu0 %v2793
        %3772 = vmatpush1.bf16.msra.mxu0 %v2792
        %3773 = vmatprep.subr.bf16.mxu0 %v2809
        %3774 = vmatpush1.bf16.msra.mxu0 %v2808
        %3775 = vmatprep.subr.bf16.mxu0 %v2825
        %3776 = vmatpush1.bf16.msra.mxu0 %v2824
        %3777 = vmatprep.subr.bf16.mxu0 %v2841
        %3778 = vmatpush1.bf16.msra.mxu0 %v2840
        %3779 = vmatprep.subr.bf16.mxu0 %v2857
        %3780 = vmatpush1.bf16.msra.mxu0 %v2856
        %3781 = vmatprep.subr.bf16.mxu0 %v2873
        %3782 = vmatpush1.bf16.msra.mxu0 %v2872
        %3783 = vmatprep.subr.bf16.mxu0 %v2889
        %3784 = vmatpush1.bf16.msra.mxu0 %v2888
        %3785 = vmatprep.subr.bf16.mxu0 %v2905
        %3786 = vmatpush1.bf16.msra.mxu0 %v2904
        %3787 = vmatprep.subr.bf16.mxu0 %v2921
        %3788 = vmatpush1.bf16.msra.mxu0 %v2920
        %3789 = vmatprep.subr.bf16.mxu0 %v2937
        %3790 = vmatpush1.bf16.msra.mxu0 %v2936
        %3791 = vmatprep.mubr.bf16.mxu0 %v893
        %3792 = vmatmul.mubr.bf16.gmra.mrb[0].mxu0 %v892
        %v3793 = vpop.f32.mrb[0].mxu0
        %v3794 = vadd.f32 %v3751, %v3793
        %v3795 = vpop.f32.mrb[0].mxu0
        %v3796 = vadd.f32 %v3753, %v3795
        %v3797 = vpop.f32.mrb[0].mxu0
        %v3798 = vadd.f32 %v3755, %v3797
        %v3799 = vpop.f32.mrb[0].mxu0
        %v3800 = vadd.f32 %v3757, %v3799
        %3801 = vdwg.mxu0
        %3802 = vmatprep.subr.bf16.mxu0 %v2443
        %3803 = vmatpush1.bf16.msra.mxu0 %v2442
        %3804 = vmatprep.subr.bf16.mxu0 %v2459
        %3805 = vmatpush1.bf16.msra.mxu0 %v2458
        %3806 = vmatprep.subr.bf16.mxu0 %v2475
        %3807 = vmatpush1.bf16.msra.mxu0 %v2474
        %3808 = vmatprep.subr.bf16.mxu0 %v2491
        %3809 = vmatpush1.bf16.msra.mxu0 %v2490
        %3810 = vmatprep.subr.bf16.mxu0 %v2507
        %3811 = vmatpush1.bf16.msra.mxu0 %v2506
        %3812 = vmatprep.subr.bf16.mxu0 %v2523
        %3813 = vmatpush1.bf16.msra.mxu0 %v2522
        %3814 = vmatprep.subr.bf16.mxu0 %v2539
        %3815 = vmatpush1.bf16.msra.mxu0 %v2538
        %3816 = vmatprep.subr.bf16.mxu0 %v2555
        %3817 = vmatpush1.bf16.msra.mxu0 %v2554
        %3818 = vmatprep.subr.bf16.mxu0 %v2571
        %3819 = vmatpush1.bf16.msra.mxu0 %v2570
        %3820 = vmatprep.subr.bf16.mxu0 %v2587
        %3821 = vmatpush1.bf16.msra.mxu0 %v2586
        %3822 = vmatprep.subr.bf16.mxu0 %v2603
        %3823 = vmatpush1.bf16.msra.mxu0 %v2602
        %3824 = vmatprep.subr.bf16.mxu0 %v2619
        %3825 = vmatpush1.bf16.msra.mxu0 %v2618
        %3826 = vmatprep.subr.bf16.mxu0 %v2635
        %3827 = vmatpush1.bf16.msra.mxu0 %v2634
        %3828 = vmatprep.subr.bf16.mxu0 %v2651
        %3829 = vmatpush1.bf16.msra.mxu0 %v2650
        %3830 = vmatprep.subr.bf16.mxu0 %v2667
        %3831 = vmatpush1.bf16.msra.mxu0 %v2666
        %3832 = vmatprep.subr.bf16.mxu0 %v2683
        %3833 = vmatpush1.bf16.msra.mxu0 %v2682
        %3834 = vmatprep.mubr.bf16.mxu0 %v891
        %3835 = vmatmul.mubr.bf16.gmra.mrb[0].mxu0 %v890
        %v3836 = vpop.f32.mrb[0].mxu0
        %v3837 = vadd.f32 0.0, %v3836
        %v3838 = vpop.f32.mrb[0].mxu0
        %v3839 = vadd.f32 0.0, %v3838
        %v3840 = vpop.f32.mrb[0].mxu0
        %v3841 = vadd.f32 0.0, %v3840
        %v3842 = vpop.f32.mrb[0].mxu0
        %v3843 = vadd.f32 0.0, %v3842
        %3844 = vdwg.mxu0
        %3845 = vmatprep.subr.bf16.mxu0 %v2699
        %3846 = vmatpush1.bf16.msra.mxu0 %v2698
        %3847 = vmatprep.subr.bf16.mxu0 %v2715
        %3848 = vmatpush1.bf16.msra.mxu0 %v2714
        %3849 = vmatprep.subr.bf16.mxu0 %v2731
        %3850 = vmatpush1.bf16.msra.mxu0 %v2730
        %3851 = vmatprep.subr.bf16.mxu0 %v2747
        %3852 = vmatpush1.bf16.msra.mxu0 %v2746
        %3853 = vmatprep.subr.bf16.mxu0 %v2763
        %3854 = vmatpush1.bf16.msra.mxu0 %v2762
        %3855 = vmatprep.subr.bf16.mxu0 %v2779
        %3856 = vmatpush1.bf16.msra.mxu0 %v2778
        %3857 = vmatprep.subr.bf16.mxu0 %v2795
        %3858 = vmatpush1.bf16.msra.mxu0 %v2794
        %3859 = vmatprep.subr.bf16.mxu0 %v2811
        %3860 = vmatpush1.bf16.msra.mxu0 %v2810
        %3861 = vmatprep.subr.bf16.mxu0 %v2827
        %3862 = vmatpush1.bf16.msra.mxu0 %v2826
        %3863 = vmatprep.subr.bf16.mxu0 %v2843
        %3864 = vmatpush1.bf16.msra.mxu0 %v2842
        %3865 = vmatprep.subr.bf16.mxu0 %v2859
        %3866 = vmatpush1.bf16.msra.mxu0 %v2858
        %3867 = vmatprep.subr.bf16.mxu0 %v2875
        %3868 = vmatpush1.bf16.msra.mxu0 %v2874
        %3869 = vmatprep.subr.bf16.mxu0 %v2891
        %3870 = vmatpush1.bf16.msra.mxu0 %v2890
        %3871 = vmatprep.subr.bf16.mxu0 %v2907
        %3872 = vmatpush1.bf16.msra.mxu0 %v2906
        %3873 = vmatprep.subr.bf16.mxu0 %v2923
        %3874 = vmatpush1.bf16.msra.mxu0 %v2922
        %3875 = vmatprep.subr.bf16.mxu0 %v2939
        %3876 = vmatpush1.bf16.msra.mxu0 %v2938
        %3877 = vmatprep.mubr.bf16.mxu0 %v893
        %3878 = vmatmul.mubr.bf16.gmra.mrb[0].mxu0 %v892
        %v3879 = vpop.f32.mrb[0].mxu0
        %v3880 = vadd.f32 %v3837, %v3879
        %v3881 = vpop.f32.mrb[0].mxu0
        %v3882 = vadd.f32 %v3839, %v3881
        %v3883 = vpop.f32.mrb[0].mxu0
        %v3884 = vadd.f32 %v3841, %v3883
        %v3885 = vpop.f32.mrb[0].mxu0
        %v3886 = vadd.f32 %v3843, %v3885
        %3887 = vdwg.mxu0
        %3888 = vmatprep.subr.bf16.mxu0 %v2445
        %3889 = vmatpush1.bf16.msra.mxu0 %v2444
        %3890 = vmatprep.subr.bf16.mxu0 %v2461
        %3891 = vmatpush1.bf16.msra.mxu0 %v2460
        %3892 = vmatprep.subr.bf16.mxu0 %v2477
        %3893 = vmatpush1.bf16.msra.mxu0 %v2476
        %3894 = vmatprep.subr.bf16.mxu0 %v2493
        %3895 = vmatpush1.bf16.msra.mxu0 %v2492
        %3896 = vmatprep.subr.bf16.mxu0 %v2509
        %3897 = vmatpush1.bf16.msra.mxu0 %v2508
        %3898 = vmatprep.subr.bf16.mxu0 %v2525
        %3899 = vmatpush1.bf16.msra.mxu0 %v2524
        %3900 = vmatprep.subr.bf16.mxu0 %v2541
        %3901 = vmatpush1.bf16.msra.mxu0 %v2540
        %3902 = vmatprep.subr.bf16.mxu0 %v2557
        %3903 = vmatpush1.bf16.msra.mxu0 %v2556
        %3904 = vmatprep.subr.bf16.mxu0 %v2573
        %3905 = vmatpush1.bf16.msra.mxu0 %v2572
        %3906 = vmatprep.subr.bf16.mxu0 %v2589
        %3907 = vmatpush1.bf16.msra.mxu0 %v2588
        %3908 = vmatprep.subr.bf16.mxu0 %v2605
        %3909 = vmatpush1.bf16.msra.mxu0 %v2604
        %3910 = vmatprep.subr.bf16.mxu0 %v2621
        %3911 = vmatpush1.bf16.msra.mxu0 %v2620
        %3912 = vmatprep.subr.bf16.mxu0 %v2637
        %3913 = vmatpush1.bf16.msra.mxu0 %v2636
        %3914 = vmatprep.subr.bf16.mxu0 %v2653
        %3915 = vmatpush1.bf16.msra.mxu0 %v2652
        %3916 = vmatprep.subr.bf16.mxu0 %v2669
        %3917 = vmatpush1.bf16.msra.mxu0 %v2668
        %3918 = vmatprep.subr.bf16.mxu0 %v2685
        %3919 = vmatpush1.bf16.msra.mxu0 %v2684
        %3920 = vmatprep.mubr.bf16.mxu0 %v891
        %3921 = vmatmul.mubr.bf16.gmra.mrb[0].mxu0 %v890
        %v3922 = vpop.f32.mrb[0].mxu0
        %v3923 = vadd.f32 0.0, %v3922
        %v3924 = vpop.f32.mrb[0].mxu0
        %v3925 = vadd.f32 0.0, %v3924
        %v3926 = vpop.f32.mrb[0].mxu0
        %v3927 = vadd.f32 0.0, %v3926
        %v3928 = vpop.f32.mrb[0].mxu0
        %v3929 = vadd.f32 0.0, %v3928
        %3930 = vdwg.mxu0
        %3931 = vmatprep.subr.bf16.mxu0 %v2701
        %3932 = vmatpush1.bf16.msra.mxu0 %v2700
        %3933 = vmatprep.subr.bf16.mxu0 %v2717
        %3934 = vmatpush1.bf16.msra.mxu0 %v2716
        %3935 = vmatprep.subr.bf16.mxu0 %v2733
        %3936 = vmatpush1.bf16.msra.mxu0 %v2732
        %3937 = vmatprep.subr.bf16.mxu0 %v2749
        %3938 = vmatpush1.bf16.msra.mxu0 %v2748
        %3939 = vmatprep.subr.bf16.mxu0 %v2765
        %3940 = vmatpush1.bf16.msra.mxu0 %v2764
        %3941 = vmatprep.subr.bf16.mxu0 %v2781
        %3942 = vmatpush1.bf16.msra.mxu0 %v2780
        %3943 = vmatprep.subr.bf16.mxu0 %v2797
        %3944 = vmatpush1.bf16.msra.mxu0 %v2796
        %3945 = vmatprep.subr.bf16.mxu0 %v2813
        %3946 = vmatpush1.bf16.msra.mxu0 %v2812
        %3947 = vmatprep.subr.bf16.mxu0 %v2829
        %3948 = vmatpush1.bf16.msra.mxu0 %v2828
        %3949 = vmatprep.subr.bf16.mxu0 %v2845
        %3950 = vmatpush1.bf16.msra.mxu0 %v2844
        %3951 = vmatprep.subr.bf16.mxu0 %v2861
        %3952 = vmatpush1.bf16.msra.mxu0 %v2860
        %3953 = vmatprep.subr.bf16.mxu0 %v2877
        %3954 = vmatpush1.bf16.msra.mxu0 %v2876
        %3955 = vmatprep.subr.bf16.mxu0 %v2893
        %3956 = vmatpush1.bf16.msra.mxu0 %v2892
        %3957 = vmatprep.subr.bf16.mxu0 %v2909
        %3958 = vmatpush1.bf16.msra.mxu0 %v2908
        %3959 = vmatprep.subr.bf16.mxu0 %v2925
        %3960 = vmatpush1.bf16.msra.mxu0 %v2924
        %3961 = vmatprep.subr.bf16.mxu0 %v2941
        %3962 = vmatpush1.bf16.msra.mxu0 %v2940
        %3963 = vmatprep.mubr.bf16.mxu0 %v893
        %3964 = vmatmul.mubr.bf16.gmra.mrb[0].mxu0 %v892
        %v3965 = vpop.f32.mrb[0].mxu0
        %v3966 = vadd.f32 %v3923, %v3965
        %v3967 = vpop.f32.mrb[0].mxu0
        %v3968 = vadd.f32 %v3925, %v3967
        %v3969 = vpop.f32.mrb[0].mxu0
        %v3970 = vadd.f32 %v3927, %v3969
        %v3971 = vpop.f32.mrb[0].mxu0
        %v3972 = vadd.f32 %v3929, %v3971
        %3973 = vdwg.mxu0
        %3974 = vmatprep.subr.bf16.mxu0 %v2447
        %3975 = vmatpush1.bf16.msra.mxu0 %v2446
        %3976 = vmatprep.subr.bf16.mxu0 %v2463
        %3977 = vmatpush1.bf16.msra.mxu0 %v2462
        %3978 = vmatprep.subr.bf16.mxu0 %v2479
        %3979 = vmatpush1.bf16.msra.mxu0 %v2478
        %3980 = vmatprep.subr.bf16.mxu0 %v2495
        %3981 = vmatpush1.bf16.msra.mxu0 %v2494
        %3982 = vmatprep.subr.bf16.mxu0 %v2511
        %3983 = vmatpush1.bf16.msra.mxu0 %v2510
        %3984 = vmatprep.subr.bf16.mxu0 %v2527
        %3985 = vmatpush1.bf16.msra.mxu0 %v2526
        %3986 = vmatprep.subr.bf16.mxu0 %v2543
        %3987 = vmatpush1.bf16.msra.mxu0 %v2542
        %3988 = vmatprep.subr.bf16.mxu0 %v2559
        %3989 = vmatpush1.bf16.msra.mxu0 %v2558
        %3990 = vmatprep.subr.bf16.mxu0 %v2575
        %3991 = vmatpush1.bf16.msra.mxu0 %v2574
        %3992 = vmatprep.subr.bf16.mxu0 %v2591
        %3993 = vmatpush1.bf16.msra.mxu0 %v2590
        %3994 = vmatprep.subr.bf16.mxu0 %v2607
        %3995 = vmatpush1.bf16.msra.mxu0 %v2606
        %3996 = vmatprep.subr.bf16.mxu0 %v2623
        %3997 = vmatpush1.bf16.msra.mxu0 %v2622
        %3998 = vmatprep.subr.bf16.mxu0 %v2639
        %3999 = vmatpush1.bf16.msra.mxu0 %v2638
        %4000 = vmatprep.subr.bf16.mxu0 %v2655
        %4001 = vmatpush1.bf16.msra.mxu0 %v2654
        %4002 = vmatprep.subr.bf16.mxu0 %v2671
        %4003 = vmatpush1.bf16.msra.mxu0 %v2670
        %4004 = vmatprep.subr.bf16.mxu0 %v2687
        %4005 = vmatpush1.bf16.msra.mxu0 %v2686
        %4006 = vmatprep.mubr.bf16.mxu0 %v891
        %4007 = vmatmul.mubr.bf16.gmra.mrb[0].mxu0 %v890
        %v4008 = vpop.f32.mrb[0].mxu0
        %v4009 = vadd.f32 0.0, %v4008
        %v4010 = vpop.f32.mrb[0].mxu0
        %v4011 = vadd.f32 0.0, %v4010
        %v4012 = vpop.f32.mrb[0].mxu0
        %v4013 = vadd.f32 0.0, %v4012
        %v4014 = vpop.f32.mrb[0].mxu0
        %v4015 = vadd.f32 0.0, %v4014
        %4016 = vdwg.mxu0
        %4017 = vmatprep.subr.bf16.mxu0 %v2703
        %4018 = vmatpush1.bf16.msra.mxu0 %v2702
        %4019 = vmatprep.subr.bf16.mxu0 %v2719
        %4020 = vmatpush1.bf16.msra.mxu0 %v2718
        %4021 = vmatprep.subr.bf16.mxu0 %v2735
        %4022 = vmatpush1.bf16.msra.mxu0 %v2734
        %4023 = vmatprep.subr.bf16.mxu0 %v2751
        %4024 = vmatpush1.bf16.msra.mxu0 %v2750
        %4025 = vmatprep.subr.bf16.mxu0 %v2767
        %4026 = vmatpush1.bf16.msra.mxu0 %v2766
        %4027 = vmatprep.subr.bf16.mxu0 %v2783
        %4028 = vmatpush1.bf16.msra.mxu0 %v2782
        %4029 = vmatprep.subr.bf16.mxu0 %v2799
        %4030 = vmatpush1.bf16.msra.mxu0 %v2798
        %4031 = vmatprep.subr.bf16.mxu0 %v2815
        %4032 = vmatpush1.bf16.msra.mxu0 %v2814
        %4033 = vmatprep.subr.bf16.mxu0 %v2831
        %4034 = vmatpush1.bf16.msra.mxu0 %v2830
        %4035 = vmatprep.subr.bf16.mxu0 %v2847
        %4036 = vmatpush1.bf16.msra.mxu0 %v2846
        %4037 = vmatprep.subr.bf16.mxu0 %v2863
        %4038 = vmatpush1.bf16.msra.mxu0 %v2862
        %4039 = vmatprep.subr.bf16.mxu0 %v2879
        %4040 = vmatpush1.bf16.msra.mxu0 %v2878
        %4041 = vmatprep.subr.bf16.mxu0 %v2895
        %4042 = vmatpush1.bf16.msra.mxu0 %v2894
        %4043 = vmatprep.subr.bf16.mxu0 %v2911
        %4044 = vmatpush1.bf16.msra.mxu0 %v2910
        %4045 = vmatprep.subr.bf16.mxu0 %v2927
        %4046 = vmatpush1.bf16.msra.mxu0 %v2926
        %4047 = vmatprep.subr.bf16.mxu0 %v2943
        %4048 = vmatpush1.bf16.msra.mxu0 %v2942
        %4049 = vmatprep.mubr.bf16.mxu0 %v893
        %4050 = vmatmul.mubr.bf16.gmra.mrb[0].mxu0 %v892
        %v4051 = vpop.f32.mrb[0].mxu0
        %v4052 = vadd.f32 %v4009, %v4051
        %v4053 = vpop.f32.mrb[0].mxu0
        %v4054 = vadd.f32 %v4011, %v4053
        %v4055 = vpop.f32.mrb[0].mxu0
        %v4056 = vadd.f32 %v4013, %v4055
        %v4057 = vpop.f32.mrb[0].mxu0
        %v4058 = vadd.f32 %v4015, %v4057
        %4059 = vdwg.mxu0
        %4060 = vmatprep.subr.bf16.mxu0 %v2449
        %4061 = vmatpush1.bf16.msra.mxu0 %v2448
        %4062 = vmatprep.subr.bf16.mxu0 %v2465
        %4063 = vmatpush1.bf16.msra.mxu0 %v2464
        %4064 = vmatprep.subr.bf16.mxu0 %v2481
        %4065 = vmatpush1.bf16.msra.mxu0 %v2480
        %4066 = vmatprep.subr.bf16.mxu0 %v2497
        %4067 = vmatpush1.bf16.msra.mxu0 %v2496
        %4068 = vmatprep.subr.bf16.mxu0 %v2513
        %4069 = vmatpush1.bf16.msra.mxu0 %v2512
        %4070 = vmatprep.subr.bf16.mxu0 %v2529
        %4071 = vmatpush1.bf16.msra.mxu0 %v2528
        %4072 = vmatprep.subr.bf16.mxu0 %v2545
        %4073 = vmatpush1.bf16.msra.mxu0 %v2544
        %4074 = vmatprep.subr.bf16.mxu0 %v2561
        %4075 = vmatpush1.bf16.msra.mxu0 %v2560
        %4076 = vmatprep.subr.bf16.mxu0 %v2577
        %4077 = vmatpush1.bf16.msra.mxu0 %v2576
        %4078 = vmatprep.subr.bf16.mxu0 %v2593
        %4079 = vmatpush1.bf16.msra.mxu0 %v2592
        %4080 = vmatprep.subr.bf16.mxu0 %v2609
        %4081 = vmatpush1.bf16.msra.mxu0 %v2608
        %4082 = vmatprep.subr.bf16.mxu0 %v2625
        %4083 = vmatpush1.bf16.msra.mxu0 %v2624
        %4084 = vmatprep.subr.bf16.mxu0 %v2641
        %4085 = vmatpush1.bf16.msra.mxu0 %v2640
        %4086 = vmatprep.subr.bf16.mxu0 %v2657
        %4087 = vmatpush1.bf16.msra.mxu0 %v2656
        %4088 = vmatprep.subr.bf16.mxu0 %v2673
        %4089 = vmatpush1.bf16.msra.mxu0 %v2672
        %4090 = vmatprep.subr.bf16.mxu0 %v2689
        %4091 = vmatpush1.bf16.msra.mxu0 %v2688
        %4092 = vmatprep.mubr.bf16.mxu0 %v891
        %4093 = vmatmul.mubr.bf16.gmra.mrb[0].mxu0 %v890
        %v4094 = vpop.f32.mrb[0].mxu0
        %v4095 = vadd.f32 0.0, %v4094
        %v4096 = vpop.f32.mrb[0].mxu0
        %v4097 = vadd.f32 0.0, %v4096
        %v4098 = vpop.f32.mrb[0].mxu0
        %v4099 = vadd.f32 0.0, %v4098
        %v4100 = vpop.f32.mrb[0].mxu0
        %v4101 = vadd.f32 0.0, %v4100
        %4102 = vdwg.mxu0
        %4103 = vmatprep.subr.bf16.mxu0 %v2705
        %4104 = vmatpush1.bf16.msra.mxu0 %v2704
        %4105 = vmatprep.subr.bf16.mxu0 %v2721
        %4106 = vmatpush1.bf16.msra.mxu0 %v2720
        %4107 = vmatprep.subr.bf16.mxu0 %v2737
        %4108 = vmatpush1.bf16.msra.mxu0 %v2736
        %4109 = vmatprep.subr.bf16.mxu0 %v2753
        %4110 = vmatpush1.bf16.msra.mxu0 %v2752
        %4111 = vmatprep.subr.bf16.mxu0 %v2769
        %4112 = vmatpush1.bf16.msra.mxu0 %v2768
        %4113 = vmatprep.subr.bf16.mxu0 %v2785
        %4114 = vmatpush1.bf16.msra.mxu0 %v2784
        %4115 = vmatprep.subr.bf16.mxu0 %v2801
        %4116 = vmatpush1.bf16.msra.mxu0 %v2800
        %4117 = vmatprep.subr.bf16.mxu0 %v2817
        %4118 = vmatpush1.bf16.msra.mxu0 %v2816
        %4119 = vmatprep.subr.bf16.mxu0 %v2833
        %4120 = vmatpush1.bf16.msra.mxu0 %v2832
        %4121 = vmatprep.subr.bf16.mxu0 %v2849
        %4122 = vmatpush1.bf16.msra.mxu0 %v2848
        %4123 = vmatprep.subr.bf16.mxu0 %v2865
        %4124 = vmatpush1.bf16.msra.mxu0 %v2864
        %4125 = vmatprep.subr.bf16.mxu0 %v2881
        %4126 = vmatpush1.bf16.msra.mxu0 %v2880
        %4127 = vmatprep.subr.bf16.mxu0 %v2897
        %4128 = vmatpush1.bf16.msra.mxu0 %v2896
        %4129 = vmatprep.subr.bf16.mxu0 %v2913
        %4130 = vmatpush1.bf16.msra.mxu0 %v2912
        %4131 = vmatprep.subr.bf16.mxu0 %v2929
        %4132 = vmatpush1.bf16.msra.mxu0 %v2928
        %4133 = vmatprep.subr.bf16.mxu0 %v2945
        %4134 = vmatpush1.bf16.msra.mxu0 %v2944
        %4135 = vmatprep.mubr.bf16.mxu0 %v893
        %4136 = vmatmul.mubr.bf16.gmra.mrb[0].mxu0 %v892
        %v4137 = vpop.f32.mrb[0].mxu0
        %v4138 = vadd.f32 %v4095, %v4137
        %v4139 = vpop.f32.mrb[0].mxu0
        %v4140 = vadd.f32 %v4097, %v4139
        %v4141 = vpop.f32.mrb[0].mxu0
        %v4142 = vadd.f32 %v4099, %v4141
        %v4143 = vpop.f32.mrb[0].mxu0
        %v4144 = vadd.f32 %v4101, %v4143
        %4145 = vdwg.mxu0
        %v4146 = vadd.f32 %v330, %v3536
        %v4147 = vadd.f32 %v331, %v3538
        %v4148 = vadd.f32 %v332, %v3622
        %v4149 = vadd.f32 %v333, %v3624
        %v4150 = vadd.f32 %v334, %v3708
        %v4151 = vadd.f32 %v335, %v3710
        %v4152 = vadd.f32 %v336, %v3794
        %v4153 = vadd.f32 %v337, %v3796
        %v4154 = vadd.f32 %v338, %v3880
        %v4155 = vadd.f32 %v339, %v3882
        %v4156 = vadd.f32 %v340, %v3966
        %v4157 = vadd.f32 %v341, %v3968
        %v4158 = vadd.f32 %v342, %v4052
        %v4159 = vadd.f32 %v343, %v4054
        %v4160 = vadd.f32 %v344, %v4138
        %v4161 = vadd.f32 %v345, %v4140
        %v4162 = vadd.f32 %v346, %v3540
        %v4163 = vadd.f32 %v347, %v3542
        %v4164 = vadd.f32 %v348, %v3626
        %v4165 = vadd.f32 %v349, %v3628
        %v4166 = vadd.f32 %v350, %v3712
        %v4167 = vadd.f32 %v351, %v3714
        %v4168 = vadd.f32 %v352, %v3798
        %v4169 = vadd.f32 %v353, %v3800
        %v4170 = vadd.f32 %v354, %v3884
        %v4171 = vadd.f32 %v355, %v3886
        %v4172 = vadd.f32 %v356, %v3970
        %v4173 = vadd.f32 %v357, %v3972
        %v4174 = vadd.f32 %v358, %v4056
        %v4175 = vadd.f32 %v359, %v4058
        %v4176 = vadd.f32 %v360, %v4142
        %v4177 = vadd.f32 %v361, %v4144
        %4178 = vst [vmem:[#allocation2] sm:$0xff] %v4146
        %4179 = vst [vmem:[#allocation2 + $0x8] sm:$0xff] %v4147
        %4180 = vst [vmem:[#allocation2 + $0x10] sm:$0xff] %v4148
        %4181 = vst [vmem:[#allocation2 + $0x18] sm:$0xff] %v4149
        %4182 = vst [vmem:[#allocation2 + $0x20] sm:$0xff] %v4150
        %4183 = vst [vmem:[#allocation2 + $0x28] sm:$0xff] %v4151
        %4184 = vst [vmem:[#allocation2 + $0x30] sm:$0xff] %v4152
        %4185 = vst [vmem:[#allocation2 + $0x38] sm:$0xff] %v4153
        %4186 = vst [vmem:[#allocation2 + $0x40] sm:$0xff] %v4154
        %4187 = vst [vmem:[#allocation2 + $0x48] sm:$0xff] %v4155
        %4188 = vst [vmem:[#allocation2 + $0x50] sm:$0xff] %v4156
        %4189 = vst [vmem:[#allocation2 + $0x58] sm:$0xff] %v4157
        %4190 = vst [vmem:[#allocation2 + $0x60] sm:$0xff] %v4158
        %4191 = vst [vmem:[#allocation2 + $0x68] sm:$0xff] %v4159
        %4192 = vst [vmem:[#allocation2 + $0x70] sm:$0xff] %v4160
        %4193 = vst [vmem:[#allocation2 + $0x78] sm:$0xff] %v4161
        %4194 = vst [vmem:[#allocation2 + $0x80] sm:$0xff] %v4162
        %4195 = vst [vmem:[#allocation2 + $0x88] sm:$0xff] %v4163
        %4196 = vst [vmem:[#allocation2 + $0x90] sm:$0xff] %v4164
        %4197 = vst [vmem:[#allocation2 + $0x98] sm:$0xff] %v4165
        %4198 = vst [vmem:[#allocation2 + $0xa0] sm:$0xff] %v4166
        %4199 = vst [vmem:[#allocation2 + $0xa8] sm:$0xff] %v4167
        %4200 = vst [vmem:[#allocation2 + $0xb0] sm:$0xff] %v4168
        %4201 = vst [vmem:[#allocation2 + $0xb8] sm:$0xff] %v4169
        %4202 = vst [vmem:[#allocation2 + $0xc0] sm:$0xff] %v4170
        %4203 = vst [vmem:[#allocation2 + $0xc8] sm:$0xff] %v4171
        %4204 = vst [vmem:[#allocation2 + $0xd0] sm:$0xff] %v4172
        %4205 = vst [vmem:[#allocation2 + $0xd8] sm:$0xff] %v4173
        %4206 = vst [vmem:[#allocation2 + $0xe0] sm:$0xff] %v4174
        %4207 = vst [vmem:[#allocation2 + $0xe8] sm:$0xff] %v4175
        %4208 = vst [vmem:[#allocation2 + $0xf0] sm:$0xff] %v4176
        %4209 = vst [vmem:[#allocation2 + $0xf8] sm:$0xff] %v4177
        %p4210 = scmp.eq.s32.totalorder %s24, 1
        // Predicated region
        $region68: #{simplenet_forward.4} parent=58 // pred_check
          %p4211 = pneg %p4210
        $region69: #{simplenet_forward.4} parent=58 // pred_check_branch
          %4213 = sbr.rel (%p4211) target = $region71
        $region70: #{simplenet_forward.4} parent=58 // pred_region
          %v4214 = vld [vmem:[#allocation2] sm:$0xff]
          %v4215 = vld [vmem:[#allocation2 + $0x8] sm:$0xff]
          %v4216 = vld [vmem:[#allocation2 + $0x10] sm:$0xff]
          %v4217 = vld [vmem:[#allocation2 + $0x18] sm:$0xff]
          %v4218 = vld [vmem:[#allocation2 + $0x20] sm:$0xff]
          %v4219 = vld [vmem:[#allocation2 + $0x28] sm:$0xff]
          %v4220 = vld [vmem:[#allocation2 + $0x30] sm:$0xff]
          %v4221 = vld [vmem:[#allocation2 + $0x38] sm:$0xff]
          %v4222 = vld [vmem:[#allocation2 + $0x40] sm:$0xff]
          %v4223 = vld [vmem:[#allocation2 + $0x48] sm:$0xff]
          %v4224 = vld [vmem:[#allocation2 + $0x50] sm:$0xff]
          %v4225 = vld [vmem:[#allocation2 + $0x58] sm:$0xff]
          %v4226 = vld [vmem:[#allocation2 + $0x60] sm:$0xff]
          %v4227 = vld [vmem:[#allocation2 + $0x68] sm:$0xff]
          %v4228 = vld [vmem:[#allocation2 + $0x70] sm:$0xff]
          %v4229 = vld [vmem:[#allocation2 + $0x78] sm:$0xff]
          %v4230 = vld [vmem:[#allocation2 + $0x80] sm:$0xff]
          %v4231 = vld [vmem:[#allocation2 + $0x88] sm:$0xff]
          %v4232 = vld [vmem:[#allocation2 + $0x90] sm:$0xff]
          %v4233 = vld [vmem:[#allocation2 + $0x98] sm:$0xff]
          %v4234 = vld [vmem:[#allocation2 + $0xa0] sm:$0xff]
          %v4235 = vld [vmem:[#allocation2 + $0xa8] sm:$0xff]
          %v4236 = vld [vmem:[#allocation2 + $0xb0] sm:$0xff]
          %v4237 = vld [vmem:[#allocation2 + $0xb8] sm:$0xff]
          %v4238 = vld [vmem:[#allocation2 + $0xc0] sm:$0xff]
          %v4239 = vld [vmem:[#allocation2 + $0xc8] sm:$0xff]
          %v4240 = vld [vmem:[#allocation2 + $0xd0] sm:$0xff]
          %v4241 = vld [vmem:[#allocation2 + $0xd8] sm:$0xff]
          %v4242 = vld [vmem:[#allocation2 + $0xe0] sm:$0xff]
          %v4243 = vld [vmem:[#allocation2 + $0xe8] sm:$0xff]
          %v4244 = vld [vmem:[#allocation2 + $0xf0] sm:$0xff]
          %v4245 = vld [vmem:[#allocation2 + $0xf8] sm:$0xff]
          %v4246 = vld [vmem:[%s2] sm:$0xff]
          %v4247 = vld [vmem:[%s2 + $0x8] sm:$0xff]
          %v4250 = vlaneseq
          %v4251 = vshrl.u32 %v4250, 7
          %v4252 = vsub.s32 0, %v4251
          %v4253 = vrot.slane %v4246, %v4252
          %v4254 = vlaneseq
          %v4255 = vshrl.u32 %v4254, 7
          %v4256 = vsub.s32 1, %v4255
          %v4257 = vrot.slane %v4246, %v4256
          %v4258 = vlaneseq
          %v4259 = vshrl.u32 %v4258, 7
          %v4260 = vsub.s32 2, %v4259
          %v4261 = vrot.slane %v4246, %v4260
          %v4262 = vlaneseq
          %v4263 = vshrl.u32 %v4262, 7
          %v4264 = vsub.s32 3, %v4263
          %v4265 = vrot.slane %v4246, %v4264
          %v4266 = vlaneseq
          %v4267 = vshrl.u32 %v4266, 7
          %v4268 = vsub.s32 4, %v4267
          %v4269 = vrot.slane %v4246, %v4268
          %v4270 = vlaneseq
          %v4271 = vshrl.u32 %v4270, 7
          %v4272 = vsub.s32 5, %v4271
          %v4273 = vrot.slane %v4246, %v4272
          %v4274 = vlaneseq
          %v4275 = vshrl.u32 %v4274, 7
          %v4276 = vsub.s32 6, %v4275
          %v4277 = vrot.slane %v4246, %v4276
          %v4278 = vlaneseq
          %v4279 = vshrl.u32 %v4278, 7
          %v4280 = vsub.s32 7, %v4279
          %v4281 = vrot.slane %v4246, %v4280
          %v4282 = vlaneseq
          %v4283 = vshrl.u32 %v4282, 7
          %v4284 = vsub.s32 0, %v4283
          %v4285 = vrot.slane %v4247, %v4284
          %v4286 = vlaneseq
          %v4287 = vshrl.u32 %v4286, 7
          %v4288 = vsub.s32 1, %v4287
          %v4289 = vrot.slane %v4247, %v4288
          %v4290 = vlaneseq
          %v4291 = vshrl.u32 %v4290, 7
          %v4292 = vsub.s32 2, %v4291
          %v4293 = vrot.slane %v4247, %v4292
          %v4294 = vlaneseq
          %v4295 = vshrl.u32 %v4294, 7
          %v4296 = vsub.s32 3, %v4295
          %v4297 = vrot.slane %v4247, %v4296
          %v4298 = vlaneseq
          %v4299 = vshrl.u32 %v4298, 7
          %v4300 = vsub.s32 4, %v4299
          %v4301 = vrot.slane %v4247, %v4300
          %v4302 = vlaneseq
          %v4303 = vshrl.u32 %v4302, 7
          %v4304 = vsub.s32 5, %v4303
          %v4305 = vrot.slane %v4247, %v4304
          %v4306 = vlaneseq
          %v4307 = vshrl.u32 %v4306, 7
          %v4308 = vsub.s32 6, %v4307
          %v4309 = vrot.slane %v4247, %v4308
          %v4310 = vlaneseq
          %v4311 = vshrl.u32 %v4310, 7
          %v4312 = vsub.s32 7, %v4311
          %v4313 = vrot.slane %v4247, %v4312
          %v4330 = vadd.f32 %v4214, %v4253
          %v4331 = vadd.f32 %v4215, %v4257
          %v4332 = vadd.f32 %v4216, %v4261
          %v4333 = vadd.f32 %v4217, %v4265
          %v4334 = vadd.f32 %v4218, %v4269
          %v4335 = vadd.f32 %v4219, %v4273
          %v4336 = vadd.f32 %v4220, %v4277
          %v4337 = vadd.f32 %v4221, %v4281
          %v4338 = vadd.f32 %v4222, %v4285
          %v4339 = vadd.f32 %v4223, %v4289
          %v4340 = vadd.f32 %v4224, %v4293
          %v4341 = vadd.f32 %v4225, %v4297
          %v4342 = vadd.f32 %v4226, %v4301
          %v4343 = vadd.f32 %v4227, %v4305
          %v4344 = vadd.f32 %v4228, %v4309
          %v4345 = vadd.f32 %v4229, %v4313
          %v4346 = vadd.f32 %v4230, %v4253
          %v4347 = vadd.f32 %v4231, %v4257
          %v4348 = vadd.f32 %v4232, %v4261
          %v4349 = vadd.f32 %v4233, %v4265
          %v4350 = vadd.f32 %v4234, %v4269
          %v4351 = vadd.f32 %v4235, %v4273
          %v4352 = vadd.f32 %v4236, %v4277
          %v4353 = vadd.f32 %v4237, %v4281
          %v4354 = vadd.f32 %v4238, %v4285
          %v4355 = vadd.f32 %v4239, %v4289
          %v4356 = vadd.f32 %v4240, %v4293
          %v4357 = vadd.f32 %v4241, %v4297
          %v4358 = vadd.f32 %v4242, %v4301
          %v4359 = vadd.f32 %v4243, %v4305
          %v4360 = vadd.f32 %v4244, %v4309
          %v4361 = vadd.f32 %v4245, %v4313
          %v4362 = vadd.f32 %v4330, %v4331
          %v4363 = vadd.f32 %v4362, %v4332
          %v4364 = vadd.f32 %v4363, %v4333
          %v4365 = vadd.f32 %v4364, %v4334
          %v4366 = vadd.f32 %v4365, %v4335
          %v4367 = vadd.f32 %v4366, %v4336
          %v4368 = vadd.f32 %v4367, %v4337
          %v4369 = vadd.f32 %v4368, %v4338
          %v4370 = vadd.f32 %v4369, %v4339
          %v4371 = vadd.f32 %v4370, %v4340
          %v4372 = vadd.f32 %v4371, %v4341
          %v4373 = vadd.f32 %v4372, %v4342
          %v4374 = vadd.f32 %v4373, %v4343
          %v4375 = vadd.f32 %v4374, %v4344
          %v4376 = vadd.f32 %v4375, %v4345
          %4377 = vadd.xlane.f32.xlu0 %v4376
          %v4378 = vpop.xlane.xlu0 %4377
          %v4379 = vadd.f32 %v4346, %v4347
          %v4380 = vadd.f32 %v4379, %v4348
          %v4381 = vadd.f32 %v4380, %v4349
          %v4382 = vadd.f32 %v4381, %v4350
          %v4383 = vadd.f32 %v4382, %v4351
          %v4384 = vadd.f32 %v4383, %v4352
          %v4385 = vadd.f32 %v4384, %v4353
          %v4386 = vadd.f32 %v4385, %v4354
          %v4387 = vadd.f32 %v4386, %v4355
          %v4388 = vadd.f32 %v4387, %v4356
          %v4389 = vadd.f32 %v4388, %v4357
          %v4390 = vadd.f32 %v4389, %v4358
          %v4391 = vadd.f32 %v4390, %v4359
          %v4392 = vadd.f32 %v4391, %v4360
          %v4393 = vadd.f32 %v4392, %v4361
          %4394 = vadd.xlane.f32.xlu0 %v4393
          %v4395 = vpop.xlane.xlu0 %4394
          %v4396 = vrcp.pop 2048.0
          %v4397 = vmul.f32 %v4378, %v4396
          %v4398 = vmul.f32 %v4395, %v4396
          %v4399 = vsub.f32 %v4330, %v4397
          %v4400 = vsub.f32 %v4331, %v4397
          %v4401 = vsub.f32 %v4332, %v4397
          %v4402 = vsub.f32 %v4333, %v4397
          %v4403 = vsub.f32 %v4334, %v4397
          %v4404 = vsub.f32 %v4335, %v4397
          %v4405 = vsub.f32 %v4336, %v4397
          %v4406 = vsub.f32 %v4337, %v4397
          %v4407 = vsub.f32 %v4338, %v4397
          %v4408 = vsub.f32 %v4339, %v4397
          %v4409 = vsub.f32 %v4340, %v4397
          %v4410 = vsub.f32 %v4341, %v4397
          %v4411 = vsub.f32 %v4342, %v4397
          %v4412 = vsub.f32 %v4343, %v4397
          %v4413 = vsub.f32 %v4344, %v4397
          %v4414 = vsub.f32 %v4345, %v4397
          %v4415 = vsub.f32 %v4346, %v4398
          %v4416 = vsub.f32 %v4347, %v4398
          %v4417 = vsub.f32 %v4348, %v4398
          %v4418 = vsub.f32 %v4349, %v4398
          %v4419 = vsub.f32 %v4350, %v4398
          %v4420 = vsub.f32 %v4351, %v4398
          %v4421 = vsub.f32 %v4352, %v4398
          %v4422 = vsub.f32 %v4353, %v4398
          %v4423 = vsub.f32 %v4354, %v4398
          %v4424 = vsub.f32 %v4355, %v4398
          %v4425 = vsub.f32 %v4356, %v4398
          %v4426 = vsub.f32 %v4357, %v4398
          %v4427 = vsub.f32 %v4358, %v4398
          %v4428 = vsub.f32 %v4359, %v4398
          %v4429 = vsub.f32 %v4360, %v4398
          %v4430 = vsub.f32 %v4361, %v4398
          %v4431 = vmul.f32 %v4399, %v4399
          %v4432 = vmul.f32 %v4400, %v4400
          %v4433 = vmul.f32 %v4401, %v4401
          %v4434 = vmul.f32 %v4402, %v4402
          %v4435 = vmul.f32 %v4403, %v4403
          %v4436 = vmul.f32 %v4404, %v4404
          %v4437 = vmul.f32 %v4405, %v4405
          %v4438 = vmul.f32 %v4406, %v4406
          %v4439 = vmul.f32 %v4407, %v4407
          %v4440 = vmul.f32 %v4408, %v4408
          %v4441 = vmul.f32 %v4409, %v4409
          %v4442 = vmul.f32 %v4410, %v4410
          %v4443 = vmul.f32 %v4411, %v4411
          %v4444 = vmul.f32 %v4412, %v4412
          %v4445 = vmul.f32 %v4413, %v4413
          %v4446 = vmul.f32 %v4414, %v4414
          %v4447 = vmul.f32 %v4415, %v4415
          %v4448 = vmul.f32 %v4416, %v4416
          %v4449 = vmul.f32 %v4417, %v4417
          %v4450 = vmul.f32 %v4418, %v4418
          %v4451 = vmul.f32 %v4419, %v4419
          %v4452 = vmul.f32 %v4420, %v4420
          %v4453 = vmul.f32 %v4421, %v4421
          %v4454 = vmul.f32 %v4422, %v4422
          %v4455 = vmul.f32 %v4423, %v4423
          %v4456 = vmul.f32 %v4424, %v4424
          %v4457 = vmul.f32 %v4425, %v4425
          %v4458 = vmul.f32 %v4426, %v4426
          %v4459 = vmul.f32 %v4427, %v4427
          %v4460 = vmul.f32 %v4428, %v4428
          %v4461 = vmul.f32 %v4429, %v4429
          %v4462 = vmul.f32 %v4430, %v4430
          %v4463 = vadd.f32 %v4431, %v4432
          %v4464 = vadd.f32 %v4463, %v4433
          %v4465 = vadd.f32 %v4464, %v4434
          %v4466 = vadd.f32 %v4465, %v4435
          %v4467 = vadd.f32 %v4466, %v4436
          %v4468 = vadd.f32 %v4467, %v4437
          %v4469 = vadd.f32 %v4468, %v4438
          %v4470 = vadd.f32 %v4469, %v4439
          %v4471 = vadd.f32 %v4470, %v4440
          %v4472 = vadd.f32 %v4471, %v4441
          %v4473 = vadd.f32 %v4472, %v4442
          %v4474 = vadd.f32 %v4473, %v4443
          %v4475 = vadd.f32 %v4474, %v4444
          %v4476 = vadd.f32 %v4475, %v4445
          %v4477 = vadd.f32 %v4476, %v4446
          %4478 = vadd.xlane.f32.xlu0 %v4477
          %v4479 = vpop.xlane.xlu0 %4478
          %v4480 = vadd.f32 %v4447, %v4448
          %v4481 = vadd.f32 %v4480, %v4449
          %v4482 = vadd.f32 %v4481, %v4450
          %v4483 = vadd.f32 %v4482, %v4451
          %v4484 = vadd.f32 %v4483, %v4452
          %v4485 = vadd.f32 %v4484, %v4453
          %v4486 = vadd.f32 %v4485, %v4454
          %v4487 = vadd.f32 %v4486, %v4455
          %v4488 = vadd.f32 %v4487, %v4456
          %v4489 = vadd.f32 %v4488, %v4457
          %v4490 = vadd.f32 %v4489, %v4458
          %v4491 = vadd.f32 %v4490, %v4459
          %v4492 = vadd.f32 %v4491, %v4460
          %v4493 = vadd.f32 %v4492, %v4461
          %v4494 = vadd.f32 %v4493, %v4462
          %4495 = vadd.xlane.f32.xlu0 %v4494
          %v4496 = vpop.xlane.xlu0 %4495
          %v4497 = vmul.f32 %v4479, %v4396
          %v4498 = vmul.f32 %v4496, %v4396
          %v4499 = vadd.f32 %v4497, 1e-05
          %v4500 = vadd.f32 %v4498, 1e-05
          %v4501 = vrsqrt.pop %v4499
          %v4502 = vrsqrt.pop %v4500
          %v4503 = vmul.f32 %v4399, %v4501
          %v4504 = vmul.f32 %v4400, %v4501
          %v4505 = vmul.f32 %v4401, %v4501
          %v4506 = vmul.f32 %v4402, %v4501
          %v4507 = vmul.f32 %v4403, %v4501
          %v4508 = vmul.f32 %v4404, %v4501
          %v4509 = vmul.f32 %v4405, %v4501
          %v4510 = vmul.f32 %v4406, %v4501
          %v4511 = vmul.f32 %v4407, %v4501
          %v4512 = vmul.f32 %v4408, %v4501
          %v4513 = vmul.f32 %v4409, %v4501
          %v4514 = vmul.f32 %v4410, %v4501
          %v4515 = vmul.f32 %v4411, %v4501
          %v4516 = vmul.f32 %v4412, %v4501
          %v4517 = vmul.f32 %v4413, %v4501
          %v4518 = vmul.f32 %v4414, %v4501
          %v4519 = vmul.f32 %v4415, %v4502
          %v4520 = vmul.f32 %v4416, %v4502
          %v4521 = vmul.f32 %v4417, %v4502
          %v4522 = vmul.f32 %v4418, %v4502
          %v4523 = vmul.f32 %v4419, %v4502
          %v4524 = vmul.f32 %v4420, %v4502
          %v4525 = vmul.f32 %v4421, %v4502
          %v4526 = vmul.f32 %v4422, %v4502
          %v4527 = vmul.f32 %v4423, %v4502
          %v4528 = vmul.f32 %v4424, %v4502
          %v4529 = vmul.f32 %v4425, %v4502
          %v4530 = vmul.f32 %v4426, %v4502
          %v4531 = vmul.f32 %v4427, %v4502
          %v4532 = vmul.f32 %v4428, %v4502
          %v4533 = vmul.f32 %v4429, %v4502
          %v4534 = vmul.f32 %v4430, %v4502
          %v4535 = vld [vmem:[%s3] sm:$0xff]
          %v4536 = vld [vmem:[%s3 + $0x8] sm:$0xff]
          %v4539 = vlaneseq
          %v4540 = vshrl.u32 %v4539, 7
          %v4541 = vsub.s32 0, %v4540
          %v4542 = vrot.slane %v4535, %v4541
          %v4543 = vlaneseq
          %v4544 = vshrl.u32 %v4543, 7
          %v4545 = vsub.s32 1, %v4544
          %v4546 = vrot.slane %v4535, %v4545
          %v4547 = vlaneseq
          %v4548 = vshrl.u32 %v4547, 7
          %v4549 = vsub.s32 2, %v4548
          %v4550 = vrot.slane %v4535, %v4549
          %v4551 = vlaneseq
          %v4552 = vshrl.u32 %v4551, 7
          %v4553 = vsub.s32 3, %v4552
          %v4554 = vrot.slane %v4535, %v4553
          %v4555 = vlaneseq
          %v4556 = vshrl.u32 %v4555, 7
          %v4557 = vsub.s32 4, %v4556
          %v4558 = vrot.slane %v4535, %v4557
          %v4559 = vlaneseq
          %v4560 = vshrl.u32 %v4559, 7
          %v4561 = vsub.s32 5, %v4560
          %v4562 = vrot.slane %v4535, %v4561
          %v4563 = vlaneseq
          %v4564 = vshrl.u32 %v4563, 7
          %v4565 = vsub.s32 6, %v4564
          %v4566 = vrot.slane %v4535, %v4565
          %v4567 = vlaneseq
          %v4568 = vshrl.u32 %v4567, 7
          %v4569 = vsub.s32 7, %v4568
          %v4570 = vrot.slane %v4535, %v4569
          %v4571 = vlaneseq
          %v4572 = vshrl.u32 %v4571, 7
          %v4573 = vsub.s32 0, %v4572
          %v4574 = vrot.slane %v4536, %v4573
          %v4575 = vlaneseq
          %v4576 = vshrl.u32 %v4575, 7
          %v4577 = vsub.s32 1, %v4576
          %v4578 = vrot.slane %v4536, %v4577
          %v4579 = vlaneseq
          %v4580 = vshrl.u32 %v4579, 7
          %v4581 = vsub.s32 2, %v4580
          %v4582 = vrot.slane %v4536, %v4581
          %v4583 = vlaneseq
          %v4584 = vshrl.u32 %v4583, 7
          %v4585 = vsub.s32 3, %v4584
          %v4586 = vrot.slane %v4536, %v4585
          %v4587 = vlaneseq
          %v4588 = vshrl.u32 %v4587, 7
          %v4589 = vsub.s32 4, %v4588
          %v4590 = vrot.slane %v4536, %v4589
          %v4591 = vlaneseq
          %v4592 = vshrl.u32 %v4591, 7
          %v4593 = vsub.s32 5, %v4592
          %v4594 = vrot.slane %v4536, %v4593
          %v4595 = vlaneseq
          %v4596 = vshrl.u32 %v4595, 7
          %v4597 = vsub.s32 6, %v4596
          %v4598 = vrot.slane %v4536, %v4597
          %v4599 = vlaneseq
          %v4600 = vshrl.u32 %v4599, 7
          %v4601 = vsub.s32 7, %v4600
          %v4602 = vrot.slane %v4536, %v4601
          %v4619 = vmul.f32 %v4503, %v4542
          %v4620 = vmul.f32 %v4504, %v4546
          %v4621 = vmul.f32 %v4505, %v4550
          %v4622 = vmul.f32 %v4506, %v4554
          %v4623 = vmul.f32 %v4507, %v4558
          %v4624 = vmul.f32 %v4508, %v4562
          %v4625 = vmul.f32 %v4509, %v4566
          %v4626 = vmul.f32 %v4510, %v4570
          %v4627 = vmul.f32 %v4511, %v4574
          %v4628 = vmul.f32 %v4512, %v4578
          %v4629 = vmul.f32 %v4513, %v4582
          %v4630 = vmul.f32 %v4514, %v4586
          %v4631 = vmul.f32 %v4515, %v4590
          %v4632 = vmul.f32 %v4516, %v4594
          %v4633 = vmul.f32 %v4517, %v4598
          %v4634 = vmul.f32 %v4518, %v4602
          %v4635 = vmul.f32 %v4519, %v4542
          %v4636 = vmul.f32 %v4520, %v4546
          %v4637 = vmul.f32 %v4521, %v4550
          %v4638 = vmul.f32 %v4522, %v4554
          %v4639 = vmul.f32 %v4523, %v4558
          %v4640 = vmul.f32 %v4524, %v4562
          %v4641 = vmul.f32 %v4525, %v4566
          %v4642 = vmul.f32 %v4526, %v4570
          %v4643 = vmul.f32 %v4527, %v4574
          %v4644 = vmul.f32 %v4528, %v4578
          %v4645 = vmul.f32 %v4529, %v4582
          %v4646 = vmul.f32 %v4530, %v4586
          %v4647 = vmul.f32 %v4531, %v4590
          %v4648 = vmul.f32 %v4532, %v4594
          %v4649 = vmul.f32 %v4533, %v4598
          %v4650 = vmul.f32 %v4534, %v4602
          %v4651 = vld [vmem:[%s4] sm:$0xff]
          %v4652 = vld [vmem:[%s4 + $0x8] sm:$0xff]
          %v4655 = vlaneseq
          %v4656 = vshrl.u32 %v4655, 7
          %v4657 = vsub.s32 0, %v4656
          %v4658 = vrot.slane %v4651, %v4657
          %v4659 = vlaneseq
          %v4660 = vshrl.u32 %v4659, 7
          %v4661 = vsub.s32 1, %v4660
          %v4662 = vrot.slane %v4651, %v4661
          %v4663 = vlaneseq
          %v4664 = vshrl.u32 %v4663, 7
          %v4665 = vsub.s32 2, %v4664
          %v4666 = vrot.slane %v4651, %v4665
          %v4667 = vlaneseq
          %v4668 = vshrl.u32 %v4667, 7
          %v4669 = vsub.s32 3, %v4668
          %v4670 = vrot.slane %v4651, %v4669
          %v4671 = vlaneseq
          %v4672 = vshrl.u32 %v4671, 7
          %v4673 = vsub.s32 4, %v4672
          %v4674 = vrot.slane %v4651, %v4673
          %v4675 = vlaneseq
          %v4676 = vshrl.u32 %v4675, 7
          %v4677 = vsub.s32 5, %v4676
          %v4678 = vrot.slane %v4651, %v4677
          %v4679 = vlaneseq
          %v4680 = vshrl.u32 %v4679, 7
          %v4681 = vsub.s32 6, %v4680
          %v4682 = vrot.slane %v4651, %v4681
          %v4683 = vlaneseq
          %v4684 = vshrl.u32 %v4683, 7
          %v4685 = vsub.s32 7, %v4684
          %v4686 = vrot.slane %v4651, %v4685
          %v4687 = vlaneseq
          %v4688 = vshrl.u32 %v4687, 7
          %v4689 = vsub.s32 0, %v4688
          %v4690 = vrot.slane %v4652, %v4689
          %v4691 = vlaneseq
          %v4692 = vshrl.u32 %v4691, 7
          %v4693 = vsub.s32 1, %v4692
          %v4694 = vrot.slane %v4652, %v4693
          %v4695 = vlaneseq
          %v4696 = vshrl.u32 %v4695, 7
          %v4697 = vsub.s32 2, %v4696
          %v4698 = vrot.slane %v4652, %v4697
          %v4699 = vlaneseq
          %v4700 = vshrl.u32 %v4699, 7
          %v4701 = vsub.s32 3, %v4700
          %v4702 = vrot.slane %v4652, %v4701
          %v4703 = vlaneseq
          %v4704 = vshrl.u32 %v4703, 7
          %v4705 = vsub.s32 4, %v4704
          %v4706 = vrot.slane %v4652, %v4705
          %v4707 = vlaneseq
          %v4708 = vshrl.u32 %v4707, 7
          %v4709 = vsub.s32 5, %v4708
          %v4710 = vrot.slane %v4652, %v4709
          %v4711 = vlaneseq
          %v4712 = vshrl.u32 %v4711, 7
          %v4713 = vsub.s32 6, %v4712
          %v4714 = vrot.slane %v4652, %v4713
          %v4715 = vlaneseq
          %v4716 = vshrl.u32 %v4715, 7
          %v4717 = vsub.s32 7, %v4716
          %v4718 = vrot.slane %v4652, %v4717
          %v4735 = vadd.f32 %v4619, %v4658
          %v4736 = vadd.f32 %v4620, %v4662
          %v4737 = vadd.f32 %v4621, %v4666
          %v4738 = vadd.f32 %v4622, %v4670
          %v4739 = vadd.f32 %v4623, %v4674
          %v4740 = vadd.f32 %v4624, %v4678
          %v4741 = vadd.f32 %v4625, %v4682
          %v4742 = vadd.f32 %v4626, %v4686
          %v4743 = vadd.f32 %v4627, %v4690
          %v4744 = vadd.f32 %v4628, %v4694
          %v4745 = vadd.f32 %v4629, %v4698
          %v4746 = vadd.f32 %v4630, %v4702
          %v4747 = vadd.f32 %v4631, %v4706
          %v4748 = vadd.f32 %v4632, %v4710
          %v4749 = vadd.f32 %v4633, %v4714
          %v4750 = vadd.f32 %v4634, %v4718
          %v4751 = vadd.f32 %v4635, %v4658
          %v4752 = vadd.f32 %v4636, %v4662
          %v4753 = vadd.f32 %v4637, %v4666
          %v4754 = vadd.f32 %v4638, %v4670
          %v4755 = vadd.f32 %v4639, %v4674
          %v4756 = vadd.f32 %v4640, %v4678
          %v4757 = vadd.f32 %v4641, %v4682
          %v4758 = vadd.f32 %v4642, %v4686
          %v4759 = vadd.f32 %v4643, %v4690
          %v4760 = vadd.f32 %v4644, %v4694
          %v4761 = vadd.f32 %v4645, %v4698
          %v4762 = vadd.f32 %v4646, %v4702
          %v4763 = vadd.f32 %v4647, %v4706
          %v4764 = vadd.f32 %v4648, %v4710
          %v4765 = vadd.f32 %v4649, %v4714
          %v4766 = vadd.f32 %v4650, %v4718
          %v4767 = vpack.c.bf16 %v4751, %v4735
          %v4768 = vpack.c.bf16 %v4752, %v4736
          %v4769 = vpack.c.bf16 %v4753, %v4737
          %v4770 = vpack.c.bf16 %v4754, %v4738
          %v4771 = vpack.c.bf16 %v4755, %v4739
          %v4772 = vpack.c.bf16 %v4756, %v4740
          %v4773 = vpack.c.bf16 %v4757, %v4741
          %v4774 = vpack.c.bf16 %v4758, %v4742
          %v4775 = vpack.c.bf16 %v4759, %v4743
          %v4776 = vpack.c.bf16 %v4760, %v4744
          %v4777 = vpack.c.bf16 %v4761, %v4745
          %v4778 = vpack.c.bf16 %v4762, %v4746
          %v4779 = vpack.c.bf16 %v4763, %v4747
          %v4780 = vpack.c.bf16 %v4764, %v4748
          %v4781 = vpack.c.bf16 %v4765, %v4749
          %v4782 = vpack.c.bf16 %v4766, %v4750
          %v4799 = vunpack.c.l.b16 %v4767
          %v4800 = vunpack.c.l.b16 %v4768
          %v4801 = vunpack.c.l.b16 %v4769
          %v4802 = vunpack.c.l.b16 %v4770
          %v4803 = vunpack.c.l.b16 %v4771
          %v4804 = vunpack.c.l.b16 %v4772
          %v4805 = vunpack.c.l.b16 %v4773
          %v4806 = vunpack.c.l.b16 %v4774
          %v4807 = vunpack.c.l.b16 %v4775
          %v4808 = vunpack.c.l.b16 %v4776
          %v4809 = vunpack.c.l.b16 %v4777
          %v4810 = vunpack.c.l.b16 %v4778
          %v4811 = vunpack.c.l.b16 %v4779
          %v4812 = vunpack.c.l.b16 %v4780
          %v4813 = vunpack.c.l.b16 %v4781
          %v4814 = vunpack.c.l.b16 %v4782
          %v4815 = vunpack.c.h.b16 %v4767
          %v4816 = vunpack.c.h.b16 %v4768
          %v4817 = vunpack.c.h.b16 %v4769
          %v4818 = vunpack.c.h.b16 %v4770
          %v4819 = vunpack.c.h.b16 %v4771
          %v4820 = vunpack.c.h.b16 %v4772
          %v4821 = vunpack.c.h.b16 %v4773
          %v4822 = vunpack.c.h.b16 %v4774
          %v4823 = vunpack.c.h.b16 %v4775
          %v4824 = vunpack.c.h.b16 %v4776
          %v4825 = vunpack.c.h.b16 %v4777
          %v4826 = vunpack.c.h.b16 %v4778
          %v4827 = vunpack.c.h.b16 %v4779
          %v4828 = vunpack.c.h.b16 %v4780
          %v4829 = vunpack.c.h.b16 %v4781
          %v4830 = vunpack.c.h.b16 %v4782
          %v4831 = vpack.c.b16 %v4800, %v4799
          %v4832 = vpack.c.b16 %v4802, %v4801
          %v4833 = vpack.c.b16 %v4804, %v4803
          %v4834 = vpack.c.b16 %v4806, %v4805
          %v4835 = vpack.c.b16 %v4808, %v4807
          %v4836 = vpack.c.b16 %v4810, %v4809
          %v4837 = vpack.c.b16 %v4812, %v4811
          %v4838 = vpack.c.b16 %v4814, %v4813
          %v4839 = vpack.c.b16 %v4816, %v4815
          %v4840 = vpack.c.b16 %v4818, %v4817
          %v4841 = vpack.c.b16 %v4820, %v4819
          %v4842 = vpack.c.b16 %v4822, %v4821
          %v4843 = vpack.c.b16 %v4824, %v4823
          %v4844 = vpack.c.b16 %v4826, %v4825
          %v4845 = vpack.c.b16 %v4828, %v4827
          %v4846 = vpack.c.b16 %v4830, %v4829
          %4863 = vst [vmem:[%s283] sm:$0xff] %v4831
          %4864 = vst [vmem:[%s283 + $0x8] sm:$0xff] %v4832
          %4865 = vst [vmem:[%s283 + $0x10] sm:$0xff] %v4833
          %4866 = vst [vmem:[%s283 + $0x18] sm:$0xff] %v4834
          %4867 = vst [vmem:[%s283 + $0x20] sm:$0xff] %v4835
          %4868 = vst [vmem:[%s283 + $0x28] sm:$0xff] %v4836
          %4869 = vst [vmem:[%s283 + $0x30] sm:$0xff] %v4837
          %4870 = vst [vmem:[%s283 + $0x38] sm:$0xff] %v4838
          %4871 = vst [vmem:[%s283 + $0x40] sm:$0xff] %v4839
          %4872 = vst [vmem:[%s283 + $0x48] sm:$0xff] %v4840
          %4873 = vst [vmem:[%s283 + $0x50] sm:$0xff] %v4841
          %4874 = vst [vmem:[%s283 + $0x58] sm:$0xff] %v4842
          %4875 = vst [vmem:[%s283 + $0x60] sm:$0xff] %v4843
          %4876 = vst [vmem:[%s283 + $0x68] sm:$0xff] %v4844
          %4877 = vst [vmem:[%s283 + $0x70] sm:$0xff] %v4845
          %4878 = vst [vmem:[%s283 + $0x78] sm:$0xff] %v4846
        $region71: #{simplenet_forward.4} parent=58 // pred_fallthru
          _
        %s4879 = sand.u32 %s156, 1
        %s4880 = scalar_lea.sflag [#allocation5], %s4879
        %s4881 = sand.u32 %s156, 1
        %s4882 = smul.addr %s4881, 128
        %s4883 = scalar_lea.vmem [#allocation4], %s4882
        // Predicated region
        $region72: #{simplenet_forward.4} parent=58 // pred_check
          %p4884 = pneg %p166
        $region73: #{simplenet_forward.4} parent=58 // pred_check_branch
          %4886 = sbr.rel (%p4884) target = $region75
        $region74: #{simplenet_forward.4} parent=58 // pred_region
          %s4887 = smul.u32 2, %s23
          %s4889 = ssub.s32 2048, 2048
          %4890 = vsyncadd %s4880, %s4889
          %s4891 = smul.addr %s4887, 16
          %s4892 = smul.addr %s4891, 64
          %s4893 = scalar_lea.hbm %s5, %s4892
          %s4894 = sshll.u32 %s4883, 4
          %s4895 = int_to_ptr.vmem [resolvable:$true] %s4894
          %4900 = dma.vmem_to_hbm [thread:$0]  %s4895, 2048, %s4893, %s4880, 1024, 1024, 64
        $region75: #{simplenet_forward.4} parent=58 // pred_fallthru
          _
      $region59: #{simplenet_forward.4} parent=5 // pred_fallthru
        _
      %p4901 = scmp.le.s32.totalorder 2, %s14
      // Predicated region
      $region76: #{simplenet_forward.4} parent=5 // pred_check
        %p4902 = pneg %p4901
      $region77: #{simplenet_forward.4} parent=5 // pred_check_branch
        %4904 = sbr.rel (%p4902) target = $region79
      $region78: #{simplenet_forward.4} parent=5 // pred_region
        %s4905 = ssub.s32 %s14, 2
        // Predicated region
        $region80: #{simplenet_forward.4} parent=78 // pred_check
          %p4906 = pneg %p172
        $region81: #{simplenet_forward.4} parent=78 // pred_check_branch
          %4908 = sbr.rel (%p4906) target = $region83
        $region82: #{simplenet_forward.4} parent=78 // pred_region
          %s4909 = sand.u32 %s157, 1
          %s4910 = scalar_lea.sflag [#allocation5], %s4909
          %s4911 = sand.u32 %s157, 1
          %s4912 = smul.addr %s4911, 128
          %s4913 = scalar_lea.vmem [#allocation4], %s4912
          %4914 = dma.done %s4910, 2048
        $region83: #{simplenet_forward.4} parent=78 // pred_fallthru
          _
      $region79: #{simplenet_forward.4} parent=5 // pred_fallthru
        _
    $region6: #{simplenet_forward.4} parent=1 // loop_footer
      %s18 = sadd.s32 1, %s14
    $region7: #{simplenet_forward.4} parent=1 // loop_footer_branch
      %13 = sbr.rel target = $region3
    $region8: #{simplenet_forward.4} parent=1 // loop_exit
      _
    %4915 = vsyncpa [#allocation5], 1
    %s4916 = scalar_lea.sflag [#allocation5], 1
    %4917 = vsyncpa %s4916, 1

// kernel: simplenet_forward.5
$region0: #{simplenet_forward.5}
  #allocation0 [shape = 'u32[]', space=smem, size = 0x4, offset = 0x4, fixed_abs, tag = 'smem constant byte address 0x4 - core index']
  #allocation1 [shape = 'u32[144,128]{1,0:T(1,128)}', space=vmem, size = 0x12000, scoped, tag = 'internal scratch']
  #allocation2 [shape = 'f32[16,2048]{1,0:T(8,128)}', space=vmem, size = 0x20000, scoped, tag = 'scratch operand']
  %s0 = inlined_call_operand.hbm [shape: bf16[32,2048], index: 0, kind: input, shape index: {}]
  %s1 = inlined_call_operand.vmem [shape: bf16[2048,2048], index: 1, kind: input, shape index: {}]
  %s2 = inlined_call_operand.hbm [shape: f32[1,2048], index: 2, kind: input, shape index: {}]
  %s3 = inlined_call_operand.vmem [shape: f32[1,2048], index: 3, kind: input, shape index: {}]
  %s4 = inlined_call_operand.vmem [shape: f32[1,2048], index: 4, kind: input, shape index: {}]
  %s5 = inlined_call_operand.hbm [shape: f32[32,2048], index: 5, kind: output, shape index: {}]
  %s6 = sld [smem:[#allocation0]]
  $region69: #{simplenet_forward.5} parent=0
    _
  %s8 = ssub.s32 1, %s6
  %s9 = scalar_select 0, %s8, %s6
  $region1: #{simplenet_forward.5} parent=0
    #allocation3 [shape = 'u8[32768]{0}', space=vmem, size = 0x8000, scoped, tag = 'input window, operand 0']
    #allocation4 [shape = 's32[2]{0}', space=sflag, size = 0x8, scoped, tag = 'scoped memory for simplenet_forward.5']
    #allocation5 [shape = 's32[2]{0}', space=sflag, size = 0x8, scoped, tag = 'scoped memory for simplenet_forward.5']
    #allocation6 [shape = 'u8[8192]{0}', space=vmem, size = 0x2000, scoped, tag = 'input window, operand 2, single buffered']
    #allocation7 [shape = 's32[1]{0}', space=sflag, size = 0x4, scoped, tag = 'scoped memory for simplenet_forward.5']
    #allocation8 [shape = 'u8[262144]{0}', space=vmem, size = 0x40000, scoped, tag = 'output window, operand 0']
    %10 = vsyncpa [#allocation4], 0
    %s11 = scalar_lea.sflag [#allocation4], 1
    %12 = vsyncpa %s11, 0
    %13 = vsyncpa [#allocation7], 0
    %14 = vsyncpa [#allocation5], 0
    %s15 = scalar_lea.sflag [#allocation5], 1
    %16 = vsyncpa %s15, 0
    loop: start=0, step=1, limit=10
    $region2: #{simplenet_forward.5} parent=1 // loop_pre_header
      _
    $region3: #{simplenet_forward.5} parent=1 // loop_header
      %s18 = sphi 0, %s22
      %p19 = scmp.ge.s32.totalorder %s18, 10
      %s25 = sphi 0, %s37
      %s26 = sphi 0, %s33
      %s27 = sphi 0, %s25
      %s28 = sphi 0, %s26
      %s29 = sphi 0, %s27
      %s30 = sphi 0, %s28
      %s42 = sphi 0, %s44
      %s45 = sphi 0, %s42
      %s46 = sphi 0, %s45
      %s62 = sphi 0, %s46
      %s68 = sphi 0, %s70
      %s71 = sphi 0, %s68
      %s72 = sphi 0, %s71
      %s88 = sphi 0, %s72
      %s92 = sphi 0, %s92
      %s94 = sphi 0, %s92
      %s95 = sphi 0, %s94
      %s109 = sphi 0, %s95
      %s113 = sphi 0, %s113
      %s115 = sphi 0, %s113
      %s116 = sphi 0, %s115
      %s130 = sphi 0, %s116
      %s134 = sphi 0, %s134
      %s136 = sphi 0, %s134
      %s137 = sphi 0, %s136
      %s151 = sphi 0, %s137
      %s157 = sphi 0, %s159
      %s160 = sphi 0, %s157
      %s161 = sphi 0, %s160
      %s177 = sphi 0, %s161
    $region4: #{simplenet_forward.5} parent=1 // loop_header_branch
      %21 = sbr.rel (%p19) target = $region8
    $region5: #{simplenet_forward.5} parent=1 // loop_body
      %s23 = ssub.s32 %s18, 1
      %s24 = ssub.s32 %s18, 2
      %s31 = sadd.s32 1, %s26
      %p32 = scmp.ge.s32.totalorder %s31, 4
      %s33 = scalar_select %p32, 0, %s31
      %s34 = sadd.s32 1, %s25
      %s35 = scalar_select %p32, %s34, %s25
      %p36 = scmp.ge.s32.totalorder %s35, 2
      %s37 = scalar_select %p36, 0, %s35
      %s38 = ssub.s32 %s25, %s37
      %s39 = ssub.s32 %s26, %s33
      %s40 = sor.u32 %s38, %s39
      %p41 = scmp.eq.s32.totalorder %s40, 0
      %s43 = sadd.s32 %s42, 1
      %s44 = scalar_select %p41, %s42, %s43
      %p47 = pneg %p41
      %p48 = scmp.eq.s32.totalorder %s18, 7
      %p49 = por %p47, %p48
      %p50 = scmp.ne.s32.totalorder %s42, %s45
      %p51 = scmp.eq.s32.totalorder %s18, 0
      %p52 = por %p50, %p51
      %p53 = scmp.ne.s32.totalorder %s42, %s45
      %p54 = scmp.eq.s32.totalorder %s23, 7
      %p55 = por %p53, %p54
      %p56 = scmp.ne.s32.totalorder %s45, %s46
      %p57 = scmp.eq.s32.totalorder %s23, 0
      %p58 = por %p56, %p57
      %p59 = scmp.ne.s32.totalorder %s45, %s46
      %p60 = scmp.eq.s32.totalorder %s24, 7
      %p61 = por %p59, %p60
      %p63 = scmp.ne.s32.totalorder %s46, %s62
      %p64 = scmp.eq.s32.totalorder %s24, 0
      %p65 = por %p63, %p64
      %s66 = ssub.s32 %s26, %s33
      %p67 = scmp.eq.s32.totalorder %s66, 0
      %s69 = sadd.s32 %s68, 1
      %s70 = scalar_select %p67, %s68, %s69
      %p73 = pneg %p67
      %p74 = scmp.eq.s32.totalorder %s18, 7
      %p75 = por %p73, %p74
      %p76 = scmp.ne.s32.totalorder %s68, %s71
      %p77 = scmp.eq.s32.totalorder %s18, 0
      %p78 = por %p76, %p77
      %p79 = scmp.ne.s32.totalorder %s68, %s71
      %p80 = scmp.eq.s32.totalorder %s23, 7
      %p81 = por %p79, %p80
      %p82 = scmp.ne.s32.totalorder %s71, %s72
      %p83 = scmp.eq.s32.totalorder %s23, 0
      %p84 = por %p82, %p83
      %p85 = scmp.ne.s32.totalorder %s71, %s72
      %p86 = scmp.eq.s32.totalorder %s24, 7
      %p87 = por %p85, %p86
      %p89 = scmp.ne.s32.totalorder %s72, %s88
      %p90 = scmp.eq.s32.totalorder %s24, 0
      %p91 = por %p89, %p90
      %s93 = sadd.s32 %s92, 1
      %p96 = scmp.eq.s32.totalorder %s18, 7
      %p97 = scmp.ne.s32.totalorder %s92, %s94
      %p98 = scmp.eq.s32.totalorder %s18, 0
      %p99 = por %p97, %p98
      %p100 = scmp.ne.s32.totalorder %s92, %s94
      %p101 = scmp.eq.s32.totalorder %s23, 7
      %p102 = por %p100, %p101
      %p103 = scmp.ne.s32.totalorder %s94, %s95
      %p104 = scmp.eq.s32.totalorder %s23, 0
      %p105 = por %p103, %p104
      %p106 = scmp.ne.s32.totalorder %s94, %s95
      %p107 = scmp.eq.s32.totalorder %s24, 7
      %p108 = por %p106, %p107
      %p110 = scmp.ne.s32.totalorder %s95, %s109
      %p111 = scmp.eq.s32.totalorder %s24, 0
      %p112 = por %p110, %p111
      %s114 = sadd.s32 %s113, 1
      %p117 = scmp.eq.s32.totalorder %s18, 7
      %p118 = scmp.ne.s32.totalorder %s113, %s115
      %p119 = scmp.eq.s32.totalorder %s18, 0
      %p120 = por %p118, %p119
      %p121 = scmp.ne.s32.totalorder %s113, %s115
      %p122 = scmp.eq.s32.totalorder %s23, 7
      %p123 = por %p121, %p122
      %p124 = scmp.ne.s32.totalorder %s115, %s116
      %p125 = scmp.eq.s32.totalorder %s23, 0
      %p126 = por %p124, %p125
      %p127 = scmp.ne.s32.totalorder %s115, %s116
      %p128 = scmp.eq.s32.totalorder %s24, 7
      %p129 = por %p127, %p128
      %p131 = scmp.ne.s32.totalorder %s116, %s130
      %p132 = scmp.eq.s32.totalorder %s24, 0
      %p133 = por %p131, %p132
      %s135 = sadd.s32 %s134, 1
      %p138 = scmp.eq.s32.totalorder %s18, 7
      %p139 = scmp.ne.s32.totalorder %s134, %s136
      %p140 = scmp.eq.s32.totalorder %s18, 0
      %p141 = por %p139, %p140
      %p142 = scmp.ne.s32.totalorder %s134, %s136
      %p143 = scmp.eq.s32.totalorder %s23, 7
      %p144 = por %p142, %p143
      %p145 = scmp.ne.s32.totalorder %s136, %s137
      %p146 = scmp.eq.s32.totalorder %s23, 0
      %p147 = por %p145, %p146
      %p148 = scmp.ne.s32.totalorder %s136, %s137
      %p149 = scmp.eq.s32.totalorder %s24, 7
      %p150 = por %p148, %p149
      %p152 = scmp.ne.s32.totalorder %s137, %s151
      %p153 = scmp.eq.s32.totalorder %s24, 0
      %p154 = por %p152, %p153
      %s155 = ssub.s32 %s25, %s37
      %p156 = scmp.eq.s32.totalorder %s155, 0
      %s158 = sadd.s32 %s157, 1
      %s159 = scalar_select %p156, %s157, %s158
      %p162 = pneg %p156
      %p163 = scmp.eq.s32.totalorder %s18, 7
      %p164 = por %p162, %p163
      %p165 = scmp.ne.s32.totalorder %s157, %s160
      %p166 = scmp.eq.s32.totalorder %s18, 0
      %p167 = por %p165, %p166
      %p168 = scmp.ne.s32.totalorder %s157, %s160
      %p169 = scmp.eq.s32.totalorder %s23, 7
      %p170 = por %p168, %p169
      %p171 = scmp.ne.s32.totalorder %s160, %s161
      %p172 = scmp.eq.s32.totalorder %s23, 0
      %p173 = por %p171, %p172
      %p174 = scmp.ne.s32.totalorder %s160, %s161
      %p175 = scmp.eq.s32.totalorder %s24, 7
      %p176 = por %p174, %p175
      %p178 = scmp.ne.s32.totalorder %s161, %s177
      %p179 = scmp.eq.s32.totalorder %s24, 0
      %p180 = por %p178, %p179
      %p181 = scmp.le.s32.totalorder 1, %s18
      %p182 = scmp.lt.s32.totalorder %s18, 9
      %p183 = pnand %p181, %p182
      %p184 = pneg %p183
      // Predicated region
      $region9: #{simplenet_forward.5} parent=5 // pred_check
        _
      $region10: #{simplenet_forward.5} parent=5 // pred_check_branch
        %186 = sbr.rel (%p183) target = $region12
      $region11: #{simplenet_forward.5} parent=5 // pred_region
        %s187 = ssub.s32 %s18, 1
        // Predicated region
        $region13: #{simplenet_forward.5} parent=11 // pred_check
          %p188 = pneg %p105
        $region14: #{simplenet_forward.5} parent=11 // pred_check_branch
          %190 = sbr.rel (%p188) target = $region16
        $region15: #{simplenet_forward.5} parent=11 // pred_region
          %s192 = ssub.s32 256, 256
          %193 = vsyncadd [#allocation7], %s192
          %s195 = sshll.u32 [#allocation6], 4
          %s196 = int_to_ptr.vmem [resolvable:$true] %s195
          %198 = dma.hbm_to_vmem [thread:$0]  %s2, 256, %s196, [#allocation7]
        $region16: #{simplenet_forward.5} parent=11 // pred_fallthru
          _
        // Predicated region
        $region17: #{simplenet_forward.5} parent=11 // pred_check
          %p199 = pneg %p126
        $region18: #{simplenet_forward.5} parent=11 // pred_check_branch
          %201 = sbr.rel (%p199) target = $region20
        $region19: #{simplenet_forward.5} parent=11 // pred_region
          _
        $region20: #{simplenet_forward.5} parent=11 // pred_fallthru
          _
        // Predicated region
        $region21: #{simplenet_forward.5} parent=11 // pred_check
          %p202 = pneg %p147
        $region22: #{simplenet_forward.5} parent=11 // pred_check_branch
          %204 = sbr.rel (%p202) target = $region24
        $region23: #{simplenet_forward.5} parent=11 // pred_region
          _
        $region24: #{simplenet_forward.5} parent=11 // pred_fallthru
          _
      $region12: #{simplenet_forward.5} parent=5 // pred_fallthru
        _
      %p205 = scmp.lt.s32.totalorder %s18, 8
      // Predicated region
      $region25: #{simplenet_forward.5} parent=5 // pred_check
        %p206 = pneg %p205
      $region26: #{simplenet_forward.5} parent=5 // pred_check_branch
        %208 = sbr.rel (%p206) target = $region28
      $region27: #{simplenet_forward.5} parent=5 // pred_region
        // Predicated region
        $region29: #{simplenet_forward.5} parent=27 // pred_check
          %p209 = pneg %p52
        $region30: #{simplenet_forward.5} parent=27 // pred_check_branch
          %211 = sbr.rel (%p209) target = $region32
        $region31: #{simplenet_forward.5} parent=27 // pred_region
          %s212 = sand.u32 %s42, 1
          %s213 = scalar_lea.sflag [#allocation4], %s212
          %s214 = sand.u32 %s42, 1
          %s215 = smul.addr %s214, 32
          %s216 = scalar_lea.vmem [#allocation3], %s215
          %s217 = smul.u32 2, %s25
          %s218 = smul.u32 4, %s26
          %s220 = ssub.s32 512, 512
          %221 = vsyncadd %s213, %s220
          %s222 = smul.addr %s217, 16
          %s223 = sadd.s32 %s218, %s222
          %s224 = smul.addr %s223, 64
          %s225 = scalar_lea.hbm %s0, %s224
          %s226 = sshll.u32 %s216, 4
          %s227 = int_to_ptr.vmem [resolvable:$true] %s226
          %232 = dma.hbm_to_vmem [thread:$0]  %s225, 512, %s227, %s213, 1024, 256, 16
        $region32: #{simplenet_forward.5} parent=27 // pred_fallthru
          _
        // Predicated region
        $region33: #{simplenet_forward.5} parent=27 // pred_check
          %p233 = pneg %p78
        $region34: #{simplenet_forward.5} parent=27 // pred_check_branch
          %235 = sbr.rel (%p233) target = $region36
        $region35: #{simplenet_forward.5} parent=27 // pred_region
          %s236 = smul.u32 64, %s26
          %p237 = scmp.lt.s32.totalorder %s236, 255
          %s238 = scalar_select %p237, %s236, 255
          %s239 = smul.addr %s238, 16
          %s240 = smul.addr %s239, 4
          %s241 = scalar_lea.vmem %s1, %s240
          %s242 = smul.u32 64, %s26
        $region36: #{simplenet_forward.5} parent=27 // pred_fallthru
          _
      $region28: #{simplenet_forward.5} parent=5 // pred_fallthru
        _
      %p243 = scmp.le.s32.totalorder 1, %s18
      %p244 = scmp.lt.s32.totalorder %s18, 9
      %p245 = pnand %p243, %p244
      %p246 = pneg %p245
      // Predicated region
      $region37: #{simplenet_forward.5} parent=5 // pred_check
        _
      $region38: #{simplenet_forward.5} parent=5 // pred_check_branch
        %248 = sbr.rel (%p245) target = $region40
      $region39: #{simplenet_forward.5} parent=5 // pred_region
        %s249 = ssub.s32 %s18, 1
        %s250 = sand.u32 %s45, 1
        %s251 = scalar_lea.sflag [#allocation4], %s250
        %s252 = sand.u32 %s45, 1
        %s253 = smul.addr %s252, 32
        %s254 = scalar_lea.vmem [#allocation3], %s253
        // Predicated region
        $region41: #{simplenet_forward.5} parent=39 // pred_check
          %p255 = pneg %p58
        $region42: #{simplenet_forward.5} parent=39 // pred_check_branch
          %257 = sbr.rel (%p255) target = $region44
        $region43: #{simplenet_forward.5} parent=39 // pred_region
          %258 = dma.done %s251, 512
        $region44: #{simplenet_forward.5} parent=39 // pred_fallthru
          _
        // Predicated region
        $region45: #{simplenet_forward.5} parent=39 // pred_check
          %p259 = pneg %p105
        $region46: #{simplenet_forward.5} parent=39 // pred_check_branch
          %261 = sbr.rel (%p259) target = $region48
        $region47: #{simplenet_forward.5} parent=39 // pred_region
          %262 = dma.done [#allocation7], 256
        $region48: #{simplenet_forward.5} parent=39 // pred_fallthru
          _
        %s263 = sand.u32 %s45, 1
        %s264 = scalar_lea.sflag [#allocation4], %s263
        %s265 = sand.u32 %s45, 1
        %s266 = smul.addr %s265, 32
        %s267 = scalar_lea.vmem [#allocation3], %s266
        %p268 = pneg %p58
        %p269 = pneg %p55
        %s270 = smul.u32 64, %s28
        %p271 = scmp.lt.s32.totalorder %s270, 255
        %s272 = scalar_select %p271, %s270, 255
        %s273 = smul.addr %s272, 16
        %s274 = smul.addr %s273, 4
        %s275 = scalar_lea.vmem %s1, %s274
        %p276 = pneg %p84
        %p277 = pneg %p81
        %p278 = pneg %p105
        %p279 = pneg %p102
        %p280 = pneg %p126
        %p281 = pneg %p123
        %p282 = pneg %p147
        %p283 = pneg %p144
        %p284 = pneg %p173
        %p285 = pneg %p170
        %s286 = sand.u32 %s160, 1
        %s287 = scalar_lea.sflag [#allocation5], %s286
        %s288 = sand.u32 %s160, 1
        %s289 = smul.addr %s288, 256
        %s290 = scalar_lea.vmem [#allocation8], %s289
        %s291 = smul.u32 2, %s27
        %s292 = smul.u32 4, %s28
        %s293 = smul.u32 64, %s28
        %p294 = scmp.lt.s32.totalorder %s293, 255
        %s295 = scalar_select %p294, %s293, 255
        %s296 = smul.addr %s295, 16
        %s297 = smul.addr %s296, 4
        %s298 = scalar_lea.vmem %s1, %s297
        %s299 = smul.u32 64, %s28
        %s300 = smul.u32 2, %s27
        %p301 = scmp.eq.s32.totalorder %s28, 0
        // Predicated region
        $region49: #{simplenet_forward.5} parent=39 // pred_check
          %p302 = pneg %p301
        $region50: #{simplenet_forward.5} parent=39 // pred_check_branch
          %304 = sbr.rel (%p302) target = $region52
        $region51: #{simplenet_forward.5} parent=39 // pred_region
          %305 = vst [vmem:[#allocation2] sm:$0xff] 0.0
          %306 = vst [vmem:[#allocation2 + $0x8] sm:$0xff] 0.0
          %307 = vst [vmem:[#allocation2 + $0x10] sm:$0xff] 0.0
          %308 = vst [vmem:[#allocation2 + $0x18] sm:$0xff] 0.0
          %309 = vst [vmem:[#allocation2 + $0x20] sm:$0xff] 0.0
          %310 = vst [vmem:[#allocation2 + $0x28] sm:$0xff] 0.0
          %311 = vst [vmem:[#allocation2 + $0x30] sm:$0xff] 0.0
          %312 = vst [vmem:[#allocation2 + $0x38] sm:$0xff] 0.0
          %313 = vst [vmem:[#allocation2 + $0x40] sm:$0xff] 0.0
          %314 = vst [vmem:[#allocation2 + $0x48] sm:$0xff] 0.0
          %315 = vst [vmem:[#allocation2 + $0x50] sm:$0xff] 0.0
          %316 = vst [vmem:[#allocation2 + $0x58] sm:$0xff] 0.0
          %317 = vst [vmem:[#allocation2 + $0x60] sm:$0xff] 0.0
          %318 = vst [vmem:[#allocation2 + $0x68] sm:$0xff] 0.0
          %319 = vst [vmem:[#allocation2 + $0x70] sm:$0xff] 0.0
          %320 = vst [vmem:[#allocation2 + $0x78] sm:$0xff] 0.0
          %321 = vst [vmem:[#allocation2 + $0x80] sm:$0xff] 0.0
          %322 = vst [vmem:[#allocation2 + $0x88] sm:$0xff] 0.0
          %323 = vst [vmem:[#allocation2 + $0x90] sm:$0xff] 0.0
          %324 = vst [vmem:[#allocation2 + $0x98] sm:$0xff] 0.0
          %325 = vst [vmem:[#allocation2 + $0xa0] sm:$0xff] 0.0
          %326 = vst [vmem:[#allocation2 + $0xa8] sm:$0xff] 0.0
          %327 = vst [vmem:[#allocation2 + $0xb0] sm:$0xff] 0.0
          %328 = vst [vmem:[#allocation2 + $0xb8] sm:$0xff] 0.0
          %329 = vst [vmem:[#allocation2 + $0xc0] sm:$0xff] 0.0
          %330 = vst [vmem:[#allocation2 + $0xc8] sm:$0xff] 0.0
          %331 = vst [vmem:[#allocation2 + $0xd0] sm:$0xff] 0.0
          %332 = vst [vmem:[#allocation2 + $0xd8] sm:$0xff] 0.0
          %333 = vst [vmem:[#allocation2 + $0xe0] sm:$0xff] 0.0
          %334 = vst [vmem:[#allocation2 + $0xe8] sm:$0xff] 0.0
          %335 = vst [vmem:[#allocation2 + $0xf0] sm:$0xff] 0.0
          %336 = vst [vmem:[#allocation2 + $0xf8] sm:$0xff] 0.0
        $region52: #{simplenet_forward.5} parent=39 // pred_fallthru
          _
        %v337 = vld [vmem:[#allocation2] sm:$0xff]
        %v338 = vld [vmem:[#allocation2 + $0x8] sm:$0xff]
        %v339 = vld [vmem:[#allocation2 + $0x10] sm:$0xff]
        %v340 = vld [vmem:[#allocation2 + $0x18] sm:$0xff]
        %v341 = vld [vmem:[#allocation2 + $0x20] sm:$0xff]
        %v342 = vld [vmem:[#allocation2 + $0x28] sm:$0xff]
        %v343 = vld [vmem:[#allocation2 + $0x30] sm:$0xff]
        %v344 = vld [vmem:[#allocation2 + $0x38] sm:$0xff]
        %v345 = vld [vmem:[#allocation2 + $0x40] sm:$0xff]
        %v346 = vld [vmem:[#allocation2 + $0x48] sm:$0xff]
        %v347 = vld [vmem:[#allocation2 + $0x50] sm:$0xff]
        %v348 = vld [vmem:[#allocation2 + $0x58] sm:$0xff]
        %v349 = vld [vmem:[#allocation2 + $0x60] sm:$0xff]
        %v350 = vld [vmem:[#allocation2 + $0x68] sm:$0xff]
        %v351 = vld [vmem:[#allocation2 + $0x70] sm:$0xff]
        %v352 = vld [vmem:[#allocation2 + $0x78] sm:$0xff]
        %v353 = vld [vmem:[#allocation2 + $0x80] sm:$0xff]
        %v354 = vld [vmem:[#allocation2 + $0x88] sm:$0xff]
        %v355 = vld [vmem:[#allocation2 + $0x90] sm:$0xff]
        %v356 = vld [vmem:[#allocation2 + $0x98] sm:$0xff]
        %v357 = vld [vmem:[#allocation2 + $0xa0] sm:$0xff]
        %v358 = vld [vmem:[#allocation2 + $0xa8] sm:$0xff]
        %v359 = vld [vmem:[#allocation2 + $0xb0] sm:$0xff]
        %v360 = vld [vmem:[#allocation2 + $0xb8] sm:$0xff]
        %v361 = vld [vmem:[#allocation2 + $0xc0] sm:$0xff]
        %v362 = vld [vmem:[#allocation2 + $0xc8] sm:$0xff]
        %v363 = vld [vmem:[#allocation2 + $0xd0] sm:$0xff]
        %v364 = vld [vmem:[#allocation2 + $0xd8] sm:$0xff]
        %v365 = vld [vmem:[#allocation2 + $0xe0] sm:$0xff]
        %v366 = vld [vmem:[#allocation2 + $0xe8] sm:$0xff]
        %v367 = vld [vmem:[#allocation2 + $0xf0] sm:$0xff]
        %v368 = vld [vmem:[#allocation2 + $0xf8] sm:$0xff]
        %v369 = vld [vmem:[%s254] sm:$0xff]
        %v370 = vld [vmem:[%s254 + $0x8] sm:$0xff]
        %v371 = vld [vmem:[%s254 + $0x10] sm:$0xff]
        %v372 = vld [vmem:[%s254 + $0x18] sm:$0xff]
        %v373 = vld [vmem:[%s298] sm:$0xff]
        %v374 = vld [vmem:[%s298 + $0x8] sm:$0xff]
        %v375 = vld [vmem:[%s298 + $0x10] sm:$0xff]
        %v376 = vld [vmem:[%s298 + $0x18] sm:$0xff]
        %v377 = vld [vmem:[%s298 + $0x20] sm:$0xff]
        %v378 = vld [vmem:[%s298 + $0x28] sm:$0xff]
        %v379 = vld [vmem:[%s298 + $0x30] sm:$0xff]
        %v380 = vld [vmem:[%s298 + $0x38] sm:$0xff]
        %v381 = vld [vmem:[%s298 + $0x40] sm:$0xff]
        %v382 = vld [vmem:[%s298 + $0x48] sm:$0xff]
        %v383 = vld [vmem:[%s298 + $0x50] sm:$0xff]
        %v384 = vld [vmem:[%s298 + $0x58] sm:$0xff]
        %v385 = vld [vmem:[%s298 + $0x60] sm:$0xff]
        %v386 = vld [vmem:[%s298 + $0x68] sm:$0xff]
        %v387 = vld [vmem:[%s298 + $0x70] sm:$0xff]
        %v388 = vld [vmem:[%s298 + $0x78] sm:$0xff]
        %v389 = vld [vmem:[%s298 + $0x80] sm:$0xff]
        %v390 = vld [vmem:[%s298 + $0x88] sm:$0xff]
        %v391 = vld [vmem:[%s298 + $0x90] sm:$0xff]
        %v392 = vld [vmem:[%s298 + $0x98] sm:$0xff]
        %v393 = vld [vmem:[%s298 + $0xa0] sm:$0xff]
        %v394 = vld [vmem:[%s298 + $0xa8] sm:$0xff]
        %v395 = vld [vmem:[%s298 + $0xb0] sm:$0xff]
        %v396 = vld [vmem:[%s298 + $0xb8] sm:$0xff]
        %v397 = vld [vmem:[%s298 + $0xc0] sm:$0xff]
        %v398 = vld [vmem:[%s298 + $0xc8] sm:$0xff]
        %v399 = vld [vmem:[%s298 + $0xd0] sm:$0xff]
        %v400 = vld [vmem:[%s298 + $0xd8] sm:$0xff]
        %v401 = vld [vmem:[%s298 + $0xe0] sm:$0xff]
        %v402 = vld [vmem:[%s298 + $0xe8] sm:$0xff]
        %v403 = vld [vmem:[%s298 + $0xf0] sm:$0xff]
        %v404 = vld [vmem:[%s298 + $0xf8] sm:$0xff]
        %v405 = vld [vmem:[%s298 + $0x100] sm:$0xff]
        %v406 = vld [vmem:[%s298 + $0x108] sm:$0xff]
        %v407 = vld [vmem:[%s298 + $0x110] sm:$0xff]
        %v408 = vld [vmem:[%s298 + $0x118] sm:$0xff]
        %v409 = vld [vmem:[%s298 + $0x120] sm:$0xff]
        %v410 = vld [vmem:[%s298 + $0x128] sm:$0xff]
        %v411 = vld [vmem:[%s298 + $0x130] sm:$0xff]
        %v412 = vld [vmem:[%s298 + $0x138] sm:$0xff]
        %v413 = vld [vmem:[%s298 + $0x140] sm:$0xff]
        %v414 = vld [vmem:[%s298 + $0x148] sm:$0xff]
        %v415 = vld [vmem:[%s298 + $0x150] sm:$0xff]
        %v416 = vld [vmem:[%s298 + $0x158] sm:$0xff]
        %v417 = vld [vmem:[%s298 + $0x160] sm:$0xff]
        %v418 = vld [vmem:[%s298 + $0x168] sm:$0xff]
        %v419 = vld [vmem:[%s298 + $0x170] sm:$0xff]
        %v420 = vld [vmem:[%s298 + $0x178] sm:$0xff]
        %v421 = vld [vmem:[%s298 + $0x180] sm:$0xff]
        %v422 = vld [vmem:[%s298 + $0x188] sm:$0xff]
        %v423 = vld [vmem:[%s298 + $0x190] sm:$0xff]
        %v424 = vld [vmem:[%s298 + $0x198] sm:$0xff]
        %v425 = vld [vmem:[%s298 + $0x1a0] sm:$0xff]
        %v426 = vld [vmem:[%s298 + $0x1a8] sm:$0xff]
        %v427 = vld [vmem:[%s298 + $0x1b0] sm:$0xff]
        %v428 = vld [vmem:[%s298 + $0x1b8] sm:$0xff]
        %v429 = vld [vmem:[%s298 + $0x1c0] sm:$0xff]
        %v430 = vld [vmem:[%s298 + $0x1c8] sm:$0xff]
        %v431 = vld [vmem:[%s298 + $0x1d0] sm:$0xff]
        %v432 = vld [vmem:[%s298 + $0x1d8] sm:$0xff]
        %v433 = vld [vmem:[%s298 + $0x1e0] sm:$0xff]
        %v434 = vld [vmem:[%s298 + $0x1e8] sm:$0xff]
        %v435 = vld [vmem:[%s298 + $0x1f0] sm:$0xff]
        %v436 = vld [vmem:[%s298 + $0x1f8] sm:$0xff]
        %v437 = vld [vmem:[%s298 + $0x200] sm:$0xff]
        %v438 = vld [vmem:[%s298 + $0x208] sm:$0xff]
        %v439 = vld [vmem:[%s298 + $0x210] sm:$0xff]
        %v440 = vld [vmem:[%s298 + $0x218] sm:$0xff]
        %v441 = vld [vmem:[%s298 + $0x220] sm:$0xff]
        %v442 = vld [vmem:[%s298 + $0x228] sm:$0xff]
        %v443 = vld [vmem:[%s298 + $0x230] sm:$0xff]
        %v444 = vld [vmem:[%s298 + $0x238] sm:$0xff]
        %v445 = vld [vmem:[%s298 + $0x240] sm:$0xff]
        %v446 = vld [vmem:[%s298 + $0x248] sm:$0xff]
        %v447 = vld [vmem:[%s298 + $0x250] sm:$0xff]
        %v448 = vld [vmem:[%s298 + $0x258] sm:$0xff]
        %v449 = vld [vmem:[%s298 + $0x260] sm:$0xff]
        %v450 = vld [vmem:[%s298 + $0x268] sm:$0xff]
        %v451 = vld [vmem:[%s298 + $0x270] sm:$0xff]
        %v452 = vld [vmem:[%s298 + $0x278] sm:$0xff]
        %v453 = vld [vmem:[%s298 + $0x280] sm:$0xff]
        %v454 = vld [vmem:[%s298 + $0x288] sm:$0xff]
        %v455 = vld [vmem:[%s298 + $0x290] sm:$0xff]
        %v456 = vld [vmem:[%s298 + $0x298] sm:$0xff]
        %v457 = vld [vmem:[%s298 + $0x2a0] sm:$0xff]
        %v458 = vld [vmem:[%s298 + $0x2a8] sm:$0xff]
        %v459 = vld [vmem:[%s298 + $0x2b0] sm:$0xff]
        %v460 = vld [vmem:[%s298 + $0x2b8] sm:$0xff]
        %v461 = vld [vmem:[%s298 + $0x2c0] sm:$0xff]
        %v462 = vld [vmem:[%s298 + $0x2c8] sm:$0xff]
        %v463 = vld [vmem:[%s298 + $0x2d0] sm:$0xff]
        %v464 = vld [vmem:[%s298 + $0x2d8] sm:$0xff]
        %v465 = vld [vmem:[%s298 + $0x2e0] sm:$0xff]
        %v466 = vld [vmem:[%s298 + $0x2e8] sm:$0xff]
        %v467 = vld [vmem:[%s298 + $0x2f0] sm:$0xff]
        %v468 = vld [vmem:[%s298 + $0x2f8] sm:$0xff]
        %v469 = vld [vmem:[%s298 + $0x300] sm:$0xff]
        %v470 = vld [vmem:[%s298 + $0x308] sm:$0xff]
        %v471 = vld [vmem:[%s298 + $0x310] sm:$0xff]
        %v472 = vld [vmem:[%s298 + $0x318] sm:$0xff]
        %v473 = vld [vmem:[%s298 + $0x320] sm:$0xff]
        %v474 = vld [vmem:[%s298 + $0x328] sm:$0xff]
        %v475 = vld [vmem:[%s298 + $0x330] sm:$0xff]
        %v476 = vld [vmem:[%s298 + $0x338] sm:$0xff]
        %v477 = vld [vmem:[%s298 + $0x340] sm:$0xff]
        %v478 = vld [vmem:[%s298 + $0x348] sm:$0xff]
        %v479 = vld [vmem:[%s298 + $0x350] sm:$0xff]
        %v480 = vld [vmem:[%s298 + $0x358] sm:$0xff]
        %v481 = vld [vmem:[%s298 + $0x360] sm:$0xff]
        %v482 = vld [vmem:[%s298 + $0x368] sm:$0xff]
        %v483 = vld [vmem:[%s298 + $0x370] sm:$0xff]
        %v484 = vld [vmem:[%s298 + $0x378] sm:$0xff]
        %v485 = vld [vmem:[%s298 + $0x380] sm:$0xff]
        %v486 = vld [vmem:[%s298 + $0x388] sm:$0xff]
        %v487 = vld [vmem:[%s298 + $0x390] sm:$0xff]
        %v488 = vld [vmem:[%s298 + $0x398] sm:$0xff]
        %v489 = vld [vmem:[%s298 + $0x3a0] sm:$0xff]
        %v490 = vld [vmem:[%s298 + $0x3a8] sm:$0xff]
        %v491 = vld [vmem:[%s298 + $0x3b0] sm:$0xff]
        %v492 = vld [vmem:[%s298 + $0x3b8] sm:$0xff]
        %v493 = vld [vmem:[%s298 + $0x3c0] sm:$0xff]
        %v494 = vld [vmem:[%s298 + $0x3c8] sm:$0xff]
        %v495 = vld [vmem:[%s298 + $0x3d0] sm:$0xff]
        %v496 = vld [vmem:[%s298 + $0x3d8] sm:$0xff]
        %v497 = vld [vmem:[%s298 + $0x3e0] sm:$0xff]
        %v498 = vld [vmem:[%s298 + $0x3e8] sm:$0xff]
        %v499 = vld [vmem:[%s298 + $0x3f0] sm:$0xff]
        %v500 = vld [vmem:[%s298 + $0x3f8] sm:$0xff]
        %v501 = vld [vmem:[%s298 + $0x400] sm:$0xff]
        %v502 = vld [vmem:[%s298 + $0x408] sm:$0xff]
        %v503 = vld [vmem:[%s298 + $0x410] sm:$0xff]
        %v504 = vld [vmem:[%s298 + $0x418] sm:$0xff]
        %v505 = vld [vmem:[%s298 + $0x420] sm:$0xff]
        %v506 = vld [vmem:[%s298 + $0x428] sm:$0xff]
        %v507 = vld [vmem:[%s298 + $0x430] sm:$0xff]
        %v508 = vld [vmem:[%s298 + $0x438] sm:$0xff]
        %v509 = vld [vmem:[%s298 + $0x440] sm:$0xff]
        %v510 = vld [vmem:[%s298 + $0x448] sm:$0xff]
        %v511 = vld [vmem:[%s298 + $0x450] sm:$0xff]
        %v512 = vld [vmem:[%s298 + $0x458] sm:$0xff]
        %v513 = vld [vmem:[%s298 + $0x460] sm:$0xff]
        %v514 = vld [vmem:[%s298 + $0x468] sm:$0xff]
        %v515 = vld [vmem:[%s298 + $0x470] sm:$0xff]
        %v516 = vld [vmem:[%s298 + $0x478] sm:$0xff]
        %v517 = vld [vmem:[%s298 + $0x480] sm:$0xff]
        %v518 = vld [vmem:[%s298 + $0x488] sm:$0xff]
        %v519 = vld [vmem:[%s298 + $0x490] sm:$0xff]
        %v520 = vld [vmem:[%s298 + $0x498] sm:$0xff]
        %v521 = vld [vmem:[%s298 + $0x4a0] sm:$0xff]
        %v522 = vld [vmem:[%s298 + $0x4a8] sm:$0xff]
        %v523 = vld [vmem:[%s298 + $0x4b0] sm:$0xff]
        %v524 = vld [vmem:[%s298 + $0x4b8] sm:$0xff]
        %v525 = vld [vmem:[%s298 + $0x4c0] sm:$0xff]
        %v526 = vld [vmem:[%s298 + $0x4c8] sm:$0xff]
        %v527 = vld [vmem:[%s298 + $0x4d0] sm:$0xff]
        %v528 = vld [vmem:[%s298 + $0x4d8] sm:$0xff]
        %v529 = vld [vmem:[%s298 + $0x4e0] sm:$0xff]
        %v530 = vld [vmem:[%s298 + $0x4e8] sm:$0xff]
        %v531 = vld [vmem:[%s298 + $0x4f0] sm:$0xff]
        %v532 = vld [vmem:[%s298 + $0x4f8] sm:$0xff]
        %v533 = vld [vmem:[%s298 + $0x500] sm:$0xff]
        %v534 = vld [vmem:[%s298 + $0x508] sm:$0xff]
        %v535 = vld [vmem:[%s298 + $0x510] sm:$0xff]
        %v536 = vld [vmem:[%s298 + $0x518] sm:$0xff]
        %v537 = vld [vmem:[%s298 + $0x520] sm:$0xff]
        %v538 = vld [vmem:[%s298 + $0x528] sm:$0xff]
        %v539 = vld [vmem:[%s298 + $0x530] sm:$0xff]
        %v540 = vld [vmem:[%s298 + $0x538] sm:$0xff]
        %v541 = vld [vmem:[%s298 + $0x540] sm:$0xff]
        %v542 = vld [vmem:[%s298 + $0x548] sm:$0xff]
        %v543 = vld [vmem:[%s298 + $0x550] sm:$0xff]
        %v544 = vld [vmem:[%s298 + $0x558] sm:$0xff]
        %v545 = vld [vmem:[%s298 + $0x560] sm:$0xff]
        %v546 = vld [vmem:[%s298 + $0x568] sm:$0xff]
        %v547 = vld [vmem:[%s298 + $0x570] sm:$0xff]
        %v548 = vld [vmem:[%s298 + $0x578] sm:$0xff]
        %v549 = vld [vmem:[%s298 + $0x580] sm:$0xff]
        %v550 = vld [vmem:[%s298 + $0x588] sm:$0xff]
        %v551 = vld [vmem:[%s298 + $0x590] sm:$0xff]
        %v552 = vld [vmem:[%s298 + $0x598] sm:$0xff]
        %v553 = vld [vmem:[%s298 + $0x5a0] sm:$0xff]
        %v554 = vld [vmem:[%s298 + $0x5a8] sm:$0xff]
        %v555 = vld [vmem:[%s298 + $0x5b0] sm:$0xff]
        %v556 = vld [vmem:[%s298 + $0x5b8] sm:$0xff]
        %v557 = vld [vmem:[%s298 + $0x5c0] sm:$0xff]
        %v558 = vld [vmem:[%s298 + $0x5c8] sm:$0xff]
        %v559 = vld [vmem:[%s298 + $0x5d0] sm:$0xff]
        %v560 = vld [vmem:[%s298 + $0x5d8] sm:$0xff]
        %v561 = vld [vmem:[%s298 + $0x5e0] sm:$0xff]
        %v562 = vld [vmem:[%s298 + $0x5e8] sm:$0xff]
        %v563 = vld [vmem:[%s298 + $0x5f0] sm:$0xff]
        %v564 = vld [vmem:[%s298 + $0x5f8] sm:$0xff]
        %v565 = vld [vmem:[%s298 + $0x600] sm:$0xff]
        %v566 = vld [vmem:[%s298 + $0x608] sm:$0xff]
        %v567 = vld [vmem:[%s298 + $0x610] sm:$0xff]
        %v568 = vld [vmem:[%s298 + $0x618] sm:$0xff]
        %v569 = vld [vmem:[%s298 + $0x620] sm:$0xff]
        %v570 = vld [vmem:[%s298 + $0x628] sm:$0xff]
        %v571 = vld [vmem:[%s298 + $0x630] sm:$0xff]
        %v572 = vld [vmem:[%s298 + $0x638] sm:$0xff]
        %v573 = vld [vmem:[%s298 + $0x640] sm:$0xff]
        %v574 = vld [vmem:[%s298 + $0x648] sm:$0xff]
        %v575 = vld [vmem:[%s298 + $0x650] sm:$0xff]
        %v576 = vld [vmem:[%s298 + $0x658] sm:$0xff]
        %v577 = vld [vmem:[%s298 + $0x660] sm:$0xff]
        %v578 = vld [vmem:[%s298 + $0x668] sm:$0xff]
        %v579 = vld [vmem:[%s298 + $0x670] sm:$0xff]
        %v580 = vld [vmem:[%s298 + $0x678] sm:$0xff]
        %v581 = vld [vmem:[%s298 + $0x680] sm:$0xff]
        %v582 = vld [vmem:[%s298 + $0x688] sm:$0xff]
        %v583 = vld [vmem:[%s298 + $0x690] sm:$0xff]
        %v584 = vld [vmem:[%s298 + $0x698] sm:$0xff]
        %v585 = vld [vmem:[%s298 + $0x6a0] sm:$0xff]
        %v586 = vld [vmem:[%s298 + $0x6a8] sm:$0xff]
        %v587 = vld [vmem:[%s298 + $0x6b0] sm:$0xff]
        %v588 = vld [vmem:[%s298 + $0x6b8] sm:$0xff]
        %v589 = vld [vmem:[%s298 + $0x6c0] sm:$0xff]
        %v590 = vld [vmem:[%s298 + $0x6c8] sm:$0xff]
        %v591 = vld [vmem:[%s298 + $0x6d0] sm:$0xff]
        %v592 = vld [vmem:[%s298 + $0x6d8] sm:$0xff]
        %v593 = vld [vmem:[%s298 + $0x6e0] sm:$0xff]
        %v594 = vld [vmem:[%s298 + $0x6e8] sm:$0xff]
        %v595 = vld [vmem:[%s298 + $0x6f0] sm:$0xff]
        %v596 = vld [vmem:[%s298 + $0x6f8] sm:$0xff]
        %v597 = vld [vmem:[%s298 + $0x700] sm:$0xff]
        %v598 = vld [vmem:[%s298 + $0x708] sm:$0xff]
        %v599 = vld [vmem:[%s298 + $0x710] sm:$0xff]
        %v600 = vld [vmem:[%s298 + $0x718] sm:$0xff]
        %v601 = vld [vmem:[%s298 + $0x720] sm:$0xff]
        %v602 = vld [vmem:[%s298 + $0x728] sm:$0xff]
        %v603 = vld [vmem:[%s298 + $0x730] sm:$0xff]
        %v604 = vld [vmem:[%s298 + $0x738] sm:$0xff]
        %v605 = vld [vmem:[%s298 + $0x740] sm:$0xff]
        %v606 = vld [vmem:[%s298 + $0x748] sm:$0xff]
        %v607 = vld [vmem:[%s298 + $0x750] sm:$0xff]
        %v608 = vld [vmem:[%s298 + $0x758] sm:$0xff]
        %v609 = vld [vmem:[%s298 + $0x760] sm:$0xff]
        %v610 = vld [vmem:[%s298 + $0x768] sm:$0xff]
        %v611 = vld [vmem:[%s298 + $0x770] sm:$0xff]
        %v612 = vld [vmem:[%s298 + $0x778] sm:$0xff]
        %v613 = vld [vmem:[%s298 + $0x780] sm:$0xff]
        %v614 = vld [vmem:[%s298 + $0x788] sm:$0xff]
        %v615 = vld [vmem:[%s298 + $0x790] sm:$0xff]
        %v616 = vld [vmem:[%s298 + $0x798] sm:$0xff]
        %v617 = vld [vmem:[%s298 + $0x7a0] sm:$0xff]
        %v618 = vld [vmem:[%s298 + $0x7a8] sm:$0xff]
        %v619 = vld [vmem:[%s298 + $0x7b0] sm:$0xff]
        %v620 = vld [vmem:[%s298 + $0x7b8] sm:$0xff]
        %v621 = vld [vmem:[%s298 + $0x7c0] sm:$0xff]
        %v622 = vld [vmem:[%s298 + $0x7c8] sm:$0xff]
        %v623 = vld [vmem:[%s298 + $0x7d0] sm:$0xff]
        %v624 = vld [vmem:[%s298 + $0x7d8] sm:$0xff]
        %v625 = vld [vmem:[%s298 + $0x7e0] sm:$0xff]
        %v626 = vld [vmem:[%s298 + $0x7e8] sm:$0xff]
        %v627 = vld [vmem:[%s298 + $0x7f0] sm:$0xff]
        %v628 = vld [vmem:[%s298 + $0x7f8] sm:$0xff]
        %v629 = vld [vmem:[%s298 + $0x800] sm:$0xff]
        %v630 = vld [vmem:[%s298 + $0x808] sm:$0xff]
        %v631 = vld [vmem:[%s298 + $0x810] sm:$0xff]
        %v632 = vld [vmem:[%s298 + $0x818] sm:$0xff]
        %v633 = vld [vmem:[%s298 + $0x820] sm:$0xff]
        %v634 = vld [vmem:[%s298 + $0x828] sm:$0xff]
        %v635 = vld [vmem:[%s298 + $0x830] sm:$0xff]
        %v636 = vld [vmem:[%s298 + $0x838] sm:$0xff]
        %v637 = vld [vmem:[%s298 + $0x840] sm:$0xff]
        %v638 = vld [vmem:[%s298 + $0x848] sm:$0xff]
        %v639 = vld [vmem:[%s298 + $0x850] sm:$0xff]
        %v640 = vld [vmem:[%s298 + $0x858] sm:$0xff]
        %v641 = vld [vmem:[%s298 + $0x860] sm:$0xff]
        %v642 = vld [vmem:[%s298 + $0x868] sm:$0xff]
        %v643 = vld [vmem:[%s298 + $0x870] sm:$0xff]
        %v644 = vld [vmem:[%s298 + $0x878] sm:$0xff]
        %v645 = vld [vmem:[%s298 + $0x880] sm:$0xff]
        %v646 = vld [vmem:[%s298 + $0x888] sm:$0xff]
        %v647 = vld [vmem:[%s298 + $0x890] sm:$0xff]
        %v648 = vld [vmem:[%s298 + $0x898] sm:$0xff]
        %v649 = vld [vmem:[%s298 + $0x8a0] sm:$0xff]
        %v650 = vld [vmem:[%s298 + $0x8a8] sm:$0xff]
        %v651 = vld [vmem:[%s298 + $0x8b0] sm:$0xff]
        %v652 = vld [vmem:[%s298 + $0x8b8] sm:$0xff]
        %v653 = vld [vmem:[%s298 + $0x8c0] sm:$0xff]
        %v654 = vld [vmem:[%s298 + $0x8c8] sm:$0xff]
        %v655 = vld [vmem:[%s298 + $0x8d0] sm:$0xff]
        %v656 = vld [vmem:[%s298 + $0x8d8] sm:$0xff]
        %v657 = vld [vmem:[%s298 + $0x8e0] sm:$0xff]
        %v658 = vld [vmem:[%s298 + $0x8e8] sm:$0xff]
        %v659 = vld [vmem:[%s298 + $0x8f0] sm:$0xff]
        %v660 = vld [vmem:[%s298 + $0x8f8] sm:$0xff]
        %v661 = vld [vmem:[%s298 + $0x900] sm:$0xff]
        %v662 = vld [vmem:[%s298 + $0x908] sm:$0xff]
        %v663 = vld [vmem:[%s298 + $0x910] sm:$0xff]
        %v664 = vld [vmem:[%s298 + $0x918] sm:$0xff]
        %v665 = vld [vmem:[%s298 + $0x920] sm:$0xff]
        %v666 = vld [vmem:[%s298 + $0x928] sm:$0xff]
        %v667 = vld [vmem:[%s298 + $0x930] sm:$0xff]
        %v668 = vld [vmem:[%s298 + $0x938] sm:$0xff]
        %v669 = vld [vmem:[%s298 + $0x940] sm:$0xff]
        %v670 = vld [vmem:[%s298 + $0x948] sm:$0xff]
        %v671 = vld [vmem:[%s298 + $0x950] sm:$0xff]
        %v672 = vld [vmem:[%s298 + $0x958] sm:$0xff]
        %v673 = vld [vmem:[%s298 + $0x960] sm:$0xff]
        %v674 = vld [vmem:[%s298 + $0x968] sm:$0xff]
        %v675 = vld [vmem:[%s298 + $0x970] sm:$0xff]
        %v676 = vld [vmem:[%s298 + $0x978] sm:$0xff]
        %v677 = vld [vmem:[%s298 + $0x980] sm:$0xff]
        %v678 = vld [vmem:[%s298 + $0x988] sm:$0xff]
        %v679 = vld [vmem:[%s298 + $0x990] sm:$0xff]
        %v680 = vld [vmem:[%s298 + $0x998] sm:$0xff]
        %v681 = vld [vmem:[%s298 + $0x9a0] sm:$0xff]
        %v682 = vld [vmem:[%s298 + $0x9a8] sm:$0xff]
        %v683 = vld [vmem:[%s298 + $0x9b0] sm:$0xff]
        %v684 = vld [vmem:[%s298 + $0x9b8] sm:$0xff]
        %v685 = vld [vmem:[%s298 + $0x9c0] sm:$0xff]
        %v686 = vld [vmem:[%s298 + $0x9c8] sm:$0xff]
        %v687 = vld [vmem:[%s298 + $0x9d0] sm:$0xff]
        %v688 = vld [vmem:[%s298 + $0x9d8] sm:$0xff]
        %v689 = vld [vmem:[%s298 + $0x9e0] sm:$0xff]
        %v690 = vld [vmem:[%s298 + $0x9e8] sm:$0xff]
        %v691 = vld [vmem:[%s298 + $0x9f0] sm:$0xff]
        %v692 = vld [vmem:[%s298 + $0x9f8] sm:$0xff]
        %v693 = vld [vmem:[%s298 + $0xa00] sm:$0xff]
        %v694 = vld [vmem:[%s298 + $0xa08] sm:$0xff]
        %v695 = vld [vmem:[%s298 + $0xa10] sm:$0xff]
        %v696 = vld [vmem:[%s298 + $0xa18] sm:$0xff]
        %v697 = vld [vmem:[%s298 + $0xa20] sm:$0xff]
        %v698 = vld [vmem:[%s298 + $0xa28] sm:$0xff]
        %v699 = vld [vmem:[%s298 + $0xa30] sm:$0xff]
        %v700 = vld [vmem:[%s298 + $0xa38] sm:$0xff]
        %v701 = vld [vmem:[%s298 + $0xa40] sm:$0xff]
        %v702 = vld [vmem:[%s298 + $0xa48] sm:$0xff]
        %v703 = vld [vmem:[%s298 + $0xa50] sm:$0xff]
        %v704 = vld [vmem:[%s298 + $0xa58] sm:$0xff]
        %v705 = vld [vmem:[%s298 + $0xa60] sm:$0xff]
        %v706 = vld [vmem:[%s298 + $0xa68] sm:$0xff]
        %v707 = vld [vmem:[%s298 + $0xa70] sm:$0xff]
        %v708 = vld [vmem:[%s298 + $0xa78] sm:$0xff]
        %v709 = vld [vmem:[%s298 + $0xa80] sm:$0xff]
        %v710 = vld [vmem:[%s298 + $0xa88] sm:$0xff]
        %v711 = vld [vmem:[%s298 + $0xa90] sm:$0xff]
        %v712 = vld [vmem:[%s298 + $0xa98] sm:$0xff]
        %v713 = vld [vmem:[%s298 + $0xaa0] sm:$0xff]
        %v714 = vld [vmem:[%s298 + $0xaa8] sm:$0xff]
        %v715 = vld [vmem:[%s298 + $0xab0] sm:$0xff]
        %v716 = vld [vmem:[%s298 + $0xab8] sm:$0xff]
        %v717 = vld [vmem:[%s298 + $0xac0] sm:$0xff]
        %v718 = vld [vmem:[%s298 + $0xac8] sm:$0xff]
        %v719 = vld [vmem:[%s298 + $0xad0] sm:$0xff]
        %v720 = vld [vmem:[%s298 + $0xad8] sm:$0xff]
        %v721 = vld [vmem:[%s298 + $0xae0] sm:$0xff]
        %v722 = vld [vmem:[%s298 + $0xae8] sm:$0xff]
        %v723 = vld [vmem:[%s298 + $0xaf0] sm:$0xff]
        %v724 = vld [vmem:[%s298 + $0xaf8] sm:$0xff]
        %v725 = vld [vmem:[%s298 + $0xb00] sm:$0xff]
        %v726 = vld [vmem:[%s298 + $0xb08] sm:$0xff]
        %v727 = vld [vmem:[%s298 + $0xb10] sm:$0xff]
        %v728 = vld [vmem:[%s298 + $0xb18] sm:$0xff]
        %v729 = vld [vmem:[%s298 + $0xb20] sm:$0xff]
        %v730 = vld [vmem:[%s298 + $0xb28] sm:$0xff]
        %v731 = vld [vmem:[%s298 + $0xb30] sm:$0xff]
        %v732 = vld [vmem:[%s298 + $0xb38] sm:$0xff]
        %v733 = vld [vmem:[%s298 + $0xb40] sm:$0xff]
        %v734 = vld [vmem:[%s298 + $0xb48] sm:$0xff]
        %v735 = vld [vmem:[%s298 + $0xb50] sm:$0xff]
        %v736 = vld [vmem:[%s298 + $0xb58] sm:$0xff]
        %v737 = vld [vmem:[%s298 + $0xb60] sm:$0xff]
        %v738 = vld [vmem:[%s298 + $0xb68] sm:$0xff]
        %v739 = vld [vmem:[%s298 + $0xb70] sm:$0xff]
        %v740 = vld [vmem:[%s298 + $0xb78] sm:$0xff]
        %v741 = vld [vmem:[%s298 + $0xb80] sm:$0xff]
        %v742 = vld [vmem:[%s298 + $0xb88] sm:$0xff]
        %v743 = vld [vmem:[%s298 + $0xb90] sm:$0xff]
        %v744 = vld [vmem:[%s298 + $0xb98] sm:$0xff]
        %v745 = vld [vmem:[%s298 + $0xba0] sm:$0xff]
        %v746 = vld [vmem:[%s298 + $0xba8] sm:$0xff]
        %v747 = vld [vmem:[%s298 + $0xbb0] sm:$0xff]
        %v748 = vld [vmem:[%s298 + $0xbb8] sm:$0xff]
        %v749 = vld [vmem:[%s298 + $0xbc0] sm:$0xff]
        %v750 = vld [vmem:[%s298 + $0xbc8] sm:$0xff]
        %v751 = vld [vmem:[%s298 + $0xbd0] sm:$0xff]
        %v752 = vld [vmem:[%s298 + $0xbd8] sm:$0xff]
        %v753 = vld [vmem:[%s298 + $0xbe0] sm:$0xff]
        %v754 = vld [vmem:[%s298 + $0xbe8] sm:$0xff]
        %v755 = vld [vmem:[%s298 + $0xbf0] sm:$0xff]
        %v756 = vld [vmem:[%s298 + $0xbf8] sm:$0xff]
        %v757 = vld [vmem:[%s298 + $0xc00] sm:$0xff]
        %v758 = vld [vmem:[%s298 + $0xc08] sm:$0xff]
        %v759 = vld [vmem:[%s298 + $0xc10] sm:$0xff]
        %v760 = vld [vmem:[%s298 + $0xc18] sm:$0xff]
        %v761 = vld [vmem:[%s298 + $0xc20] sm:$0xff]
        %v762 = vld [vmem:[%s298 + $0xc28] sm:$0xff]
        %v763 = vld [vmem:[%s298 + $0xc30] sm:$0xff]
        %v764 = vld [vmem:[%s298 + $0xc38] sm:$0xff]
        %v765 = vld [vmem:[%s298 + $0xc40] sm:$0xff]
        %v766 = vld [vmem:[%s298 + $0xc48] sm:$0xff]
        %v767 = vld [vmem:[%s298 + $0xc50] sm:$0xff]
        %v768 = vld [vmem:[%s298 + $0xc58] sm:$0xff]
        %v769 = vld [vmem:[%s298 + $0xc60] sm:$0xff]
        %v770 = vld [vmem:[%s298 + $0xc68] sm:$0xff]
        %v771 = vld [vmem:[%s298 + $0xc70] sm:$0xff]
        %v772 = vld [vmem:[%s298 + $0xc78] sm:$0xff]
        %v773 = vld [vmem:[%s298 + $0xc80] sm:$0xff]
        %v774 = vld [vmem:[%s298 + $0xc88] sm:$0xff]
        %v775 = vld [vmem:[%s298 + $0xc90] sm:$0xff]
        %v776 = vld [vmem:[%s298 + $0xc98] sm:$0xff]
        %v777 = vld [vmem:[%s298 + $0xca0] sm:$0xff]
        %v778 = vld [vmem:[%s298 + $0xca8] sm:$0xff]
        %v779 = vld [vmem:[%s298 + $0xcb0] sm:$0xff]
        %v780 = vld [vmem:[%s298 + $0xcb8] sm:$0xff]
        %v781 = vld [vmem:[%s298 + $0xcc0] sm:$0xff]
        %v782 = vld [vmem:[%s298 + $0xcc8] sm:$0xff]
        %v783 = vld [vmem:[%s298 + $0xcd0] sm:$0xff]
        %v784 = vld [vmem:[%s298 + $0xcd8] sm:$0xff]
        %v785 = vld [vmem:[%s298 + $0xce0] sm:$0xff]
        %v786 = vld [vmem:[%s298 + $0xce8] sm:$0xff]
        %v787 = vld [vmem:[%s298 + $0xcf0] sm:$0xff]
        %v788 = vld [vmem:[%s298 + $0xcf8] sm:$0xff]
        %v789 = vld [vmem:[%s298 + $0xd00] sm:$0xff]
        %v790 = vld [vmem:[%s298 + $0xd08] sm:$0xff]
        %v791 = vld [vmem:[%s298 + $0xd10] sm:$0xff]
        %v792 = vld [vmem:[%s298 + $0xd18] sm:$0xff]
        %v793 = vld [vmem:[%s298 + $0xd20] sm:$0xff]
        %v794 = vld [vmem:[%s298 + $0xd28] sm:$0xff]
        %v795 = vld [vmem:[%s298 + $0xd30] sm:$0xff]
        %v796 = vld [vmem:[%s298 + $0xd38] sm:$0xff]
        %v797 = vld [vmem:[%s298 + $0xd40] sm:$0xff]
        %v798 = vld [vmem:[%s298 + $0xd48] sm:$0xff]
        %v799 = vld [vmem:[%s298 + $0xd50] sm:$0xff]
        %v800 = vld [vmem:[%s298 + $0xd58] sm:$0xff]
        %v801 = vld [vmem:[%s298 + $0xd60] sm:$0xff]
        %v802 = vld [vmem:[%s298 + $0xd68] sm:$0xff]
        %v803 = vld [vmem:[%s298 + $0xd70] sm:$0xff]
        %v804 = vld [vmem:[%s298 + $0xd78] sm:$0xff]
        %v805 = vld [vmem:[%s298 + $0xd80] sm:$0xff]
        %v806 = vld [vmem:[%s298 + $0xd88] sm:$0xff]
        %v807 = vld [vmem:[%s298 + $0xd90] sm:$0xff]
        %v808 = vld [vmem:[%s298 + $0xd98] sm:$0xff]
        %v809 = vld [vmem:[%s298 + $0xda0] sm:$0xff]
        %v810 = vld [vmem:[%s298 + $0xda8] sm:$0xff]
        %v811 = vld [vmem:[%s298 + $0xdb0] sm:$0xff]
        %v812 = vld [vmem:[%s298 + $0xdb8] sm:$0xff]
        %v813 = vld [vmem:[%s298 + $0xdc0] sm:$0xff]
        %v814 = vld [vmem:[%s298 + $0xdc8] sm:$0xff]
        %v815 = vld [vmem:[%s298 + $0xdd0] sm:$0xff]
        %v816 = vld [vmem:[%s298 + $0xdd8] sm:$0xff]
        %v817 = vld [vmem:[%s298 + $0xde0] sm:$0xff]
        %v818 = vld [vmem:[%s298 + $0xde8] sm:$0xff]
        %v819 = vld [vmem:[%s298 + $0xdf0] sm:$0xff]
        %v820 = vld [vmem:[%s298 + $0xdf8] sm:$0xff]
        %v821 = vld [vmem:[%s298 + $0xe00] sm:$0xff]
        %v822 = vld [vmem:[%s298 + $0xe08] sm:$0xff]
        %v823 = vld [vmem:[%s298 + $0xe10] sm:$0xff]
        %v824 = vld [vmem:[%s298 + $0xe18] sm:$0xff]
        %v825 = vld [vmem:[%s298 + $0xe20] sm:$0xff]
        %v826 = vld [vmem:[%s298 + $0xe28] sm:$0xff]
        %v827 = vld [vmem:[%s298 + $0xe30] sm:$0xff]
        %v828 = vld [vmem:[%s298 + $0xe38] sm:$0xff]
        %v829 = vld [vmem:[%s298 + $0xe40] sm:$0xff]
        %v830 = vld [vmem:[%s298 + $0xe48] sm:$0xff]
        %v831 = vld [vmem:[%s298 + $0xe50] sm:$0xff]
        %v832 = vld [vmem:[%s298 + $0xe58] sm:$0xff]
        %v833 = vld [vmem:[%s298 + $0xe60] sm:$0xff]
        %v834 = vld [vmem:[%s298 + $0xe68] sm:$0xff]
        %v835 = vld [vmem:[%s298 + $0xe70] sm:$0xff]
        %v836 = vld [vmem:[%s298 + $0xe78] sm:$0xff]
        %v837 = vld [vmem:[%s298 + $0xe80] sm:$0xff]
        %v838 = vld [vmem:[%s298 + $0xe88] sm:$0xff]
        %v839 = vld [vmem:[%s298 + $0xe90] sm:$0xff]
        %v840 = vld [vmem:[%s298 + $0xe98] sm:$0xff]
        %v841 = vld [vmem:[%s298 + $0xea0] sm:$0xff]
        %v842 = vld [vmem:[%s298 + $0xea8] sm:$0xff]
        %v843 = vld [vmem:[%s298 + $0xeb0] sm:$0xff]
        %v844 = vld [vmem:[%s298 + $0xeb8] sm:$0xff]
        %v845 = vld [vmem:[%s298 + $0xec0] sm:$0xff]
        %v846 = vld [vmem:[%s298 + $0xec8] sm:$0xff]
        %v847 = vld [vmem:[%s298 + $0xed0] sm:$0xff]
        %v848 = vld [vmem:[%s298 + $0xed8] sm:$0xff]
        %v849 = vld [vmem:[%s298 + $0xee0] sm:$0xff]
        %v850 = vld [vmem:[%s298 + $0xee8] sm:$0xff]
        %v851 = vld [vmem:[%s298 + $0xef0] sm:$0xff]
        %v852 = vld [vmem:[%s298 + $0xef8] sm:$0xff]
        %v853 = vld [vmem:[%s298 + $0xf00] sm:$0xff]
        %v854 = vld [vmem:[%s298 + $0xf08] sm:$0xff]
        %v855 = vld [vmem:[%s298 + $0xf10] sm:$0xff]
        %v856 = vld [vmem:[%s298 + $0xf18] sm:$0xff]
        %v857 = vld [vmem:[%s298 + $0xf20] sm:$0xff]
        %v858 = vld [vmem:[%s298 + $0xf28] sm:$0xff]
        %v859 = vld [vmem:[%s298 + $0xf30] sm:$0xff]
        %v860 = vld [vmem:[%s298 + $0xf38] sm:$0xff]
        %v861 = vld [vmem:[%s298 + $0xf40] sm:$0xff]
        %v862 = vld [vmem:[%s298 + $0xf48] sm:$0xff]
        %v863 = vld [vmem:[%s298 + $0xf50] sm:$0xff]
        %v864 = vld [vmem:[%s298 + $0xf58] sm:$0xff]
        %v865 = vld [vmem:[%s298 + $0xf60] sm:$0xff]
        %v866 = vld [vmem:[%s298 + $0xf68] sm:$0xff]
        %v867 = vld [vmem:[%s298 + $0xf70] sm:$0xff]
        %v868 = vld [vmem:[%s298 + $0xf78] sm:$0xff]
        %v869 = vld [vmem:[%s298 + $0xf80] sm:$0xff]
        %v870 = vld [vmem:[%s298 + $0xf88] sm:$0xff]
        %v871 = vld [vmem:[%s298 + $0xf90] sm:$0xff]
        %v872 = vld [vmem:[%s298 + $0xf98] sm:$0xff]
        %v873 = vld [vmem:[%s298 + $0xfa0] sm:$0xff]
        %v874 = vld [vmem:[%s298 + $0xfa8] sm:$0xff]
        %v875 = vld [vmem:[%s298 + $0xfb0] sm:$0xff]
        %v876 = vld [vmem:[%s298 + $0xfb8] sm:$0xff]
        %v877 = vld [vmem:[%s298 + $0xfc0] sm:$0xff]
        %v878 = vld [vmem:[%s298 + $0xfc8] sm:$0xff]
        %v879 = vld [vmem:[%s298 + $0xfd0] sm:$0xff]
        %v880 = vld [vmem:[%s298 + $0xfd8] sm:$0xff]
        %v881 = vld [vmem:[%s298 + $0xfe0] sm:$0xff]
        %v882 = vld [vmem:[%s298 + $0xfe8] sm:$0xff]
        %v883 = vld [vmem:[%s298 + $0xff0] sm:$0xff]
        %v884 = vld [vmem:[%s298 + $0xff8] sm:$0xff]
        %v889 = vunpack.c.l.b16 %v369
        %v890 = vunpack.c.h.b16 %v369
        %v891 = vunpack.c.l.b16 %v370
        %v892 = vunpack.c.h.b16 %v370
        %v893 = vunpack.c.l.b16 %v371
        %v894 = vunpack.c.h.b16 %v371
        %v895 = vunpack.c.l.b16 %v372
        %v896 = vunpack.c.h.b16 %v372
        %v897 = vpack.c.b16 %v893, %v889
        %v898 = vpack.c.b16 %v894, %v890
        %v899 = vpack.c.b16 %v895, %v891
        %v900 = vpack.c.b16 %v896, %v892
        %v1417 = vunpack.c.l.b16 %v373
        %v1418 = vunpack.c.h.b16 %v373
        %v1419 = vunpack.c.l.b16 %v374
        %v1420 = vunpack.c.h.b16 %v374
        %v1421 = vunpack.c.l.b16 %v375
        %v1422 = vunpack.c.h.b16 %v375
        %v1423 = vunpack.c.l.b16 %v376
        %v1424 = vunpack.c.h.b16 %v376
        %v1425 = vunpack.c.l.b16 %v377
        %v1426 = vunpack.c.h.b16 %v377
        %v1427 = vunpack.c.l.b16 %v378
        %v1428 = vunpack.c.h.b16 %v378
        %v1429 = vunpack.c.l.b16 %v379
        %v1430 = vunpack.c.h.b16 %v379
        %v1431 = vunpack.c.l.b16 %v380
        %v1432 = vunpack.c.h.b16 %v380
        %v1433 = vunpack.c.l.b16 %v381
        %v1434 = vunpack.c.h.b16 %v381
        %v1435 = vunpack.c.l.b16 %v382
        %v1436 = vunpack.c.h.b16 %v382
        %v1437 = vunpack.c.l.b16 %v383
        %v1438 = vunpack.c.h.b16 %v383
        %v1439 = vunpack.c.l.b16 %v384
        %v1440 = vunpack.c.h.b16 %v384
        %v1441 = vunpack.c.l.b16 %v385
        %v1442 = vunpack.c.h.b16 %v385
        %v1443 = vunpack.c.l.b16 %v386
        %v1444 = vunpack.c.h.b16 %v386
        %v1445 = vunpack.c.l.b16 %v387
        %v1446 = vunpack.c.h.b16 %v387
        %v1447 = vunpack.c.l.b16 %v388
        %v1448 = vunpack.c.h.b16 %v388
        %v1449 = vunpack.c.l.b16 %v389
        %v1450 = vunpack.c.h.b16 %v389
        %v1451 = vunpack.c.l.b16 %v390
        %v1452 = vunpack.c.h.b16 %v390
        %v1453 = vunpack.c.l.b16 %v391
        %v1454 = vunpack.c.h.b16 %v391
        %v1455 = vunpack.c.l.b16 %v392
        %v1456 = vunpack.c.h.b16 %v392
        %v1457 = vunpack.c.l.b16 %v393
        %v1458 = vunpack.c.h.b16 %v393
        %v1459 = vunpack.c.l.b16 %v394
        %v1460 = vunpack.c.h.b16 %v394
        %v1461 = vunpack.c.l.b16 %v395
        %v1462 = vunpack.c.h.b16 %v395
        %v1463 = vunpack.c.l.b16 %v396
        %v1464 = vunpack.c.h.b16 %v396
        %v1465 = vunpack.c.l.b16 %v397
        %v1466 = vunpack.c.h.b16 %v397
        %v1467 = vunpack.c.l.b16 %v398
        %v1468 = vunpack.c.h.b16 %v398
        %v1469 = vunpack.c.l.b16 %v399
        %v1470 = vunpack.c.h.b16 %v399
        %v1471 = vunpack.c.l.b16 %v400
        %v1472 = vunpack.c.h.b16 %v400
        %v1473 = vunpack.c.l.b16 %v401
        %v1474 = vunpack.c.h.b16 %v401
        %v1475 = vunpack.c.l.b16 %v402
        %v1476 = vunpack.c.h.b16 %v402
        %v1477 = vunpack.c.l.b16 %v403
        %v1478 = vunpack.c.h.b16 %v403
        %v1479 = vunpack.c.l.b16 %v404
        %v1480 = vunpack.c.h.b16 %v404
        %v1481 = vunpack.c.l.b16 %v405
        %v1482 = vunpack.c.h.b16 %v405
        %v1483 = vunpack.c.l.b16 %v406
        %v1484 = vunpack.c.h.b16 %v406
        %v1485 = vunpack.c.l.b16 %v407
        %v1486 = vunpack.c.h.b16 %v407
        %v1487 = vunpack.c.l.b16 %v408
        %v1488 = vunpack.c.h.b16 %v408
        %v1489 = vunpack.c.l.b16 %v409
        %v1490 = vunpack.c.h.b16 %v409
        %v1491 = vunpack.c.l.b16 %v410
        %v1492 = vunpack.c.h.b16 %v410
        %v1493 = vunpack.c.l.b16 %v411
        %v1494 = vunpack.c.h.b16 %v411
        %v1495 = vunpack.c.l.b16 %v412
        %v1496 = vunpack.c.h.b16 %v412
        %v1497 = vunpack.c.l.b16 %v413
        %v1498 = vunpack.c.h.b16 %v413
        %v1499 = vunpack.c.l.b16 %v414
        %v1500 = vunpack.c.h.b16 %v414
        %v1501 = vunpack.c.l.b16 %v415
        %v1502 = vunpack.c.h.b16 %v415
        %v1503 = vunpack.c.l.b16 %v416
        %v1504 = vunpack.c.h.b16 %v416
        %v1505 = vunpack.c.l.b16 %v417
        %v1506 = vunpack.c.h.b16 %v417
        %v1507 = vunpack.c.l.b16 %v418
        %v1508 = vunpack.c.h.b16 %v418
        %v1509 = vunpack.c.l.b16 %v419
        %v1510 = vunpack.c.h.b16 %v419
        %v1511 = vunpack.c.l.b16 %v420
        %v1512 = vunpack.c.h.b16 %v420
        %v1513 = vunpack.c.l.b16 %v421
        %v1514 = vunpack.c.h.b16 %v421
        %v1515 = vunpack.c.l.b16 %v422
        %v1516 = vunpack.c.h.b16 %v422
        %v1517 = vunpack.c.l.b16 %v423
        %v1518 = vunpack.c.h.b16 %v423
        %v1519 = vunpack.c.l.b16 %v424
        %v1520 = vunpack.c.h.b16 %v424
        %v1521 = vunpack.c.l.b16 %v425
        %v1522 = vunpack.c.h.b16 %v425
        %v1523 = vunpack.c.l.b16 %v426
        %v1524 = vunpack.c.h.b16 %v426
        %v1525 = vunpack.c.l.b16 %v427
        %v1526 = vunpack.c.h.b16 %v427
        %v1527 = vunpack.c.l.b16 %v428
        %v1528 = vunpack.c.h.b16 %v428
        %v1529 = vunpack.c.l.b16 %v429
        %v1530 = vunpack.c.h.b16 %v429
        %v1531 = vunpack.c.l.b16 %v430
        %v1532 = vunpack.c.h.b16 %v430
        %v1533 = vunpack.c.l.b16 %v431
        %v1534 = vunpack.c.h.b16 %v431
        %v1535 = vunpack.c.l.b16 %v432
        %v1536 = vunpack.c.h.b16 %v432
        %v1537 = vunpack.c.l.b16 %v433
        %v1538 = vunpack.c.h.b16 %v433
        %v1539 = vunpack.c.l.b16 %v434
        %v1540 = vunpack.c.h.b16 %v434
        %v1541 = vunpack.c.l.b16 %v435
        %v1542 = vunpack.c.h.b16 %v435
        %v1543 = vunpack.c.l.b16 %v436
        %v1544 = vunpack.c.h.b16 %v436
        %v1545 = vunpack.c.l.b16 %v437
        %v1546 = vunpack.c.h.b16 %v437
        %v1547 = vunpack.c.l.b16 %v438
        %v1548 = vunpack.c.h.b16 %v438
        %v1549 = vunpack.c.l.b16 %v439
        %v1550 = vunpack.c.h.b16 %v439
        %v1551 = vunpack.c.l.b16 %v440
        %v1552 = vunpack.c.h.b16 %v440
        %v1553 = vunpack.c.l.b16 %v441
        %v1554 = vunpack.c.h.b16 %v441
        %v1555 = vunpack.c.l.b16 %v442
        %v1556 = vunpack.c.h.b16 %v442
        %v1557 = vunpack.c.l.b16 %v443
        %v1558 = vunpack.c.h.b16 %v443
        %v1559 = vunpack.c.l.b16 %v444
        %v1560 = vunpack.c.h.b16 %v444
        %v1561 = vunpack.c.l.b16 %v445
        %v1562 = vunpack.c.h.b16 %v445
        %v1563 = vunpack.c.l.b16 %v446
        %v1564 = vunpack.c.h.b16 %v446
        %v1565 = vunpack.c.l.b16 %v447
        %v1566 = vunpack.c.h.b16 %v447
        %v1567 = vunpack.c.l.b16 %v448
        %v1568 = vunpack.c.h.b16 %v448
        %v1569 = vunpack.c.l.b16 %v449
        %v1570 = vunpack.c.h.b16 %v449
        %v1571 = vunpack.c.l.b16 %v450
        %v1572 = vunpack.c.h.b16 %v450
        %v1573 = vunpack.c.l.b16 %v451
        %v1574 = vunpack.c.h.b16 %v451
        %v1575 = vunpack.c.l.b16 %v452
        %v1576 = vunpack.c.h.b16 %v452
        %v1577 = vunpack.c.l.b16 %v453
        %v1578 = vunpack.c.h.b16 %v453
        %v1579 = vunpack.c.l.b16 %v454
        %v1580 = vunpack.c.h.b16 %v454
        %v1581 = vunpack.c.l.b16 %v455
        %v1582 = vunpack.c.h.b16 %v455
        %v1583 = vunpack.c.l.b16 %v456
        %v1584 = vunpack.c.h.b16 %v456
        %v1585 = vunpack.c.l.b16 %v457
        %v1586 = vunpack.c.h.b16 %v457
        %v1587 = vunpack.c.l.b16 %v458
        %v1588 = vunpack.c.h.b16 %v458
        %v1589 = vunpack.c.l.b16 %v459
        %v1590 = vunpack.c.h.b16 %v459
        %v1591 = vunpack.c.l.b16 %v460
        %v1592 = vunpack.c.h.b16 %v460
        %v1593 = vunpack.c.l.b16 %v461
        %v1594 = vunpack.c.h.b16 %v461
        %v1595 = vunpack.c.l.b16 %v462
        %v1596 = vunpack.c.h.b16 %v462
        %v1597 = vunpack.c.l.b16 %v463
        %v1598 = vunpack.c.h.b16 %v463
        %v1599 = vunpack.c.l.b16 %v464
        %v1600 = vunpack.c.h.b16 %v464
        %v1601 = vunpack.c.l.b16 %v465
        %v1602 = vunpack.c.h.b16 %v465
        %v1603 = vunpack.c.l.b16 %v466
        %v1604 = vunpack.c.h.b16 %v466
        %v1605 = vunpack.c.l.b16 %v467
        %v1606 = vunpack.c.h.b16 %v467
        %v1607 = vunpack.c.l.b16 %v468
        %v1608 = vunpack.c.h.b16 %v468
        %v1609 = vunpack.c.l.b16 %v469
        %v1610 = vunpack.c.h.b16 %v469
        %v1611 = vunpack.c.l.b16 %v470
        %v1612 = vunpack.c.h.b16 %v470
        %v1613 = vunpack.c.l.b16 %v471
        %v1614 = vunpack.c.h.b16 %v471
        %v1615 = vunpack.c.l.b16 %v472
        %v1616 = vunpack.c.h.b16 %v472
        %v1617 = vunpack.c.l.b16 %v473
        %v1618 = vunpack.c.h.b16 %v473
        %v1619 = vunpack.c.l.b16 %v474
        %v1620 = vunpack.c.h.b16 %v474
        %v1621 = vunpack.c.l.b16 %v475
        %v1622 = vunpack.c.h.b16 %v475
        %v1623 = vunpack.c.l.b16 %v476
        %v1624 = vunpack.c.h.b16 %v476
        %v1625 = vunpack.c.l.b16 %v477
        %v1626 = vunpack.c.h.b16 %v477
        %v1627 = vunpack.c.l.b16 %v478
        %v1628 = vunpack.c.h.b16 %v478
        %v1629 = vunpack.c.l.b16 %v479
        %v1630 = vunpack.c.h.b16 %v479
        %v1631 = vunpack.c.l.b16 %v480
        %v1632 = vunpack.c.h.b16 %v480
        %v1633 = vunpack.c.l.b16 %v481
        %v1634 = vunpack.c.h.b16 %v481
        %v1635 = vunpack.c.l.b16 %v482
        %v1636 = vunpack.c.h.b16 %v482
        %v1637 = vunpack.c.l.b16 %v483
        %v1638 = vunpack.c.h.b16 %v483
        %v1639 = vunpack.c.l.b16 %v484
        %v1640 = vunpack.c.h.b16 %v484
        %v1641 = vunpack.c.l.b16 %v485
        %v1642 = vunpack.c.h.b16 %v485
        %v1643 = vunpack.c.l.b16 %v486
        %v1644 = vunpack.c.h.b16 %v486
        %v1645 = vunpack.c.l.b16 %v487
        %v1646 = vunpack.c.h.b16 %v487
        %v1647 = vunpack.c.l.b16 %v488
        %v1648 = vunpack.c.h.b16 %v488
        %v1649 = vunpack.c.l.b16 %v489
        %v1650 = vunpack.c.h.b16 %v489
        %v1651 = vunpack.c.l.b16 %v490
        %v1652 = vunpack.c.h.b16 %v490
        %v1653 = vunpack.c.l.b16 %v491
        %v1654 = vunpack.c.h.b16 %v491
        %v1655 = vunpack.c.l.b16 %v492
        %v1656 = vunpack.c.h.b16 %v492
        %v1657 = vunpack.c.l.b16 %v493
        %v1658 = vunpack.c.h.b16 %v493
        %v1659 = vunpack.c.l.b16 %v494
        %v1660 = vunpack.c.h.b16 %v494
        %v1661 = vunpack.c.l.b16 %v495
        %v1662 = vunpack.c.h.b16 %v495
        %v1663 = vunpack.c.l.b16 %v496
        %v1664 = vunpack.c.h.b16 %v496
        %v1665 = vunpack.c.l.b16 %v497
        %v1666 = vunpack.c.h.b16 %v497
        %v1667 = vunpack.c.l.b16 %v498
        %v1668 = vunpack.c.h.b16 %v498
        %v1669 = vunpack.c.l.b16 %v499
        %v1670 = vunpack.c.h.b16 %v499
        %v1671 = vunpack.c.l.b16 %v500
        %v1672 = vunpack.c.h.b16 %v500
        %v1673 = vunpack.c.l.b16 %v501
        %v1674 = vunpack.c.h.b16 %v501
        %v1675 = vunpack.c.l.b16 %v502
        %v1676 = vunpack.c.h.b16 %v502
        %v1677 = vunpack.c.l.b16 %v503
        %v1678 = vunpack.c.h.b16 %v503
        %v1679 = vunpack.c.l.b16 %v504
        %v1680 = vunpack.c.h.b16 %v504
        %v1681 = vunpack.c.l.b16 %v505
        %v1682 = vunpack.c.h.b16 %v505
        %v1683 = vunpack.c.l.b16 %v506
        %v1684 = vunpack.c.h.b16 %v506
        %v1685 = vunpack.c.l.b16 %v507
        %v1686 = vunpack.c.h.b16 %v507
        %v1687 = vunpack.c.l.b16 %v508
        %v1688 = vunpack.c.h.b16 %v508
        %v1689 = vunpack.c.l.b16 %v509
        %v1690 = vunpack.c.h.b16 %v509
        %v1691 = vunpack.c.l.b16 %v510
        %v1692 = vunpack.c.h.b16 %v510
        %v1693 = vunpack.c.l.b16 %v511
        %v1694 = vunpack.c.h.b16 %v511
        %v1695 = vunpack.c.l.b16 %v512
        %v1696 = vunpack.c.h.b16 %v512
        %v1697 = vunpack.c.l.b16 %v513
        %v1698 = vunpack.c.h.b16 %v513
        %v1699 = vunpack.c.l.b16 %v514
        %v1700 = vunpack.c.h.b16 %v514
        %v1701 = vunpack.c.l.b16 %v515
        %v1702 = vunpack.c.h.b16 %v515
        %v1703 = vunpack.c.l.b16 %v516
        %v1704 = vunpack.c.h.b16 %v516
        %v1705 = vunpack.c.l.b16 %v517
        %v1706 = vunpack.c.h.b16 %v517
        %v1707 = vunpack.c.l.b16 %v518
        %v1708 = vunpack.c.h.b16 %v518
        %v1709 = vunpack.c.l.b16 %v519
        %v1710 = vunpack.c.h.b16 %v519
        %v1711 = vunpack.c.l.b16 %v520
        %v1712 = vunpack.c.h.b16 %v520
        %v1713 = vunpack.c.l.b16 %v521
        %v1714 = vunpack.c.h.b16 %v521
        %v1715 = vunpack.c.l.b16 %v522
        %v1716 = vunpack.c.h.b16 %v522
        %v1717 = vunpack.c.l.b16 %v523
        %v1718 = vunpack.c.h.b16 %v523
        %v1719 = vunpack.c.l.b16 %v524
        %v1720 = vunpack.c.h.b16 %v524
        %v1721 = vunpack.c.l.b16 %v525
        %v1722 = vunpack.c.h.b16 %v525
        %v1723 = vunpack.c.l.b16 %v526
        %v1724 = vunpack.c.h.b16 %v526
        %v1725 = vunpack.c.l.b16 %v527
        %v1726 = vunpack.c.h.b16 %v527
        %v1727 = vunpack.c.l.b16 %v528
        %v1728 = vunpack.c.h.b16 %v528
        %v1729 = vunpack.c.l.b16 %v529
        %v1730 = vunpack.c.h.b16 %v529
        %v1731 = vunpack.c.l.b16 %v530
        %v1732 = vunpack.c.h.b16 %v530
        %v1733 = vunpack.c.l.b16 %v531
        %v1734 = vunpack.c.h.b16 %v531
        %v1735 = vunpack.c.l.b16 %v532
        %v1736 = vunpack.c.h.b16 %v532
        %v1737 = vunpack.c.l.b16 %v533
        %v1738 = vunpack.c.h.b16 %v533
        %v1739 = vunpack.c.l.b16 %v534
        %v1740 = vunpack.c.h.b16 %v534
        %v1741 = vunpack.c.l.b16 %v535
        %v1742 = vunpack.c.h.b16 %v535
        %v1743 = vunpack.c.l.b16 %v536
        %v1744 = vunpack.c.h.b16 %v536
        %v1745 = vunpack.c.l.b16 %v537
        %v1746 = vunpack.c.h.b16 %v537
        %v1747 = vunpack.c.l.b16 %v538
        %v1748 = vunpack.c.h.b16 %v538
        %v1749 = vunpack.c.l.b16 %v539
        %v1750 = vunpack.c.h.b16 %v539
        %v1751 = vunpack.c.l.b16 %v540
        %v1752 = vunpack.c.h.b16 %v540
        %v1753 = vunpack.c.l.b16 %v541
        %v1754 = vunpack.c.h.b16 %v541
        %v1755 = vunpack.c.l.b16 %v542
        %v1756 = vunpack.c.h.b16 %v542
        %v1757 = vunpack.c.l.b16 %v543
        %v1758 = vunpack.c.h.b16 %v543
        %v1759 = vunpack.c.l.b16 %v544
        %v1760 = vunpack.c.h.b16 %v544
        %v1761 = vunpack.c.l.b16 %v545
        %v1762 = vunpack.c.h.b16 %v545
        %v1763 = vunpack.c.l.b16 %v546
        %v1764 = vunpack.c.h.b16 %v546
        %v1765 = vunpack.c.l.b16 %v547
        %v1766 = vunpack.c.h.b16 %v547
        %v1767 = vunpack.c.l.b16 %v548
        %v1768 = vunpack.c.h.b16 %v548
        %v1769 = vunpack.c.l.b16 %v549
        %v1770 = vunpack.c.h.b16 %v549
        %v1771 = vunpack.c.l.b16 %v550
        %v1772 = vunpack.c.h.b16 %v550
        %v1773 = vunpack.c.l.b16 %v551
        %v1774 = vunpack.c.h.b16 %v551
        %v1775 = vunpack.c.l.b16 %v552
        %v1776 = vunpack.c.h.b16 %v552
        %v1777 = vunpack.c.l.b16 %v553
        %v1778 = vunpack.c.h.b16 %v553
        %v1779 = vunpack.c.l.b16 %v554
        %v1780 = vunpack.c.h.b16 %v554
        %v1781 = vunpack.c.l.b16 %v555
        %v1782 = vunpack.c.h.b16 %v555
        %v1783 = vunpack.c.l.b16 %v556
        %v1784 = vunpack.c.h.b16 %v556
        %v1785 = vunpack.c.l.b16 %v557
        %v1786 = vunpack.c.h.b16 %v557
        %v1787 = vunpack.c.l.b16 %v558
        %v1788 = vunpack.c.h.b16 %v558
        %v1789 = vunpack.c.l.b16 %v559
        %v1790 = vunpack.c.h.b16 %v559
        %v1791 = vunpack.c.l.b16 %v560
        %v1792 = vunpack.c.h.b16 %v560
        %v1793 = vunpack.c.l.b16 %v561
        %v1794 = vunpack.c.h.b16 %v561
        %v1795 = vunpack.c.l.b16 %v562
        %v1796 = vunpack.c.h.b16 %v562
        %v1797 = vunpack.c.l.b16 %v563
        %v1798 = vunpack.c.h.b16 %v563
        %v1799 = vunpack.c.l.b16 %v564
        %v1800 = vunpack.c.h.b16 %v564
        %v1801 = vunpack.c.l.b16 %v565
        %v1802 = vunpack.c.h.b16 %v565
        %v1803 = vunpack.c.l.b16 %v566
        %v1804 = vunpack.c.h.b16 %v566
        %v1805 = vunpack.c.l.b16 %v567
        %v1806 = vunpack.c.h.b16 %v567
        %v1807 = vunpack.c.l.b16 %v568
        %v1808 = vunpack.c.h.b16 %v568
        %v1809 = vunpack.c.l.b16 %v569
        %v1810 = vunpack.c.h.b16 %v569
        %v1811 = vunpack.c.l.b16 %v570
        %v1812 = vunpack.c.h.b16 %v570
        %v1813 = vunpack.c.l.b16 %v571
        %v1814 = vunpack.c.h.b16 %v571
        %v1815 = vunpack.c.l.b16 %v572
        %v1816 = vunpack.c.h.b16 %v572
        %v1817 = vunpack.c.l.b16 %v573
        %v1818 = vunpack.c.h.b16 %v573
        %v1819 = vunpack.c.l.b16 %v574
        %v1820 = vunpack.c.h.b16 %v574
        %v1821 = vunpack.c.l.b16 %v575
        %v1822 = vunpack.c.h.b16 %v575
        %v1823 = vunpack.c.l.b16 %v576
        %v1824 = vunpack.c.h.b16 %v576
        %v1825 = vunpack.c.l.b16 %v577
        %v1826 = vunpack.c.h.b16 %v577
        %v1827 = vunpack.c.l.b16 %v578
        %v1828 = vunpack.c.h.b16 %v578
        %v1829 = vunpack.c.l.b16 %v579
        %v1830 = vunpack.c.h.b16 %v579
        %v1831 = vunpack.c.l.b16 %v580
        %v1832 = vunpack.c.h.b16 %v580
        %v1833 = vunpack.c.l.b16 %v581
        %v1834 = vunpack.c.h.b16 %v581
        %v1835 = vunpack.c.l.b16 %v582
        %v1836 = vunpack.c.h.b16 %v582
        %v1837 = vunpack.c.l.b16 %v583
        %v1838 = vunpack.c.h.b16 %v583
        %v1839 = vunpack.c.l.b16 %v584
        %v1840 = vunpack.c.h.b16 %v584
        %v1841 = vunpack.c.l.b16 %v585
        %v1842 = vunpack.c.h.b16 %v585
        %v1843 = vunpack.c.l.b16 %v586
        %v1844 = vunpack.c.h.b16 %v586
        %v1845 = vunpack.c.l.b16 %v587
        %v1846 = vunpack.c.h.b16 %v587
        %v1847 = vunpack.c.l.b16 %v588
        %v1848 = vunpack.c.h.b16 %v588
        %v1849 = vunpack.c.l.b16 %v589
        %v1850 = vunpack.c.h.b16 %v589
        %v1851 = vunpack.c.l.b16 %v590
        %v1852 = vunpack.c.h.b16 %v590
        %v1853 = vunpack.c.l.b16 %v591
        %v1854 = vunpack.c.h.b16 %v591
        %v1855 = vunpack.c.l.b16 %v592
        %v1856 = vunpack.c.h.b16 %v592
        %v1857 = vunpack.c.l.b16 %v593
        %v1858 = vunpack.c.h.b16 %v593
        %v1859 = vunpack.c.l.b16 %v594
        %v1860 = vunpack.c.h.b16 %v594
        %v1861 = vunpack.c.l.b16 %v595
        %v1862 = vunpack.c.h.b16 %v595
        %v1863 = vunpack.c.l.b16 %v596
        %v1864 = vunpack.c.h.b16 %v596
        %v1865 = vunpack.c.l.b16 %v597
        %v1866 = vunpack.c.h.b16 %v597
        %v1867 = vunpack.c.l.b16 %v598
        %v1868 = vunpack.c.h.b16 %v598
        %v1869 = vunpack.c.l.b16 %v599
        %v1870 = vunpack.c.h.b16 %v599
        %v1871 = vunpack.c.l.b16 %v600
        %v1872 = vunpack.c.h.b16 %v600
        %v1873 = vunpack.c.l.b16 %v601
        %v1874 = vunpack.c.h.b16 %v601
        %v1875 = vunpack.c.l.b16 %v602
        %v1876 = vunpack.c.h.b16 %v602
        %v1877 = vunpack.c.l.b16 %v603
        %v1878 = vunpack.c.h.b16 %v603
        %v1879 = vunpack.c.l.b16 %v604
        %v1880 = vunpack.c.h.b16 %v604
        %v1881 = vunpack.c.l.b16 %v605
        %v1882 = vunpack.c.h.b16 %v605
        %v1883 = vunpack.c.l.b16 %v606
        %v1884 = vunpack.c.h.b16 %v606
        %v1885 = vunpack.c.l.b16 %v607
        %v1886 = vunpack.c.h.b16 %v607
        %v1887 = vunpack.c.l.b16 %v608
        %v1888 = vunpack.c.h.b16 %v608
        %v1889 = vunpack.c.l.b16 %v609
        %v1890 = vunpack.c.h.b16 %v609
        %v1891 = vunpack.c.l.b16 %v610
        %v1892 = vunpack.c.h.b16 %v610
        %v1893 = vunpack.c.l.b16 %v611
        %v1894 = vunpack.c.h.b16 %v611
        %v1895 = vunpack.c.l.b16 %v612
        %v1896 = vunpack.c.h.b16 %v612
        %v1897 = vunpack.c.l.b16 %v613
        %v1898 = vunpack.c.h.b16 %v613
        %v1899 = vunpack.c.l.b16 %v614
        %v1900 = vunpack.c.h.b16 %v614
        %v1901 = vunpack.c.l.b16 %v615
        %v1902 = vunpack.c.h.b16 %v615
        %v1903 = vunpack.c.l.b16 %v616
        %v1904 = vunpack.c.h.b16 %v616
        %v1905 = vunpack.c.l.b16 %v617
        %v1906 = vunpack.c.h.b16 %v617
        %v1907 = vunpack.c.l.b16 %v618
        %v1908 = vunpack.c.h.b16 %v618
        %v1909 = vunpack.c.l.b16 %v619
        %v1910 = vunpack.c.h.b16 %v619
        %v1911 = vunpack.c.l.b16 %v620
        %v1912 = vunpack.c.h.b16 %v620
        %v1913 = vunpack.c.l.b16 %v621
        %v1914 = vunpack.c.h.b16 %v621
        %v1915 = vunpack.c.l.b16 %v622
        %v1916 = vunpack.c.h.b16 %v622
        %v1917 = vunpack.c.l.b16 %v623
        %v1918 = vunpack.c.h.b16 %v623
        %v1919 = vunpack.c.l.b16 %v624
        %v1920 = vunpack.c.h.b16 %v624
        %v1921 = vunpack.c.l.b16 %v625
        %v1922 = vunpack.c.h.b16 %v625
        %v1923 = vunpack.c.l.b16 %v626
        %v1924 = vunpack.c.h.b16 %v626
        %v1925 = vunpack.c.l.b16 %v627
        %v1926 = vunpack.c.h.b16 %v627
        %v1927 = vunpack.c.l.b16 %v628
        %v1928 = vunpack.c.h.b16 %v628
        %v1929 = vunpack.c.l.b16 %v629
        %v1930 = vunpack.c.h.b16 %v629
        %v1931 = vunpack.c.l.b16 %v630
        %v1932 = vunpack.c.h.b16 %v630
        %v1933 = vunpack.c.l.b16 %v631
        %v1934 = vunpack.c.h.b16 %v631
        %v1935 = vunpack.c.l.b16 %v632
        %v1936 = vunpack.c.h.b16 %v632
        %v1937 = vunpack.c.l.b16 %v633
        %v1938 = vunpack.c.h.b16 %v633
        %v1939 = vunpack.c.l.b16 %v634
        %v1940 = vunpack.c.h.b16 %v634
        %v1941 = vunpack.c.l.b16 %v635
        %v1942 = vunpack.c.h.b16 %v635
        %v1943 = vunpack.c.l.b16 %v636
        %v1944 = vunpack.c.h.b16 %v636
        %v1945 = vunpack.c.l.b16 %v637
        %v1946 = vunpack.c.h.b16 %v637
        %v1947 = vunpack.c.l.b16 %v638
        %v1948 = vunpack.c.h.b16 %v638
        %v1949 = vunpack.c.l.b16 %v639
        %v1950 = vunpack.c.h.b16 %v639
        %v1951 = vunpack.c.l.b16 %v640
        %v1952 = vunpack.c.h.b16 %v640
        %v1953 = vunpack.c.l.b16 %v641
        %v1954 = vunpack.c.h.b16 %v641
        %v1955 = vunpack.c.l.b16 %v642
        %v1956 = vunpack.c.h.b16 %v642
        %v1957 = vunpack.c.l.b16 %v643
        %v1958 = vunpack.c.h.b16 %v643
        %v1959 = vunpack.c.l.b16 %v644
        %v1960 = vunpack.c.h.b16 %v644
        %v1961 = vunpack.c.l.b16 %v645
        %v1962 = vunpack.c.h.b16 %v645
        %v1963 = vunpack.c.l.b16 %v646
        %v1964 = vunpack.c.h.b16 %v646
        %v1965 = vunpack.c.l.b16 %v647
        %v1966 = vunpack.c.h.b16 %v647
        %v1967 = vunpack.c.l.b16 %v648
        %v1968 = vunpack.c.h.b16 %v648
        %v1969 = vunpack.c.l.b16 %v649
        %v1970 = vunpack.c.h.b16 %v649
        %v1971 = vunpack.c.l.b16 %v650
        %v1972 = vunpack.c.h.b16 %v650
        %v1973 = vunpack.c.l.b16 %v651
        %v1974 = vunpack.c.h.b16 %v651
        %v1975 = vunpack.c.l.b16 %v652
        %v1976 = vunpack.c.h.b16 %v652
        %v1977 = vunpack.c.l.b16 %v653
        %v1978 = vunpack.c.h.b16 %v653
        %v1979 = vunpack.c.l.b16 %v654
        %v1980 = vunpack.c.h.b16 %v654
        %v1981 = vunpack.c.l.b16 %v655
        %v1982 = vunpack.c.h.b16 %v655
        %v1983 = vunpack.c.l.b16 %v656
        %v1984 = vunpack.c.h.b16 %v656
        %v1985 = vunpack.c.l.b16 %v657
        %v1986 = vunpack.c.h.b16 %v657
        %v1987 = vunpack.c.l.b16 %v658
        %v1988 = vunpack.c.h.b16 %v658
        %v1989 = vunpack.c.l.b16 %v659
        %v1990 = vunpack.c.h.b16 %v659
        %v1991 = vunpack.c.l.b16 %v660
        %v1992 = vunpack.c.h.b16 %v660
        %v1993 = vunpack.c.l.b16 %v661
        %v1994 = vunpack.c.h.b16 %v661
        %v1995 = vunpack.c.l.b16 %v662
        %v1996 = vunpack.c.h.b16 %v662
        %v1997 = vunpack.c.l.b16 %v663
        %v1998 = vunpack.c.h.b16 %v663
        %v1999 = vunpack.c.l.b16 %v664
        %v2000 = vunpack.c.h.b16 %v664
        %v2001 = vunpack.c.l.b16 %v665
        %v2002 = vunpack.c.h.b16 %v665
        %v2003 = vunpack.c.l.b16 %v666
        %v2004 = vunpack.c.h.b16 %v666
        %v2005 = vunpack.c.l.b16 %v667
        %v2006 = vunpack.c.h.b16 %v667
        %v2007 = vunpack.c.l.b16 %v668
        %v2008 = vunpack.c.h.b16 %v668
        %v2009 = vunpack.c.l.b16 %v669
        %v2010 = vunpack.c.h.b16 %v669
        %v2011 = vunpack.c.l.b16 %v670
        %v2012 = vunpack.c.h.b16 %v670
        %v2013 = vunpack.c.l.b16 %v671
        %v2014 = vunpack.c.h.b16 %v671
        %v2015 = vunpack.c.l.b16 %v672
        %v2016 = vunpack.c.h.b16 %v672
        %v2017 = vunpack.c.l.b16 %v673
        %v2018 = vunpack.c.h.b16 %v673
        %v2019 = vunpack.c.l.b16 %v674
        %v2020 = vunpack.c.h.b16 %v674
        %v2021 = vunpack.c.l.b16 %v675
        %v2022 = vunpack.c.h.b16 %v675
        %v2023 = vunpack.c.l.b16 %v676
        %v2024 = vunpack.c.h.b16 %v676
        %v2025 = vunpack.c.l.b16 %v677
        %v2026 = vunpack.c.h.b16 %v677
        %v2027 = vunpack.c.l.b16 %v678
        %v2028 = vunpack.c.h.b16 %v678
        %v2029 = vunpack.c.l.b16 %v679
        %v2030 = vunpack.c.h.b16 %v679
        %v2031 = vunpack.c.l.b16 %v680
        %v2032 = vunpack.c.h.b16 %v680
        %v2033 = vunpack.c.l.b16 %v681
        %v2034 = vunpack.c.h.b16 %v681
        %v2035 = vunpack.c.l.b16 %v682
        %v2036 = vunpack.c.h.b16 %v682
        %v2037 = vunpack.c.l.b16 %v683
        %v2038 = vunpack.c.h.b16 %v683
        %v2039 = vunpack.c.l.b16 %v684
        %v2040 = vunpack.c.h.b16 %v684
        %v2041 = vunpack.c.l.b16 %v685
        %v2042 = vunpack.c.h.b16 %v685
        %v2043 = vunpack.c.l.b16 %v686
        %v2044 = vunpack.c.h.b16 %v686
        %v2045 = vunpack.c.l.b16 %v687
        %v2046 = vunpack.c.h.b16 %v687
        %v2047 = vunpack.c.l.b16 %v688
        %v2048 = vunpack.c.h.b16 %v688
        %v2049 = vunpack.c.l.b16 %v689
        %v2050 = vunpack.c.h.b16 %v689
        %v2051 = vunpack.c.l.b16 %v690
        %v2052 = vunpack.c.h.b16 %v690
        %v2053 = vunpack.c.l.b16 %v691
        %v2054 = vunpack.c.h.b16 %v691
        %v2055 = vunpack.c.l.b16 %v692
        %v2056 = vunpack.c.h.b16 %v692
        %v2057 = vunpack.c.l.b16 %v693
        %v2058 = vunpack.c.h.b16 %v693
        %v2059 = vunpack.c.l.b16 %v694
        %v2060 = vunpack.c.h.b16 %v694
        %v2061 = vunpack.c.l.b16 %v695
        %v2062 = vunpack.c.h.b16 %v695
        %v2063 = vunpack.c.l.b16 %v696
        %v2064 = vunpack.c.h.b16 %v696
        %v2065 = vunpack.c.l.b16 %v697
        %v2066 = vunpack.c.h.b16 %v697
        %v2067 = vunpack.c.l.b16 %v698
        %v2068 = vunpack.c.h.b16 %v698
        %v2069 = vunpack.c.l.b16 %v699
        %v2070 = vunpack.c.h.b16 %v699
        %v2071 = vunpack.c.l.b16 %v700
        %v2072 = vunpack.c.h.b16 %v700
        %v2073 = vunpack.c.l.b16 %v701
        %v2074 = vunpack.c.h.b16 %v701
        %v2075 = vunpack.c.l.b16 %v702
        %v2076 = vunpack.c.h.b16 %v702
        %v2077 = vunpack.c.l.b16 %v703
        %v2078 = vunpack.c.h.b16 %v703
        %v2079 = vunpack.c.l.b16 %v704
        %v2080 = vunpack.c.h.b16 %v704
        %v2081 = vunpack.c.l.b16 %v705
        %v2082 = vunpack.c.h.b16 %v705
        %v2083 = vunpack.c.l.b16 %v706
        %v2084 = vunpack.c.h.b16 %v706
        %v2085 = vunpack.c.l.b16 %v707
        %v2086 = vunpack.c.h.b16 %v707
        %v2087 = vunpack.c.l.b16 %v708
        %v2088 = vunpack.c.h.b16 %v708
        %v2089 = vunpack.c.l.b16 %v709
        %v2090 = vunpack.c.h.b16 %v709
        %v2091 = vunpack.c.l.b16 %v710
        %v2092 = vunpack.c.h.b16 %v710
        %v2093 = vunpack.c.l.b16 %v711
        %v2094 = vunpack.c.h.b16 %v711
        %v2095 = vunpack.c.l.b16 %v712
        %v2096 = vunpack.c.h.b16 %v712
        %v2097 = vunpack.c.l.b16 %v713
        %v2098 = vunpack.c.h.b16 %v713
        %v2099 = vunpack.c.l.b16 %v714
        %v2100 = vunpack.c.h.b16 %v714
        %v2101 = vunpack.c.l.b16 %v715
        %v2102 = vunpack.c.h.b16 %v715
        %v2103 = vunpack.c.l.b16 %v716
        %v2104 = vunpack.c.h.b16 %v716
        %v2105 = vunpack.c.l.b16 %v717
        %v2106 = vunpack.c.h.b16 %v717
        %v2107 = vunpack.c.l.b16 %v718
        %v2108 = vunpack.c.h.b16 %v718
        %v2109 = vunpack.c.l.b16 %v719
        %v2110 = vunpack.c.h.b16 %v719
        %v2111 = vunpack.c.l.b16 %v720
        %v2112 = vunpack.c.h.b16 %v720
        %v2113 = vunpack.c.l.b16 %v721
        %v2114 = vunpack.c.h.b16 %v721
        %v2115 = vunpack.c.l.b16 %v722
        %v2116 = vunpack.c.h.b16 %v722
        %v2117 = vunpack.c.l.b16 %v723
        %v2118 = vunpack.c.h.b16 %v723
        %v2119 = vunpack.c.l.b16 %v724
        %v2120 = vunpack.c.h.b16 %v724
        %v2121 = vunpack.c.l.b16 %v725
        %v2122 = vunpack.c.h.b16 %v725
        %v2123 = vunpack.c.l.b16 %v726
        %v2124 = vunpack.c.h.b16 %v726
        %v2125 = vunpack.c.l.b16 %v727
        %v2126 = vunpack.c.h.b16 %v727
        %v2127 = vunpack.c.l.b16 %v728
        %v2128 = vunpack.c.h.b16 %v728
        %v2129 = vunpack.c.l.b16 %v729
        %v2130 = vunpack.c.h.b16 %v729
        %v2131 = vunpack.c.l.b16 %v730
        %v2132 = vunpack.c.h.b16 %v730
        %v2133 = vunpack.c.l.b16 %v731
        %v2134 = vunpack.c.h.b16 %v731
        %v2135 = vunpack.c.l.b16 %v732
        %v2136 = vunpack.c.h.b16 %v732
        %v2137 = vunpack.c.l.b16 %v733
        %v2138 = vunpack.c.h.b16 %v733
        %v2139 = vunpack.c.l.b16 %v734
        %v2140 = vunpack.c.h.b16 %v734
        %v2141 = vunpack.c.l.b16 %v735
        %v2142 = vunpack.c.h.b16 %v735
        %v2143 = vunpack.c.l.b16 %v736
        %v2144 = vunpack.c.h.b16 %v736
        %v2145 = vunpack.c.l.b16 %v737
        %v2146 = vunpack.c.h.b16 %v737
        %v2147 = vunpack.c.l.b16 %v738
        %v2148 = vunpack.c.h.b16 %v738
        %v2149 = vunpack.c.l.b16 %v739
        %v2150 = vunpack.c.h.b16 %v739
        %v2151 = vunpack.c.l.b16 %v740
        %v2152 = vunpack.c.h.b16 %v740
        %v2153 = vunpack.c.l.b16 %v741
        %v2154 = vunpack.c.h.b16 %v741
        %v2155 = vunpack.c.l.b16 %v742
        %v2156 = vunpack.c.h.b16 %v742
        %v2157 = vunpack.c.l.b16 %v743
        %v2158 = vunpack.c.h.b16 %v743
        %v2159 = vunpack.c.l.b16 %v744
        %v2160 = vunpack.c.h.b16 %v744
        %v2161 = vunpack.c.l.b16 %v745
        %v2162 = vunpack.c.h.b16 %v745
        %v2163 = vunpack.c.l.b16 %v746
        %v2164 = vunpack.c.h.b16 %v746
        %v2165 = vunpack.c.l.b16 %v747
        %v2166 = vunpack.c.h.b16 %v747
        %v2167 = vunpack.c.l.b16 %v748
        %v2168 = vunpack.c.h.b16 %v748
        %v2169 = vunpack.c.l.b16 %v749
        %v2170 = vunpack.c.h.b16 %v749
        %v2171 = vunpack.c.l.b16 %v750
        %v2172 = vunpack.c.h.b16 %v750
        %v2173 = vunpack.c.l.b16 %v751
        %v2174 = vunpack.c.h.b16 %v751
        %v2175 = vunpack.c.l.b16 %v752
        %v2176 = vunpack.c.h.b16 %v752
        %v2177 = vunpack.c.l.b16 %v753
        %v2178 = vunpack.c.h.b16 %v753
        %v2179 = vunpack.c.l.b16 %v754
        %v2180 = vunpack.c.h.b16 %v754
        %v2181 = vunpack.c.l.b16 %v755
        %v2182 = vunpack.c.h.b16 %v755
        %v2183 = vunpack.c.l.b16 %v756
        %v2184 = vunpack.c.h.b16 %v756
        %v2185 = vunpack.c.l.b16 %v757
        %v2186 = vunpack.c.h.b16 %v757
        %v2187 = vunpack.c.l.b16 %v758
        %v2188 = vunpack.c.h.b16 %v758
        %v2189 = vunpack.c.l.b16 %v759
        %v2190 = vunpack.c.h.b16 %v759
        %v2191 = vunpack.c.l.b16 %v760
        %v2192 = vunpack.c.h.b16 %v760
        %v2193 = vunpack.c.l.b16 %v761
        %v2194 = vunpack.c.h.b16 %v761
        %v2195 = vunpack.c.l.b16 %v762
        %v2196 = vunpack.c.h.b16 %v762
        %v2197 = vunpack.c.l.b16 %v763
        %v2198 = vunpack.c.h.b16 %v763
        %v2199 = vunpack.c.l.b16 %v764
        %v2200 = vunpack.c.h.b16 %v764
        %v2201 = vunpack.c.l.b16 %v765
        %v2202 = vunpack.c.h.b16 %v765
        %v2203 = vunpack.c.l.b16 %v766
        %v2204 = vunpack.c.h.b16 %v766
        %v2205 = vunpack.c.l.b16 %v767
        %v2206 = vunpack.c.h.b16 %v767
        %v2207 = vunpack.c.l.b16 %v768
        %v2208 = vunpack.c.h.b16 %v768
        %v2209 = vunpack.c.l.b16 %v769
        %v2210 = vunpack.c.h.b16 %v769
        %v2211 = vunpack.c.l.b16 %v770
        %v2212 = vunpack.c.h.b16 %v770
        %v2213 = vunpack.c.l.b16 %v771
        %v2214 = vunpack.c.h.b16 %v771
        %v2215 = vunpack.c.l.b16 %v772
        %v2216 = vunpack.c.h.b16 %v772
        %v2217 = vunpack.c.l.b16 %v773
        %v2218 = vunpack.c.h.b16 %v773
        %v2219 = vunpack.c.l.b16 %v774
        %v2220 = vunpack.c.h.b16 %v774
        %v2221 = vunpack.c.l.b16 %v775
        %v2222 = vunpack.c.h.b16 %v775
        %v2223 = vunpack.c.l.b16 %v776
        %v2224 = vunpack.c.h.b16 %v776
        %v2225 = vunpack.c.l.b16 %v777
        %v2226 = vunpack.c.h.b16 %v777
        %v2227 = vunpack.c.l.b16 %v778
        %v2228 = vunpack.c.h.b16 %v778
        %v2229 = vunpack.c.l.b16 %v779
        %v2230 = vunpack.c.h.b16 %v779
        %v2231 = vunpack.c.l.b16 %v780
        %v2232 = vunpack.c.h.b16 %v780
        %v2233 = vunpack.c.l.b16 %v781
        %v2234 = vunpack.c.h.b16 %v781
        %v2235 = vunpack.c.l.b16 %v782
        %v2236 = vunpack.c.h.b16 %v782
        %v2237 = vunpack.c.l.b16 %v783
        %v2238 = vunpack.c.h.b16 %v783
        %v2239 = vunpack.c.l.b16 %v784
        %v2240 = vunpack.c.h.b16 %v784
        %v2241 = vunpack.c.l.b16 %v785
        %v2242 = vunpack.c.h.b16 %v785
        %v2243 = vunpack.c.l.b16 %v786
        %v2244 = vunpack.c.h.b16 %v786
        %v2245 = vunpack.c.l.b16 %v787
        %v2246 = vunpack.c.h.b16 %v787
        %v2247 = vunpack.c.l.b16 %v788
        %v2248 = vunpack.c.h.b16 %v788
        %v2249 = vunpack.c.l.b16 %v789
        %v2250 = vunpack.c.h.b16 %v789
        %v2251 = vunpack.c.l.b16 %v790
        %v2252 = vunpack.c.h.b16 %v790
        %v2253 = vunpack.c.l.b16 %v791
        %v2254 = vunpack.c.h.b16 %v791
        %v2255 = vunpack.c.l.b16 %v792
        %v2256 = vunpack.c.h.b16 %v792
        %v2257 = vunpack.c.l.b16 %v793
        %v2258 = vunpack.c.h.b16 %v793
        %v2259 = vunpack.c.l.b16 %v794
        %v2260 = vunpack.c.h.b16 %v794
        %v2261 = vunpack.c.l.b16 %v795
        %v2262 = vunpack.c.h.b16 %v795
        %v2263 = vunpack.c.l.b16 %v796
        %v2264 = vunpack.c.h.b16 %v796
        %v2265 = vunpack.c.l.b16 %v797
        %v2266 = vunpack.c.h.b16 %v797
        %v2267 = vunpack.c.l.b16 %v798
        %v2268 = vunpack.c.h.b16 %v798
        %v2269 = vunpack.c.l.b16 %v799
        %v2270 = vunpack.c.h.b16 %v799
        %v2271 = vunpack.c.l.b16 %v800
        %v2272 = vunpack.c.h.b16 %v800
        %v2273 = vunpack.c.l.b16 %v801
        %v2274 = vunpack.c.h.b16 %v801
        %v2275 = vunpack.c.l.b16 %v802
        %v2276 = vunpack.c.h.b16 %v802
        %v2277 = vunpack.c.l.b16 %v803
        %v2278 = vunpack.c.h.b16 %v803
        %v2279 = vunpack.c.l.b16 %v804
        %v2280 = vunpack.c.h.b16 %v804
        %v2281 = vunpack.c.l.b16 %v805
        %v2282 = vunpack.c.h.b16 %v805
        %v2283 = vunpack.c.l.b16 %v806
        %v2284 = vunpack.c.h.b16 %v806
        %v2285 = vunpack.c.l.b16 %v807
        %v2286 = vunpack.c.h.b16 %v807
        %v2287 = vunpack.c.l.b16 %v808
        %v2288 = vunpack.c.h.b16 %v808
        %v2289 = vunpack.c.l.b16 %v809
        %v2290 = vunpack.c.h.b16 %v809
        %v2291 = vunpack.c.l.b16 %v810
        %v2292 = vunpack.c.h.b16 %v810
        %v2293 = vunpack.c.l.b16 %v811
        %v2294 = vunpack.c.h.b16 %v811
        %v2295 = vunpack.c.l.b16 %v812
        %v2296 = vunpack.c.h.b16 %v812
        %v2297 = vunpack.c.l.b16 %v813
        %v2298 = vunpack.c.h.b16 %v813
        %v2299 = vunpack.c.l.b16 %v814
        %v2300 = vunpack.c.h.b16 %v814
        %v2301 = vunpack.c.l.b16 %v815
        %v2302 = vunpack.c.h.b16 %v815
        %v2303 = vunpack.c.l.b16 %v816
        %v2304 = vunpack.c.h.b16 %v816
        %v2305 = vunpack.c.l.b16 %v817
        %v2306 = vunpack.c.h.b16 %v817
        %v2307 = vunpack.c.l.b16 %v818
        %v2308 = vunpack.c.h.b16 %v818
        %v2309 = vunpack.c.l.b16 %v819
        %v2310 = vunpack.c.h.b16 %v819
        %v2311 = vunpack.c.l.b16 %v820
        %v2312 = vunpack.c.h.b16 %v820
        %v2313 = vunpack.c.l.b16 %v821
        %v2314 = vunpack.c.h.b16 %v821
        %v2315 = vunpack.c.l.b16 %v822
        %v2316 = vunpack.c.h.b16 %v822
        %v2317 = vunpack.c.l.b16 %v823
        %v2318 = vunpack.c.h.b16 %v823
        %v2319 = vunpack.c.l.b16 %v824
        %v2320 = vunpack.c.h.b16 %v824
        %v2321 = vunpack.c.l.b16 %v825
        %v2322 = vunpack.c.h.b16 %v825
        %v2323 = vunpack.c.l.b16 %v826
        %v2324 = vunpack.c.h.b16 %v826
        %v2325 = vunpack.c.l.b16 %v827
        %v2326 = vunpack.c.h.b16 %v827
        %v2327 = vunpack.c.l.b16 %v828
        %v2328 = vunpack.c.h.b16 %v828
        %v2329 = vunpack.c.l.b16 %v829
        %v2330 = vunpack.c.h.b16 %v829
        %v2331 = vunpack.c.l.b16 %v830
        %v2332 = vunpack.c.h.b16 %v830
        %v2333 = vunpack.c.l.b16 %v831
        %v2334 = vunpack.c.h.b16 %v831
        %v2335 = vunpack.c.l.b16 %v832
        %v2336 = vunpack.c.h.b16 %v832
        %v2337 = vunpack.c.l.b16 %v833
        %v2338 = vunpack.c.h.b16 %v833
        %v2339 = vunpack.c.l.b16 %v834
        %v2340 = vunpack.c.h.b16 %v834
        %v2341 = vunpack.c.l.b16 %v835
        %v2342 = vunpack.c.h.b16 %v835
        %v2343 = vunpack.c.l.b16 %v836
        %v2344 = vunpack.c.h.b16 %v836
        %v2345 = vunpack.c.l.b16 %v837
        %v2346 = vunpack.c.h.b16 %v837
        %v2347 = vunpack.c.l.b16 %v838
        %v2348 = vunpack.c.h.b16 %v838
        %v2349 = vunpack.c.l.b16 %v839
        %v2350 = vunpack.c.h.b16 %v839
        %v2351 = vunpack.c.l.b16 %v840
        %v2352 = vunpack.c.h.b16 %v840
        %v2353 = vunpack.c.l.b16 %v841
        %v2354 = vunpack.c.h.b16 %v841
        %v2355 = vunpack.c.l.b16 %v842
        %v2356 = vunpack.c.h.b16 %v842
        %v2357 = vunpack.c.l.b16 %v843
        %v2358 = vunpack.c.h.b16 %v843
        %v2359 = vunpack.c.l.b16 %v844
        %v2360 = vunpack.c.h.b16 %v844
        %v2361 = vunpack.c.l.b16 %v845
        %v2362 = vunpack.c.h.b16 %v845
        %v2363 = vunpack.c.l.b16 %v846
        %v2364 = vunpack.c.h.b16 %v846
        %v2365 = vunpack.c.l.b16 %v847
        %v2366 = vunpack.c.h.b16 %v847
        %v2367 = vunpack.c.l.b16 %v848
        %v2368 = vunpack.c.h.b16 %v848
        %v2369 = vunpack.c.l.b16 %v849
        %v2370 = vunpack.c.h.b16 %v849
        %v2371 = vunpack.c.l.b16 %v850
        %v2372 = vunpack.c.h.b16 %v850
        %v2373 = vunpack.c.l.b16 %v851
        %v2374 = vunpack.c.h.b16 %v851
        %v2375 = vunpack.c.l.b16 %v852
        %v2376 = vunpack.c.h.b16 %v852
        %v2377 = vunpack.c.l.b16 %v853
        %v2378 = vunpack.c.h.b16 %v853
        %v2379 = vunpack.c.l.b16 %v854
        %v2380 = vunpack.c.h.b16 %v854
        %v2381 = vunpack.c.l.b16 %v855
        %v2382 = vunpack.c.h.b16 %v855
        %v2383 = vunpack.c.l.b16 %v856
        %v2384 = vunpack.c.h.b16 %v856
        %v2385 = vunpack.c.l.b16 %v857
        %v2386 = vunpack.c.h.b16 %v857
        %v2387 = vunpack.c.l.b16 %v858
        %v2388 = vunpack.c.h.b16 %v858
        %v2389 = vunpack.c.l.b16 %v859
        %v2390 = vunpack.c.h.b16 %v859
        %v2391 = vunpack.c.l.b16 %v860
        %v2392 = vunpack.c.h.b16 %v860
        %v2393 = vunpack.c.l.b16 %v861
        %v2394 = vunpack.c.h.b16 %v861
        %v2395 = vunpack.c.l.b16 %v862
        %v2396 = vunpack.c.h.b16 %v862
        %v2397 = vunpack.c.l.b16 %v863
        %v2398 = vunpack.c.h.b16 %v863
        %v2399 = vunpack.c.l.b16 %v864
        %v2400 = vunpack.c.h.b16 %v864
        %v2401 = vunpack.c.l.b16 %v865
        %v2402 = vunpack.c.h.b16 %v865
        %v2403 = vunpack.c.l.b16 %v866
        %v2404 = vunpack.c.h.b16 %v866
        %v2405 = vunpack.c.l.b16 %v867
        %v2406 = vunpack.c.h.b16 %v867
        %v2407 = vunpack.c.l.b16 %v868
        %v2408 = vunpack.c.h.b16 %v868
        %v2409 = vunpack.c.l.b16 %v869
        %v2410 = vunpack.c.h.b16 %v869
        %v2411 = vunpack.c.l.b16 %v870
        %v2412 = vunpack.c.h.b16 %v870
        %v2413 = vunpack.c.l.b16 %v871
        %v2414 = vunpack.c.h.b16 %v871
        %v2415 = vunpack.c.l.b16 %v872
        %v2416 = vunpack.c.h.b16 %v872
        %v2417 = vunpack.c.l.b16 %v873
        %v2418 = vunpack.c.h.b16 %v873
        %v2419 = vunpack.c.l.b16 %v874
        %v2420 = vunpack.c.h.b16 %v874
        %v2421 = vunpack.c.l.b16 %v875
        %v2422 = vunpack.c.h.b16 %v875
        %v2423 = vunpack.c.l.b16 %v876
        %v2424 = vunpack.c.h.b16 %v876
        %v2425 = vunpack.c.l.b16 %v877
        %v2426 = vunpack.c.h.b16 %v877
        %v2427 = vunpack.c.l.b16 %v878
        %v2428 = vunpack.c.h.b16 %v878
        %v2429 = vunpack.c.l.b16 %v879
        %v2430 = vunpack.c.h.b16 %v879
        %v2431 = vunpack.c.l.b16 %v880
        %v2432 = vunpack.c.h.b16 %v880
        %v2433 = vunpack.c.l.b16 %v881
        %v2434 = vunpack.c.h.b16 %v881
        %v2435 = vunpack.c.l.b16 %v882
        %v2436 = vunpack.c.h.b16 %v882
        %v2437 = vunpack.c.l.b16 %v883
        %v2438 = vunpack.c.h.b16 %v883
        %v2439 = vunpack.c.l.b16 %v884
        %v2440 = vunpack.c.h.b16 %v884
        %v2441 = vpack.c.b16 %v1433, %v1417
        %v2442 = vpack.c.b16 %v1434, %v1418
        %v2443 = vpack.c.b16 %v1435, %v1419
        %v2444 = vpack.c.b16 %v1436, %v1420
        %v2445 = vpack.c.b16 %v1437, %v1421
        %v2446 = vpack.c.b16 %v1438, %v1422
        %v2447 = vpack.c.b16 %v1439, %v1423
        %v2448 = vpack.c.b16 %v1440, %v1424
        %v2449 = vpack.c.b16 %v1441, %v1425
        %v2450 = vpack.c.b16 %v1442, %v1426
        %v2451 = vpack.c.b16 %v1443, %v1427
        %v2452 = vpack.c.b16 %v1444, %v1428
        %v2453 = vpack.c.b16 %v1445, %v1429
        %v2454 = vpack.c.b16 %v1446, %v1430
        %v2455 = vpack.c.b16 %v1447, %v1431
        %v2456 = vpack.c.b16 %v1448, %v1432
        %v2457 = vpack.c.b16 %v1465, %v1449
        %v2458 = vpack.c.b16 %v1466, %v1450
        %v2459 = vpack.c.b16 %v1467, %v1451
        %v2460 = vpack.c.b16 %v1468, %v1452
        %v2461 = vpack.c.b16 %v1469, %v1453
        %v2462 = vpack.c.b16 %v1470, %v1454
        %v2463 = vpack.c.b16 %v1471, %v1455
        %v2464 = vpack.c.b16 %v1472, %v1456
        %v2465 = vpack.c.b16 %v1473, %v1457
        %v2466 = vpack.c.b16 %v1474, %v1458
        %v2467 = vpack.c.b16 %v1475, %v1459
        %v2468 = vpack.c.b16 %v1476, %v1460
        %v2469 = vpack.c.b16 %v1477, %v1461
        %v2470 = vpack.c.b16 %v1478, %v1462
        %v2471 = vpack.c.b16 %v1479, %v1463
        %v2472 = vpack.c.b16 %v1480, %v1464
        %v2473 = vpack.c.b16 %v1497, %v1481
        %v2474 = vpack.c.b16 %v1498, %v1482
        %v2475 = vpack.c.b16 %v1499, %v1483
        %v2476 = vpack.c.b16 %v1500, %v1484
        %v2477 = vpack.c.b16 %v1501, %v1485
        %v2478 = vpack.c.b16 %v1502, %v1486
        %v2479 = vpack.c.b16 %v1503, %v1487
        %v2480 = vpack.c.b16 %v1504, %v1488
        %v2481 = vpack.c.b16 %v1505, %v1489
        %v2482 = vpack.c.b16 %v1506, %v1490
        %v2483 = vpack.c.b16 %v1507, %v1491
        %v2484 = vpack.c.b16 %v1508, %v1492
        %v2485 = vpack.c.b16 %v1509, %v1493
        %v2486 = vpack.c.b16 %v1510, %v1494
        %v2487 = vpack.c.b16 %v1511, %v1495
        %v2488 = vpack.c.b16 %v1512, %v1496
        %v2489 = vpack.c.b16 %v1529, %v1513
        %v2490 = vpack.c.b16 %v1530, %v1514
        %v2491 = vpack.c.b16 %v1531, %v1515
        %v2492 = vpack.c.b16 %v1532, %v1516
        %v2493 = vpack.c.b16 %v1533, %v1517
        %v2494 = vpack.c.b16 %v1534, %v1518
        %v2495 = vpack.c.b16 %v1535, %v1519
        %v2496 = vpack.c.b16 %v1536, %v1520
        %v2497 = vpack.c.b16 %v1537, %v1521
        %v2498 = vpack.c.b16 %v1538, %v1522
        %v2499 = vpack.c.b16 %v1539, %v1523
        %v2500 = vpack.c.b16 %v1540, %v1524
        %v2501 = vpack.c.b16 %v1541, %v1525
        %v2502 = vpack.c.b16 %v1542, %v1526
        %v2503 = vpack.c.b16 %v1543, %v1527
        %v2504 = vpack.c.b16 %v1544, %v1528
        %v2505 = vpack.c.b16 %v1561, %v1545
        %v2506 = vpack.c.b16 %v1562, %v1546
        %v2507 = vpack.c.b16 %v1563, %v1547
        %v2508 = vpack.c.b16 %v1564, %v1548
        %v2509 = vpack.c.b16 %v1565, %v1549
        %v2510 = vpack.c.b16 %v1566, %v1550
        %v2511 = vpack.c.b16 %v1567, %v1551
        %v2512 = vpack.c.b16 %v1568, %v1552
        %v2513 = vpack.c.b16 %v1569, %v1553
        %v2514 = vpack.c.b16 %v1570, %v1554
        %v2515 = vpack.c.b16 %v1571, %v1555
        %v2516 = vpack.c.b16 %v1572, %v1556
        %v2517 = vpack.c.b16 %v1573, %v1557
        %v2518 = vpack.c.b16 %v1574, %v1558
        %v2519 = vpack.c.b16 %v1575, %v1559
        %v2520 = vpack.c.b16 %v1576, %v1560
        %v2521 = vpack.c.b16 %v1593, %v1577
        %v2522 = vpack.c.b16 %v1594, %v1578
        %v2523 = vpack.c.b16 %v1595, %v1579
        %v2524 = vpack.c.b16 %v1596, %v1580
        %v2525 = vpack.c.b16 %v1597, %v1581
        %v2526 = vpack.c.b16 %v1598, %v1582
        %v2527 = vpack.c.b16 %v1599, %v1583
        %v2528 = vpack.c.b16 %v1600, %v1584
        %v2529 = vpack.c.b16 %v1601, %v1585
        %v2530 = vpack.c.b16 %v1602, %v1586
        %v2531 = vpack.c.b16 %v1603, %v1587
        %v2532 = vpack.c.b16 %v1604, %v1588
        %v2533 = vpack.c.b16 %v1605, %v1589
        %v2534 = vpack.c.b16 %v1606, %v1590
        %v2535 = vpack.c.b16 %v1607, %v1591
        %v2536 = vpack.c.b16 %v1608, %v1592
        %v2537 = vpack.c.b16 %v1625, %v1609
        %v2538 = vpack.c.b16 %v1626, %v1610
        %v2539 = vpack.c.b16 %v1627, %v1611
        %v2540 = vpack.c.b16 %v1628, %v1612
        %v2541 = vpack.c.b16 %v1629, %v1613
        %v2542 = vpack.c.b16 %v1630, %v1614
        %v2543 = vpack.c.b16 %v1631, %v1615
        %v2544 = vpack.c.b16 %v1632, %v1616
        %v2545 = vpack.c.b16 %v1633, %v1617
        %v2546 = vpack.c.b16 %v1634, %v1618
        %v2547 = vpack.c.b16 %v1635, %v1619
        %v2548 = vpack.c.b16 %v1636, %v1620
        %v2549 = vpack.c.b16 %v1637, %v1621
        %v2550 = vpack.c.b16 %v1638, %v1622
        %v2551 = vpack.c.b16 %v1639, %v1623
        %v2552 = vpack.c.b16 %v1640, %v1624
        %v2553 = vpack.c.b16 %v1657, %v1641
        %v2554 = vpack.c.b16 %v1658, %v1642
        %v2555 = vpack.c.b16 %v1659, %v1643
        %v2556 = vpack.c.b16 %v1660, %v1644
        %v2557 = vpack.c.b16 %v1661, %v1645
        %v2558 = vpack.c.b16 %v1662, %v1646
        %v2559 = vpack.c.b16 %v1663, %v1647
        %v2560 = vpack.c.b16 %v1664, %v1648
        %v2561 = vpack.c.b16 %v1665, %v1649
        %v2562 = vpack.c.b16 %v1666, %v1650
        %v2563 = vpack.c.b16 %v1667, %v1651
        %v2564 = vpack.c.b16 %v1668, %v1652
        %v2565 = vpack.c.b16 %v1669, %v1653
        %v2566 = vpack.c.b16 %v1670, %v1654
        %v2567 = vpack.c.b16 %v1671, %v1655
        %v2568 = vpack.c.b16 %v1672, %v1656
        %v2569 = vpack.c.b16 %v1689, %v1673
        %v2570 = vpack.c.b16 %v1690, %v1674
        %v2571 = vpack.c.b16 %v1691, %v1675
        %v2572 = vpack.c.b16 %v1692, %v1676
        %v2573 = vpack.c.b16 %v1693, %v1677
        %v2574 = vpack.c.b16 %v1694, %v1678
        %v2575 = vpack.c.b16 %v1695, %v1679
        %v2576 = vpack.c.b16 %v1696, %v1680
        %v2577 = vpack.c.b16 %v1697, %v1681
        %v2578 = vpack.c.b16 %v1698, %v1682
        %v2579 = vpack.c.b16 %v1699, %v1683
        %v2580 = vpack.c.b16 %v1700, %v1684
        %v2581 = vpack.c.b16 %v1701, %v1685
        %v2582 = vpack.c.b16 %v1702, %v1686
        %v2583 = vpack.c.b16 %v1703, %v1687
        %v2584 = vpack.c.b16 %v1704, %v1688
        %v2585 = vpack.c.b16 %v1721, %v1705
        %v2586 = vpack.c.b16 %v1722, %v1706
        %v2587 = vpack.c.b16 %v1723, %v1707
        %v2588 = vpack.c.b16 %v1724, %v1708
        %v2589 = vpack.c.b16 %v1725, %v1709
        %v2590 = vpack.c.b16 %v1726, %v1710
        %v2591 = vpack.c.b16 %v1727, %v1711
        %v2592 = vpack.c.b16 %v1728, %v1712
        %v2593 = vpack.c.b16 %v1729, %v1713
        %v2594 = vpack.c.b16 %v1730, %v1714
        %v2595 = vpack.c.b16 %v1731, %v1715
        %v2596 = vpack.c.b16 %v1732, %v1716
        %v2597 = vpack.c.b16 %v1733, %v1717
        %v2598 = vpack.c.b16 %v1734, %v1718
        %v2599 = vpack.c.b16 %v1735, %v1719
        %v2600 = vpack.c.b16 %v1736, %v1720
        %v2601 = vpack.c.b16 %v1753, %v1737
        %v2602 = vpack.c.b16 %v1754, %v1738
        %v2603 = vpack.c.b16 %v1755, %v1739
        %v2604 = vpack.c.b16 %v1756, %v1740
        %v2605 = vpack.c.b16 %v1757, %v1741
        %v2606 = vpack.c.b16 %v1758, %v1742
        %v2607 = vpack.c.b16 %v1759, %v1743
        %v2608 = vpack.c.b16 %v1760, %v1744
        %v2609 = vpack.c.b16 %v1761, %v1745
        %v2610 = vpack.c.b16 %v1762, %v1746
        %v2611 = vpack.c.b16 %v1763, %v1747
        %v2612 = vpack.c.b16 %v1764, %v1748
        %v2613 = vpack.c.b16 %v1765, %v1749
        %v2614 = vpack.c.b16 %v1766, %v1750
        %v2615 = vpack.c.b16 %v1767, %v1751
        %v2616 = vpack.c.b16 %v1768, %v1752
        %v2617 = vpack.c.b16 %v1785, %v1769
        %v2618 = vpack.c.b16 %v1786, %v1770
        %v2619 = vpack.c.b16 %v1787, %v1771
        %v2620 = vpack.c.b16 %v1788, %v1772
        %v2621 = vpack.c.b16 %v1789, %v1773
        %v2622 = vpack.c.b16 %v1790, %v1774
        %v2623 = vpack.c.b16 %v1791, %v1775
        %v2624 = vpack.c.b16 %v1792, %v1776
        %v2625 = vpack.c.b16 %v1793, %v1777
        %v2626 = vpack.c.b16 %v1794, %v1778
        %v2627 = vpack.c.b16 %v1795, %v1779
        %v2628 = vpack.c.b16 %v1796, %v1780
        %v2629 = vpack.c.b16 %v1797, %v1781
        %v2630 = vpack.c.b16 %v1798, %v1782
        %v2631 = vpack.c.b16 %v1799, %v1783
        %v2632 = vpack.c.b16 %v1800, %v1784
        %v2633 = vpack.c.b16 %v1817, %v1801
        %v2634 = vpack.c.b16 %v1818, %v1802
        %v2635 = vpack.c.b16 %v1819, %v1803
        %v2636 = vpack.c.b16 %v1820, %v1804
        %v2637 = vpack.c.b16 %v1821, %v1805
        %v2638 = vpack.c.b16 %v1822, %v1806
        %v2639 = vpack.c.b16 %v1823, %v1807
        %v2640 = vpack.c.b16 %v1824, %v1808
        %v2641 = vpack.c.b16 %v1825, %v1809
        %v2642 = vpack.c.b16 %v1826, %v1810
        %v2643 = vpack.c.b16 %v1827, %v1811
        %v2644 = vpack.c.b16 %v1828, %v1812
        %v2645 = vpack.c.b16 %v1829, %v1813
        %v2646 = vpack.c.b16 %v1830, %v1814
        %v2647 = vpack.c.b16 %v1831, %v1815
        %v2648 = vpack.c.b16 %v1832, %v1816
        %v2649 = vpack.c.b16 %v1849, %v1833
        %v2650 = vpack.c.b16 %v1850, %v1834
        %v2651 = vpack.c.b16 %v1851, %v1835
        %v2652 = vpack.c.b16 %v1852, %v1836
        %v2653 = vpack.c.b16 %v1853, %v1837
        %v2654 = vpack.c.b16 %v1854, %v1838
        %v2655 = vpack.c.b16 %v1855, %v1839
        %v2656 = vpack.c.b16 %v1856, %v1840
        %v2657 = vpack.c.b16 %v1857, %v1841
        %v2658 = vpack.c.b16 %v1858, %v1842
        %v2659 = vpack.c.b16 %v1859, %v1843
        %v2660 = vpack.c.b16 %v1860, %v1844
        %v2661 = vpack.c.b16 %v1861, %v1845
        %v2662 = vpack.c.b16 %v1862, %v1846
        %v2663 = vpack.c.b16 %v1863, %v1847
        %v2664 = vpack.c.b16 %v1864, %v1848
        %v2665 = vpack.c.b16 %v1881, %v1865
        %v2666 = vpack.c.b16 %v1882, %v1866
        %v2667 = vpack.c.b16 %v1883, %v1867
        %v2668 = vpack.c.b16 %v1884, %v1868
        %v2669 = vpack.c.b16 %v1885, %v1869
        %v2670 = vpack.c.b16 %v1886, %v1870
        %v2671 = vpack.c.b16 %v1887, %v1871
        %v2672 = vpack.c.b16 %v1888, %v1872
        %v2673 = vpack.c.b16 %v1889, %v1873
        %v2674 = vpack.c.b16 %v1890, %v1874
        %v2675 = vpack.c.b16 %v1891, %v1875
        %v2676 = vpack.c.b16 %v1892, %v1876
        %v2677 = vpack.c.b16 %v1893, %v1877
        %v2678 = vpack.c.b16 %v1894, %v1878
        %v2679 = vpack.c.b16 %v1895, %v1879
        %v2680 = vpack.c.b16 %v1896, %v1880
        %v2681 = vpack.c.b16 %v1913, %v1897
        %v2682 = vpack.c.b16 %v1914, %v1898
        %v2683 = vpack.c.b16 %v1915, %v1899
        %v2684 = vpack.c.b16 %v1916, %v1900
        %v2685 = vpack.c.b16 %v1917, %v1901
        %v2686 = vpack.c.b16 %v1918, %v1902
        %v2687 = vpack.c.b16 %v1919, %v1903
        %v2688 = vpack.c.b16 %v1920, %v1904
        %v2689 = vpack.c.b16 %v1921, %v1905
        %v2690 = vpack.c.b16 %v1922, %v1906
        %v2691 = vpack.c.b16 %v1923, %v1907
        %v2692 = vpack.c.b16 %v1924, %v1908
        %v2693 = vpack.c.b16 %v1925, %v1909
        %v2694 = vpack.c.b16 %v1926, %v1910
        %v2695 = vpack.c.b16 %v1927, %v1911
        %v2696 = vpack.c.b16 %v1928, %v1912
        %v2697 = vpack.c.b16 %v1945, %v1929
        %v2698 = vpack.c.b16 %v1946, %v1930
        %v2699 = vpack.c.b16 %v1947, %v1931
        %v2700 = vpack.c.b16 %v1948, %v1932
        %v2701 = vpack.c.b16 %v1949, %v1933
        %v2702 = vpack.c.b16 %v1950, %v1934
        %v2703 = vpack.c.b16 %v1951, %v1935
        %v2704 = vpack.c.b16 %v1952, %v1936
        %v2705 = vpack.c.b16 %v1953, %v1937
        %v2706 = vpack.c.b16 %v1954, %v1938
        %v2707 = vpack.c.b16 %v1955, %v1939
        %v2708 = vpack.c.b16 %v1956, %v1940
        %v2709 = vpack.c.b16 %v1957, %v1941
        %v2710 = vpack.c.b16 %v1958, %v1942
        %v2711 = vpack.c.b16 %v1959, %v1943
        %v2712 = vpack.c.b16 %v1960, %v1944
        %v2713 = vpack.c.b16 %v1977, %v1961
        %v2714 = vpack.c.b16 %v1978, %v1962
        %v2715 = vpack.c.b16 %v1979, %v1963
        %v2716 = vpack.c.b16 %v1980, %v1964
        %v2717 = vpack.c.b16 %v1981, %v1965
        %v2718 = vpack.c.b16 %v1982, %v1966
        %v2719 = vpack.c.b16 %v1983, %v1967
        %v2720 = vpack.c.b16 %v1984, %v1968
        %v2721 = vpack.c.b16 %v1985, %v1969
        %v2722 = vpack.c.b16 %v1986, %v1970
        %v2723 = vpack.c.b16 %v1987, %v1971
        %v2724 = vpack.c.b16 %v1988, %v1972
        %v2725 = vpack.c.b16 %v1989, %v1973
        %v2726 = vpack.c.b16 %v1990, %v1974
        %v2727 = vpack.c.b16 %v1991, %v1975
        %v2728 = vpack.c.b16 %v1992, %v1976
        %v2729 = vpack.c.b16 %v2009, %v1993
        %v2730 = vpack.c.b16 %v2010, %v1994
        %v2731 = vpack.c.b16 %v2011, %v1995
        %v2732 = vpack.c.b16 %v2012, %v1996
        %v2733 = vpack.c.b16 %v2013, %v1997
        %v2734 = vpack.c.b16 %v2014, %v1998
        %v2735 = vpack.c.b16 %v2015, %v1999
        %v2736 = vpack.c.b16 %v2016, %v2000
        %v2737 = vpack.c.b16 %v2017, %v2001
        %v2738 = vpack.c.b16 %v2018, %v2002
        %v2739 = vpack.c.b16 %v2019, %v2003
        %v2740 = vpack.c.b16 %v2020, %v2004
        %v2741 = vpack.c.b16 %v2021, %v2005
        %v2742 = vpack.c.b16 %v2022, %v2006
        %v2743 = vpack.c.b16 %v2023, %v2007
        %v2744 = vpack.c.b16 %v2024, %v2008
        %v2745 = vpack.c.b16 %v2041, %v2025
        %v2746 = vpack.c.b16 %v2042, %v2026
        %v2747 = vpack.c.b16 %v2043, %v2027
        %v2748 = vpack.c.b16 %v2044, %v2028
        %v2749 = vpack.c.b16 %v2045, %v2029
        %v2750 = vpack.c.b16 %v2046, %v2030
        %v2751 = vpack.c.b16 %v2047, %v2031
        %v2752 = vpack.c.b16 %v2048, %v2032
        %v2753 = vpack.c.b16 %v2049, %v2033
        %v2754 = vpack.c.b16 %v2050, %v2034
        %v2755 = vpack.c.b16 %v2051, %v2035
        %v2756 = vpack.c.b16 %v2052, %v2036
        %v2757 = vpack.c.b16 %v2053, %v2037
        %v2758 = vpack.c.b16 %v2054, %v2038
        %v2759 = vpack.c.b16 %v2055, %v2039
        %v2760 = vpack.c.b16 %v2056, %v2040
        %v2761 = vpack.c.b16 %v2073, %v2057
        %v2762 = vpack.c.b16 %v2074, %v2058
        %v2763 = vpack.c.b16 %v2075, %v2059
        %v2764 = vpack.c.b16 %v2076, %v2060
        %v2765 = vpack.c.b16 %v2077, %v2061
        %v2766 = vpack.c.b16 %v2078, %v2062
        %v2767 = vpack.c.b16 %v2079, %v2063
        %v2768 = vpack.c.b16 %v2080, %v2064
        %v2769 = vpack.c.b16 %v2081, %v2065
        %v2770 = vpack.c.b16 %v2082, %v2066
        %v2771 = vpack.c.b16 %v2083, %v2067
        %v2772 = vpack.c.b16 %v2084, %v2068
        %v2773 = vpack.c.b16 %v2085, %v2069
        %v2774 = vpack.c.b16 %v2086, %v2070
        %v2775 = vpack.c.b16 %v2087, %v2071
        %v2776 = vpack.c.b16 %v2088, %v2072
        %v2777 = vpack.c.b16 %v2105, %v2089
        %v2778 = vpack.c.b16 %v2106, %v2090
        %v2779 = vpack.c.b16 %v2107, %v2091
        %v2780 = vpack.c.b16 %v2108, %v2092
        %v2781 = vpack.c.b16 %v2109, %v2093
        %v2782 = vpack.c.b16 %v2110, %v2094
        %v2783 = vpack.c.b16 %v2111, %v2095
        %v2784 = vpack.c.b16 %v2112, %v2096
        %v2785 = vpack.c.b16 %v2113, %v2097
        %v2786 = vpack.c.b16 %v2114, %v2098
        %v2787 = vpack.c.b16 %v2115, %v2099
        %v2788 = vpack.c.b16 %v2116, %v2100
        %v2789 = vpack.c.b16 %v2117, %v2101
        %v2790 = vpack.c.b16 %v2118, %v2102
        %v2791 = vpack.c.b16 %v2119, %v2103
        %v2792 = vpack.c.b16 %v2120, %v2104
        %v2793 = vpack.c.b16 %v2137, %v2121
        %v2794 = vpack.c.b16 %v2138, %v2122
        %v2795 = vpack.c.b16 %v2139, %v2123
        %v2796 = vpack.c.b16 %v2140, %v2124
        %v2797 = vpack.c.b16 %v2141, %v2125
        %v2798 = vpack.c.b16 %v2142, %v2126
        %v2799 = vpack.c.b16 %v2143, %v2127
        %v2800 = vpack.c.b16 %v2144, %v2128
        %v2801 = vpack.c.b16 %v2145, %v2129
        %v2802 = vpack.c.b16 %v2146, %v2130
        %v2803 = vpack.c.b16 %v2147, %v2131
        %v2804 = vpack.c.b16 %v2148, %v2132
        %v2805 = vpack.c.b16 %v2149, %v2133
        %v2806 = vpack.c.b16 %v2150, %v2134
        %v2807 = vpack.c.b16 %v2151, %v2135
        %v2808 = vpack.c.b16 %v2152, %v2136
        %v2809 = vpack.c.b16 %v2169, %v2153
        %v2810 = vpack.c.b16 %v2170, %v2154
        %v2811 = vpack.c.b16 %v2171, %v2155
        %v2812 = vpack.c.b16 %v2172, %v2156
        %v2813 = vpack.c.b16 %v2173, %v2157
        %v2814 = vpack.c.b16 %v2174, %v2158
        %v2815 = vpack.c.b16 %v2175, %v2159
        %v2816 = vpack.c.b16 %v2176, %v2160
        %v2817 = vpack.c.b16 %v2177, %v2161
        %v2818 = vpack.c.b16 %v2178, %v2162
        %v2819 = vpack.c.b16 %v2179, %v2163
        %v2820 = vpack.c.b16 %v2180, %v2164
        %v2821 = vpack.c.b16 %v2181, %v2165
        %v2822 = vpack.c.b16 %v2182, %v2166
        %v2823 = vpack.c.b16 %v2183, %v2167
        %v2824 = vpack.c.b16 %v2184, %v2168
        %v2825 = vpack.c.b16 %v2201, %v2185
        %v2826 = vpack.c.b16 %v2202, %v2186
        %v2827 = vpack.c.b16 %v2203, %v2187
        %v2828 = vpack.c.b16 %v2204, %v2188
        %v2829 = vpack.c.b16 %v2205, %v2189
        %v2830 = vpack.c.b16 %v2206, %v2190
        %v2831 = vpack.c.b16 %v2207, %v2191
        %v2832 = vpack.c.b16 %v2208, %v2192
        %v2833 = vpack.c.b16 %v2209, %v2193
        %v2834 = vpack.c.b16 %v2210, %v2194
        %v2835 = vpack.c.b16 %v2211, %v2195
        %v2836 = vpack.c.b16 %v2212, %v2196
        %v2837 = vpack.c.b16 %v2213, %v2197
        %v2838 = vpack.c.b16 %v2214, %v2198
        %v2839 = vpack.c.b16 %v2215, %v2199
        %v2840 = vpack.c.b16 %v2216, %v2200
        %v2841 = vpack.c.b16 %v2233, %v2217
        %v2842 = vpack.c.b16 %v2234, %v2218
        %v2843 = vpack.c.b16 %v2235, %v2219
        %v2844 = vpack.c.b16 %v2236, %v2220
        %v2845 = vpack.c.b16 %v2237, %v2221
        %v2846 = vpack.c.b16 %v2238, %v2222
        %v2847 = vpack.c.b16 %v2239, %v2223
        %v2848 = vpack.c.b16 %v2240, %v2224
        %v2849 = vpack.c.b16 %v2241, %v2225
        %v2850 = vpack.c.b16 %v2242, %v2226
        %v2851 = vpack.c.b16 %v2243, %v2227
        %v2852 = vpack.c.b16 %v2244, %v2228
        %v2853 = vpack.c.b16 %v2245, %v2229
        %v2854 = vpack.c.b16 %v2246, %v2230
        %v2855 = vpack.c.b16 %v2247, %v2231
        %v2856 = vpack.c.b16 %v2248, %v2232
        %v2857 = vpack.c.b16 %v2265, %v2249
        %v2858 = vpack.c.b16 %v2266, %v2250
        %v2859 = vpack.c.b16 %v2267, %v2251
        %v2860 = vpack.c.b16 %v2268, %v2252
        %v2861 = vpack.c.b16 %v2269, %v2253
        %v2862 = vpack.c.b16 %v2270, %v2254
        %v2863 = vpack.c.b16 %v2271, %v2255
        %v2864 = vpack.c.b16 %v2272, %v2256
        %v2865 = vpack.c.b16 %v2273, %v2257
        %v2866 = vpack.c.b16 %v2274, %v2258
        %v2867 = vpack.c.b16 %v2275, %v2259
        %v2868 = vpack.c.b16 %v2276, %v2260
        %v2869 = vpack.c.b16 %v2277, %v2261
        %v2870 = vpack.c.b16 %v2278, %v2262
        %v2871 = vpack.c.b16 %v2279, %v2263
        %v2872 = vpack.c.b16 %v2280, %v2264
        %v2873 = vpack.c.b16 %v2297, %v2281
        %v2874 = vpack.c.b16 %v2298, %v2282
        %v2875 = vpack.c.b16 %v2299, %v2283
        %v2876 = vpack.c.b16 %v2300, %v2284
        %v2877 = vpack.c.b16 %v2301, %v2285
        %v2878 = vpack.c.b16 %v2302, %v2286
        %v2879 = vpack.c.b16 %v2303, %v2287
        %v2880 = vpack.c.b16 %v2304, %v2288
        %v2881 = vpack.c.b16 %v2305, %v2289
        %v2882 = vpack.c.b16 %v2306, %v2290
        %v2883 = vpack.c.b16 %v2307, %v2291
        %v2884 = vpack.c.b16 %v2308, %v2292
        %v2885 = vpack.c.b16 %v2309, %v2293
        %v2886 = vpack.c.b16 %v2310, %v2294
        %v2887 = vpack.c.b16 %v2311, %v2295
        %v2888 = vpack.c.b16 %v2312, %v2296
        %v2889 = vpack.c.b16 %v2329, %v2313
        %v2890 = vpack.c.b16 %v2330, %v2314
        %v2891 = vpack.c.b16 %v2331, %v2315
        %v2892 = vpack.c.b16 %v2332, %v2316
        %v2893 = vpack.c.b16 %v2333, %v2317
        %v2894 = vpack.c.b16 %v2334, %v2318
        %v2895 = vpack.c.b16 %v2335, %v2319
        %v2896 = vpack.c.b16 %v2336, %v2320
        %v2897 = vpack.c.b16 %v2337, %v2321
        %v2898 = vpack.c.b16 %v2338, %v2322
        %v2899 = vpack.c.b16 %v2339, %v2323
        %v2900 = vpack.c.b16 %v2340, %v2324
        %v2901 = vpack.c.b16 %v2341, %v2325
        %v2902 = vpack.c.b16 %v2342, %v2326
        %v2903 = vpack.c.b16 %v2343, %v2327
        %v2904 = vpack.c.b16 %v2344, %v2328
        %v2905 = vpack.c.b16 %v2361, %v2345
        %v2906 = vpack.c.b16 %v2362, %v2346
        %v2907 = vpack.c.b16 %v2363, %v2347
        %v2908 = vpack.c.b16 %v2364, %v2348
        %v2909 = vpack.c.b16 %v2365, %v2349
        %v2910 = vpack.c.b16 %v2366, %v2350
        %v2911 = vpack.c.b16 %v2367, %v2351
        %v2912 = vpack.c.b16 %v2368, %v2352
        %v2913 = vpack.c.b16 %v2369, %v2353
        %v2914 = vpack.c.b16 %v2370, %v2354
        %v2915 = vpack.c.b16 %v2371, %v2355
        %v2916 = vpack.c.b16 %v2372, %v2356
        %v2917 = vpack.c.b16 %v2373, %v2357
        %v2918 = vpack.c.b16 %v2374, %v2358
        %v2919 = vpack.c.b16 %v2375, %v2359
        %v2920 = vpack.c.b16 %v2376, %v2360
        %v2921 = vpack.c.b16 %v2393, %v2377
        %v2922 = vpack.c.b16 %v2394, %v2378
        %v2923 = vpack.c.b16 %v2395, %v2379
        %v2924 = vpack.c.b16 %v2396, %v2380
        %v2925 = vpack.c.b16 %v2397, %v2381
        %v2926 = vpack.c.b16 %v2398, %v2382
        %v2927 = vpack.c.b16 %v2399, %v2383
        %v2928 = vpack.c.b16 %v2400, %v2384
        %v2929 = vpack.c.b16 %v2401, %v2385
        %v2930 = vpack.c.b16 %v2402, %v2386
        %v2931 = vpack.c.b16 %v2403, %v2387
        %v2932 = vpack.c.b16 %v2404, %v2388
        %v2933 = vpack.c.b16 %v2405, %v2389
        %v2934 = vpack.c.b16 %v2406, %v2390
        %v2935 = vpack.c.b16 %v2407, %v2391
        %v2936 = vpack.c.b16 %v2408, %v2392
        %v2937 = vpack.c.b16 %v2425, %v2409
        %v2938 = vpack.c.b16 %v2426, %v2410
        %v2939 = vpack.c.b16 %v2427, %v2411
        %v2940 = vpack.c.b16 %v2428, %v2412
        %v2941 = vpack.c.b16 %v2429, %v2413
        %v2942 = vpack.c.b16 %v2430, %v2414
        %v2943 = vpack.c.b16 %v2431, %v2415
        %v2944 = vpack.c.b16 %v2432, %v2416
        %v2945 = vpack.c.b16 %v2433, %v2417
        %v2946 = vpack.c.b16 %v2434, %v2418
        %v2947 = vpack.c.b16 %v2435, %v2419
        %v2948 = vpack.c.b16 %v2436, %v2420
        %v2949 = vpack.c.b16 %v2437, %v2421
        %v2950 = vpack.c.b16 %v2438, %v2422
        %v2951 = vpack.c.b16 %v2439, %v2423
        %v2952 = vpack.c.b16 %v2440, %v2424
        %3465 = vmatprep.subr.bf16.mxu0 %v2442
        %3466 = vmatpush1.bf16.msra.mxu0 %v2441
        %3467 = vmatprep.subr.bf16.mxu0 %v2458
        %3468 = vmatpush1.bf16.msra.mxu0 %v2457
        %3469 = vmatprep.subr.bf16.mxu0 %v2474
        %3470 = vmatpush1.bf16.msra.mxu0 %v2473
        %3471 = vmatprep.subr.bf16.mxu0 %v2490
        %3472 = vmatpush1.bf16.msra.mxu0 %v2489
        %3473 = vmatprep.subr.bf16.mxu0 %v2506
        %3474 = vmatpush1.bf16.msra.mxu0 %v2505
        %3475 = vmatprep.subr.bf16.mxu0 %v2522
        %3476 = vmatpush1.bf16.msra.mxu0 %v2521
        %3477 = vmatprep.subr.bf16.mxu0 %v2538
        %3478 = vmatpush1.bf16.msra.mxu0 %v2537
        %3479 = vmatprep.subr.bf16.mxu0 %v2554
        %3480 = vmatpush1.bf16.msra.mxu0 %v2553
        %3481 = vmatprep.subr.bf16.mxu0 %v2570
        %3482 = vmatpush1.bf16.msra.mxu0 %v2569
        %3483 = vmatprep.subr.bf16.mxu0 %v2586
        %3484 = vmatpush1.bf16.msra.mxu0 %v2585
        %3485 = vmatprep.subr.bf16.mxu0 %v2602
        %3486 = vmatpush1.bf16.msra.mxu0 %v2601
        %3487 = vmatprep.subr.bf16.mxu0 %v2618
        %3488 = vmatpush1.bf16.msra.mxu0 %v2617
        %3489 = vmatprep.subr.bf16.mxu0 %v2634
        %3490 = vmatpush1.bf16.msra.mxu0 %v2633
        %3491 = vmatprep.subr.bf16.mxu0 %v2650
        %3492 = vmatpush1.bf16.msra.mxu0 %v2649
        %3493 = vmatprep.subr.bf16.mxu0 %v2666
        %3494 = vmatpush1.bf16.msra.mxu0 %v2665
        %3495 = vmatprep.subr.bf16.mxu0 %v2682
        %3496 = vmatpush1.bf16.msra.mxu0 %v2681
        %3497 = vmatprep.mubr.bf16.mxu0 %v898
        %3498 = vmatmul.mubr.bf16.gmra.mrb[0].mxu0 %v897
        %v3499 = vpop.f32.mrb[0].mxu0
        %v3500 = vadd.f32 0.0, %v3499
        %v3501 = vpop.f32.mrb[0].mxu0
        %v3502 = vadd.f32 0.0, %v3501
        %v3503 = vpop.f32.mrb[0].mxu0
        %v3504 = vadd.f32 0.0, %v3503
        %v3505 = vpop.f32.mrb[0].mxu0
        %v3506 = vadd.f32 0.0, %v3505
        %3507 = vdwg.mxu0
        %3508 = vmatprep.subr.bf16.mxu0 %v2698
        %3509 = vmatpush1.bf16.msra.mxu0 %v2697
        %3510 = vmatprep.subr.bf16.mxu0 %v2714
        %3511 = vmatpush1.bf16.msra.mxu0 %v2713
        %3512 = vmatprep.subr.bf16.mxu0 %v2730
        %3513 = vmatpush1.bf16.msra.mxu0 %v2729
        %3514 = vmatprep.subr.bf16.mxu0 %v2746
        %3515 = vmatpush1.bf16.msra.mxu0 %v2745
        %3516 = vmatprep.subr.bf16.mxu0 %v2762
        %3517 = vmatpush1.bf16.msra.mxu0 %v2761
        %3518 = vmatprep.subr.bf16.mxu0 %v2778
        %3519 = vmatpush1.bf16.msra.mxu0 %v2777
        %3520 = vmatprep.subr.bf16.mxu0 %v2794
        %3521 = vmatpush1.bf16.msra.mxu0 %v2793
        %3522 = vmatprep.subr.bf16.mxu0 %v2810
        %3523 = vmatpush1.bf16.msra.mxu0 %v2809
        %3524 = vmatprep.subr.bf16.mxu0 %v2826
        %3525 = vmatpush1.bf16.msra.mxu0 %v2825
        %3526 = vmatprep.subr.bf16.mxu0 %v2842
        %3527 = vmatpush1.bf16.msra.mxu0 %v2841
        %3528 = vmatprep.subr.bf16.mxu0 %v2858
        %3529 = vmatpush1.bf16.msra.mxu0 %v2857
        %3530 = vmatprep.subr.bf16.mxu0 %v2874
        %3531 = vmatpush1.bf16.msra.mxu0 %v2873
        %3532 = vmatprep.subr.bf16.mxu0 %v2890
        %3533 = vmatpush1.bf16.msra.mxu0 %v2889
        %3534 = vmatprep.subr.bf16.mxu0 %v2906
        %3535 = vmatpush1.bf16.msra.mxu0 %v2905
        %3536 = vmatprep.subr.bf16.mxu0 %v2922
        %3537 = vmatpush1.bf16.msra.mxu0 %v2921
        %3538 = vmatprep.subr.bf16.mxu0 %v2938
        %3539 = vmatpush1.bf16.msra.mxu0 %v2937
        %3540 = vmatprep.mubr.bf16.mxu0 %v900
        %3541 = vmatmul.mubr.bf16.gmra.mrb[0].mxu0 %v899
        %v3542 = vpop.f32.mrb[0].mxu0
        %v3543 = vadd.f32 %v3500, %v3542
        %v3544 = vpop.f32.mrb[0].mxu0
        %v3545 = vadd.f32 %v3502, %v3544
        %v3546 = vpop.f32.mrb[0].mxu0
        %v3547 = vadd.f32 %v3504, %v3546
        %v3548 = vpop.f32.mrb[0].mxu0
        %v3549 = vadd.f32 %v3506, %v3548
        %3550 = vdwg.mxu0
        %3551 = vmatprep.subr.bf16.mxu0 %v2444
        %3552 = vmatpush1.bf16.msra.mxu0 %v2443
        %3553 = vmatprep.subr.bf16.mxu0 %v2460
        %3554 = vmatpush1.bf16.msra.mxu0 %v2459
        %3555 = vmatprep.subr.bf16.mxu0 %v2476
        %3556 = vmatpush1.bf16.msra.mxu0 %v2475
        %3557 = vmatprep.subr.bf16.mxu0 %v2492
        %3558 = vmatpush1.bf16.msra.mxu0 %v2491
        %3559 = vmatprep.subr.bf16.mxu0 %v2508
        %3560 = vmatpush1.bf16.msra.mxu0 %v2507
        %3561 = vmatprep.subr.bf16.mxu0 %v2524
        %3562 = vmatpush1.bf16.msra.mxu0 %v2523
        %3563 = vmatprep.subr.bf16.mxu0 %v2540
        %3564 = vmatpush1.bf16.msra.mxu0 %v2539
        %3565 = vmatprep.subr.bf16.mxu0 %v2556
        %3566 = vmatpush1.bf16.msra.mxu0 %v2555
        %3567 = vmatprep.subr.bf16.mxu0 %v2572
        %3568 = vmatpush1.bf16.msra.mxu0 %v2571
        %3569 = vmatprep.subr.bf16.mxu0 %v2588
        %3570 = vmatpush1.bf16.msra.mxu0 %v2587
        %3571 = vmatprep.subr.bf16.mxu0 %v2604
        %3572 = vmatpush1.bf16.msra.mxu0 %v2603
        %3573 = vmatprep.subr.bf16.mxu0 %v2620
        %3574 = vmatpush1.bf16.msra.mxu0 %v2619
        %3575 = vmatprep.subr.bf16.mxu0 %v2636
        %3576 = vmatpush1.bf16.msra.mxu0 %v2635
        %3577 = vmatprep.subr.bf16.mxu0 %v2652
        %3578 = vmatpush1.bf16.msra.mxu0 %v2651
        %3579 = vmatprep.subr.bf16.mxu0 %v2668
        %3580 = vmatpush1.bf16.msra.mxu0 %v2667
        %3581 = vmatprep.subr.bf16.mxu0 %v2684
        %3582 = vmatpush1.bf16.msra.mxu0 %v2683
        %3583 = vmatprep.mubr.bf16.mxu0 %v898
        %3584 = vmatmul.mubr.bf16.gmra.mrb[0].mxu0 %v897
        %v3585 = vpop.f32.mrb[0].mxu0
        %v3586 = vadd.f32 0.0, %v3585
        %v3587 = vpop.f32.mrb[0].mxu0
        %v3588 = vadd.f32 0.0, %v3587
        %v3589 = vpop.f32.mrb[0].mxu0
        %v3590 = vadd.f32 0.0, %v3589
        %v3591 = vpop.f32.mrb[0].mxu0
        %v3592 = vadd.f32 0.0, %v3591
        %3593 = vdwg.mxu0
        %3594 = vmatprep.subr.bf16.mxu0 %v2700
        %3595 = vmatpush1.bf16.msra.mxu0 %v2699
        %3596 = vmatprep.subr.bf16.mxu0 %v2716
        %3597 = vmatpush1.bf16.msra.mxu0 %v2715
        %3598 = vmatprep.subr.bf16.mxu0 %v2732
        %3599 = vmatpush1.bf16.msra.mxu0 %v2731
        %3600 = vmatprep.subr.bf16.mxu0 %v2748
        %3601 = vmatpush1.bf16.msra.mxu0 %v2747
        %3602 = vmatprep.subr.bf16.mxu0 %v2764
        %3603 = vmatpush1.bf16.msra.mxu0 %v2763
        %3604 = vmatprep.subr.bf16.mxu0 %v2780
        %3605 = vmatpush1.bf16.msra.mxu0 %v2779
        %3606 = vmatprep.subr.bf16.mxu0 %v2796
        %3607 = vmatpush1.bf16.msra.mxu0 %v2795
        %3608 = vmatprep.subr.bf16.mxu0 %v2812
        %3609 = vmatpush1.bf16.msra.mxu0 %v2811
        %3610 = vmatprep.subr.bf16.mxu0 %v2828
        %3611 = vmatpush1.bf16.msra.mxu0 %v2827
        %3612 = vmatprep.subr.bf16.mxu0 %v2844
        %3613 = vmatpush1.bf16.msra.mxu0 %v2843
        %3614 = vmatprep.subr.bf16.mxu0 %v2860
        %3615 = vmatpush1.bf16.msra.mxu0 %v2859
        %3616 = vmatprep.subr.bf16.mxu0 %v2876
        %3617 = vmatpush1.bf16.msra.mxu0 %v2875
        %3618 = vmatprep.subr.bf16.mxu0 %v2892
        %3619 = vmatpush1.bf16.msra.mxu0 %v2891
        %3620 = vmatprep.subr.bf16.mxu0 %v2908
        %3621 = vmatpush1.bf16.msra.mxu0 %v2907
        %3622 = vmatprep.subr.bf16.mxu0 %v2924
        %3623 = vmatpush1.bf16.msra.mxu0 %v2923
        %3624 = vmatprep.subr.bf16.mxu0 %v2940
        %3625 = vmatpush1.bf16.msra.mxu0 %v2939
        %3626 = vmatprep.mubr.bf16.mxu0 %v900
        %3627 = vmatmul.mubr.bf16.gmra.mrb[0].mxu0 %v899
        %v3628 = vpop.f32.mrb[0].mxu0
        %v3629 = vadd.f32 %v3586, %v3628
        %v3630 = vpop.f32.mrb[0].mxu0
        %v3631 = vadd.f32 %v3588, %v3630
        %v3632 = vpop.f32.mrb[0].mxu0
        %v3633 = vadd.f32 %v3590, %v3632
        %v3634 = vpop.f32.mrb[0].mxu0
        %v3635 = vadd.f32 %v3592, %v3634
        %3636 = vdwg.mxu0
        %3637 = vmatprep.subr.bf16.mxu0 %v2446
        %3638 = vmatpush1.bf16.msra.mxu0 %v2445
        %3639 = vmatprep.subr.bf16.mxu0 %v2462
        %3640 = vmatpush1.bf16.msra.mxu0 %v2461
        %3641 = vmatprep.subr.bf16.mxu0 %v2478
        %3642 = vmatpush1.bf16.msra.mxu0 %v2477
        %3643 = vmatprep.subr.bf16.mxu0 %v2494
        %3644 = vmatpush1.bf16.msra.mxu0 %v2493
        %3645 = vmatprep.subr.bf16.mxu0 %v2510
        %3646 = vmatpush1.bf16.msra.mxu0 %v2509
        %3647 = vmatprep.subr.bf16.mxu0 %v2526
        %3648 = vmatpush1.bf16.msra.mxu0 %v2525
        %3649 = vmatprep.subr.bf16.mxu0 %v2542
        %3650 = vmatpush1.bf16.msra.mxu0 %v2541
        %3651 = vmatprep.subr.bf16.mxu0 %v2558
        %3652 = vmatpush1.bf16.msra.mxu0 %v2557
        %3653 = vmatprep.subr.bf16.mxu0 %v2574
        %3654 = vmatpush1.bf16.msra.mxu0 %v2573
        %3655 = vmatprep.subr.bf16.mxu0 %v2590
        %3656 = vmatpush1.bf16.msra.mxu0 %v2589
        %3657 = vmatprep.subr.bf16.mxu0 %v2606
        %3658 = vmatpush1.bf16.msra.mxu0 %v2605
        %3659 = vmatprep.subr.bf16.mxu0 %v2622
        %3660 = vmatpush1.bf16.msra.mxu0 %v2621
        %3661 = vmatprep.subr.bf16.mxu0 %v2638
        %3662 = vmatpush1.bf16.msra.mxu0 %v2637
        %3663 = vmatprep.subr.bf16.mxu0 %v2654
        %3664 = vmatpush1.bf16.msra.mxu0 %v2653
        %3665 = vmatprep.subr.bf16.mxu0 %v2670
        %3666 = vmatpush1.bf16.msra.mxu0 %v2669
        %3667 = vmatprep.subr.bf16.mxu0 %v2686
        %3668 = vmatpush1.bf16.msra.mxu0 %v2685
        %3669 = vmatprep.mubr.bf16.mxu0 %v898
        %3670 = vmatmul.mubr.bf16.gmra.mrb[0].mxu0 %v897
        %v3671 = vpop.f32.mrb[0].mxu0
        %v3672 = vadd.f32 0.0, %v3671
        %v3673 = vpop.f32.mrb[0].mxu0
        %v3674 = vadd.f32 0.0, %v3673
        %v3675 = vpop.f32.mrb[0].mxu0
        %v3676 = vadd.f32 0.0, %v3675
        %v3677 = vpop.f32.mrb[0].mxu0
        %v3678 = vadd.f32 0.0, %v3677
        %3679 = vdwg.mxu0
        %3680 = vmatprep.subr.bf16.mxu0 %v2702
        %3681 = vmatpush1.bf16.msra.mxu0 %v2701
        %3682 = vmatprep.subr.bf16.mxu0 %v2718
        %3683 = vmatpush1.bf16.msra.mxu0 %v2717
        %3684 = vmatprep.subr.bf16.mxu0 %v2734
        %3685 = vmatpush1.bf16.msra.mxu0 %v2733
        %3686 = vmatprep.subr.bf16.mxu0 %v2750
        %3687 = vmatpush1.bf16.msra.mxu0 %v2749
        %3688 = vmatprep.subr.bf16.mxu0 %v2766
        %3689 = vmatpush1.bf16.msra.mxu0 %v2765
        %3690 = vmatprep.subr.bf16.mxu0 %v2782
        %3691 = vmatpush1.bf16.msra.mxu0 %v2781
        %3692 = vmatprep.subr.bf16.mxu0 %v2798
        %3693 = vmatpush1.bf16.msra.mxu0 %v2797
        %3694 = vmatprep.subr.bf16.mxu0 %v2814
        %3695 = vmatpush1.bf16.msra.mxu0 %v2813
        %3696 = vmatprep.subr.bf16.mxu0 %v2830
        %3697 = vmatpush1.bf16.msra.mxu0 %v2829
        %3698 = vmatprep.subr.bf16.mxu0 %v2846
        %3699 = vmatpush1.bf16.msra.mxu0 %v2845
        %3700 = vmatprep.subr.bf16.mxu0 %v2862
        %3701 = vmatpush1.bf16.msra.mxu0 %v2861
        %3702 = vmatprep.subr.bf16.mxu0 %v2878
        %3703 = vmatpush1.bf16.msra.mxu0 %v2877
        %3704 = vmatprep.subr.bf16.mxu0 %v2894
        %3705 = vmatpush1.bf16.msra.mxu0 %v2893
        %3706 = vmatprep.subr.bf16.mxu0 %v2910
        %3707 = vmatpush1.bf16.msra.mxu0 %v2909
        %3708 = vmatprep.subr.bf16.mxu0 %v2926
        %3709 = vmatpush1.bf16.msra.mxu0 %v2925
        %3710 = vmatprep.subr.bf16.mxu0 %v2942
        %3711 = vmatpush1.bf16.msra.mxu0 %v2941
        %3712 = vmatprep.mubr.bf16.mxu0 %v900
        %3713 = vmatmul.mubr.bf16.gmra.mrb[0].mxu0 %v899
        %v3714 = vpop.f32.mrb[0].mxu0
        %v3715 = vadd.f32 %v3672, %v3714
        %v3716 = vpop.f32.mrb[0].mxu0
        %v3717 = vadd.f32 %v3674, %v3716
        %v3718 = vpop.f32.mrb[0].mxu0
        %v3719 = vadd.f32 %v3676, %v3718
        %v3720 = vpop.f32.mrb[0].mxu0
        %v3721 = vadd.f32 %v3678, %v3720
        %3722 = vdwg.mxu0
        %3723 = vmatprep.subr.bf16.mxu0 %v2448
        %3724 = vmatpush1.bf16.msra.mxu0 %v2447
        %3725 = vmatprep.subr.bf16.mxu0 %v2464
        %3726 = vmatpush1.bf16.msra.mxu0 %v2463
        %3727 = vmatprep.subr.bf16.mxu0 %v2480
        %3728 = vmatpush1.bf16.msra.mxu0 %v2479
        %3729 = vmatprep.subr.bf16.mxu0 %v2496
        %3730 = vmatpush1.bf16.msra.mxu0 %v2495
        %3731 = vmatprep.subr.bf16.mxu0 %v2512
        %3732 = vmatpush1.bf16.msra.mxu0 %v2511
        %3733 = vmatprep.subr.bf16.mxu0 %v2528
        %3734 = vmatpush1.bf16.msra.mxu0 %v2527
        %3735 = vmatprep.subr.bf16.mxu0 %v2544
        %3736 = vmatpush1.bf16.msra.mxu0 %v2543
        %3737 = vmatprep.subr.bf16.mxu0 %v2560
        %3738 = vmatpush1.bf16.msra.mxu0 %v2559
        %3739 = vmatprep.subr.bf16.mxu0 %v2576
        %3740 = vmatpush1.bf16.msra.mxu0 %v2575
        %3741 = vmatprep.subr.bf16.mxu0 %v2592
        %3742 = vmatpush1.bf16.msra.mxu0 %v2591
        %3743 = vmatprep.subr.bf16.mxu0 %v2608
        %3744 = vmatpush1.bf16.msra.mxu0 %v2607
        %3745 = vmatprep.subr.bf16.mxu0 %v2624
        %3746 = vmatpush1.bf16.msra.mxu0 %v2623
        %3747 = vmatprep.subr.bf16.mxu0 %v2640
        %3748 = vmatpush1.bf16.msra.mxu0 %v2639
        %3749 = vmatprep.subr.bf16.mxu0 %v2656
        %3750 = vmatpush1.bf16.msra.mxu0 %v2655
        %3751 = vmatprep.subr.bf16.mxu0 %v2672
        %3752 = vmatpush1.bf16.msra.mxu0 %v2671
        %3753 = vmatprep.subr.bf16.mxu0 %v2688
        %3754 = vmatpush1.bf16.msra.mxu0 %v2687
        %3755 = vmatprep.mubr.bf16.mxu0 %v898
        %3756 = vmatmul.mubr.bf16.gmra.mrb[0].mxu0 %v897
        %v3757 = vpop.f32.mrb[0].mxu0
        %v3758 = vadd.f32 0.0, %v3757
        %v3759 = vpop.f32.mrb[0].mxu0
        %v3760 = vadd.f32 0.0, %v3759
        %v3761 = vpop.f32.mrb[0].mxu0
        %v3762 = vadd.f32 0.0, %v3761
        %v3763 = vpop.f32.mrb[0].mxu0
        %v3764 = vadd.f32 0.0, %v3763
        %3765 = vdwg.mxu0
        %3766 = vmatprep.subr.bf16.mxu0 %v2704
        %3767 = vmatpush1.bf16.msra.mxu0 %v2703
        %3768 = vmatprep.subr.bf16.mxu0 %v2720
        %3769 = vmatpush1.bf16.msra.mxu0 %v2719
        %3770 = vmatprep.subr.bf16.mxu0 %v2736
        %3771 = vmatpush1.bf16.msra.mxu0 %v2735
        %3772 = vmatprep.subr.bf16.mxu0 %v2752
        %3773 = vmatpush1.bf16.msra.mxu0 %v2751
        %3774 = vmatprep.subr.bf16.mxu0 %v2768
        %3775 = vmatpush1.bf16.msra.mxu0 %v2767
        %3776 = vmatprep.subr.bf16.mxu0 %v2784
        %3777 = vmatpush1.bf16.msra.mxu0 %v2783
        %3778 = vmatprep.subr.bf16.mxu0 %v2800
        %3779 = vmatpush1.bf16.msra.mxu0 %v2799
        %3780 = vmatprep.subr.bf16.mxu0 %v2816
        %3781 = vmatpush1.bf16.msra.mxu0 %v2815
        %3782 = vmatprep.subr.bf16.mxu0 %v2832
        %3783 = vmatpush1.bf16.msra.mxu0 %v2831
        %3784 = vmatprep.subr.bf16.mxu0 %v2848
        %3785 = vmatpush1.bf16.msra.mxu0 %v2847
        %3786 = vmatprep.subr.bf16.mxu0 %v2864
        %3787 = vmatpush1.bf16.msra.mxu0 %v2863
        %3788 = vmatprep.subr.bf16.mxu0 %v2880
        %3789 = vmatpush1.bf16.msra.mxu0 %v2879
        %3790 = vmatprep.subr.bf16.mxu0 %v2896
        %3791 = vmatpush1.bf16.msra.mxu0 %v2895
        %3792 = vmatprep.subr.bf16.mxu0 %v2912
        %3793 = vmatpush1.bf16.msra.mxu0 %v2911
        %3794 = vmatprep.subr.bf16.mxu0 %v2928
        %3795 = vmatpush1.bf16.msra.mxu0 %v2927
        %3796 = vmatprep.subr.bf16.mxu0 %v2944
        %3797 = vmatpush1.bf16.msra.mxu0 %v2943
        %3798 = vmatprep.mubr.bf16.mxu0 %v900
        %3799 = vmatmul.mubr.bf16.gmra.mrb[0].mxu0 %v899
        %v3800 = vpop.f32.mrb[0].mxu0
        %v3801 = vadd.f32 %v3758, %v3800
        %v3802 = vpop.f32.mrb[0].mxu0
        %v3803 = vadd.f32 %v3760, %v3802
        %v3804 = vpop.f32.mrb[0].mxu0
        %v3805 = vadd.f32 %v3762, %v3804
        %v3806 = vpop.f32.mrb[0].mxu0
        %v3807 = vadd.f32 %v3764, %v3806
        %3808 = vdwg.mxu0
        %3809 = vmatprep.subr.bf16.mxu0 %v2450
        %3810 = vmatpush1.bf16.msra.mxu0 %v2449
        %3811 = vmatprep.subr.bf16.mxu0 %v2466
        %3812 = vmatpush1.bf16.msra.mxu0 %v2465
        %3813 = vmatprep.subr.bf16.mxu0 %v2482
        %3814 = vmatpush1.bf16.msra.mxu0 %v2481
        %3815 = vmatprep.subr.bf16.mxu0 %v2498
        %3816 = vmatpush1.bf16.msra.mxu0 %v2497
        %3817 = vmatprep.subr.bf16.mxu0 %v2514
        %3818 = vmatpush1.bf16.msra.mxu0 %v2513
        %3819 = vmatprep.subr.bf16.mxu0 %v2530
        %3820 = vmatpush1.bf16.msra.mxu0 %v2529
        %3821 = vmatprep.subr.bf16.mxu0 %v2546
        %3822 = vmatpush1.bf16.msra.mxu0 %v2545
        %3823 = vmatprep.subr.bf16.mxu0 %v2562
        %3824 = vmatpush1.bf16.msra.mxu0 %v2561
        %3825 = vmatprep.subr.bf16.mxu0 %v2578
        %3826 = vmatpush1.bf16.msra.mxu0 %v2577
        %3827 = vmatprep.subr.bf16.mxu0 %v2594
        %3828 = vmatpush1.bf16.msra.mxu0 %v2593
        %3829 = vmatprep.subr.bf16.mxu0 %v2610
        %3830 = vmatpush1.bf16.msra.mxu0 %v2609
        %3831 = vmatprep.subr.bf16.mxu0 %v2626
        %3832 = vmatpush1.bf16.msra.mxu0 %v2625
        %3833 = vmatprep.subr.bf16.mxu0 %v2642
        %3834 = vmatpush1.bf16.msra.mxu0 %v2641
        %3835 = vmatprep.subr.bf16.mxu0 %v2658
        %3836 = vmatpush1.bf16.msra.mxu0 %v2657
        %3837 = vmatprep.subr.bf16.mxu0 %v2674
        %3838 = vmatpush1.bf16.msra.mxu0 %v2673
        %3839 = vmatprep.subr.bf16.mxu0 %v2690
        %3840 = vmatpush1.bf16.msra.mxu0 %v2689
        %3841 = vmatprep.mubr.bf16.mxu0 %v898
        %3842 = vmatmul.mubr.bf16.gmra.mrb[0].mxu0 %v897
        %v3843 = vpop.f32.mrb[0].mxu0
        %v3844 = vadd.f32 0.0, %v3843
        %v3845 = vpop.f32.mrb[0].mxu0
        %v3846 = vadd.f32 0.0, %v3845
        %v3847 = vpop.f32.mrb[0].mxu0
        %v3848 = vadd.f32 0.0, %v3847
        %v3849 = vpop.f32.mrb[0].mxu0
        %v3850 = vadd.f32 0.0, %v3849
        %3851 = vdwg.mxu0
        %3852 = vmatprep.subr.bf16.mxu0 %v2706
        %3853 = vmatpush1.bf16.msra.mxu0 %v2705
        %3854 = vmatprep.subr.bf16.mxu0 %v2722
        %3855 = vmatpush1.bf16.msra.mxu0 %v2721
        %3856 = vmatprep.subr.bf16.mxu0 %v2738
        %3857 = vmatpush1.bf16.msra.mxu0 %v2737
        %3858 = vmatprep.subr.bf16.mxu0 %v2754
        %3859 = vmatpush1.bf16.msra.mxu0 %v2753
        %3860 = vmatprep.subr.bf16.mxu0 %v2770
        %3861 = vmatpush1.bf16.msra.mxu0 %v2769
        %3862 = vmatprep.subr.bf16.mxu0 %v2786
        %3863 = vmatpush1.bf16.msra.mxu0 %v2785
        %3864 = vmatprep.subr.bf16.mxu0 %v2802
        %3865 = vmatpush1.bf16.msra.mxu0 %v2801
        %3866 = vmatprep.subr.bf16.mxu0 %v2818
        %3867 = vmatpush1.bf16.msra.mxu0 %v2817
        %3868 = vmatprep.subr.bf16.mxu0 %v2834
        %3869 = vmatpush1.bf16.msra.mxu0 %v2833
        %3870 = vmatprep.subr.bf16.mxu0 %v2850
        %3871 = vmatpush1.bf16.msra.mxu0 %v2849
        %3872 = vmatprep.subr.bf16.mxu0 %v2866
        %3873 = vmatpush1.bf16.msra.mxu0 %v2865
        %3874 = vmatprep.subr.bf16.mxu0 %v2882
        %3875 = vmatpush1.bf16.msra.mxu0 %v2881
        %3876 = vmatprep.subr.bf16.mxu0 %v2898
        %3877 = vmatpush1.bf16.msra.mxu0 %v2897
        %3878 = vmatprep.subr.bf16.mxu0 %v2914
        %3879 = vmatpush1.bf16.msra.mxu0 %v2913
        %3880 = vmatprep.subr.bf16.mxu0 %v2930
        %3881 = vmatpush1.bf16.msra.mxu0 %v2929
        %3882 = vmatprep.subr.bf16.mxu0 %v2946
        %3883 = vmatpush1.bf16.msra.mxu0 %v2945
        %3884 = vmatprep.mubr.bf16.mxu0 %v900
        %3885 = vmatmul.mubr.bf16.gmra.mrb[0].mxu0 %v899
        %v3886 = vpop.f32.mrb[0].mxu0
        %v3887 = vadd.f32 %v3844, %v3886
        %v3888 = vpop.f32.mrb[0].mxu0
        %v3889 = vadd.f32 %v3846, %v3888
        %v3890 = vpop.f32.mrb[0].mxu0
        %v3891 = vadd.f32 %v3848, %v3890
        %v3892 = vpop.f32.mrb[0].mxu0
        %v3893 = vadd.f32 %v3850, %v3892
        %3894 = vdwg.mxu0
        %3895 = vmatprep.subr.bf16.mxu0 %v2452
        %3896 = vmatpush1.bf16.msra.mxu0 %v2451
        %3897 = vmatprep.subr.bf16.mxu0 %v2468
        %3898 = vmatpush1.bf16.msra.mxu0 %v2467
        %3899 = vmatprep.subr.bf16.mxu0 %v2484
        %3900 = vmatpush1.bf16.msra.mxu0 %v2483
        %3901 = vmatprep.subr.bf16.mxu0 %v2500
        %3902 = vmatpush1.bf16.msra.mxu0 %v2499
        %3903 = vmatprep.subr.bf16.mxu0 %v2516
        %3904 = vmatpush1.bf16.msra.mxu0 %v2515
        %3905 = vmatprep.subr.bf16.mxu0 %v2532
        %3906 = vmatpush1.bf16.msra.mxu0 %v2531
        %3907 = vmatprep.subr.bf16.mxu0 %v2548
        %3908 = vmatpush1.bf16.msra.mxu0 %v2547
        %3909 = vmatprep.subr.bf16.mxu0 %v2564
        %3910 = vmatpush1.bf16.msra.mxu0 %v2563
        %3911 = vmatprep.subr.bf16.mxu0 %v2580
        %3912 = vmatpush1.bf16.msra.mxu0 %v2579
        %3913 = vmatprep.subr.bf16.mxu0 %v2596
        %3914 = vmatpush1.bf16.msra.mxu0 %v2595
        %3915 = vmatprep.subr.bf16.mxu0 %v2612
        %3916 = vmatpush1.bf16.msra.mxu0 %v2611
        %3917 = vmatprep.subr.bf16.mxu0 %v2628
        %3918 = vmatpush1.bf16.msra.mxu0 %v2627
        %3919 = vmatprep.subr.bf16.mxu0 %v2644
        %3920 = vmatpush1.bf16.msra.mxu0 %v2643
        %3921 = vmatprep.subr.bf16.mxu0 %v2660
        %3922 = vmatpush1.bf16.msra.mxu0 %v2659
        %3923 = vmatprep.subr.bf16.mxu0 %v2676
        %3924 = vmatpush1.bf16.msra.mxu0 %v2675
        %3925 = vmatprep.subr.bf16.mxu0 %v2692
        %3926 = vmatpush1.bf16.msra.mxu0 %v2691
        %3927 = vmatprep.mubr.bf16.mxu0 %v898
        %3928 = vmatmul.mubr.bf16.gmra.mrb[0].mxu0 %v897
        %v3929 = vpop.f32.mrb[0].mxu0
        %v3930 = vadd.f32 0.0, %v3929
        %v3931 = vpop.f32.mrb[0].mxu0
        %v3932 = vadd.f32 0.0, %v3931
        %v3933 = vpop.f32.mrb[0].mxu0
        %v3934 = vadd.f32 0.0, %v3933
        %v3935 = vpop.f32.mrb[0].mxu0
        %v3936 = vadd.f32 0.0, %v3935
        %3937 = vdwg.mxu0
        %3938 = vmatprep.subr.bf16.mxu0 %v2708
        %3939 = vmatpush1.bf16.msra.mxu0 %v2707
        %3940 = vmatprep.subr.bf16.mxu0 %v2724
        %3941 = vmatpush1.bf16.msra.mxu0 %v2723
        %3942 = vmatprep.subr.bf16.mxu0 %v2740
        %3943 = vmatpush1.bf16.msra.mxu0 %v2739
        %3944 = vmatprep.subr.bf16.mxu0 %v2756
        %3945 = vmatpush1.bf16.msra.mxu0 %v2755
        %3946 = vmatprep.subr.bf16.mxu0 %v2772
        %3947 = vmatpush1.bf16.msra.mxu0 %v2771
        %3948 = vmatprep.subr.bf16.mxu0 %v2788
        %3949 = vmatpush1.bf16.msra.mxu0 %v2787
        %3950 = vmatprep.subr.bf16.mxu0 %v2804
        %3951 = vmatpush1.bf16.msra.mxu0 %v2803
        %3952 = vmatprep.subr.bf16.mxu0 %v2820
        %3953 = vmatpush1.bf16.msra.mxu0 %v2819
        %3954 = vmatprep.subr.bf16.mxu0 %v2836
        %3955 = vmatpush1.bf16.msra.mxu0 %v2835
        %3956 = vmatprep.subr.bf16.mxu0 %v2852
        %3957 = vmatpush1.bf16.msra.mxu0 %v2851
        %3958 = vmatprep.subr.bf16.mxu0 %v2868
        %3959 = vmatpush1.bf16.msra.mxu0 %v2867
        %3960 = vmatprep.subr.bf16.mxu0 %v2884
        %3961 = vmatpush1.bf16.msra.mxu0 %v2883
        %3962 = vmatprep.subr.bf16.mxu0 %v2900
        %3963 = vmatpush1.bf16.msra.mxu0 %v2899
        %3964 = vmatprep.subr.bf16.mxu0 %v2916
        %3965 = vmatpush1.bf16.msra.mxu0 %v2915
        %3966 = vmatprep.subr.bf16.mxu0 %v2932
        %3967 = vmatpush1.bf16.msra.mxu0 %v2931
        %3968 = vmatprep.subr.bf16.mxu0 %v2948
        %3969 = vmatpush1.bf16.msra.mxu0 %v2947
        %3970 = vmatprep.mubr.bf16.mxu0 %v900
        %3971 = vmatmul.mubr.bf16.gmra.mrb[0].mxu0 %v899
        %v3972 = vpop.f32.mrb[0].mxu0
        %v3973 = vadd.f32 %v3930, %v3972
        %v3974 = vpop.f32.mrb[0].mxu0
        %v3975 = vadd.f32 %v3932, %v3974
        %v3976 = vpop.f32.mrb[0].mxu0
        %v3977 = vadd.f32 %v3934, %v3976
        %v3978 = vpop.f32.mrb[0].mxu0
        %v3979 = vadd.f32 %v3936, %v3978
        %3980 = vdwg.mxu0
        %3981 = vmatprep.subr.bf16.mxu0 %v2454
        %3982 = vmatpush1.bf16.msra.mxu0 %v2453
        %3983 = vmatprep.subr.bf16.mxu0 %v2470
        %3984 = vmatpush1.bf16.msra.mxu0 %v2469
        %3985 = vmatprep.subr.bf16.mxu0 %v2486
        %3986 = vmatpush1.bf16.msra.mxu0 %v2485
        %3987 = vmatprep.subr.bf16.mxu0 %v2502
        %3988 = vmatpush1.bf16.msra.mxu0 %v2501
        %3989 = vmatprep.subr.bf16.mxu0 %v2518
        %3990 = vmatpush1.bf16.msra.mxu0 %v2517
        %3991 = vmatprep.subr.bf16.mxu0 %v2534
        %3992 = vmatpush1.bf16.msra.mxu0 %v2533
        %3993 = vmatprep.subr.bf16.mxu0 %v2550
        %3994 = vmatpush1.bf16.msra.mxu0 %v2549
        %3995 = vmatprep.subr.bf16.mxu0 %v2566
        %3996 = vmatpush1.bf16.msra.mxu0 %v2565
        %3997 = vmatprep.subr.bf16.mxu0 %v2582
        %3998 = vmatpush1.bf16.msra.mxu0 %v2581
        %3999 = vmatprep.subr.bf16.mxu0 %v2598
        %4000 = vmatpush1.bf16.msra.mxu0 %v2597
        %4001 = vmatprep.subr.bf16.mxu0 %v2614
        %4002 = vmatpush1.bf16.msra.mxu0 %v2613
        %4003 = vmatprep.subr.bf16.mxu0 %v2630
        %4004 = vmatpush1.bf16.msra.mxu0 %v2629
        %4005 = vmatprep.subr.bf16.mxu0 %v2646
        %4006 = vmatpush1.bf16.msra.mxu0 %v2645
        %4007 = vmatprep.subr.bf16.mxu0 %v2662
        %4008 = vmatpush1.bf16.msra.mxu0 %v2661
        %4009 = vmatprep.subr.bf16.mxu0 %v2678
        %4010 = vmatpush1.bf16.msra.mxu0 %v2677
        %4011 = vmatprep.subr.bf16.mxu0 %v2694
        %4012 = vmatpush1.bf16.msra.mxu0 %v2693
        %4013 = vmatprep.mubr.bf16.mxu0 %v898
        %4014 = vmatmul.mubr.bf16.gmra.mrb[0].mxu0 %v897
        %v4015 = vpop.f32.mrb[0].mxu0
        %v4016 = vadd.f32 0.0, %v4015
        %v4017 = vpop.f32.mrb[0].mxu0
        %v4018 = vadd.f32 0.0, %v4017
        %v4019 = vpop.f32.mrb[0].mxu0
        %v4020 = vadd.f32 0.0, %v4019
        %v4021 = vpop.f32.mrb[0].mxu0
        %v4022 = vadd.f32 0.0, %v4021
        %4023 = vdwg.mxu0
        %4024 = vmatprep.subr.bf16.mxu0 %v2710
        %4025 = vmatpush1.bf16.msra.mxu0 %v2709
        %4026 = vmatprep.subr.bf16.mxu0 %v2726
        %4027 = vmatpush1.bf16.msra.mxu0 %v2725
        %4028 = vmatprep.subr.bf16.mxu0 %v2742
        %4029 = vmatpush1.bf16.msra.mxu0 %v2741
        %4030 = vmatprep.subr.bf16.mxu0 %v2758
        %4031 = vmatpush1.bf16.msra.mxu0 %v2757
        %4032 = vmatprep.subr.bf16.mxu0 %v2774
        %4033 = vmatpush1.bf16.msra.mxu0 %v2773
        %4034 = vmatprep.subr.bf16.mxu0 %v2790
        %4035 = vmatpush1.bf16.msra.mxu0 %v2789
        %4036 = vmatprep.subr.bf16.mxu0 %v2806
        %4037 = vmatpush1.bf16.msra.mxu0 %v2805
        %4038 = vmatprep.subr.bf16.mxu0 %v2822
        %4039 = vmatpush1.bf16.msra.mxu0 %v2821
        %4040 = vmatprep.subr.bf16.mxu0 %v2838
        %4041 = vmatpush1.bf16.msra.mxu0 %v2837
        %4042 = vmatprep.subr.bf16.mxu0 %v2854
        %4043 = vmatpush1.bf16.msra.mxu0 %v2853
        %4044 = vmatprep.subr.bf16.mxu0 %v2870
        %4045 = vmatpush1.bf16.msra.mxu0 %v2869
        %4046 = vmatprep.subr.bf16.mxu0 %v2886
        %4047 = vmatpush1.bf16.msra.mxu0 %v2885
        %4048 = vmatprep.subr.bf16.mxu0 %v2902
        %4049 = vmatpush1.bf16.msra.mxu0 %v2901
        %4050 = vmatprep.subr.bf16.mxu0 %v2918
        %4051 = vmatpush1.bf16.msra.mxu0 %v2917
        %4052 = vmatprep.subr.bf16.mxu0 %v2934
        %4053 = vmatpush1.bf16.msra.mxu0 %v2933
        %4054 = vmatprep.subr.bf16.mxu0 %v2950
        %4055 = vmatpush1.bf16.msra.mxu0 %v2949
        %4056 = vmatprep.mubr.bf16.mxu0 %v900
        %4057 = vmatmul.mubr.bf16.gmra.mrb[0].mxu0 %v899
        %v4058 = vpop.f32.mrb[0].mxu0
        %v4059 = vadd.f32 %v4016, %v4058
        %v4060 = vpop.f32.mrb[0].mxu0
        %v4061 = vadd.f32 %v4018, %v4060
        %v4062 = vpop.f32.mrb[0].mxu0
        %v4063 = vadd.f32 %v4020, %v4062
        %v4064 = vpop.f32.mrb[0].mxu0
        %v4065 = vadd.f32 %v4022, %v4064
        %4066 = vdwg.mxu0
        %4067 = vmatprep.subr.bf16.mxu0 %v2456
        %4068 = vmatpush1.bf16.msra.mxu0 %v2455
        %4069 = vmatprep.subr.bf16.mxu0 %v2472
        %4070 = vmatpush1.bf16.msra.mxu0 %v2471
        %4071 = vmatprep.subr.bf16.mxu0 %v2488
        %4072 = vmatpush1.bf16.msra.mxu0 %v2487
        %4073 = vmatprep.subr.bf16.mxu0 %v2504
        %4074 = vmatpush1.bf16.msra.mxu0 %v2503
        %4075 = vmatprep.subr.bf16.mxu0 %v2520
        %4076 = vmatpush1.bf16.msra.mxu0 %v2519
        %4077 = vmatprep.subr.bf16.mxu0 %v2536
        %4078 = vmatpush1.bf16.msra.mxu0 %v2535
        %4079 = vmatprep.subr.bf16.mxu0 %v2552
        %4080 = vmatpush1.bf16.msra.mxu0 %v2551
        %4081 = vmatprep.subr.bf16.mxu0 %v2568
        %4082 = vmatpush1.bf16.msra.mxu0 %v2567
        %4083 = vmatprep.subr.bf16.mxu0 %v2584
        %4084 = vmatpush1.bf16.msra.mxu0 %v2583
        %4085 = vmatprep.subr.bf16.mxu0 %v2600
        %4086 = vmatpush1.bf16.msra.mxu0 %v2599
        %4087 = vmatprep.subr.bf16.mxu0 %v2616
        %4088 = vmatpush1.bf16.msra.mxu0 %v2615
        %4089 = vmatprep.subr.bf16.mxu0 %v2632
        %4090 = vmatpush1.bf16.msra.mxu0 %v2631
        %4091 = vmatprep.subr.bf16.mxu0 %v2648
        %4092 = vmatpush1.bf16.msra.mxu0 %v2647
        %4093 = vmatprep.subr.bf16.mxu0 %v2664
        %4094 = vmatpush1.bf16.msra.mxu0 %v2663
        %4095 = vmatprep.subr.bf16.mxu0 %v2680
        %4096 = vmatpush1.bf16.msra.mxu0 %v2679
        %4097 = vmatprep.subr.bf16.mxu0 %v2696
        %4098 = vmatpush1.bf16.msra.mxu0 %v2695
        %4099 = vmatprep.mubr.bf16.mxu0 %v898
        %4100 = vmatmul.mubr.bf16.gmra.mrb[0].mxu0 %v897
        %v4101 = vpop.f32.mrb[0].mxu0
        %v4102 = vadd.f32 0.0, %v4101
        %v4103 = vpop.f32.mrb[0].mxu0
        %v4104 = vadd.f32 0.0, %v4103
        %v4105 = vpop.f32.mrb[0].mxu0
        %v4106 = vadd.f32 0.0, %v4105
        %v4107 = vpop.f32.mrb[0].mxu0
        %v4108 = vadd.f32 0.0, %v4107
        %4109 = vdwg.mxu0
        %4110 = vmatprep.subr.bf16.mxu0 %v2712
        %4111 = vmatpush1.bf16.msra.mxu0 %v2711
        %4112 = vmatprep.subr.bf16.mxu0 %v2728
        %4113 = vmatpush1.bf16.msra.mxu0 %v2727
        %4114 = vmatprep.subr.bf16.mxu0 %v2744
        %4115 = vmatpush1.bf16.msra.mxu0 %v2743
        %4116 = vmatprep.subr.bf16.mxu0 %v2760
        %4117 = vmatpush1.bf16.msra.mxu0 %v2759
        %4118 = vmatprep.subr.bf16.mxu0 %v2776
        %4119 = vmatpush1.bf16.msra.mxu0 %v2775
        %4120 = vmatprep.subr.bf16.mxu0 %v2792
        %4121 = vmatpush1.bf16.msra.mxu0 %v2791
        %4122 = vmatprep.subr.bf16.mxu0 %v2808
        %4123 = vmatpush1.bf16.msra.mxu0 %v2807
        %4124 = vmatprep.subr.bf16.mxu0 %v2824
        %4125 = vmatpush1.bf16.msra.mxu0 %v2823
        %4126 = vmatprep.subr.bf16.mxu0 %v2840
        %4127 = vmatpush1.bf16.msra.mxu0 %v2839
        %4128 = vmatprep.subr.bf16.mxu0 %v2856
        %4129 = vmatpush1.bf16.msra.mxu0 %v2855
        %4130 = vmatprep.subr.bf16.mxu0 %v2872
        %4131 = vmatpush1.bf16.msra.mxu0 %v2871
        %4132 = vmatprep.subr.bf16.mxu0 %v2888
        %4133 = vmatpush1.bf16.msra.mxu0 %v2887
        %4134 = vmatprep.subr.bf16.mxu0 %v2904
        %4135 = vmatpush1.bf16.msra.mxu0 %v2903
        %4136 = vmatprep.subr.bf16.mxu0 %v2920
        %4137 = vmatpush1.bf16.msra.mxu0 %v2919
        %4138 = vmatprep.subr.bf16.mxu0 %v2936
        %4139 = vmatpush1.bf16.msra.mxu0 %v2935
        %4140 = vmatprep.subr.bf16.mxu0 %v2952
        %4141 = vmatpush1.bf16.msra.mxu0 %v2951
        %4142 = vmatprep.mubr.bf16.mxu0 %v900
        %4143 = vmatmul.mubr.bf16.gmra.mrb[0].mxu0 %v899
        %v4144 = vpop.f32.mrb[0].mxu0
        %v4145 = vadd.f32 %v4102, %v4144
        %v4146 = vpop.f32.mrb[0].mxu0
        %v4147 = vadd.f32 %v4104, %v4146
        %v4148 = vpop.f32.mrb[0].mxu0
        %v4149 = vadd.f32 %v4106, %v4148
        %v4150 = vpop.f32.mrb[0].mxu0
        %v4151 = vadd.f32 %v4108, %v4150
        %4152 = vdwg.mxu0
        %v4153 = vadd.f32 %v337, %v3543
        %v4154 = vadd.f32 %v338, %v3545
        %v4155 = vadd.f32 %v339, %v3629
        %v4156 = vadd.f32 %v340, %v3631
        %v4157 = vadd.f32 %v341, %v3715
        %v4158 = vadd.f32 %v342, %v3717
        %v4159 = vadd.f32 %v343, %v3801
        %v4160 = vadd.f32 %v344, %v3803
        %v4161 = vadd.f32 %v345, %v3887
        %v4162 = vadd.f32 %v346, %v3889
        %v4163 = vadd.f32 %v347, %v3973
        %v4164 = vadd.f32 %v348, %v3975
        %v4165 = vadd.f32 %v349, %v4059
        %v4166 = vadd.f32 %v350, %v4061
        %v4167 = vadd.f32 %v351, %v4145
        %v4168 = vadd.f32 %v352, %v4147
        %v4169 = vadd.f32 %v353, %v3547
        %v4170 = vadd.f32 %v354, %v3549
        %v4171 = vadd.f32 %v355, %v3633
        %v4172 = vadd.f32 %v356, %v3635
        %v4173 = vadd.f32 %v357, %v3719
        %v4174 = vadd.f32 %v358, %v3721
        %v4175 = vadd.f32 %v359, %v3805
        %v4176 = vadd.f32 %v360, %v3807
        %v4177 = vadd.f32 %v361, %v3891
        %v4178 = vadd.f32 %v362, %v3893
        %v4179 = vadd.f32 %v363, %v3977
        %v4180 = vadd.f32 %v364, %v3979
        %v4181 = vadd.f32 %v365, %v4063
        %v4182 = vadd.f32 %v366, %v4065
        %v4183 = vadd.f32 %v367, %v4149
        %v4184 = vadd.f32 %v368, %v4151
        %4185 = vst [vmem:[#allocation2] sm:$0xff] %v4153
        %4186 = vst [vmem:[#allocation2 + $0x8] sm:$0xff] %v4154
        %4187 = vst [vmem:[#allocation2 + $0x10] sm:$0xff] %v4155
        %4188 = vst [vmem:[#allocation2 + $0x18] sm:$0xff] %v4156
        %4189 = vst [vmem:[#allocation2 + $0x20] sm:$0xff] %v4157
        %4190 = vst [vmem:[#allocation2 + $0x28] sm:$0xff] %v4158
        %4191 = vst [vmem:[#allocation2 + $0x30] sm:$0xff] %v4159
        %4192 = vst [vmem:[#allocation2 + $0x38] sm:$0xff] %v4160
        %4193 = vst [vmem:[#allocation2 + $0x40] sm:$0xff] %v4161
        %4194 = vst [vmem:[#allocation2 + $0x48] sm:$0xff] %v4162
        %4195 = vst [vmem:[#allocation2 + $0x50] sm:$0xff] %v4163
        %4196 = vst [vmem:[#allocation2 + $0x58] sm:$0xff] %v4164
        %4197 = vst [vmem:[#allocation2 + $0x60] sm:$0xff] %v4165
        %4198 = vst [vmem:[#allocation2 + $0x68] sm:$0xff] %v4166
        %4199 = vst [vmem:[#allocation2 + $0x70] sm:$0xff] %v4167
        %4200 = vst [vmem:[#allocation2 + $0x78] sm:$0xff] %v4168
        %4201 = vst [vmem:[#allocation2 + $0x80] sm:$0xff] %v4169
        %4202 = vst [vmem:[#allocation2 + $0x88] sm:$0xff] %v4170
        %4203 = vst [vmem:[#allocation2 + $0x90] sm:$0xff] %v4171
        %4204 = vst [vmem:[#allocation2 + $0x98] sm:$0xff] %v4172
        %4205 = vst [vmem:[#allocation2 + $0xa0] sm:$0xff] %v4173
        %4206 = vst [vmem:[#allocation2 + $0xa8] sm:$0xff] %v4174
        %4207 = vst [vmem:[#allocation2 + $0xb0] sm:$0xff] %v4175
        %4208 = vst [vmem:[#allocation2 + $0xb8] sm:$0xff] %v4176
        %4209 = vst [vmem:[#allocation2 + $0xc0] sm:$0xff] %v4177
        %4210 = vst [vmem:[#allocation2 + $0xc8] sm:$0xff] %v4178
        %4211 = vst [vmem:[#allocation2 + $0xd0] sm:$0xff] %v4179
        %4212 = vst [vmem:[#allocation2 + $0xd8] sm:$0xff] %v4180
        %4213 = vst [vmem:[#allocation2 + $0xe0] sm:$0xff] %v4181
        %4214 = vst [vmem:[#allocation2 + $0xe8] sm:$0xff] %v4182
        %4215 = vst [vmem:[#allocation2 + $0xf0] sm:$0xff] %v4183
        %4216 = vst [vmem:[#allocation2 + $0xf8] sm:$0xff] %v4184
        %p4217 = scmp.eq.s32.totalorder %s28, 3
        // Predicated region
        $region53: #{simplenet_forward.5} parent=39 // pred_check
          %p4218 = pneg %p4217
        $region54: #{simplenet_forward.5} parent=39 // pred_check_branch
          %4220 = sbr.rel (%p4218) target = $region56
        $region55: #{simplenet_forward.5} parent=39 // pred_region
          %v4221 = vld [vmem:[#allocation2] sm:$0xff]
          %v4222 = vld [vmem:[#allocation2 + $0x8] sm:$0xff]
          %v4223 = vld [vmem:[#allocation2 + $0x10] sm:$0xff]
          %v4224 = vld [vmem:[#allocation2 + $0x18] sm:$0xff]
          %v4225 = vld [vmem:[#allocation2 + $0x20] sm:$0xff]
          %v4226 = vld [vmem:[#allocation2 + $0x28] sm:$0xff]
          %v4227 = vld [vmem:[#allocation2 + $0x30] sm:$0xff]
          %v4228 = vld [vmem:[#allocation2 + $0x38] sm:$0xff]
          %v4229 = vld [vmem:[#allocation2 + $0x40] sm:$0xff]
          %v4230 = vld [vmem:[#allocation2 + $0x48] sm:$0xff]
          %v4231 = vld [vmem:[#allocation2 + $0x50] sm:$0xff]
          %v4232 = vld [vmem:[#allocation2 + $0x58] sm:$0xff]
          %v4233 = vld [vmem:[#allocation2 + $0x60] sm:$0xff]
          %v4234 = vld [vmem:[#allocation2 + $0x68] sm:$0xff]
          %v4235 = vld [vmem:[#allocation2 + $0x70] sm:$0xff]
          %v4236 = vld [vmem:[#allocation2 + $0x78] sm:$0xff]
          %v4237 = vld [vmem:[#allocation2 + $0x80] sm:$0xff]
          %v4238 = vld [vmem:[#allocation2 + $0x88] sm:$0xff]
          %v4239 = vld [vmem:[#allocation2 + $0x90] sm:$0xff]
          %v4240 = vld [vmem:[#allocation2 + $0x98] sm:$0xff]
          %v4241 = vld [vmem:[#allocation2 + $0xa0] sm:$0xff]
          %v4242 = vld [vmem:[#allocation2 + $0xa8] sm:$0xff]
          %v4243 = vld [vmem:[#allocation2 + $0xb0] sm:$0xff]
          %v4244 = vld [vmem:[#allocation2 + $0xb8] sm:$0xff]
          %v4245 = vld [vmem:[#allocation2 + $0xc0] sm:$0xff]
          %v4246 = vld [vmem:[#allocation2 + $0xc8] sm:$0xff]
          %v4247 = vld [vmem:[#allocation2 + $0xd0] sm:$0xff]
          %v4248 = vld [vmem:[#allocation2 + $0xd8] sm:$0xff]
          %v4249 = vld [vmem:[#allocation2 + $0xe0] sm:$0xff]
          %v4250 = vld [vmem:[#allocation2 + $0xe8] sm:$0xff]
          %v4251 = vld [vmem:[#allocation2 + $0xf0] sm:$0xff]
          %v4252 = vld [vmem:[#allocation2 + $0xf8] sm:$0xff]
          %v4253 = vld [vmem:[#allocation6] sm:$0xff]
          %v4254 = vld [vmem:[#allocation6 + $0x8] sm:$0xff]
          %v4257 = vlaneseq
          %v4258 = vshrl.u32 %v4257, 7
          %v4259 = vsub.s32 0, %v4258
          %v4260 = vrot.slane %v4253, %v4259
          %v4261 = vlaneseq
          %v4262 = vshrl.u32 %v4261, 7
          %v4263 = vsub.s32 1, %v4262
          %v4264 = vrot.slane %v4253, %v4263
          %v4265 = vlaneseq
          %v4266 = vshrl.u32 %v4265, 7
          %v4267 = vsub.s32 2, %v4266
          %v4268 = vrot.slane %v4253, %v4267
          %v4269 = vlaneseq
          %v4270 = vshrl.u32 %v4269, 7
          %v4271 = vsub.s32 3, %v4270
          %v4272 = vrot.slane %v4253, %v4271
          %v4273 = vlaneseq
          %v4274 = vshrl.u32 %v4273, 7
          %v4275 = vsub.s32 4, %v4274
          %v4276 = vrot.slane %v4253, %v4275
          %v4277 = vlaneseq
          %v4278 = vshrl.u32 %v4277, 7
          %v4279 = vsub.s32 5, %v4278
          %v4280 = vrot.slane %v4253, %v4279
          %v4281 = vlaneseq
          %v4282 = vshrl.u32 %v4281, 7
          %v4283 = vsub.s32 6, %v4282
          %v4284 = vrot.slane %v4253, %v4283
          %v4285 = vlaneseq
          %v4286 = vshrl.u32 %v4285, 7
          %v4287 = vsub.s32 7, %v4286
          %v4288 = vrot.slane %v4253, %v4287
          %v4289 = vlaneseq
          %v4290 = vshrl.u32 %v4289, 7
          %v4291 = vsub.s32 0, %v4290
          %v4292 = vrot.slane %v4254, %v4291
          %v4293 = vlaneseq
          %v4294 = vshrl.u32 %v4293, 7
          %v4295 = vsub.s32 1, %v4294
          %v4296 = vrot.slane %v4254, %v4295
          %v4297 = vlaneseq
          %v4298 = vshrl.u32 %v4297, 7
          %v4299 = vsub.s32 2, %v4298
          %v4300 = vrot.slane %v4254, %v4299
          %v4301 = vlaneseq
          %v4302 = vshrl.u32 %v4301, 7
          %v4303 = vsub.s32 3, %v4302
          %v4304 = vrot.slane %v4254, %v4303
          %v4305 = vlaneseq
          %v4306 = vshrl.u32 %v4305, 7
          %v4307 = vsub.s32 4, %v4306
          %v4308 = vrot.slane %v4254, %v4307
          %v4309 = vlaneseq
          %v4310 = vshrl.u32 %v4309, 7
          %v4311 = vsub.s32 5, %v4310
          %v4312 = vrot.slane %v4254, %v4311
          %v4313 = vlaneseq
          %v4314 = vshrl.u32 %v4313, 7
          %v4315 = vsub.s32 6, %v4314
          %v4316 = vrot.slane %v4254, %v4315
          %v4317 = vlaneseq
          %v4318 = vshrl.u32 %v4317, 7
          %v4319 = vsub.s32 7, %v4318
          %v4320 = vrot.slane %v4254, %v4319
          %v4337 = vadd.f32 %v4221, %v4260
          %v4338 = vadd.f32 %v4222, %v4264
          %v4339 = vadd.f32 %v4223, %v4268
          %v4340 = vadd.f32 %v4224, %v4272
          %v4341 = vadd.f32 %v4225, %v4276
          %v4342 = vadd.f32 %v4226, %v4280
          %v4343 = vadd.f32 %v4227, %v4284
          %v4344 = vadd.f32 %v4228, %v4288
          %v4345 = vadd.f32 %v4229, %v4292
          %v4346 = vadd.f32 %v4230, %v4296
          %v4347 = vadd.f32 %v4231, %v4300
          %v4348 = vadd.f32 %v4232, %v4304
          %v4349 = vadd.f32 %v4233, %v4308
          %v4350 = vadd.f32 %v4234, %v4312
          %v4351 = vadd.f32 %v4235, %v4316
          %v4352 = vadd.f32 %v4236, %v4320
          %v4353 = vadd.f32 %v4237, %v4260
          %v4354 = vadd.f32 %v4238, %v4264
          %v4355 = vadd.f32 %v4239, %v4268
          %v4356 = vadd.f32 %v4240, %v4272
          %v4357 = vadd.f32 %v4241, %v4276
          %v4358 = vadd.f32 %v4242, %v4280
          %v4359 = vadd.f32 %v4243, %v4284
          %v4360 = vadd.f32 %v4244, %v4288
          %v4361 = vadd.f32 %v4245, %v4292
          %v4362 = vadd.f32 %v4246, %v4296
          %v4363 = vadd.f32 %v4247, %v4300
          %v4364 = vadd.f32 %v4248, %v4304
          %v4365 = vadd.f32 %v4249, %v4308
          %v4366 = vadd.f32 %v4250, %v4312
          %v4367 = vadd.f32 %v4251, %v4316
          %v4368 = vadd.f32 %v4252, %v4320
          %4369 = vst [vmem:[%s290] sm:$0xff] %v4337
          %4370 = vst [vmem:[%s290 + $0x8] sm:$0xff] %v4338
          %4371 = vst [vmem:[%s290 + $0x10] sm:$0xff] %v4339
          %4372 = vst [vmem:[%s290 + $0x18] sm:$0xff] %v4340
          %4373 = vst [vmem:[%s290 + $0x20] sm:$0xff] %v4341
          %4374 = vst [vmem:[%s290 + $0x28] sm:$0xff] %v4342
          %4375 = vst [vmem:[%s290 + $0x30] sm:$0xff] %v4343
          %4376 = vst [vmem:[%s290 + $0x38] sm:$0xff] %v4344
          %4377 = vst [vmem:[%s290 + $0x40] sm:$0xff] %v4345
          %4378 = vst [vmem:[%s290 + $0x48] sm:$0xff] %v4346
          %4379 = vst [vmem:[%s290 + $0x50] sm:$0xff] %v4347
          %4380 = vst [vmem:[%s290 + $0x58] sm:$0xff] %v4348
          %4381 = vst [vmem:[%s290 + $0x60] sm:$0xff] %v4349
          %4382 = vst [vmem:[%s290 + $0x68] sm:$0xff] %v4350
          %4383 = vst [vmem:[%s290 + $0x70] sm:$0xff] %v4351
          %4384 = vst [vmem:[%s290 + $0x78] sm:$0xff] %v4352
          %4385 = vst [vmem:[%s290 + $0x80] sm:$0xff] %v4353
          %4386 = vst [vmem:[%s290 + $0x88] sm:$0xff] %v4354
          %4387 = vst [vmem:[%s290 + $0x90] sm:$0xff] %v4355
          %4388 = vst [vmem:[%s290 + $0x98] sm:$0xff] %v4356
          %4389 = vst [vmem:[%s290 + $0xa0] sm:$0xff] %v4357
          %4390 = vst [vmem:[%s290 + $0xa8] sm:$0xff] %v4358
          %4391 = vst [vmem:[%s290 + $0xb0] sm:$0xff] %v4359
          %4392 = vst [vmem:[%s290 + $0xb8] sm:$0xff] %v4360
          %4393 = vst [vmem:[%s290 + $0xc0] sm:$0xff] %v4361
          %4394 = vst [vmem:[%s290 + $0xc8] sm:$0xff] %v4362
          %4395 = vst [vmem:[%s290 + $0xd0] sm:$0xff] %v4363
          %4396 = vst [vmem:[%s290 + $0xd8] sm:$0xff] %v4364
          %4397 = vst [vmem:[%s290 + $0xe0] sm:$0xff] %v4365
          %4398 = vst [vmem:[%s290 + $0xe8] sm:$0xff] %v4366
          %4399 = vst [vmem:[%s290 + $0xf0] sm:$0xff] %v4367
          %4400 = vst [vmem:[%s290 + $0xf8] sm:$0xff] %v4368
        $region56: #{simplenet_forward.5} parent=39 // pred_fallthru
          _
        %s4401 = sand.u32 %s160, 1
        %s4402 = scalar_lea.sflag [#allocation5], %s4401
        %s4403 = sand.u32 %s160, 1
        %s4404 = smul.addr %s4403, 256
        %s4405 = scalar_lea.vmem [#allocation8], %s4404
        // Predicated region
        $region57: #{simplenet_forward.5} parent=39 // pred_check
          %p4406 = pneg %p170
        $region58: #{simplenet_forward.5} parent=39 // pred_check_branch
          %4408 = sbr.rel (%p4406) target = $region60
        $region59: #{simplenet_forward.5} parent=39 // pred_region
          %s4409 = smul.u32 2, %s27
          %s4411 = ssub.s32 4096, 4096
          %4412 = vsyncadd %s4402, %s4411
          %s4413 = smul.addr %s4409, 16
          %s4414 = smul.addr %s4413, 128
          %s4415 = scalar_lea.hbm %s5, %s4414
          %s4416 = sshll.u32 %s4405, 4
          %s4417 = int_to_ptr.vmem [resolvable:$true] %s4416
          %4422 = dma.vmem_to_hbm [thread:$0]  %s4417, 4096, %s4415, %s4402, 2048, 2048, 128
        $region60: #{simplenet_forward.5} parent=39 // pred_fallthru
          _
      $region40: #{simplenet_forward.5} parent=5 // pred_fallthru
        _
      %p4423 = scmp.le.s32.totalorder 2, %s18
      // Predicated region
      $region61: #{simplenet_forward.5} parent=5 // pred_check
        %p4424 = pneg %p4423
      $region62: #{simplenet_forward.5} parent=5 // pred_check_branch
        %4426 = sbr.rel (%p4424) target = $region64
      $region63: #{simplenet_forward.5} parent=5 // pred_region
        %s4427 = ssub.s32 %s18, 2
        // Predicated region
        $region65: #{simplenet_forward.5} parent=63 // pred_check
          %p4428 = pneg %p176
        $region66: #{simplenet_forward.5} parent=63 // pred_check_branch
          %4430 = sbr.rel (%p4428) target = $region68
        $region67: #{simplenet_forward.5} parent=63 // pred_region
          %s4431 = sand.u32 %s161, 1
          %s4432 = scalar_lea.sflag [#allocation5], %s4431
          %s4433 = sand.u32 %s161, 1
          %s4434 = smul.addr %s4433, 256
          %s4435 = scalar_lea.vmem [#allocation8], %s4434
          %4436 = dma.done %s4432, 4096
        $region68: #{simplenet_forward.5} parent=63 // pred_fallthru
          _
      $region64: #{simplenet_forward.5} parent=5 // pred_fallthru
        _
    $region6: #{simplenet_forward.5} parent=1 // loop_footer
      %s22 = sadd.s32 1, %s18
    $region7: #{simplenet_forward.5} parent=1 // loop_footer_branch
      %17 = sbr.rel target = $region3
    $region8: #{simplenet_forward.5} parent=1 // loop_exit
      _
    %4437 = vsyncpa [#allocation4], 1
    %s4438 = scalar_lea.sflag [#allocation4], 1
    %4439 = vsyncpa %s4438, 1
    %4440 = vsyncpa [#allocation7], 1
    %4441 = vsyncpa [#allocation5], 1
    %s4442 = scalar_lea.sflag [#allocation5], 1
    %4443 = vsyncpa %s4442, 1

</llo_original>
